<compile_context>
chip_gen: v7x
topology: tpu7x:2x2x1
jax: 0.10.0
libtpu: 0.0.40
codegen_flags: <defaults>
</compile_context>

<pallas_src>
import jax
import jax.numpy as jnp
from jax import lax
from jax.experimental import pallas as pl
from jax.experimental.pallas import tpu as pltpu

N, H, W, CIN = 2, 16, 16, 4
CIN_PAD = 8                      # pad input channels 4 -> 8 (sublane-aligned contraction)
P = N * H * W                    # 512 flattened (n, i, j) positions on the lane axis
LOG2W = 4
assert (1 << LOG2W) == W and H == W
EPS = 1e-5


# ---------------------------------------------------------------- kernel
def weightgen_kernel(x_ref, w1_ref, w2_ref, w3_ref, w4_ref, bnp_ref, out_ref):
    # ---- combined boundary masks: computed once, reused by all 3 convs ----
    p_idx = lax.broadcasted_iota(jnp.int32, (1, P), 1)
    col = jnp.bitwise_and(p_idx, W - 1)                                 # j
    row = jnp.bitwise_and(jnp.right_shift(p_idx, LOG2W), H - 1)         # i

    def edge(v, d, hi):
        return ((v + d >= 0) & (v + d < hi)).astype(jnp.float32)

    mrow = {-1: edge(row, -1, H), 1: edge(row, 1, H)}
    mcol = {-1: edge(col, -1, W), 1: edge(col, 1, W)}
    masks = {}
    for di in (-1, 0, 1):
        for dj in (-1, 0, 1):
            if di == 0 and dj == 0:
                masks[(di, dj)] = None                 # center tap: no mask
            elif di == 0:
                masks[(di, dj)] = mcol[dj]             # all-ones row factor skipped
            elif dj == 0:
                masks[(di, dj)] = mrow[di]             # all-ones col factor skipped
            else:
                masks[(di, dj)] = mrow[di] * mcol[dj]

    ones_col = jnp.ones((P, 1), jnp.float32)           # MXU-side lane-reduction vector
    inv_p = jnp.float32(1.0 / P)

    def conv3x3(h, w_ref):
        """h: (cin, P); w_ref: (9, cout, cin).  9 per-tap accumulating MXU matmuls;
        each rolled+masked tap goes straight to the MXU (no im2col materialization)."""
        acc = None
        t = 0
        for di in (-1, 0, 1):
            for dj in (-1, 0, 1):
                off = di * W + dj                       # lane offset of the source pixel
                if off == 0:
                    tap = h
                else:
                    tap = pltpu.roll(h, (-off) % P, axis=1)       # XLU lane rotation
                    tap = tap * masks[(di, dj)]                   # zero out-of-image taps
                contrib = jnp.dot(w_ref[t], tap, preferred_element_type=jnp.float32)
                acc = contrib if acc is None else acc + contrib
                t += 1
        return acc

    def bn_relu(y, gamma, beta):
        """Training-mode BN (biased var) folded into one scale/shift + ReLU.
        Per-channel sums are done on the MXU (matmul against ones), not the XLU."""
        s1 = jnp.dot(y, ones_col, preferred_element_type=jnp.float32)        # (C, 1)
        s2 = jnp.dot(y * y, ones_col, preferred_element_type=jnp.float32)    # (C, 1)
        mean = s1 * inv_p
        var = jnp.maximum(s2 * inv_p - mean * mean, 0.0)    # clamp: rounding can go < 0
        scale = gamma * lax.rsqrt(var + EPS)
        shift = beta - mean * scale
        return jnp.maximum(y * scale + shift, 0.0)

    g1, be1 = bnp_ref[:, 0:1], bnp_ref[:, 1:2]
    g2, be2 = bnp_ref[:, 2:3], bnp_ref[:, 3:4]
    g3, be3 = bnp_ref[0:16, 4:5], bnp_ref[0:16, 5:6]
    b4 = bnp_ref[0:1, 6:7]

    # In-kernel assembly of the (CIN_PAD, P) activation slab from the (N, CIN, H*W) view
    # (fuses the host-side NCHW transpose + channel pad into the kernel).
    x_rows = jnp.concatenate([x_ref[n] for n in range(N)], axis=1)            # (CIN, P)
    x_slab = jnp.concatenate(
        [x_rows, jnp.zeros((CIN_PAD - CIN, P), jnp.float32)], axis=0)         # (CIN_PAD, P)

    h1 = bn_relu(conv3x3(x_slab, w1_ref), g1, be1)      # (32, P)
    h2 = bn_relu(conv3x3(h1, w2_ref), g2, be2)          # (32, P)
    h3 = bn_relu(conv3x3(h2, w3_ref), g3, be3)          # (16, P)

    # conv4: 1x1 conv (16 -> 1) as an MXU contraction + sigmoid; lane-dense (1, P) output
    y = jnp.dot(w4_ref[...], h3, preferred_element_type=jnp.float32) + b4
    out_ref[...] = jax.nn.sigmoid(y)


# ---------------------------------------------------------------- wrapper
@jax.jit
def weight_generator(x_nchw, params):
    w1p, w2p, w3p, w4p, bnp = params
    n, c, h, w = x_nchw.shape
    p = n * h * w
    x_view = x_nchw.reshape(n, c, h * w)     # free reshape only; layout work done in-kernel

    vmem = pl.BlockSpec(memory_space=pltpu.MemorySpace.VMEM)
    out = pl.pallas_call(
        weightgen_kernel,
        out_shape=jax.ShapeDtypeStruct((1, p), jnp.float32),
        in_specs=[vmem] * 6,
        out_specs=vmem,
        cost_estimate=pl.CostEstimate(
            flops=17_000_000, transcendentals=600, bytes_accessed=76_000),
    )(x_view, w1p, w2p, w3p, w4p, bnp)
    return out.reshape(n, 1, h, w)           # NCHW weight map (matches the PyTorch module)


# ---------------------------------------------------------------- params
def init_params(key):
    ks = jax.random.split(key, 12)

    def conv_w(k, cout, cin, kh, kw):
        fan_in = cin * kh * kw
        return jax.random.normal(k, (cout, cin, kh, kw), jnp.float32) / jnp.sqrt(fan_in)

    w1o = conv_w(ks[0], 32, CIN, 3, 3); b1 = 0.05 * jax.random.normal(ks[1], (32,))
    w2o = conv_w(ks[2], 32, 32, 3, 3);  b2 = 0.05 * jax.random.normal(ks[3], (32,))
    w3o = conv_w(ks[4], 16, 32, 3, 3);  b3 = 0.05 * jax.random.normal(ks[5], (16,))
    w4o = conv_w(ks[6], 1, 16, 1, 1);   b4 = 0.05 * jax.random.normal(ks[7], (1,))
    g1 = 1.0 + 0.1 * jax.random.normal(ks[8], (32,));  be1 = 0.05 * jax.random.normal(ks[9], (32,))
    g2 = 1.0 + 0.1 * jax.random.normal(ks[10], (32,)); be2 = 0.05 * jax.random.normal(ks[11], (32,))
    g3 = jnp.ones((16,), jnp.float32);                 be3 = jnp.zeros((16,), jnp.float32)

    raw = dict(w1=w1o, b1=b1, g1=g1, be1=be1, w2=w2o, b2=b2, g2=g2, be2=be2,
               w3=w3o, b3=b3, g3=g3, be3=be3, w4=w4o, b4=b4)

    def pack3x3(w_oihw, cin_pad):        # OIHW -> (9, Cout, cin_pad), tap index = ki*3 + kj
        cout, cin, kh, kw = w_oihw.shape
        wt = jnp.transpose(w_oihw, (2, 3, 0, 1))                  # (kh, kw, cout, cin)
        wt = jnp.pad(wt, ((0, 0), (0, 0), (0, 0), (0, cin_pad - cin)))
        return wt.reshape(kh * kw, cout, cin_pad)

    w1p = pack3x3(w1o, CIN_PAD)          # (9, 32, 8)
    w2p = pack3x3(w2o, 32)               # (9, 32, 32)
    w3p = pack3x3(w3o, 32)               # (9, 16, 32)
    w4p = w4o.reshape(1, 16)             # (1, 16) row for the MXU 1x1 contraction

    # BN affine params + conv4 bias packed into one (32, 8) array (column vectors per channel)
    bnp = jnp.zeros((32, 8), jnp.float32)
    bnp = bnp.at[:, 0].set(g1).at[:, 1].set(be1)
    bnp = bnp.at[:, 2].set(g2).at[:, 3].set(be2)
    bnp = bnp.at[:16, 4].set(g3).at[:16, 5].set(be3)
    bnp = bnp.at[0, 6].set(b4[0])
    # conv biases b1/b2/b3 are NOT passed: training-mode BN cancels them exactly.
    return (w1p, w2p, w3p, w4p, bnp), raw


# ---------------------------------------------------------------- pure-JAX reference
def reference(x_nchw, raw):
    x = jnp.transpose(x_nchw, (0, 2, 3, 1))                       # NHWC

    def conv(x, w_oihw, b, pad):
        w = jnp.transpose(w_oihw, (2, 3, 1, 0))                   # HWIO
        y = lax.conv_general_dilated(x, w, (1, 1), [(pad, pad), (pad, pad)],
                                     dimension_numbers=('NHWC', 'HWIO', 'NHWC'))
        return y + b

    def bn(y, g, be):
        mean = y.mean(axis=(0, 1, 2), keepdims=True)
        var = ((y - mean) ** 2).mean(axis=(0, 1, 2), keepdims=True)
        return (y - mean) * lax.rsqrt(var + EPS) * g + be

    h = jax.nn.relu(bn(conv(x, raw['w1'], raw['b1'], 1), raw['g1'], raw['be1']))
    h = jax.nn.relu(bn(conv(h, raw['w2'], raw['b2'], 1), raw['g2'], raw['be2']))
    h = jax.nn.relu(bn(conv(h, raw['w3'], raw['b3'], 1), raw['g3'], raw['be3']))
    out = jax.nn.sigmoid(conv(h, raw['w4'], raw['b4'], 0))        # (N, H, W, 1)
    return jnp.transpose(out, (0, 3, 1, 2))                       # NCHW


# ---------------------------------------------------------------- main
if __name__ == "__main__":
    key = jax.random.PRNGKey(0)
    kx, kp = jax.random.split(key)
    x_nchw = jax.random.normal(kx, (N, CIN, H, W), jnp.float32)   # PyTorch-style NCHW input

    params, raw = init_params(kp)
    out = weight_generator(x_nchw, params)                        # (N, 1, H, W)
    out = jax.block_until_ready(out)

    ref = reference(x_nchw, raw)
    assert out.shape == (N, 1, H, W)
    assert bool(jnp.all(jnp.isfinite(out)))
    assert bool(jnp.allclose(out, ref, atol=1e-2, rtol=1e-2)), \
        f"max err {float(jnp.max(jnp.abs(out - ref)))}"
    print("KERNEL_OK")
</pallas_src>

<mosaic_0001>
module attributes {stable_mosaic.version = 11 : i64} {
  func.func @weightgen_kernel(%arg0: memref<2x4x256xf32, #tpu.memory_space<vmem>>, %arg1: memref<9x32x8xf32, #tpu.memory_space<vmem>>, %arg2: memref<9x32x32xf32, #tpu.memory_space<vmem>>, %arg3: memref<9x16x32xf32, #tpu.memory_space<vmem>>, %arg4: memref<1x16xf32, #tpu.memory_space<vmem>>, %arg5: memref<32x8xf32, #tpu.memory_space<vmem>>, %arg6: memref<1x512xf32, #tpu.memory_space<vmem>>) attributes {dimension_semantics = [], scalar_prefetch = 0 : i64, scratch_operands = 0 : i64, tpu.core_type = #tpu.core_type<tc>} {
    %0 = tpu.iota {dimensions = array<i32: 1>} : vector<1x512xi32>
    %c15_i32 = arith.constant 15 : i32
    %1 = vector.broadcast %c15_i32 : i32 to vector<1x512xi32>
    %2 = arith.andi %0, %1 : vector<1x512xi32>
    %c4_i32 = arith.constant 4 : i32
    %3 = vector.broadcast %c4_i32 : i32 to vector<1x512xi32>
    %4 = arith.shrsi %0, %3 : vector<1x512xi32>
    %c15_i32_0 = arith.constant 15 : i32
    %5 = vector.broadcast %c15_i32_0 : i32 to vector<1x512xi32>
    %6 = arith.andi %4, %5 : vector<1x512xi32>
    %c-1_i32 = arith.constant -1 : i32
    %7 = vector.broadcast %c-1_i32 : i32 to vector<1x512xi32>
    %8 = arith.addi %6, %7 : vector<1x512xi32>
    %c0_i32 = arith.constant 0 : i32
    %9 = vector.broadcast %c0_i32 : i32 to vector<1x512xi32>
    %10 = arith.cmpi sge, %8, %9 : vector<1x512xi32>
    %c-1_i32_1 = arith.constant -1 : i32
    %11 = vector.broadcast %c-1_i32_1 : i32 to vector<1x512xi32>
    %12 = arith.addi %6, %11 : vector<1x512xi32>
    %c16_i32 = arith.constant 16 : i32
    %13 = vector.broadcast %c16_i32 : i32 to vector<1x512xi32>
    %14 = arith.cmpi slt, %12, %13 : vector<1x512xi32>
    %15 = arith.andi %10, %14 : vector<1x512xi1>
    %16 = arith.extui %15 : vector<1x512xi1> to vector<1x512xi32>
    %17 = arith.sitofp %16 : vector<1x512xi32> to vector<1x512xf32>
    %c1_i32 = arith.constant 1 : i32
    %18 = vector.broadcast %c1_i32 : i32 to vector<1x512xi32>
    %19 = arith.addi %6, %18 : vector<1x512xi32>
    %c0_i32_2 = arith.constant 0 : i32
    %20 = vector.broadcast %c0_i32_2 : i32 to vector<1x512xi32>
    %21 = arith.cmpi sge, %19, %20 : vector<1x512xi32>
    %c1_i32_3 = arith.constant 1 : i32
    %22 = vector.broadcast %c1_i32_3 : i32 to vector<1x512xi32>
    %23 = arith.addi %6, %22 : vector<1x512xi32>
    %c16_i32_4 = arith.constant 16 : i32
    %24 = vector.broadcast %c16_i32_4 : i32 to vector<1x512xi32>
    %25 = arith.cmpi slt, %23, %24 : vector<1x512xi32>
    %26 = arith.andi %21, %25 : vector<1x512xi1>
    %27 = arith.extui %26 : vector<1x512xi1> to vector<1x512xi32>
    %28 = arith.sitofp %27 : vector<1x512xi32> to vector<1x512xf32>
    %c-1_i32_5 = arith.constant -1 : i32
    %29 = vector.broadcast %c-1_i32_5 : i32 to vector<1x512xi32>
    %30 = arith.addi %2, %29 : vector<1x512xi32>
    %c0_i32_6 = arith.constant 0 : i32
    %31 = vector.broadcast %c0_i32_6 : i32 to vector<1x512xi32>
    %32 = arith.cmpi sge, %30, %31 : vector<1x512xi32>
    %c-1_i32_7 = arith.constant -1 : i32
    %33 = vector.broadcast %c-1_i32_7 : i32 to vector<1x512xi32>
    %34 = arith.addi %2, %33 : vector<1x512xi32>
    %c16_i32_8 = arith.constant 16 : i32
    %35 = vector.broadcast %c16_i32_8 : i32 to vector<1x512xi32>
    %36 = arith.cmpi slt, %34, %35 : vector<1x512xi32>
    %37 = arith.andi %32, %36 : vector<1x512xi1>
    %38 = arith.extui %37 : vector<1x512xi1> to vector<1x512xi32>
    %39 = arith.sitofp %38 : vector<1x512xi32> to vector<1x512xf32>
    %c1_i32_9 = arith.constant 1 : i32
    %40 = vector.broadcast %c1_i32_9 : i32 to vector<1x512xi32>
    %41 = arith.addi %2, %40 : vector<1x512xi32>
    %c0_i32_10 = arith.constant 0 : i32
    %42 = vector.broadcast %c0_i32_10 : i32 to vector<1x512xi32>
    %43 = arith.cmpi sge, %41, %42 : vector<1x512xi32>
    %c1_i32_11 = arith.constant 1 : i32
    %44 = vector.broadcast %c1_i32_11 : i32 to vector<1x512xi32>
    %45 = arith.addi %2, %44 : vector<1x512xi32>
    %c16_i32_12 = arith.constant 16 : i32
    %46 = vector.broadcast %c16_i32_12 : i32 to vector<1x512xi32>
    %47 = arith.cmpi slt, %45, %46 : vector<1x512xi32>
    %48 = arith.andi %43, %47 : vector<1x512xi1>
    %49 = arith.extui %48 : vector<1x512xi1> to vector<1x512xi32>
    %50 = arith.sitofp %49 : vector<1x512xi32> to vector<1x512xf32>
    %51 = arith.mulf %17, %39 : vector<1x512xf32>
    %52 = arith.mulf %17, %50 : vector<1x512xf32>
    %53 = arith.mulf %28, %39 : vector<1x512xf32>
    %54 = arith.mulf %28, %50 : vector<1x512xf32>
    %cst = arith.constant 1.000000e+00 : f32
    %55 = vector.broadcast %cst : f32 to vector<512x1xf32>
    %c0 = arith.constant 0 : index
    %c0_13 = arith.constant 0 : index
    %56 = vector.load %arg5[%c0, %c0_13] : memref<32x8xf32, #tpu.memory_space<vmem>>, vector<32x1xf32>
    %c0_14 = arith.constant 0 : index
    %c1 = arith.constant 1 : index
    %57 = vector.load %arg5[%c0_14, %c1] : memref<32x8xf32, #tpu.memory_space<vmem>>, vector<32x1xf32>
    %c0_15 = arith.constant 0 : index
    %c2 = arith.constant 2 : index
    %58 = vector.load %arg5[%c0_15, %c2] : memref<32x8xf32, #tpu.memory_space<vmem>>, vector<32x1xf32>
    %c0_16 = arith.constant 0 : index
    %c3 = arith.constant 3 : index
    %59 = vector.load %arg5[%c0_16, %c3] : memref<32x8xf32, #tpu.memory_space<vmem>>, vector<32x1xf32>
    %c0_17 = arith.constant 0 : index
    %c4 = arith.constant 4 : index
    %60 = vector.load %arg5[%c0_17, %c4] : memref<32x8xf32, #tpu.memory_space<vmem>>, vector<16x1xf32>
    %c0_18 = arith.constant 0 : index
    %c5 = arith.constant 5 : index
    %61 = vector.load %arg5[%c0_18, %c5] : memref<32x8xf32, #tpu.memory_space<vmem>>, vector<16x1xf32>
    %c0_19 = arith.constant 0 : index
    %c6 = arith.constant 6 : index
    %62 = vector.load %arg5[%c0_19, %c6] : memref<32x8xf32, #tpu.memory_space<vmem>>, vector<1x1xf32>
    %c0_20 = arith.constant 0 : index
    %c0_21 = arith.constant 0 : index
    %c0_22 = arith.constant 0 : index
    %63 = vector.load %arg0[%c0_20, %c0_21, %c0_22] : memref<2x4x256xf32, #tpu.memory_space<vmem>>, vector<1x4x256xf32>
    %64 = vector.shape_cast %63 : vector<1x4x256xf32> to vector<4x256xf32>
    %c1_23 = arith.constant 1 : index
    %c0_24 = arith.constant 0 : index
    %c0_25 = arith.constant 0 : index
    %65 = vector.load %arg0[%c1_23, %c0_24, %c0_25] : memref<2x4x256xf32, #tpu.memory_space<vmem>>, vector<1x4x256xf32>
    %66 = vector.shape_cast %65 : vector<1x4x256xf32> to vector<4x256xf32>
    %67 = tpu.concatenate %64, %66 in 1 : vector<4x256xf32>, vector<4x256xf32> -> vector<4x512xf32>
    %cst_26 = arith.constant 0.000000e+00 : f32
    %68 = vector.broadcast %cst_26 : f32 to vector<4x512xf32>
    %69 = tpu.concatenate %67, %68 in 0 : vector<4x512xf32>, vector<4x512xf32> -> vector<8x512xf32>
    %c17_i32 = arith.constant 17 : i32
    %70 = tpu.dynamic_rotate %69 by %c17_i32 dim 1 : vector<8x512xf32>, i32 -> vector<8x512xf32>
    %71 = vector.broadcast %51 : vector<1x512xf32> to vector<8x512xf32>
    %72 = arith.mulf %70, %71 : vector<8x512xf32>
    %c0_27 = arith.constant 0 : index
    %c0_28 = arith.constant 0 : index
    %c0_29 = arith.constant 0 : index
    %73 = vector.load %arg1[%c0_27, %c0_28, %c0_29] : memref<9x32x8xf32, #tpu.memory_space<vmem>>, vector<1x32x8xf32>
    %74 = vector.shape_cast %73 : vector<1x32x8xf32> to vector<32x8xf32>
    %cst_30 = arith.constant dense<0.000000e+00> : vector<32x512xf32>
    %75 = tpu.matmul %74, %72, %cst_30 {dimension_numbers = #tpu.dot_dimension_numbers<[1], [0], [0], [1], [0, 0, 1, 1], [], []>} : vector<32x8xf32>, vector<8x512xf32>, vector<32x512xf32> -> vector<32x512xf32>
    %c16_i32_31 = arith.constant 16 : i32
    %76 = tpu.dynamic_rotate %69 by %c16_i32_31 dim 1 : vector<8x512xf32>, i32 -> vector<8x512xf32>
    %77 = vector.broadcast %17 : vector<1x512xf32> to vector<8x512xf32>
    %78 = arith.mulf %76, %77 : vector<8x512xf32>
    %c1_32 = arith.constant 1 : index
    %c0_33 = arith.constant 0 : index
    %c0_34 = arith.constant 0 : index
    %79 = vector.load %arg1[%c1_32, %c0_33, %c0_34] : memref<9x32x8xf32, #tpu.memory_space<vmem>>, vector<1x32x8xf32>
    %80 = vector.shape_cast %79 : vector<1x32x8xf32> to vector<32x8xf32>
    %cst_35 = arith.constant dense<0.000000e+00> : vector<32x512xf32>
    %81 = tpu.matmul %80, %78, %cst_35 {dimension_numbers = #tpu.dot_dimension_numbers<[1], [0], [0], [1], [0, 0, 1, 1], [], []>} : vector<32x8xf32>, vector<8x512xf32>, vector<32x512xf32> -> vector<32x512xf32>
    %82 = arith.addf %75, %81 : vector<32x512xf32>
    %c15_i32_36 = arith.constant 15 : i32
    %83 = tpu.dynamic_rotate %69 by %c15_i32_36 dim 1 : vector<8x512xf32>, i32 -> vector<8x512xf32>
    %84 = vector.broadcast %52 : vector<1x512xf32> to vector<8x512xf32>
    %85 = arith.mulf %83, %84 : vector<8x512xf32>
    %c2_37 = arith.constant 2 : index
    %c0_38 = arith.constant 0 : index
    %c0_39 = arith.constant 0 : index
    %86 = vector.load %arg1[%c2_37, %c0_38, %c0_39] : memref<9x32x8xf32, #tpu.memory_space<vmem>>, vector<1x32x8xf32>
    %87 = vector.shape_cast %86 : vector<1x32x8xf32> to vector<32x8xf32>
    %cst_40 = arith.constant dense<0.000000e+00> : vector<32x512xf32>
    %88 = tpu.matmul %87, %85, %cst_40 {dimension_numbers = #tpu.dot_dimension_numbers<[1], [0], [0], [1], [0, 0, 1, 1], [], []>} : vector<32x8xf32>, vector<8x512xf32>, vector<32x512xf32> -> vector<32x512xf32>
    %89 = arith.addf %82, %88 : vector<32x512xf32>
    %c1_i32_41 = arith.constant 1 : i32
    %90 = tpu.dynamic_rotate %69 by %c1_i32_41 dim 1 : vector<8x512xf32>, i32 -> vector<8x512xf32>
    %91 = vector.broadcast %39 : vector<1x512xf32> to vector<8x512xf32>
    %92 = arith.mulf %90, %91 : vector<8x512xf32>
    %c3_42 = arith.constant 3 : index
    %c0_43 = arith.constant 0 : index
    %c0_44 = arith.constant 0 : index
    %93 = vector.load %arg1[%c3_42, %c0_43, %c0_44] : memref<9x32x8xf32, #tpu.memory_space<vmem>>, vector<1x32x8xf32>
    %94 = vector.shape_cast %93 : vector<1x32x8xf32> to vector<32x8xf32>
    %cst_45 = arith.constant dense<0.000000e+00> : vector<32x512xf32>
    %95 = tpu.matmul %94, %92, %cst_45 {dimension_numbers = #tpu.dot_dimension_numbers<[1], [0], [0], [1], [0, 0, 1, 1], [], []>} : vector<32x8xf32>, vector<8x512xf32>, vector<32x512xf32> -> vector<32x512xf32>
    %96 = arith.addf %89, %95 : vector<32x512xf32>
    %c4_46 = arith.constant 4 : index
    %c0_47 = arith.constant 0 : index
    %c0_48 = arith.constant 0 : index
    %97 = vector.load %arg1[%c4_46, %c0_47, %c0_48] : memref<9x32x8xf32, #tpu.memory_space<vmem>>, vector<1x32x8xf32>
    %98 = vector.shape_cast %97 : vector<1x32x8xf32> to vector<32x8xf32>
    %cst_49 = arith.constant dense<0.000000e+00> : vector<32x512xf32>
    %99 = tpu.matmul %98, %69, %cst_49 {dimension_numbers = #tpu.dot_dimension_numbers<[1], [0], [0], [1], [0, 0, 1, 1], [], []>} : vector<32x8xf32>, vector<8x512xf32>, vector<32x512xf32> -> vector<32x512xf32>
    %100 = arith.addf %96, %99 : vector<32x512xf32>
    %c511_i32 = arith.constant 511 : i32
    %101 = tpu.dynamic_rotate %69 by %c511_i32 dim 1 : vector<8x512xf32>, i32 -> vector<8x512xf32>
    %102 = vector.broadcast %50 : vector<1x512xf32> to vector<8x512xf32>
    %103 = arith.mulf %101, %102 : vector<8x512xf32>
    %c5_50 = arith.constant 5 : index
    %c0_51 = arith.constant 0 : index
    %c0_52 = arith.constant 0 : index
    %104 = vector.load %arg1[%c5_50, %c0_51, %c0_52] : memref<9x32x8xf32, #tpu.memory_space<vmem>>, vector<1x32x8xf32>
    %105 = vector.shape_cast %104 : vector<1x32x8xf32> to vector<32x8xf32>
    %cst_53 = arith.constant dense<0.000000e+00> : vector<32x512xf32>
    %106 = tpu.matmul %105, %103, %cst_53 {dimension_numbers = #tpu.dot_dimension_numbers<[1], [0], [0], [1], [0, 0, 1, 1], [], []>} : vector<32x8xf32>, vector<8x512xf32>, vector<32x512xf32> -> vector<32x512xf32>
    %107 = arith.addf %100, %106 : vector<32x512xf32>
    %c497_i32 = arith.constant 497 : i32
    %108 = tpu.dynamic_rotate %69 by %c497_i32 dim 1 : vector<8x512xf32>, i32 -> vector<8x512xf32>
    %109 = vector.broadcast %53 : vector<1x512xf32> to vector<8x512xf32>
    %110 = arith.mulf %108, %109 : vector<8x512xf32>
    %c6_54 = arith.constant 6 : index
    %c0_55 = arith.constant 0 : index
    %c0_56 = arith.constant 0 : index
    %111 = vector.load %arg1[%c6_54, %c0_55, %c0_56] : memref<9x32x8xf32, #tpu.memory_space<vmem>>, vector<1x32x8xf32>
    %112 = vector.shape_cast %111 : vector<1x32x8xf32> to vector<32x8xf32>
    %cst_57 = arith.constant dense<0.000000e+00> : vector<32x512xf32>
    %113 = tpu.matmul %112, %110, %cst_57 {dimension_numbers = #tpu.dot_dimension_numbers<[1], [0], [0], [1], [0, 0, 1, 1], [], []>} : vector<32x8xf32>, vector<8x512xf32>, vector<32x512xf32> -> vector<32x512xf32>
    %114 = arith.addf %107, %113 : vector<32x512xf32>
    %c496_i32 = arith.constant 496 : i32
    %115 = tpu.dynamic_rotate %69 by %c496_i32 dim 1 : vector<8x512xf32>, i32 -> vector<8x512xf32>
    %116 = vector.broadcast %28 : vector<1x512xf32> to vector<8x512xf32>
    %117 = arith.mulf %115, %116 : vector<8x512xf32>
    %c7 = arith.constant 7 : index
    %c0_58 = arith.constant 0 : index
    %c0_59 = arith.constant 0 : index
    %118 = vector.load %arg1[%c7, %c0_58, %c0_59] : memref<9x32x8xf32, #tpu.memory_space<vmem>>, vector<1x32x8xf32>
    %119 = vector.shape_cast %118 : vector<1x32x8xf32> to vector<32x8xf32>
    %cst_60 = arith.constant dense<0.000000e+00> : vector<32x512xf32>
    %120 = tpu.matmul %119, %117, %cst_60 {dimension_numbers = #tpu.dot_dimension_numbers<[1], [0], [0], [1], [0, 0, 1, 1], [], []>} : vector<32x8xf32>, vector<8x512xf32>, vector<32x512xf32> -> vector<32x512xf32>
    %121 = arith.addf %114, %120 : vector<32x512xf32>
    %c495_i32 = arith.constant 495 : i32
    %122 = tpu.dynamic_rotate %69 by %c495_i32 dim 1 : vector<8x512xf32>, i32 -> vector<8x512xf32>
    %123 = vector.broadcast %54 : vector<1x512xf32> to vector<8x512xf32>
    %124 = arith.mulf %122, %123 : vector<8x512xf32>
    %c8 = arith.constant 8 : index
    %c0_61 = arith.constant 0 : index
    %c0_62 = arith.constant 0 : index
    %125 = vector.load %arg1[%c8, %c0_61, %c0_62] : memref<9x32x8xf32, #tpu.memory_space<vmem>>, vector<1x32x8xf32>
    %126 = vector.shape_cast %125 : vector<1x32x8xf32> to vector<32x8xf32>
    %cst_63 = arith.constant dense<0.000000e+00> : vector<32x512xf32>
    %127 = tpu.matmul %126, %124, %cst_63 {dimension_numbers = #tpu.dot_dimension_numbers<[1], [0], [0], [1], [0, 0, 1, 1], [], []>} : vector<32x8xf32>, vector<8x512xf32>, vector<32x512xf32> -> vector<32x512xf32>
    %128 = arith.addf %121, %127 : vector<32x512xf32>
    %cst_64 = arith.constant dense<0.000000e+00> : vector<32x1xf32>
    %129 = tpu.matmul %128, %55, %cst_64 {dimension_numbers = #tpu.dot_dimension_numbers<[1], [0], [0], [1], [0, 0, 1, 1], [], []>} : vector<32x512xf32>, vector<512x1xf32>, vector<32x1xf32> -> vector<32x1xf32>
    %130 = arith.mulf %128, %128 : vector<32x512xf32>
    %cst_65 = arith.constant dense<0.000000e+00> : vector<32x1xf32>
    %131 = tpu.matmul %130, %55, %cst_65 {dimension_numbers = #tpu.dot_dimension_numbers<[1], [0], [0], [1], [0, 0, 1, 1], [], []>} : vector<32x512xf32>, vector<512x1xf32>, vector<32x1xf32> -> vector<32x1xf32>
    %cst_66 = arith.constant 0.001953125 : f32
    %132 = vector.broadcast %cst_66 : f32 to vector<32x1xf32>
    %133 = arith.mulf %129, %132 : vector<32x1xf32>
    %cst_67 = arith.constant 0.001953125 : f32
    %134 = vector.broadcast %cst_67 : f32 to vector<32x1xf32>
    %135 = arith.mulf %131, %134 : vector<32x1xf32>
    %136 = arith.mulf %133, %133 : vector<32x1xf32>
    %137 = arith.subf %135, %136 : vector<32x1xf32>
    %cst_68 = arith.constant 0.000000e+00 : f32
    %138 = vector.broadcast %cst_68 : f32 to vector<32x1xf32>
    %139 = arith.maximumf %137, %138 : vector<32x1xf32>
    %cst_69 = arith.constant 9.99999974E-6 : f32
    %140 = vector.broadcast %cst_69 : f32 to vector<32x1xf32>
    %141 = arith.addf %139, %140 : vector<32x1xf32>
    %142 = math.rsqrt %141 : vector<32x1xf32>
    %143 = arith.mulf %56, %142 : vector<32x1xf32>
    %144 = arith.mulf %133, %143 : vector<32x1xf32>
    %145 = arith.subf %57, %144 : vector<32x1xf32>
    %146 = vector.broadcast %143 : vector<32x1xf32> to vector<32x512xf32>
    %147 = arith.mulf %128, %146 : vector<32x512xf32>
    %148 = vector.broadcast %145 : vector<32x1xf32> to vector<32x512xf32>
    %149 = arith.addf %147, %148 : vector<32x512xf32>
    %cst_70 = arith.constant 0.000000e+00 : f32
    %150 = vector.broadcast %cst_70 : f32 to vector<32x512xf32>
    %151 = arith.maximumf %149, %150 : vector<32x512xf32>
    %c17_i32_71 = arith.constant 17 : i32
    %152 = tpu.dynamic_rotate %151 by %c17_i32_71 dim 1 : vector<32x512xf32>, i32 -> vector<32x512xf32>
    %153 = vector.broadcast %51 : vector<1x512xf32> to vector<32x512xf32>
    %154 = arith.mulf %152, %153 : vector<32x512xf32>
    %c0_72 = arith.constant 0 : index
    %c0_73 = arith.constant 0 : index
    %c0_74 = arith.constant 0 : index
    %155 = vector.load %arg2[%c0_72, %c0_73, %c0_74] : memref<9x32x32xf32, #tpu.memory_space<vmem>>, vector<1x32x32xf32>
    %156 = vector.shape_cast %155 : vector<1x32x32xf32> to vector<32x32xf32>
    %cst_75 = arith.constant dense<0.000000e+00> : vector<32x512xf32>
    %157 = tpu.matmul %156, %154, %cst_75 {dimension_numbers = #tpu.dot_dimension_numbers<[1], [0], [0], [1], [0, 0, 1, 1], [], []>} : vector<32x32xf32>, vector<32x512xf32>, vector<32x512xf32> -> vector<32x512xf32>
    %c16_i32_76 = arith.constant 16 : i32
    %158 = tpu.dynamic_rotate %151 by %c16_i32_76 dim 1 : vector<32x512xf32>, i32 -> vector<32x512xf32>
    %159 = vector.broadcast %17 : vector<1x512xf32> to vector<32x512xf32>
    %160 = arith.mulf %158, %159 : vector<32x512xf32>
    %c1_77 = arith.constant 1 : index
    %c0_78 = arith.constant 0 : index
    %c0_79 = arith.constant 0 : index
    %161 = vector.load %arg2[%c1_77, %c0_78, %c0_79] : memref<9x32x32xf32, #tpu.memory_space<vmem>>, vector<1x32x32xf32>
    %162 = vector.shape_cast %161 : vector<1x32x32xf32> to vector<32x32xf32>
    %cst_80 = arith.constant dense<0.000000e+00> : vector<32x512xf32>
    %163 = tpu.matmul %162, %160, %cst_80 {dimension_numbers = #tpu.dot_dimension_numbers<[1], [0], [0], [1], [0, 0, 1, 1], [], []>} : vector<32x32xf32>, vector<32x512xf32>, vector<32x512xf32> -> vector<32x512xf32>
    %164 = arith.addf %157, %163 : vector<32x512xf32>
    %c15_i32_81 = arith.constant 15 : i32
    %165 = tpu.dynamic_rotate %151 by %c15_i32_81 dim 1 : vector<32x512xf32>, i32 -> vector<32x512xf32>
    %166 = vector.broadcast %52 : vector<1x512xf32> to vector<32x512xf32>
    %167 = arith.mulf %165, %166 : vector<32x512xf32>
    %c2_82 = arith.constant 2 : index
    %c0_83 = arith.constant 0 : index
    %c0_84 = arith.constant 0 : index
    %168 = vector.load %arg2[%c2_82, %c0_83, %c0_84] : memref<9x32x32xf32, #tpu.memory_space<vmem>>, vector<1x32x32xf32>
    %169 = vector.shape_cast %168 : vector<1x32x32xf32> to vector<32x32xf32>
    %cst_85 = arith.constant dense<0.000000e+00> : vector<32x512xf32>
    %170 = tpu.matmul %169, %167, %cst_85 {dimension_numbers = #tpu.dot_dimension_numbers<[1], [0], [0], [1], [0, 0, 1, 1], [], []>} : vector<32x32xf32>, vector<32x512xf32>, vector<32x512xf32> -> vector<32x512xf32>
    %171 = arith.addf %164, %170 : vector<32x512xf32>
    %c1_i32_86 = arith.constant 1 : i32
    %172 = tpu.dynamic_rotate %151 by %c1_i32_86 dim 1 : vector<32x512xf32>, i32 -> vector<32x512xf32>
    %173 = vector.broadcast %39 : vector<1x512xf32> to vector<32x512xf32>
    %174 = arith.mulf %172, %173 : vector<32x512xf32>
    %c3_87 = arith.constant 3 : index
    %c0_88 = arith.constant 0 : index
    %c0_89 = arith.constant 0 : index
    %175 = vector.load %arg2[%c3_87, %c0_88, %c0_89] : memref<9x32x32xf32, #tpu.memory_space<vmem>>, vector<1x32x32xf32>
    %176 = vector.shape_cast %175 : vector<1x32x32xf32> to vector<32x32xf32>
    %cst_90 = arith.constant dense<0.000000e+00> : vector<32x512xf32>
    %177 = tpu.matmul %176, %174, %cst_90 {dimension_numbers = #tpu.dot_dimension_numbers<[1], [0], [0], [1], [0, 0, 1, 1], [], []>} : vector<32x32xf32>, vector<32x512xf32>, vector<32x512xf32> -> vector<32x512xf32>
    %178 = arith.addf %171, %177 : vector<32x512xf32>
    %c4_91 = arith.constant 4 : index
    %c0_92 = arith.constant 0 : index
    %c0_93 = arith.constant 0 : index
    %179 = vector.load %arg2[%c4_91, %c0_92, %c0_93] : memref<9x32x32xf32, #tpu.memory_space<vmem>>, vector<1x32x32xf32>
    %180 = vector.shape_cast %179 : vector<1x32x32xf32> to vector<32x32xf32>
    %cst_94 = arith.constant dense<0.000000e+00> : vector<32x512xf32>
    %181 = tpu.matmul %180, %151, %cst_94 {dimension_numbers = #tpu.dot_dimension_numbers<[1], [0], [0], [1], [0, 0, 1, 1], [], []>} : vector<32x32xf32>, vector<32x512xf32>, vector<32x512xf32> -> vector<32x512xf32>
    %182 = arith.addf %178, %181 : vector<32x512xf32>
    %c511_i32_95 = arith.constant 511 : i32
    %183 = tpu.dynamic_rotate %151 by %c511_i32_95 dim 1 : vector<32x512xf32>, i32 -> vector<32x512xf32>
    %184 = vector.broadcast %50 : vector<1x512xf32> to vector<32x512xf32>
    %185 = arith.mulf %183, %184 : vector<32x512xf32>
    %c5_96 = arith.constant 5 : index
    %c0_97 = arith.constant 0 : index
    %c0_98 = arith.constant 0 : index
    %186 = vector.load %arg2[%c5_96, %c0_97, %c0_98] : memref<9x32x32xf32, #tpu.memory_space<vmem>>, vector<1x32x32xf32>
    %187 = vector.shape_cast %186 : vector<1x32x32xf32> to vector<32x32xf32>
    %cst_99 = arith.constant dense<0.000000e+00> : vector<32x512xf32>
    %188 = tpu.matmul %187, %185, %cst_99 {dimension_numbers = #tpu.dot_dimension_numbers<[1], [0], [0], [1], [0, 0, 1, 1], [], []>} : vector<32x32xf32>, vector<32x512xf32>, vector<32x512xf32> -> vector<32x512xf32>
    %189 = arith.addf %182, %188 : vector<32x512xf32>
    %c497_i32_100 = arith.constant 497 : i32
    %190 = tpu.dynamic_rotate %151 by %c497_i32_100 dim 1 : vector<32x512xf32>, i32 -> vector<32x512xf32>
    %191 = vector.broadcast %53 : vector<1x512xf32> to vector<32x512xf32>
    %192 = arith.mulf %190, %191 : vector<32x512xf32>
    %c6_101 = arith.constant 6 : index
    %c0_102 = arith.constant 0 : index
    %c0_103 = arith.constant 0 : index
    %193 = vector.load %arg2[%c6_101, %c0_102, %c0_103] : memref<9x32x32xf32, #tpu.memory_space<vmem>>, vector<1x32x32xf32>
    %194 = vector.shape_cast %193 : vector<1x32x32xf32> to vector<32x32xf32>
    %cst_104 = arith.constant dense<0.000000e+00> : vector<32x512xf32>
    %195 = tpu.matmul %194, %192, %cst_104 {dimension_numbers = #tpu.dot_dimension_numbers<[1], [0], [0], [1], [0, 0, 1, 1], [], []>} : vector<32x32xf32>, vector<32x512xf32>, vector<32x512xf32> -> vector<32x512xf32>
    %196 = arith.addf %189, %195 : vector<32x512xf32>
    %c496_i32_105 = arith.constant 496 : i32
    %197 = tpu.dynamic_rotate %151 by %c496_i32_105 dim 1 : vector<32x512xf32>, i32 -> vector<32x512xf32>
    %198 = vector.broadcast %28 : vector<1x512xf32> to vector<32x512xf32>
    %199 = arith.mulf %197, %198 : vector<32x512xf32>
    %c7_106 = arith.constant 7 : index
    %c0_107 = arith.constant 0 : index
    %c0_108 = arith.constant 0 : index
    %200 = vector.load %arg2[%c7_106, %c0_107, %c0_108] : memref<9x32x32xf32, #tpu.memory_space<vmem>>, vector<1x32x32xf32>
    %201 = vector.shape_cast %200 : vector<1x32x32xf32> to vector<32x32xf32>
    %cst_109 = arith.constant dense<0.000000e+00> : vector<32x512xf32>
    %202 = tpu.matmul %201, %199, %cst_109 {dimension_numbers = #tpu.dot_dimension_numbers<[1], [0], [0], [1], [0, 0, 1, 1], [], []>} : vector<32x32xf32>, vector<32x512xf32>, vector<32x512xf32> -> vector<32x512xf32>
    %203 = arith.addf %196, %202 : vector<32x512xf32>
    %c495_i32_110 = arith.constant 495 : i32
    %204 = tpu.dynamic_rotate %151 by %c495_i32_110 dim 1 : vector<32x512xf32>, i32 -> vector<32x512xf32>
    %205 = vector.broadcast %54 : vector<1x512xf32> to vector<32x512xf32>
    %206 = arith.mulf %204, %205 : vector<32x512xf32>
    %c8_111 = arith.constant 8 : index
    %c0_112 = arith.constant 0 : index
    %c0_113 = arith.constant 0 : index
    %207 = vector.load %arg2[%c8_111, %c0_112, %c0_113] : memref<9x32x32xf32, #tpu.memory_space<vmem>>, vector<1x32x32xf32>
    %208 = vector.shape_cast %207 : vector<1x32x32xf32> to vector<32x32xf32>
    %cst_114 = arith.constant dense<0.000000e+00> : vector<32x512xf32>
    %209 = tpu.matmul %208, %206, %cst_114 {dimension_numbers = #tpu.dot_dimension_numbers<[1], [0], [0], [1], [0, 0, 1, 1], [], []>} : vector<32x32xf32>, vector<32x512xf32>, vector<32x512xf32> -> vector<32x512xf32>
    %210 = arith.addf %203, %209 : vector<32x512xf32>
    %cst_115 = arith.constant dense<0.000000e+00> : vector<32x1xf32>
    %211 = tpu.matmul %210, %55, %cst_115 {dimension_numbers = #tpu.dot_dimension_numbers<[1], [0], [0], [1], [0, 0, 1, 1], [], []>} : vector<32x512xf32>, vector<512x1xf32>, vector<32x1xf32> -> vector<32x1xf32>
    %212 = arith.mulf %210, %210 : vector<32x512xf32>
    %cst_116 = arith.constant dense<0.000000e+00> : vector<32x1xf32>
    %213 = tpu.matmul %212, %55, %cst_116 {dimension_numbers = #tpu.dot_dimension_numbers<[1], [0], [0], [1], [0, 0, 1, 1], [], []>} : vector<32x512xf32>, vector<512x1xf32>, vector<32x1xf32> -> vector<32x1xf32>
    %cst_117 = arith.constant 0.001953125 : f32
    %214 = vector.broadcast %cst_117 : f32 to vector<32x1xf32>
    %215 = arith.mulf %211, %214 : vector<32x1xf32>
    %cst_118 = arith.constant 0.001953125 : f32
    %216 = vector.broadcast %cst_118 : f32 to vector<32x1xf32>
    %217 = arith.mulf %213, %216 : vector<32x1xf32>
    %218 = arith.mulf %215, %215 : vector<32x1xf32>
    %219 = arith.subf %217, %218 : vector<32x1xf32>
    %cst_119 = arith.constant 0.000000e+00 : f32
    %220 = vector.broadcast %cst_119 : f32 to vector<32x1xf32>
    %221 = arith.maximumf %219, %220 : vector<32x1xf32>
    %cst_120 = arith.constant 9.99999974E-6 : f32
    %222 = vector.broadcast %cst_120 : f32 to vector<32x1xf32>
    %223 = arith.addf %221, %222 : vector<32x1xf32>
    %224 = math.rsqrt %223 : vector<32x1xf32>
    %225 = arith.mulf %58, %224 : vector<32x1xf32>
    %226 = arith.mulf %215, %225 : vector<32x1xf32>
    %227 = arith.subf %59, %226 : vector<32x1xf32>
    %228 = vector.broadcast %225 : vector<32x1xf32> to vector<32x512xf32>
    %229 = arith.mulf %210, %228 : vector<32x512xf32>
    %230 = vector.broadcast %227 : vector<32x1xf32> to vector<32x512xf32>
    %231 = arith.addf %229, %230 : vector<32x512xf32>
    %cst_121 = arith.constant 0.000000e+00 : f32
    %232 = vector.broadcast %cst_121 : f32 to vector<32x512xf32>
    %233 = arith.maximumf %231, %232 : vector<32x512xf32>
    %c17_i32_122 = arith.constant 17 : i32
    %234 = tpu.dynamic_rotate %233 by %c17_i32_122 dim 1 : vector<32x512xf32>, i32 -> vector<32x512xf32>
    %235 = vector.broadcast %51 : vector<1x512xf32> to vector<32x512xf32>
    %236 = arith.mulf %234, %235 : vector<32x512xf32>
    %c0_123 = arith.constant 0 : index
    %c0_124 = arith.constant 0 : index
    %c0_125 = arith.constant 0 : index
    %237 = vector.load %arg3[%c0_123, %c0_124, %c0_125] : memref<9x16x32xf32, #tpu.memory_space<vmem>>, vector<1x16x32xf32>
    %238 = vector.shape_cast %237 : vector<1x16x32xf32> to vector<16x32xf32>
    %cst_126 = arith.constant dense<0.000000e+00> : vector<16x512xf32>
    %239 = tpu.matmul %238, %236, %cst_126 {dimension_numbers = #tpu.dot_dimension_numbers<[1], [0], [0], [1], [0, 0, 1, 1], [], []>} : vector<16x32xf32>, vector<32x512xf32>, vector<16x512xf32> -> vector<16x512xf32>
    %c16_i32_127 = arith.constant 16 : i32
    %240 = tpu.dynamic_rotate %233 by %c16_i32_127 dim 1 : vector<32x512xf32>, i32 -> vector<32x512xf32>
    %241 = vector.broadcast %17 : vector<1x512xf32> to vector<32x512xf32>
    %242 = arith.mulf %240, %241 : vector<32x512xf32>
    %c1_128 = arith.constant 1 : index
    %c0_129 = arith.constant 0 : index
    %c0_130 = arith.constant 0 : index
    %243 = vector.load %arg3[%c1_128, %c0_129, %c0_130] : memref<9x16x32xf32, #tpu.memory_space<vmem>>, vector<1x16x32xf32>
    %244 = vector.shape_cast %243 : vector<1x16x32xf32> to vector<16x32xf32>
    %cst_131 = arith.constant dense<0.000000e+00> : vector<16x512xf32>
    %245 = tpu.matmul %244, %242, %cst_131 {dimension_numbers = #tpu.dot_dimension_numbers<[1], [0], [0], [1], [0, 0, 1, 1], [], []>} : vector<16x32xf32>, vector<32x512xf32>, vector<16x512xf32> -> vector<16x512xf32>
    %246 = arith.addf %239, %245 : vector<16x512xf32>
    %c15_i32_132 = arith.constant 15 : i32
    %247 = tpu.dynamic_rotate %233 by %c15_i32_132 dim 1 : vector<32x512xf32>, i32 -> vector<32x512xf32>
    %248 = vector.broadcast %52 : vector<1x512xf32> to vector<32x512xf32>
    %249 = arith.mulf %247, %248 : vector<32x512xf32>
    %c2_133 = arith.constant 2 : index
    %c0_134 = arith.constant 0 : index
    %c0_135 = arith.constant 0 : index
    %250 = vector.load %arg3[%c2_133, %c0_134, %c0_135] : memref<9x16x32xf32, #tpu.memory_space<vmem>>, vector<1x16x32xf32>
    %251 = vector.shape_cast %250 : vector<1x16x32xf32> to vector<16x32xf32>
    %cst_136 = arith.constant dense<0.000000e+00> : vector<16x512xf32>
    %252 = tpu.matmul %251, %249, %cst_136 {dimension_numbers = #tpu.dot_dimension_numbers<[1], [0], [0], [1], [0, 0, 1, 1], [], []>} : vector<16x32xf32>, vector<32x512xf32>, vector<16x512xf32> -> vector<16x512xf32>
    %253 = arith.addf %246, %252 : vector<16x512xf32>
    %c1_i32_137 = arith.constant 1 : i32
    %254 = tpu.dynamic_rotate %233 by %c1_i32_137 dim 1 : vector<32x512xf32>, i32 -> vector<32x512xf32>
    %255 = vector.broadcast %39 : vector<1x512xf32> to vector<32x512xf32>
    %256 = arith.mulf %254, %255 : vector<32x512xf32>
    %c3_138 = arith.constant 3 : index
    %c0_139 = arith.constant 0 : index
    %c0_140 = arith.constant 0 : index
    %257 = vector.load %arg3[%c3_138, %c0_139, %c0_140] : memref<9x16x32xf32, #tpu.memory_space<vmem>>, vector<1x16x32xf32>
    %258 = vector.shape_cast %257 : vector<1x16x32xf32> to vector<16x32xf32>
    %cst_141 = arith.constant dense<0.000000e+00> : vector<16x512xf32>
    %259 = tpu.matmul %258, %256, %cst_141 {dimension_numbers = #tpu.dot_dimension_numbers<[1], [0], [0], [1], [0, 0, 1, 1], [], []>} : vector<16x32xf32>, vector<32x512xf32>, vector<16x512xf32> -> vector<16x512xf32>
    %260 = arith.addf %253, %259 : vector<16x512xf32>
    %c4_142 = arith.constant 4 : index
    %c0_143 = arith.constant 0 : index
    %c0_144 = arith.constant 0 : index
    %261 = vector.load %arg3[%c4_142, %c0_143, %c0_144] : memref<9x16x32xf32, #tpu.memory_space<vmem>>, vector<1x16x32xf32>
    %262 = vector.shape_cast %261 : vector<1x16x32xf32> to vector<16x32xf32>
    %cst_145 = arith.constant dense<0.000000e+00> : vector<16x512xf32>
    %263 = tpu.matmul %262, %233, %cst_145 {dimension_numbers = #tpu.dot_dimension_numbers<[1], [0], [0], [1], [0, 0, 1, 1], [], []>} : vector<16x32xf32>, vector<32x512xf32>, vector<16x512xf32> -> vector<16x512xf32>
    %264 = arith.addf %260, %263 : vector<16x512xf32>
    %c511_i32_146 = arith.constant 511 : i32
    %265 = tpu.dynamic_rotate %233 by %c511_i32_146 dim 1 : vector<32x512xf32>, i32 -> vector<32x512xf32>
    %266 = vector.broadcast %50 : vector<1x512xf32> to vector<32x512xf32>
    %267 = arith.mulf %265, %266 : vector<32x512xf32>
    %c5_147 = arith.constant 5 : index
    %c0_148 = arith.constant 0 : index
    %c0_149 = arith.constant 0 : index
    %268 = vector.load %arg3[%c5_147, %c0_148, %c0_149] : memref<9x16x32xf32, #tpu.memory_space<vmem>>, vector<1x16x32xf32>
    %269 = vector.shape_cast %268 : vector<1x16x32xf32> to vector<16x32xf32>
    %cst_150 = arith.constant dense<0.000000e+00> : vector<16x512xf32>
    %270 = tpu.matmul %269, %267, %cst_150 {dimension_numbers = #tpu.dot_dimension_numbers<[1], [0], [0], [1], [0, 0, 1, 1], [], []>} : vector<16x32xf32>, vector<32x512xf32>, vector<16x512xf32> -> vector<16x512xf32>
    %271 = arith.addf %264, %270 : vector<16x512xf32>
    %c497_i32_151 = arith.constant 497 : i32
    %272 = tpu.dynamic_rotate %233 by %c497_i32_151 dim 1 : vector<32x512xf32>, i32 -> vector<32x512xf32>
    %273 = vector.broadcast %53 : vector<1x512xf32> to vector<32x512xf32>
    %274 = arith.mulf %272, %273 : vector<32x512xf32>
    %c6_152 = arith.constant 6 : index
    %c0_153 = arith.constant 0 : index
    %c0_154 = arith.constant 0 : index
    %275 = vector.load %arg3[%c6_152, %c0_153, %c0_154] : memref<9x16x32xf32, #tpu.memory_space<vmem>>, vector<1x16x32xf32>
    %276 = vector.shape_cast %275 : vector<1x16x32xf32> to vector<16x32xf32>
    %cst_155 = arith.constant dense<0.000000e+00> : vector<16x512xf32>
    %277 = tpu.matmul %276, %274, %cst_155 {dimension_numbers = #tpu.dot_dimension_numbers<[1], [0], [0], [1], [0, 0, 1, 1], [], []>} : vector<16x32xf32>, vector<32x512xf32>, vector<16x512xf32> -> vector<16x512xf32>
    %278 = arith.addf %271, %277 : vector<16x512xf32>
    %c496_i32_156 = arith.constant 496 : i32
    %279 = tpu.dynamic_rotate %233 by %c496_i32_156 dim 1 : vector<32x512xf32>, i32 -> vector<32x512xf32>
    %280 = vector.broadcast %28 : vector<1x512xf32> to vector<32x512xf32>
    %281 = arith.mulf %279, %280 : vector<32x512xf32>
    %c7_157 = arith.constant 7 : index
    %c0_158 = arith.constant 0 : index
    %c0_159 = arith.constant 0 : index
    %282 = vector.load %arg3[%c7_157, %c0_158, %c0_159] : memref<9x16x32xf32, #tpu.memory_space<vmem>>, vector<1x16x32xf32>
    %283 = vector.shape_cast %282 : vector<1x16x32xf32> to vector<16x32xf32>
    %cst_160 = arith.constant dense<0.000000e+00> : vector<16x512xf32>
    %284 = tpu.matmul %283, %281, %cst_160 {dimension_numbers = #tpu.dot_dimension_numbers<[1], [0], [0], [1], [0, 0, 1, 1], [], []>} : vector<16x32xf32>, vector<32x512xf32>, vector<16x512xf32> -> vector<16x512xf32>
    %285 = arith.addf %278, %284 : vector<16x512xf32>
    %c495_i32_161 = arith.constant 495 : i32
    %286 = tpu.dynamic_rotate %233 by %c495_i32_161 dim 1 : vector<32x512xf32>, i32 -> vector<32x512xf32>
    %287 = vector.broadcast %54 : vector<1x512xf32> to vector<32x512xf32>
    %288 = arith.mulf %286, %287 : vector<32x512xf32>
    %c8_162 = arith.constant 8 : index
    %c0_163 = arith.constant 0 : index
    %c0_164 = arith.constant 0 : index
    %289 = vector.load %arg3[%c8_162, %c0_163, %c0_164] : memref<9x16x32xf32, #tpu.memory_space<vmem>>, vector<1x16x32xf32>
    %290 = vector.shape_cast %289 : vector<1x16x32xf32> to vector<16x32xf32>
    %cst_165 = arith.constant dense<0.000000e+00> : vector<16x512xf32>
    %291 = tpu.matmul %290, %288, %cst_165 {dimension_numbers = #tpu.dot_dimension_numbers<[1], [0], [0], [1], [0, 0, 1, 1], [], []>} : vector<16x32xf32>, vector<32x512xf32>, vector<16x512xf32> -> vector<16x512xf32>
    %292 = arith.addf %285, %291 : vector<16x512xf32>
    %cst_166 = arith.constant dense<0.000000e+00> : vector<16x1xf32>
    %293 = tpu.matmul %292, %55, %cst_166 {dimension_numbers = #tpu.dot_dimension_numbers<[1], [0], [0], [1], [0, 0, 1, 1], [], []>} : vector<16x512xf32>, vector<512x1xf32>, vector<16x1xf32> -> vector<16x1xf32>
    %294 = arith.mulf %292, %292 : vector<16x512xf32>
    %cst_167 = arith.constant dense<0.000000e+00> : vector<16x1xf32>
    %295 = tpu.matmul %294, %55, %cst_167 {dimension_numbers = #tpu.dot_dimension_numbers<[1], [0], [0], [1], [0, 0, 1, 1], [], []>} : vector<16x512xf32>, vector<512x1xf32>, vector<16x1xf32> -> vector<16x1xf32>
    %cst_168 = arith.constant 0.001953125 : f32
    %296 = vector.broadcast %cst_168 : f32 to vector<16x1xf32>
    %297 = arith.mulf %293, %296 : vector<16x1xf32>
    %cst_169 = arith.constant 0.001953125 : f32
    %298 = vector.broadcast %cst_169 : f32 to vector<16x1xf32>
    %299 = arith.mulf %295, %298 : vector<16x1xf32>
    %300 = arith.mulf %297, %297 : vector<16x1xf32>
    %301 = arith.subf %299, %300 : vector<16x1xf32>
    %cst_170 = arith.constant 0.000000e+00 : f32
    %302 = vector.broadcast %cst_170 : f32 to vector<16x1xf32>
    %303 = arith.maximumf %301, %302 : vector<16x1xf32>
    %cst_171 = arith.constant 9.99999974E-6 : f32
    %304 = vector.broadcast %cst_171 : f32 to vector<16x1xf32>
    %305 = arith.addf %303, %304 : vector<16x1xf32>
    %306 = math.rsqrt %305 : vector<16x1xf32>
    %307 = arith.mulf %60, %306 : vector<16x1xf32>
    %308 = arith.mulf %297, %307 : vector<16x1xf32>
    %309 = arith.subf %61, %308 : vector<16x1xf32>
    %310 = vector.broadcast %307 : vector<16x1xf32> to vector<16x512xf32>
    %311 = arith.mulf %292, %310 : vector<16x512xf32>
    %312 = vector.broadcast %309 : vector<16x1xf32> to vector<16x512xf32>
    %313 = arith.addf %311, %312 : vector<16x512xf32>
    %cst_172 = arith.constant 0.000000e+00 : f32
    %314 = vector.broadcast %cst_172 : f32 to vector<16x512xf32>
    %315 = arith.maximumf %313, %314 : vector<16x512xf32>
    %c0_173 = arith.constant 0 : index
    %c0_174 = arith.constant 0 : index
    %316 = vector.load %arg4[%c0_173, %c0_174] : memref<1x16xf32, #tpu.memory_space<vmem>>, vector<1x16xf32>
    %cst_175 = arith.constant dense<0.000000e+00> : vector<1x512xf32>
    %317 = tpu.matmul %316, %315, %cst_175 {dimension_numbers = #tpu.dot_dimension_numbers<[1], [0], [0], [1], [0, 0, 1, 1], [], []>} : vector<1x16xf32>, vector<16x512xf32>, vector<1x512xf32> -> vector<1x512xf32>
    %318 = vector.broadcast %62 : vector<1x1xf32> to vector<1x512xf32>
    %319 = arith.addf %317, %318 : vector<1x512xf32>
    %320 = arith.negf %319 : vector<1x512xf32>
    %321 = math.exp %320 : vector<1x512xf32>
    %cst_176 = arith.constant 1.000000e+00 : f32
    %322 = vector.broadcast %cst_176 : f32 to vector<1x512xf32>
    %323 = arith.addf %322, %321 : vector<1x512xf32>
    %324 = arith.divf %322, %323 : vector<1x512xf32>
    %c0_177 = arith.constant 0 : index
    %c0_178 = arith.constant 0 : index
    %325 = vector.load %arg6[%c0_177, %c0_178] : memref<1x512xf32, #tpu.memory_space<vmem>>, vector<1x512xf32>
    tpu.vector_store %arg6[%c0_177, %c0_178], %324 {strides = array<i32>} : memref<1x512xf32, #tpu.memory_space<vmem>>, vector<1x512xf32>,
    return
  }
}

</mosaic_0001>

<llo_original>
// kernel: weight_generator.1
$region0: #{weight_generator.1}
  #allocation0 [shape = 'u32[]', space=smem, size = 0x4, offset = 0x4, fixed_abs, tag = 'smem constant byte address 0x4 - core index']
  #allocation1 [shape = 'u32[144,128]{1,0:T(1,128)}', space=vmem, size = 0x12000, scoped, tag = 'internal scratch']
  %s0 = inlined_call_operand.vmem [shape: f32[2,4,256], index: 0, kind: input, shape index: {}]
  %s1 = inlined_call_operand.vmem [shape: f32[9,32,8], index: 1, kind: input, shape index: {}]
  %s2 = inlined_call_operand.vmem [shape: f32[9,32,32], index: 2, kind: input, shape index: {}]
  %s3 = inlined_call_operand.vmem [shape: f32[9,16,32], index: 3, kind: input, shape index: {}]
  %s4 = inlined_call_operand.vmem [shape: f32[1,16], index: 4, kind: input, shape index: {}]
  %s5 = inlined_call_operand.vmem [shape: f32[32,8], index: 5, kind: input, shape index: {}]
  %s6 = inlined_call_operand.vmem [shape: f32[1,512], index: 6, kind: output, shape index: {}]
  %s7 = sld [smem:[#allocation0]]
  $region34: #{weight_generator.1} parent=0
    _
  %s9 = ssub.s32 1, %s7
  %s10 = scalar_select 0, %s9, %s7
  // Predicated region
  $region2: #{weight_generator.1} parent=0 // pred_check
    _
  $region3: #{weight_generator.1} parent=0 // pred_check_branch
    %12 = sbr.rel (0) target = $region5
  $region4: #{weight_generator.1} parent=0 // pred_region
    _
  $region5: #{weight_generator.1} parent=0 // pred_fallthru
    _
  // Predicated region
  $region6: #{weight_generator.1} parent=0 // pred_check
    _
  $region7: #{weight_generator.1} parent=0 // pred_check_branch
    %14 = sbr.rel (0) target = $region9
  $region8: #{weight_generator.1} parent=0 // pred_region
    _
  $region9: #{weight_generator.1} parent=0 // pred_fallthru
    _
  // Predicated region
  $region10: #{weight_generator.1} parent=0 // pred_check
    _
  $region11: #{weight_generator.1} parent=0 // pred_check_branch
    %16 = sbr.rel (0) target = $region13
  $region12: #{weight_generator.1} parent=0 // pred_region
    _
  $region13: #{weight_generator.1} parent=0 // pred_fallthru
    _
  // Predicated region
  $region14: #{weight_generator.1} parent=0 // pred_check
    _
  $region15: #{weight_generator.1} parent=0 // pred_check_branch
    %18 = sbr.rel (0) target = $region17
  $region16: #{weight_generator.1} parent=0 // pred_region
    _
  $region17: #{weight_generator.1} parent=0 // pred_fallthru
    _
  // Predicated region
  $region18: #{weight_generator.1} parent=0 // pred_check
    _
  $region19: #{weight_generator.1} parent=0 // pred_check_branch
    %20 = sbr.rel (0) target = $region21
  $region20: #{weight_generator.1} parent=0 // pred_region
    _
  $region21: #{weight_generator.1} parent=0 // pred_fallthru
    _
  // Predicated region
  $region22: #{weight_generator.1} parent=0 // pred_check
    _
  $region23: #{weight_generator.1} parent=0 // pred_check_branch
    %22 = sbr.rel (0) target = $region25
  $region24: #{weight_generator.1} parent=0 // pred_region
    _
  $region25: #{weight_generator.1} parent=0 // pred_fallthru
    _
  %v23 = vlaneseq
  %v24 = vand.u32 %v23, 127
  %v25 = vadd.s32 %v24, 128
  %v26 = vadd.s32 %v24, 256
  %v27 = vadd.s32 %v24, 384
  %v28 = vand.u32 %v24, 15
  %v29 = vand.u32 %v25, 15
  %v30 = vand.u32 %v26, 15
  %v31 = vand.u32 %v27, 15
  %v32 = vshra.s32 %v24, 4
  %v33 = vshra.s32 %v25, 4
  %v34 = vshra.s32 %v26, 4
  %v35 = vshra.s32 %v27, 4
  %v36 = vand.u32 %v32, 15
  %v37 = vand.u32 %v33, 15
  %v38 = vand.u32 %v34, 15
  %v39 = vand.u32 %v35, 15
  %v40 = vadd.s32 %v36, 4294967295
  %v41 = vadd.s32 %v37, 4294967295
  %v42 = vadd.s32 %v38, 4294967295
  %v43 = vadd.s32 %v39, 4294967295
  %vm44 = vcmp.ge.s32.totalorder %v40, 0
  %vm45 = vcmp.ge.s32.totalorder %v41, 0
  %vm46 = vcmp.ge.s32.totalorder %v42, 0
  %vm47 = vcmp.ge.s32.totalorder %v43, 0
  %vm48 = vcmp.lt.s32.totalorder %v40, 16
  %vm49 = vcmp.lt.s32.totalorder %v41, 16
  %vm50 = vcmp.lt.s32.totalorder %v42, 16
  %vm51 = vcmp.lt.s32.totalorder %v43, 16
  %vm52 = vmand %vm44, %vm48
  %vm53 = vmand %vm45, %vm49
  %vm54 = vmand %vm46, %vm50
  %vm55 = vmand %vm47, %vm51
  %v56 = vsel %vm52, 1, 0
  %v57 = vsel %vm53, 1, 0
  %v58 = vsel %vm54, 1, 0
  %v59 = vsel %vm55, 1, 0
  %v60 = vcvt.s32.f32 %v56
  %v61 = vcvt.s32.f32 %v57
  %v62 = vcvt.s32.f32 %v58
  %v63 = vcvt.s32.f32 %v59
  %v64 = vadd.s32 %v36, 1
  %v65 = vadd.s32 %v37, 1
  %v66 = vadd.s32 %v38, 1
  %v67 = vadd.s32 %v39, 1
  %vm68 = vcmp.ge.s32.totalorder %v64, 0
  %vm69 = vcmp.ge.s32.totalorder %v65, 0
  %vm70 = vcmp.ge.s32.totalorder %v66, 0
  %vm71 = vcmp.ge.s32.totalorder %v67, 0
  %vm72 = vcmp.lt.s32.totalorder %v64, 16
  %vm73 = vcmp.lt.s32.totalorder %v65, 16
  %vm74 = vcmp.lt.s32.totalorder %v66, 16
  %vm75 = vcmp.lt.s32.totalorder %v67, 16
  %vm76 = vmand %vm68, %vm72
  %vm77 = vmand %vm69, %vm73
  %vm78 = vmand %vm70, %vm74
  %vm79 = vmand %vm71, %vm75
  %v80 = vsel %vm76, 1, 0
  %v81 = vsel %vm77, 1, 0
  %v82 = vsel %vm78, 1, 0
  %v83 = vsel %vm79, 1, 0
  %v84 = vcvt.s32.f32 %v80
  %v85 = vcvt.s32.f32 %v81
  %v86 = vcvt.s32.f32 %v82
  %v87 = vcvt.s32.f32 %v83
  %v88 = vadd.s32 %v28, 4294967295
  %v89 = vadd.s32 %v29, 4294967295
  %v90 = vadd.s32 %v30, 4294967295
  %v91 = vadd.s32 %v31, 4294967295
  %vm92 = vcmp.ge.s32.totalorder %v88, 0
  %vm93 = vcmp.ge.s32.totalorder %v89, 0
  %vm94 = vcmp.ge.s32.totalorder %v90, 0
  %vm95 = vcmp.ge.s32.totalorder %v91, 0
  %vm96 = vcmp.lt.s32.totalorder %v88, 16
  %vm97 = vcmp.lt.s32.totalorder %v89, 16
  %vm98 = vcmp.lt.s32.totalorder %v90, 16
  %vm99 = vcmp.lt.s32.totalorder %v91, 16
  %vm100 = vmand %vm92, %vm96
  %vm101 = vmand %vm93, %vm97
  %vm102 = vmand %vm94, %vm98
  %vm103 = vmand %vm95, %vm99
  %v104 = vsel %vm100, 1, 0
  %v105 = vsel %vm101, 1, 0
  %v106 = vsel %vm102, 1, 0
  %v107 = vsel %vm103, 1, 0
  %v108 = vcvt.s32.f32 %v104
  %v109 = vcvt.s32.f32 %v105
  %v110 = vcvt.s32.f32 %v106
  %v111 = vcvt.s32.f32 %v107
  %v112 = vadd.s32 %v28, 1
  %v113 = vadd.s32 %v29, 1
  %v114 = vadd.s32 %v30, 1
  %v115 = vadd.s32 %v31, 1
  %vm116 = vcmp.ge.s32.totalorder %v112, 0
  %vm117 = vcmp.ge.s32.totalorder %v113, 0
  %vm118 = vcmp.ge.s32.totalorder %v114, 0
  %vm119 = vcmp.ge.s32.totalorder %v115, 0
  %vm120 = vcmp.lt.s32.totalorder %v112, 16
  %vm121 = vcmp.lt.s32.totalorder %v113, 16
  %vm122 = vcmp.lt.s32.totalorder %v114, 16
  %vm123 = vcmp.lt.s32.totalorder %v115, 16
  %vm124 = vmand %vm116, %vm120
  %vm125 = vmand %vm117, %vm121
  %vm126 = vmand %vm118, %vm122
  %vm127 = vmand %vm119, %vm123
  %v128 = vsel %vm124, 1, 0
  %v129 = vsel %vm125, 1, 0
  %v130 = vsel %vm126, 1, 0
  %v131 = vsel %vm127, 1, 0
  %v132 = vcvt.s32.f32 %v128
  %v133 = vcvt.s32.f32 %v129
  %v134 = vcvt.s32.f32 %v130
  %v135 = vcvt.s32.f32 %v131
  %v136 = vmul.f32 %v60, %v108
  %v137 = vmul.f32 %v61, %v109
  %v138 = vmul.f32 %v62, %v110
  %v139 = vmul.f32 %v63, %v111
  %v140 = vmul.f32 %v60, %v132
  %v141 = vmul.f32 %v61, %v133
  %v142 = vmul.f32 %v62, %v134
  %v143 = vmul.f32 %v63, %v135
  %v144 = vmul.f32 %v84, %v108
  %v145 = vmul.f32 %v85, %v109
  %v146 = vmul.f32 %v86, %v110
  %v147 = vmul.f32 %v87, %v111
  %v148 = vmul.f32 %v84, %v132
  %v149 = vmul.f32 %v85, %v133
  %v150 = vmul.f32 %v86, %v134
  %v151 = vmul.f32 %v87, %v135
  %v152 = vld [vmem:[%s5] sm:$0xff]
  %v153 = vld [vmem:[%s5 + $0x8] sm:$0xff]
  %v154 = vld [vmem:[%s5 + $0x10] sm:$0xff]
  %v155 = vld [vmem:[%s5 + $0x18] sm:$0xff]
  %v156 = vld [vmem:[%s5] sm:$0x1]
  %v157 = vld [vmem:[%s0] sm:$0xff]
  %s158 = scalar_lea.vmem %s0, 8
  %v159 = vld [vmem:[%s158] sm:$0xff]
  %v161 = vcombine.high %v157, %v157
  %v164 = vcombine.high %v159, %v159
  %vm166 = vcmask 1043456
  %v167 = vsel %vm166, %v157, 0.0
  %v168 = vsel %vm166, %v161, 0.0
  %v169 = vsel %vm166, %v159, 0.0
  %v170 = vsel %vm166, %v164, 0.0
  %171 = vrot.lane.b32.xlu0 %v167, 17
  %v172 = vpop.permute.xlu0 %171
  %173 = vrot.lane.b32.xlu0 %v168, 17
  %v174 = vpop.permute.xlu0 %173
  %175 = vrot.lane.b32.xlu0 %v169, 17
  %v176 = vpop.permute.xlu0 %175
  %177 = vrot.lane.b32.xlu0 %v170, 17
  %v178 = vpop.permute.xlu0 %177
  %vm179 = vcmp.lt.s32.totalorder %v24, 17
  %v180 = vsel %vm179, %v176, %v178
  %v181 = vsel %vm179, %v174, %v176
  %v182 = vsel %vm179, %v172, %v174
  %v183 = vsel %vm179, %v178, %v172
  %v184 = vmul.f32 %v183, %v136
  %v185 = vmul.f32 %v182, %v137
  %v186 = vmul.f32 %v181, %v138
  %v187 = vmul.f32 %v180, %v139
  %v188 = vld [vmem:[%s1] sm:$0xff]
  %v189 = vld [vmem:[%s1 + $0x8] sm:$0xff]
  %v190 = vld [vmem:[%s1 + $0x10] sm:$0xff]
  %v191 = vld [vmem:[%s1 + $0x18] sm:$0xff]
  %192 = vrot.lane.b32.xlu0 %v167, 16
  %v193 = vpop.permute.xlu0 %192
  %194 = vrot.lane.b32.xlu0 %v168, 16
  %v195 = vpop.permute.xlu0 %194
  %196 = vrot.lane.b32.xlu0 %v169, 16
  %v197 = vpop.permute.xlu0 %196
  %198 = vrot.lane.b32.xlu0 %v170, 16
  %v199 = vpop.permute.xlu0 %198
  %vm200 = vcmp.lt.s32.totalorder %v24, 16
  %v201 = vsel %vm200, %v197, %v199
  %v202 = vsel %vm200, %v195, %v197
  %v203 = vsel %vm200, %v193, %v195
  %v204 = vsel %vm200, %v199, %v193
  %v205 = vmul.f32 %v204, %v60
  %v206 = vmul.f32 %v203, %v61
  %v207 = vmul.f32 %v202, %v62
  %v208 = vmul.f32 %v201, %v63
  %s209 = scalar_lea.vmem %s1, 32
  %v210 = vld [vmem:[%s209] sm:$0xff]
  %v211 = vld [vmem:[%s209 + $0x8] sm:$0xff]
  %v212 = vld [vmem:[%s209 + $0x10] sm:$0xff]
  %v213 = vld [vmem:[%s209 + $0x18] sm:$0xff]
  %vm214 = vcmask 64512
  %v216 = vsel %vm214, %v210, 0
  %v219 = vsel %vm214, %v211, 0
  %v222 = vsel %vm214, %v212, 0
  %v225 = vsel %vm214, %v213, 0
  %227 = vmatprep.subr.mxu0 %v206
  %228 = vmatpush1.msra.mxu0 %v205
  %229 = vmatprep.subr.mxu0 0.0
  %230 = vmatpush1.msra.mxu0 0.0
  %231 = vmatprep.subr.mxu0 0.0
  %232 = vmatpush1.msra.mxu0 0.0
  %233 = vmatprep.subr.mxu0 0.0
  %234 = vmatpush1.msra.mxu0 0.0
  %235 = vmatprep.subr.mxu0 0.0
  %236 = vmatpush1.msra.mxu0 0.0
  %237 = vmatprep.subr.mxu0 0.0
  %238 = vmatpush1.msra.mxu0 0.0
  %239 = vmatprep.subr.mxu0 0.0
  %240 = vmatpush1.msra.mxu0 0.0
  %241 = vmatprep.subr.mxu0 0.0
  %242 = vmatpush1.msra.mxu0 0.0
  %243 = vmatprep.subr.mxu0 0.0
  %244 = vmatpush1.msra.mxu0 0.0
  %245 = vmatprep.subr.mxu0 0.0
  %246 = vmatpush1.msra.mxu0 0.0
  %247 = vmatprep.subr.mxu0 0.0
  %248 = vmatpush1.msra.mxu0 0.0
  %249 = vmatprep.subr.mxu0 0.0
  %250 = vmatpush1.msra.mxu0 0.0
  %251 = vmatprep.subr.mxu0 0.0
  %252 = vmatpush1.msra.mxu0 0.0
  %253 = vmatprep.subr.mxu0 0.0
  %254 = vmatpush1.msra.mxu0 0.0
  %255 = vmatprep.subr.mxu0 0.0
  %256 = vmatpush1.msra.mxu0 0.0
  %257 = vmatprep.subr.mxu0 0.0
  %258 = vmatpush1.msra.mxu0 0.0
  %259 = vmatprep.subr.mxu0 0.0
  %260 = vmatpush1.msra.mxu0 0.0
  %261 = vmatprep.subr.mxu0 0.0
  %262 = vmatpush1.msra.mxu0 0.0
  %263 = vmatprep.subr.mxu0 0.0
  %264 = vmatpush1.msra.mxu0 0.0
  %265 = vmatprep.subr.mxu0 0.0
  %266 = vmatpush1.msra.mxu0 0.0
  %267 = vmatprep.subr.mxu0 0.0
  %268 = vmatpush1.msra.mxu0 0.0
  %269 = vmatprep.subr.mxu0 0.0
  %270 = vmatpush1.msra.mxu0 0.0
  %271 = vmatprep.subr.mxu0 0.0
  %272 = vmatpush1.msra.mxu0 0.0
  %273 = vmatprep.subr.mxu0 0.0
  %274 = vmatpush1.msra.mxu0 0.0
  %275 = vmatprep.subr.mxu0 0.0
  %276 = vmatpush1.msra.mxu0 0.0
  %277 = vmatprep.subr.mxu0 0.0
  %278 = vmatpush1.msra.mxu0 0.0
  %279 = vmatprep.subr.mxu0 0.0
  %280 = vmatpush1.msra.mxu0 0.0
  %281 = vmatprep.subr.mxu0 0.0
  %282 = vmatpush1.msra.mxu0 0.0
  %283 = vmatprep.subr.mxu0 0.0
  %284 = vmatpush1.msra.mxu0 0.0
  %285 = vmatprep.subr.mxu0 0.0
  %286 = vmatpush1.msra.mxu0 0.0
  %287 = vmatprep.subr.mxu0 0.0
  %288 = vmatpush1.msra.mxu0 0.0
  %289 = vmatprep.subr.mxu0 0.0
  %290 = vmatpush1.msra.mxu0 0.0
  %291 = vmatprep.mubr.f32.mxu0 0.0
  %292 = vmatmul.mubr.f32.gmra.mrb[0].mxu0 %v216
  %v293 = vpop.f32.mrb[0].mxu0
  %v294 = vadd.f32 0.0, %v293
  %v295 = vpop.f32.mrb[0].mxu0
  %v296 = vadd.f32 0.0, %v295
  %297 = vmatprep.mubr.f32.mxu0 0.0
  %298 = vmatmul.mubr.f32.gmra.mrb[0].mxu0 %v219
  %v299 = vpop.f32.mrb[0].mxu0
  %v300 = vadd.f32 0.0, %v299
  %v301 = vpop.f32.mrb[0].mxu0
  %v302 = vadd.f32 0.0, %v301
  %303 = vmatprep.mubr.f32.mxu0 0.0
  %304 = vmatmul.mubr.f32.gmra.mrb[0].mxu0 %v222
  %v305 = vpop.f32.mrb[0].mxu0
  %v306 = vadd.f32 0.0, %v305
  %v307 = vpop.f32.mrb[0].mxu0
  %v308 = vadd.f32 0.0, %v307
  %309 = vmatprep.mubr.f32.mxu0 0.0
  %310 = vmatmul.mubr.f32.gmra.mrb[0].mxu0 %v225
  %v311 = vpop.f32.mrb[0].mxu0
  %v312 = vadd.f32 0.0, %v311
  %v313 = vpop.f32.mrb[0].mxu0
  %v314 = vadd.f32 0.0, %v313
  %315 = vdwg.mxu0
  %316 = vmatprep.subr.mxu0 %v208
  %317 = vmatpush1.msra.mxu0 %v207
  %318 = vmatprep.subr.mxu0 0.0
  %319 = vmatpush1.msra.mxu0 0.0
  %320 = vmatprep.subr.mxu0 0.0
  %321 = vmatpush1.msra.mxu0 0.0
  %322 = vmatprep.subr.mxu0 0.0
  %323 = vmatpush1.msra.mxu0 0.0
  %324 = vmatprep.subr.mxu0 0.0
  %325 = vmatpush1.msra.mxu0 0.0
  %326 = vmatprep.subr.mxu0 0.0
  %327 = vmatpush1.msra.mxu0 0.0
  %328 = vmatprep.subr.mxu0 0.0
  %329 = vmatpush1.msra.mxu0 0.0
  %330 = vmatprep.subr.mxu0 0.0
  %331 = vmatpush1.msra.mxu0 0.0
  %332 = vmatprep.subr.mxu0 0.0
  %333 = vmatpush1.msra.mxu0 0.0
  %334 = vmatprep.subr.mxu0 0.0
  %335 = vmatpush1.msra.mxu0 0.0
  %336 = vmatprep.subr.mxu0 0.0
  %337 = vmatpush1.msra.mxu0 0.0
  %338 = vmatprep.subr.mxu0 0.0
  %339 = vmatpush1.msra.mxu0 0.0
  %340 = vmatprep.subr.mxu0 0.0
  %341 = vmatpush1.msra.mxu0 0.0
  %342 = vmatprep.subr.mxu0 0.0
  %343 = vmatpush1.msra.mxu0 0.0
  %344 = vmatprep.subr.mxu0 0.0
  %345 = vmatpush1.msra.mxu0 0.0
  %346 = vmatprep.subr.mxu0 0.0
  %347 = vmatpush1.msra.mxu0 0.0
  %348 = vmatprep.subr.mxu0 0.0
  %349 = vmatpush1.msra.mxu0 0.0
  %350 = vmatprep.subr.mxu0 0.0
  %351 = vmatpush1.msra.mxu0 0.0
  %352 = vmatprep.subr.mxu0 0.0
  %353 = vmatpush1.msra.mxu0 0.0
  %354 = vmatprep.subr.mxu0 0.0
  %355 = vmatpush1.msra.mxu0 0.0
  %356 = vmatprep.subr.mxu0 0.0
  %357 = vmatpush1.msra.mxu0 0.0
  %358 = vmatprep.subr.mxu0 0.0
  %359 = vmatpush1.msra.mxu0 0.0
  %360 = vmatprep.subr.mxu0 0.0
  %361 = vmatpush1.msra.mxu0 0.0
  %362 = vmatprep.subr.mxu0 0.0
  %363 = vmatpush1.msra.mxu0 0.0
  %364 = vmatprep.subr.mxu0 0.0
  %365 = vmatpush1.msra.mxu0 0.0
  %366 = vmatprep.subr.mxu0 0.0
  %367 = vmatpush1.msra.mxu0 0.0
  %368 = vmatprep.subr.mxu0 0.0
  %369 = vmatpush1.msra.mxu0 0.0
  %370 = vmatprep.subr.mxu0 0.0
  %371 = vmatpush1.msra.mxu0 0.0
  %372 = vmatprep.subr.mxu0 0.0
  %373 = vmatpush1.msra.mxu0 0.0
  %374 = vmatprep.subr.mxu0 0.0
  %375 = vmatpush1.msra.mxu0 0.0
  %376 = vmatprep.subr.mxu0 0.0
  %377 = vmatpush1.msra.mxu0 0.0
  %378 = vmatprep.subr.mxu0 0.0
  %379 = vmatpush1.msra.mxu0 0.0
  %380 = vmatprep.mubr.f32.mxu0 0.0
  %381 = vmatmul.mubr.f32.gmra.mrb[0].mxu0 %v216
  %v382 = vpop.f32.mrb[0].mxu0
  %v383 = vadd.f32 0.0, %v382
  %v384 = vpop.f32.mrb[0].mxu0
  %v385 = vadd.f32 0.0, %v384
  %386 = vmatprep.mubr.f32.mxu0 0.0
  %387 = vmatmul.mubr.f32.gmra.mrb[0].mxu0 %v219
  %v388 = vpop.f32.mrb[0].mxu0
  %v389 = vadd.f32 0.0, %v388
  %v390 = vpop.f32.mrb[0].mxu0
  %v391 = vadd.f32 0.0, %v390
  %392 = vmatprep.mubr.f32.mxu0 0.0
  %393 = vmatmul.mubr.f32.gmra.mrb[0].mxu0 %v222
  %v394 = vpop.f32.mrb[0].mxu0
  %v395 = vadd.f32 0.0, %v394
  %v396 = vpop.f32.mrb[0].mxu0
  %v397 = vadd.f32 0.0, %v396
  %398 = vmatprep.mubr.f32.mxu0 0.0
  %399 = vmatmul.mubr.f32.gmra.mrb[0].mxu0 %v225
  %v400 = vpop.f32.mrb[0].mxu0
  %v401 = vadd.f32 0.0, %v400
  %v402 = vpop.f32.mrb[0].mxu0
  %v403 = vadd.f32 0.0, %v402
  %404 = vdwg.mxu0
  %v406 = vsel %vm214, %v188, 0
  %v409 = vsel %vm214, %v189, 0
  %v412 = vsel %vm214, %v190, 0
  %v415 = vsel %vm214, %v191, 0
  %417 = vmatprep.subr.mxu0 %v185
  %418 = vmatpush1.msra.mxu0 %v184
  %419 = vmatprep.subr.mxu0 0.0
  %420 = vmatpush1.msra.mxu0 0.0
  %421 = vmatprep.subr.mxu0 0.0
  %422 = vmatpush1.msra.mxu0 0.0
  %423 = vmatprep.subr.mxu0 0.0
  %424 = vmatpush1.msra.mxu0 0.0
  %425 = vmatprep.subr.mxu0 0.0
  %426 = vmatpush1.msra.mxu0 0.0
  %427 = vmatprep.subr.mxu0 0.0
  %428 = vmatpush1.msra.mxu0 0.0
  %429 = vmatprep.subr.mxu0 0.0
  %430 = vmatpush1.msra.mxu0 0.0
  %431 = vmatprep.subr.mxu0 0.0
  %432 = vmatpush1.msra.mxu0 0.0
  %433 = vmatprep.subr.mxu0 0.0
  %434 = vmatpush1.msra.mxu0 0.0
  %435 = vmatprep.subr.mxu0 0.0
  %436 = vmatpush1.msra.mxu0 0.0
  %437 = vmatprep.subr.mxu0 0.0
  %438 = vmatpush1.msra.mxu0 0.0
  %439 = vmatprep.subr.mxu0 0.0
  %440 = vmatpush1.msra.mxu0 0.0
  %441 = vmatprep.subr.mxu0 0.0
  %442 = vmatpush1.msra.mxu0 0.0
  %443 = vmatprep.subr.mxu0 0.0
  %444 = vmatpush1.msra.mxu0 0.0
  %445 = vmatprep.subr.mxu0 0.0
  %446 = vmatpush1.msra.mxu0 0.0
  %447 = vmatprep.subr.mxu0 0.0
  %448 = vmatpush1.msra.mxu0 0.0
  %449 = vmatprep.subr.mxu0 0.0
  %450 = vmatpush1.msra.mxu0 0.0
  %451 = vmatprep.subr.mxu0 0.0
  %452 = vmatpush1.msra.mxu0 0.0
  %453 = vmatprep.subr.mxu0 0.0
  %454 = vmatpush1.msra.mxu0 0.0
  %455 = vmatprep.subr.mxu0 0.0
  %456 = vmatpush1.msra.mxu0 0.0
  %457 = vmatprep.subr.mxu0 0.0
  %458 = vmatpush1.msra.mxu0 0.0
  %459 = vmatprep.subr.mxu0 0.0
  %460 = vmatpush1.msra.mxu0 0.0
  %461 = vmatprep.subr.mxu0 0.0
  %462 = vmatpush1.msra.mxu0 0.0
  %463 = vmatprep.subr.mxu0 0.0
  %464 = vmatpush1.msra.mxu0 0.0
  %465 = vmatprep.subr.mxu0 0.0
  %466 = vmatpush1.msra.mxu0 0.0
  %467 = vmatprep.subr.mxu0 0.0
  %468 = vmatpush1.msra.mxu0 0.0
  %469 = vmatprep.subr.mxu0 0.0
  %470 = vmatpush1.msra.mxu0 0.0
  %471 = vmatprep.subr.mxu0 0.0
  %472 = vmatpush1.msra.mxu0 0.0
  %473 = vmatprep.subr.mxu0 0.0
  %474 = vmatpush1.msra.mxu0 0.0
  %475 = vmatprep.subr.mxu0 0.0
  %476 = vmatpush1.msra.mxu0 0.0
  %477 = vmatprep.subr.mxu0 0.0
  %478 = vmatpush1.msra.mxu0 0.0
  %479 = vmatprep.subr.mxu0 0.0
  %480 = vmatpush1.msra.mxu0 0.0
  %481 = vmatprep.mubr.f32.mxu0 0.0
  %482 = vmatmul.mubr.f32.gmra.mrb[0].mxu0 %v406
  %v483 = vpop.f32.mrb[0].mxu0
  %v484 = vadd.f32 %v294, %v483
  %v485 = vpop.f32.mrb[0].mxu0
  %v486 = vadd.f32 %v296, %v485
  %487 = vmatprep.mubr.f32.mxu0 0.0
  %488 = vmatmul.mubr.f32.gmra.mrb[0].mxu0 %v409
  %v489 = vpop.f32.mrb[0].mxu0
  %v490 = vadd.f32 %v300, %v489
  %v491 = vpop.f32.mrb[0].mxu0
  %v492 = vadd.f32 %v302, %v491
  %493 = vmatprep.mubr.f32.mxu0 0.0
  %494 = vmatmul.mubr.f32.gmra.mrb[0].mxu0 %v412
  %v495 = vpop.f32.mrb[0].mxu0
  %v496 = vadd.f32 %v306, %v495
  %v497 = vpop.f32.mrb[0].mxu0
  %v498 = vadd.f32 %v308, %v497
  %499 = vmatprep.mubr.f32.mxu0 0.0
  %500 = vmatmul.mubr.f32.gmra.mrb[0].mxu0 %v415
  %v501 = vpop.f32.mrb[0].mxu0
  %v502 = vadd.f32 %v312, %v501
  %v503 = vpop.f32.mrb[0].mxu0
  %v504 = vadd.f32 %v314, %v503
  %505 = vdwg.mxu0
  %506 = vmatprep.subr.mxu0 %v187
  %507 = vmatpush1.msra.mxu0 %v186
  %508 = vmatprep.subr.mxu0 0.0
  %509 = vmatpush1.msra.mxu0 0.0
  %510 = vmatprep.subr.mxu0 0.0
  %511 = vmatpush1.msra.mxu0 0.0
  %512 = vmatprep.subr.mxu0 0.0
  %513 = vmatpush1.msra.mxu0 0.0
  %514 = vmatprep.subr.mxu0 0.0
  %515 = vmatpush1.msra.mxu0 0.0
  %516 = vmatprep.subr.mxu0 0.0
  %517 = vmatpush1.msra.mxu0 0.0
  %518 = vmatprep.subr.mxu0 0.0
  %519 = vmatpush1.msra.mxu0 0.0
  %520 = vmatprep.subr.mxu0 0.0
  %521 = vmatpush1.msra.mxu0 0.0
  %522 = vmatprep.subr.mxu0 0.0
  %523 = vmatpush1.msra.mxu0 0.0
  %524 = vmatprep.subr.mxu0 0.0
  %525 = vmatpush1.msra.mxu0 0.0
  %526 = vmatprep.subr.mxu0 0.0
  %527 = vmatpush1.msra.mxu0 0.0
  %528 = vmatprep.subr.mxu0 0.0
  %529 = vmatpush1.msra.mxu0 0.0
  %530 = vmatprep.subr.mxu0 0.0
  %531 = vmatpush1.msra.mxu0 0.0
  %532 = vmatprep.subr.mxu0 0.0
  %533 = vmatpush1.msra.mxu0 0.0
  %534 = vmatprep.subr.mxu0 0.0
  %535 = vmatpush1.msra.mxu0 0.0
  %536 = vmatprep.subr.mxu0 0.0
  %537 = vmatpush1.msra.mxu0 0.0
  %538 = vmatprep.subr.mxu0 0.0
  %539 = vmatpush1.msra.mxu0 0.0
  %540 = vmatprep.subr.mxu0 0.0
  %541 = vmatpush1.msra.mxu0 0.0
  %542 = vmatprep.subr.mxu0 0.0
  %543 = vmatpush1.msra.mxu0 0.0
  %544 = vmatprep.subr.mxu0 0.0
  %545 = vmatpush1.msra.mxu0 0.0
  %546 = vmatprep.subr.mxu0 0.0
  %547 = vmatpush1.msra.mxu0 0.0
  %548 = vmatprep.subr.mxu0 0.0
  %549 = vmatpush1.msra.mxu0 0.0
  %550 = vmatprep.subr.mxu0 0.0
  %551 = vmatpush1.msra.mxu0 0.0
  %552 = vmatprep.subr.mxu0 0.0
  %553 = vmatpush1.msra.mxu0 0.0
  %554 = vmatprep.subr.mxu0 0.0
  %555 = vmatpush1.msra.mxu0 0.0
  %556 = vmatprep.subr.mxu0 0.0
  %557 = vmatpush1.msra.mxu0 0.0
  %558 = vmatprep.subr.mxu0 0.0
  %559 = vmatpush1.msra.mxu0 0.0
  %560 = vmatprep.subr.mxu0 0.0
  %561 = vmatpush1.msra.mxu0 0.0
  %562 = vmatprep.subr.mxu0 0.0
  %563 = vmatpush1.msra.mxu0 0.0
  %564 = vmatprep.subr.mxu0 0.0
  %565 = vmatpush1.msra.mxu0 0.0
  %566 = vmatprep.subr.mxu0 0.0
  %567 = vmatpush1.msra.mxu0 0.0
  %568 = vmatprep.subr.mxu0 0.0
  %569 = vmatpush1.msra.mxu0 0.0
  %570 = vmatprep.mubr.f32.mxu0 0.0
  %571 = vmatmul.mubr.f32.gmra.mrb[0].mxu0 %v406
  %v572 = vpop.f32.mrb[0].mxu0
  %v573 = vadd.f32 %v383, %v572
  %v574 = vpop.f32.mrb[0].mxu0
  %v575 = vadd.f32 %v385, %v574
  %576 = vmatprep.mubr.f32.mxu0 0.0
  %577 = vmatmul.mubr.f32.gmra.mrb[0].mxu0 %v409
  %v578 = vpop.f32.mrb[0].mxu0
  %v579 = vadd.f32 %v389, %v578
  %v580 = vpop.f32.mrb[0].mxu0
  %v581 = vadd.f32 %v391, %v580
  %582 = vmatprep.mubr.f32.mxu0 0.0
  %583 = vmatmul.mubr.f32.gmra.mrb[0].mxu0 %v412
  %v584 = vpop.f32.mrb[0].mxu0
  %v585 = vadd.f32 %v395, %v584
  %v586 = vpop.f32.mrb[0].mxu0
  %v587 = vadd.f32 %v397, %v586
  %588 = vmatprep.mubr.f32.mxu0 0.0
  %589 = vmatmul.mubr.f32.gmra.mrb[0].mxu0 %v415
  %v590 = vpop.f32.mrb[0].mxu0
  %v591 = vadd.f32 %v401, %v590
  %v592 = vpop.f32.mrb[0].mxu0
  %v593 = vadd.f32 %v403, %v592
  %594 = vdwg.mxu0
  %595 = vrot.lane.b32.xlu0 %v167, 15
  %v596 = vpop.permute.xlu0 %595
  %597 = vrot.lane.b32.xlu0 %v168, 15
  %v598 = vpop.permute.xlu0 %597
  %599 = vrot.lane.b32.xlu0 %v169, 15
  %v600 = vpop.permute.xlu0 %599
  %601 = vrot.lane.b32.xlu0 %v170, 15
  %v602 = vpop.permute.xlu0 %601
  %vm603 = vcmp.lt.s32.totalorder %v24, 15
  %v604 = vsel %vm603, %v600, %v602
  %v605 = vsel %vm603, %v598, %v600
  %v606 = vsel %vm603, %v596, %v598
  %v607 = vsel %vm603, %v602, %v596
  %v608 = vmul.f32 %v607, %v140
  %v609 = vmul.f32 %v606, %v141
  %v610 = vmul.f32 %v605, %v142
  %v611 = vmul.f32 %v604, %v143
  %s612 = scalar_lea.vmem %s1, 64
  %v613 = vld [vmem:[%s612] sm:$0xff]
  %v614 = vld [vmem:[%s612 + $0x8] sm:$0xff]
  %v615 = vld [vmem:[%s612 + $0x10] sm:$0xff]
  %v616 = vld [vmem:[%s612 + $0x18] sm:$0xff]
  %v618 = vsel %vm214, %v613, 0
  %v621 = vsel %vm214, %v614, 0
  %v624 = vsel %vm214, %v615, 0
  %v627 = vsel %vm214, %v616, 0
  %629 = vmatprep.subr.mxu0 %v609
  %630 = vmatpush1.msra.mxu0 %v608
  %631 = vmatprep.subr.mxu0 0.0
  %632 = vmatpush1.msra.mxu0 0.0
  %633 = vmatprep.subr.mxu0 0.0
  %634 = vmatpush1.msra.mxu0 0.0
  %635 = vmatprep.subr.mxu0 0.0
  %636 = vmatpush1.msra.mxu0 0.0
  %637 = vmatprep.subr.mxu0 0.0
  %638 = vmatpush1.msra.mxu0 0.0
  %639 = vmatprep.subr.mxu0 0.0
  %640 = vmatpush1.msra.mxu0 0.0
  %641 = vmatprep.subr.mxu0 0.0
  %642 = vmatpush1.msra.mxu0 0.0
  %643 = vmatprep.subr.mxu0 0.0
  %644 = vmatpush1.msra.mxu0 0.0
  %645 = vmatprep.subr.mxu0 0.0
  %646 = vmatpush1.msra.mxu0 0.0
  %647 = vmatprep.subr.mxu0 0.0
  %648 = vmatpush1.msra.mxu0 0.0
  %649 = vmatprep.subr.mxu0 0.0
  %650 = vmatpush1.msra.mxu0 0.0
  %651 = vmatprep.subr.mxu0 0.0
  %652 = vmatpush1.msra.mxu0 0.0
  %653 = vmatprep.subr.mxu0 0.0
  %654 = vmatpush1.msra.mxu0 0.0
  %655 = vmatprep.subr.mxu0 0.0
  %656 = vmatpush1.msra.mxu0 0.0
  %657 = vmatprep.subr.mxu0 0.0
  %658 = vmatpush1.msra.mxu0 0.0
  %659 = vmatprep.subr.mxu0 0.0
  %660 = vmatpush1.msra.mxu0 0.0
  %661 = vmatprep.subr.mxu0 0.0
  %662 = vmatpush1.msra.mxu0 0.0
  %663 = vmatprep.subr.mxu0 0.0
  %664 = vmatpush1.msra.mxu0 0.0
  %665 = vmatprep.subr.mxu0 0.0
  %666 = vmatpush1.msra.mxu0 0.0
  %667 = vmatprep.subr.mxu0 0.0
  %668 = vmatpush1.msra.mxu0 0.0
  %669 = vmatprep.subr.mxu0 0.0
  %670 = vmatpush1.msra.mxu0 0.0
  %671 = vmatprep.subr.mxu0 0.0
  %672 = vmatpush1.msra.mxu0 0.0
  %673 = vmatprep.subr.mxu0 0.0
  %674 = vmatpush1.msra.mxu0 0.0
  %675 = vmatprep.subr.mxu0 0.0
  %676 = vmatpush1.msra.mxu0 0.0
  %677 = vmatprep.subr.mxu0 0.0
  %678 = vmatpush1.msra.mxu0 0.0
  %679 = vmatprep.subr.mxu0 0.0
  %680 = vmatpush1.msra.mxu0 0.0
  %681 = vmatprep.subr.mxu0 0.0
  %682 = vmatpush1.msra.mxu0 0.0
  %683 = vmatprep.subr.mxu0 0.0
  %684 = vmatpush1.msra.mxu0 0.0
  %685 = vmatprep.subr.mxu0 0.0
  %686 = vmatpush1.msra.mxu0 0.0
  %687 = vmatprep.subr.mxu0 0.0
  %688 = vmatpush1.msra.mxu0 0.0
  %689 = vmatprep.subr.mxu0 0.0
  %690 = vmatpush1.msra.mxu0 0.0
  %691 = vmatprep.subr.mxu0 0.0
  %692 = vmatpush1.msra.mxu0 0.0
  %693 = vmatprep.mubr.f32.mxu0 0.0
  %694 = vmatmul.mubr.f32.gmra.mrb[0].mxu0 %v618
  %v695 = vpop.f32.mrb[0].mxu0
  %v696 = vadd.f32 0.0, %v695
  %v697 = vpop.f32.mrb[0].mxu0
  %v698 = vadd.f32 0.0, %v697
  %699 = vmatprep.mubr.f32.mxu0 0.0
  %700 = vmatmul.mubr.f32.gmra.mrb[0].mxu0 %v621
  %v701 = vpop.f32.mrb[0].mxu0
  %v702 = vadd.f32 0.0, %v701
  %v703 = vpop.f32.mrb[0].mxu0
  %v704 = vadd.f32 0.0, %v703
  %705 = vmatprep.mubr.f32.mxu0 0.0
  %706 = vmatmul.mubr.f32.gmra.mrb[0].mxu0 %v624
  %v707 = vpop.f32.mrb[0].mxu0
  %v708 = vadd.f32 0.0, %v707
  %v709 = vpop.f32.mrb[0].mxu0
  %v710 = vadd.f32 0.0, %v709
  %711 = vmatprep.mubr.f32.mxu0 0.0
  %712 = vmatmul.mubr.f32.gmra.mrb[0].mxu0 %v627
  %v713 = vpop.f32.mrb[0].mxu0
  %v714 = vadd.f32 0.0, %v713
  %v715 = vpop.f32.mrb[0].mxu0
  %v716 = vadd.f32 0.0, %v715
  %717 = vdwg.mxu0
  %718 = vmatprep.subr.mxu0 %v611
  %719 = vmatpush1.msra.mxu0 %v610
  %720 = vmatprep.subr.mxu0 0.0
  %721 = vmatpush1.msra.mxu0 0.0
  %722 = vmatprep.subr.mxu0 0.0
  %723 = vmatpush1.msra.mxu0 0.0
  %724 = vmatprep.subr.mxu0 0.0
  %725 = vmatpush1.msra.mxu0 0.0
  %726 = vmatprep.subr.mxu0 0.0
  %727 = vmatpush1.msra.mxu0 0.0
  %728 = vmatprep.subr.mxu0 0.0
  %729 = vmatpush1.msra.mxu0 0.0
  %730 = vmatprep.subr.mxu0 0.0
  %731 = vmatpush1.msra.mxu0 0.0
  %732 = vmatprep.subr.mxu0 0.0
  %733 = vmatpush1.msra.mxu0 0.0
  %734 = vmatprep.subr.mxu0 0.0
  %735 = vmatpush1.msra.mxu0 0.0
  %736 = vmatprep.subr.mxu0 0.0
  %737 = vmatpush1.msra.mxu0 0.0
  %738 = vmatprep.subr.mxu0 0.0
  %739 = vmatpush1.msra.mxu0 0.0
  %740 = vmatprep.subr.mxu0 0.0
  %741 = vmatpush1.msra.mxu0 0.0
  %742 = vmatprep.subr.mxu0 0.0
  %743 = vmatpush1.msra.mxu0 0.0
  %744 = vmatprep.subr.mxu0 0.0
  %745 = vmatpush1.msra.mxu0 0.0
  %746 = vmatprep.subr.mxu0 0.0
  %747 = vmatpush1.msra.mxu0 0.0
  %748 = vmatprep.subr.mxu0 0.0
  %749 = vmatpush1.msra.mxu0 0.0
  %750 = vmatprep.subr.mxu0 0.0
  %751 = vmatpush1.msra.mxu0 0.0
  %752 = vmatprep.subr.mxu0 0.0
  %753 = vmatpush1.msra.mxu0 0.0
  %754 = vmatprep.subr.mxu0 0.0
  %755 = vmatpush1.msra.mxu0 0.0
  %756 = vmatprep.subr.mxu0 0.0
  %757 = vmatpush1.msra.mxu0 0.0
  %758 = vmatprep.subr.mxu0 0.0
  %759 = vmatpush1.msra.mxu0 0.0
  %760 = vmatprep.subr.mxu0 0.0
  %761 = vmatpush1.msra.mxu0 0.0
  %762 = vmatprep.subr.mxu0 0.0
  %763 = vmatpush1.msra.mxu0 0.0
  %764 = vmatprep.subr.mxu0 0.0
  %765 = vmatpush1.msra.mxu0 0.0
  %766 = vmatprep.subr.mxu0 0.0
  %767 = vmatpush1.msra.mxu0 0.0
  %768 = vmatprep.subr.mxu0 0.0
  %769 = vmatpush1.msra.mxu0 0.0
  %770 = vmatprep.subr.mxu0 0.0
  %771 = vmatpush1.msra.mxu0 0.0
  %772 = vmatprep.subr.mxu0 0.0
  %773 = vmatpush1.msra.mxu0 0.0
  %774 = vmatprep.subr.mxu0 0.0
  %775 = vmatpush1.msra.mxu0 0.0
  %776 = vmatprep.subr.mxu0 0.0
  %777 = vmatpush1.msra.mxu0 0.0
  %778 = vmatprep.subr.mxu0 0.0
  %779 = vmatpush1.msra.mxu0 0.0
  %780 = vmatprep.subr.mxu0 0.0
  %781 = vmatpush1.msra.mxu0 0.0
  %782 = vmatprep.mubr.f32.mxu0 0.0
  %783 = vmatmul.mubr.f32.gmra.mrb[0].mxu0 %v618
  %v784 = vpop.f32.mrb[0].mxu0
  %v785 = vadd.f32 0.0, %v784
  %v786 = vpop.f32.mrb[0].mxu0
  %v787 = vadd.f32 0.0, %v786
  %788 = vmatprep.mubr.f32.mxu0 0.0
  %789 = vmatmul.mubr.f32.gmra.mrb[0].mxu0 %v621
  %v790 = vpop.f32.mrb[0].mxu0
  %v791 = vadd.f32 0.0, %v790
  %v792 = vpop.f32.mrb[0].mxu0
  %v793 = vadd.f32 0.0, %v792
  %794 = vmatprep.mubr.f32.mxu0 0.0
  %795 = vmatmul.mubr.f32.gmra.mrb[0].mxu0 %v624
  %v796 = vpop.f32.mrb[0].mxu0
  %v797 = vadd.f32 0.0, %v796
  %v798 = vpop.f32.mrb[0].mxu0
  %v799 = vadd.f32 0.0, %v798
  %800 = vmatprep.mubr.f32.mxu0 0.0
  %801 = vmatmul.mubr.f32.gmra.mrb[0].mxu0 %v627
  %v802 = vpop.f32.mrb[0].mxu0
  %v803 = vadd.f32 0.0, %v802
  %v804 = vpop.f32.mrb[0].mxu0
  %v805 = vadd.f32 0.0, %v804
  %806 = vdwg.mxu0
  %v807 = vadd.f32 %v484, %v696
  %v808 = vadd.f32 %v486, %v698
  %v809 = vadd.f32 %v573, %v785
  %v810 = vadd.f32 %v575, %v787
  %v811 = vadd.f32 %v490, %v702
  %v812 = vadd.f32 %v492, %v704
  %v813 = vadd.f32 %v579, %v791
  %v814 = vadd.f32 %v581, %v793
  %v815 = vadd.f32 %v496, %v708
  %v816 = vadd.f32 %v498, %v710
  %v817 = vadd.f32 %v585, %v797
  %v818 = vadd.f32 %v587, %v799
  %v819 = vadd.f32 %v502, %v714
  %v820 = vadd.f32 %v504, %v716
  %v821 = vadd.f32 %v591, %v803
  %v822 = vadd.f32 %v593, %v805
  %823 = vrot.lane.b32.xlu0 %v167, 1
  %v824 = vpop.permute.xlu0 %823
  %825 = vrot.lane.b32.xlu0 %v168, 1
  %v826 = vpop.permute.xlu0 %825
  %827 = vrot.lane.b32.xlu0 %v169, 1
  %v828 = vpop.permute.xlu0 %827
  %829 = vrot.lane.b32.xlu0 %v170, 1
  %v830 = vpop.permute.xlu0 %829
  %vm831 = vcmp.lt.s32.totalorder %v24, 1
  %v832 = vsel %vm831, %v828, %v830
  %v833 = vsel %vm831, %v826, %v828
  %v834 = vsel %vm831, %v824, %v826
  %v835 = vsel %vm831, %v830, %v824
  %v836 = vmul.f32 %v835, %v108
  %v837 = vmul.f32 %v834, %v109
  %v838 = vmul.f32 %v833, %v110
  %v839 = vmul.f32 %v832, %v111
  %s840 = scalar_lea.vmem %s1, 96
  %v841 = vld [vmem:[%s840] sm:$0xff]
  %v842 = vld [vmem:[%s840 + $0x8] sm:$0xff]
  %v843 = vld [vmem:[%s840 + $0x10] sm:$0xff]
  %v844 = vld [vmem:[%s840 + $0x18] sm:$0xff]
  %v846 = vsel %vm214, %v841, 0
  %v849 = vsel %vm214, %v842, 0
  %v852 = vsel %vm214, %v843, 0
  %v855 = vsel %vm214, %v844, 0
  %857 = vmatprep.subr.mxu0 %v837
  %858 = vmatpush1.msra.mxu0 %v836
  %859 = vmatprep.subr.mxu0 0.0
  %860 = vmatpush1.msra.mxu0 0.0
  %861 = vmatprep.subr.mxu0 0.0
  %862 = vmatpush1.msra.mxu0 0.0
  %863 = vmatprep.subr.mxu0 0.0
  %864 = vmatpush1.msra.mxu0 0.0
  %865 = vmatprep.subr.mxu0 0.0
  %866 = vmatpush1.msra.mxu0 0.0
  %867 = vmatprep.subr.mxu0 0.0
  %868 = vmatpush1.msra.mxu0 0.0
  %869 = vmatprep.subr.mxu0 0.0
  %870 = vmatpush1.msra.mxu0 0.0
  %871 = vmatprep.subr.mxu0 0.0
  %872 = vmatpush1.msra.mxu0 0.0
  %873 = vmatprep.subr.mxu0 0.0
  %874 = vmatpush1.msra.mxu0 0.0
  %875 = vmatprep.subr.mxu0 0.0
  %876 = vmatpush1.msra.mxu0 0.0
  %877 = vmatprep.subr.mxu0 0.0
  %878 = vmatpush1.msra.mxu0 0.0
  %879 = vmatprep.subr.mxu0 0.0
  %880 = vmatpush1.msra.mxu0 0.0
  %881 = vmatprep.subr.mxu0 0.0
  %882 = vmatpush1.msra.mxu0 0.0
  %883 = vmatprep.subr.mxu0 0.0
  %884 = vmatpush1.msra.mxu0 0.0
  %885 = vmatprep.subr.mxu0 0.0
  %886 = vmatpush1.msra.mxu0 0.0
  %887 = vmatprep.subr.mxu0 0.0
  %888 = vmatpush1.msra.mxu0 0.0
  %889 = vmatprep.subr.mxu0 0.0
  %890 = vmatpush1.msra.mxu0 0.0
  %891 = vmatprep.subr.mxu0 0.0
  %892 = vmatpush1.msra.mxu0 0.0
  %893 = vmatprep.subr.mxu0 0.0
  %894 = vmatpush1.msra.mxu0 0.0
  %895 = vmatprep.subr.mxu0 0.0
  %896 = vmatpush1.msra.mxu0 0.0
  %897 = vmatprep.subr.mxu0 0.0
  %898 = vmatpush1.msra.mxu0 0.0
  %899 = vmatprep.subr.mxu0 0.0
  %900 = vmatpush1.msra.mxu0 0.0
  %901 = vmatprep.subr.mxu0 0.0
  %902 = vmatpush1.msra.mxu0 0.0
  %903 = vmatprep.subr.mxu0 0.0
  %904 = vmatpush1.msra.mxu0 0.0
  %905 = vmatprep.subr.mxu0 0.0
  %906 = vmatpush1.msra.mxu0 0.0
  %907 = vmatprep.subr.mxu0 0.0
  %908 = vmatpush1.msra.mxu0 0.0
  %909 = vmatprep.subr.mxu0 0.0
  %910 = vmatpush1.msra.mxu0 0.0
  %911 = vmatprep.subr.mxu0 0.0
  %912 = vmatpush1.msra.mxu0 0.0
  %913 = vmatprep.subr.mxu0 0.0
  %914 = vmatpush1.msra.mxu0 0.0
  %915 = vmatprep.subr.mxu0 0.0
  %916 = vmatpush1.msra.mxu0 0.0
  %917 = vmatprep.subr.mxu0 0.0
  %918 = vmatpush1.msra.mxu0 0.0
  %919 = vmatprep.subr.mxu0 0.0
  %920 = vmatpush1.msra.mxu0 0.0
  %921 = vmatprep.mubr.f32.mxu0 0.0
  %922 = vmatmul.mubr.f32.gmra.mrb[0].mxu0 %v846
  %v923 = vpop.f32.mrb[0].mxu0
  %v924 = vadd.f32 0.0, %v923
  %v925 = vpop.f32.mrb[0].mxu0
  %v926 = vadd.f32 0.0, %v925
  %927 = vmatprep.mubr.f32.mxu0 0.0
  %928 = vmatmul.mubr.f32.gmra.mrb[0].mxu0 %v849
  %v929 = vpop.f32.mrb[0].mxu0
  %v930 = vadd.f32 0.0, %v929
  %v931 = vpop.f32.mrb[0].mxu0
  %v932 = vadd.f32 0.0, %v931
  %933 = vmatprep.mubr.f32.mxu0 0.0
  %934 = vmatmul.mubr.f32.gmra.mrb[0].mxu0 %v852
  %v935 = vpop.f32.mrb[0].mxu0
  %v936 = vadd.f32 0.0, %v935
  %v937 = vpop.f32.mrb[0].mxu0
  %v938 = vadd.f32 0.0, %v937
  %939 = vmatprep.mubr.f32.mxu0 0.0
  %940 = vmatmul.mubr.f32.gmra.mrb[0].mxu0 %v855
  %v941 = vpop.f32.mrb[0].mxu0
  %v942 = vadd.f32 0.0, %v941
  %v943 = vpop.f32.mrb[0].mxu0
  %v944 = vadd.f32 0.0, %v943
  %945 = vdwg.mxu0
  %946 = vmatprep.subr.mxu0 %v839
  %947 = vmatpush1.msra.mxu0 %v838
  %948 = vmatprep.subr.mxu0 0.0
  %949 = vmatpush1.msra.mxu0 0.0
  %950 = vmatprep.subr.mxu0 0.0
  %951 = vmatpush1.msra.mxu0 0.0
  %952 = vmatprep.subr.mxu0 0.0
  %953 = vmatpush1.msra.mxu0 0.0
  %954 = vmatprep.subr.mxu0 0.0
  %955 = vmatpush1.msra.mxu0 0.0
  %956 = vmatprep.subr.mxu0 0.0
  %957 = vmatpush1.msra.mxu0 0.0
  %958 = vmatprep.subr.mxu0 0.0
  %959 = vmatpush1.msra.mxu0 0.0
  %960 = vmatprep.subr.mxu0 0.0
  %961 = vmatpush1.msra.mxu0 0.0
  %962 = vmatprep.subr.mxu0 0.0
  %963 = vmatpush1.msra.mxu0 0.0
  %964 = vmatprep.subr.mxu0 0.0
  %965 = vmatpush1.msra.mxu0 0.0
  %966 = vmatprep.subr.mxu0 0.0
  %967 = vmatpush1.msra.mxu0 0.0
  %968 = vmatprep.subr.mxu0 0.0
  %969 = vmatpush1.msra.mxu0 0.0
  %970 = vmatprep.subr.mxu0 0.0
  %971 = vmatpush1.msra.mxu0 0.0
  %972 = vmatprep.subr.mxu0 0.0
  %973 = vmatpush1.msra.mxu0 0.0
  %974 = vmatprep.subr.mxu0 0.0
  %975 = vmatpush1.msra.mxu0 0.0
  %976 = vmatprep.subr.mxu0 0.0
  %977 = vmatpush1.msra.mxu0 0.0
  %978 = vmatprep.subr.mxu0 0.0
  %979 = vmatpush1.msra.mxu0 0.0
  %980 = vmatprep.subr.mxu0 0.0
  %981 = vmatpush1.msra.mxu0 0.0
  %982 = vmatprep.subr.mxu0 0.0
  %983 = vmatpush1.msra.mxu0 0.0
  %984 = vmatprep.subr.mxu0 0.0
  %985 = vmatpush1.msra.mxu0 0.0
  %986 = vmatprep.subr.mxu0 0.0
  %987 = vmatpush1.msra.mxu0 0.0
  %988 = vmatprep.subr.mxu0 0.0
  %989 = vmatpush1.msra.mxu0 0.0
  %990 = vmatprep.subr.mxu0 0.0
  %991 = vmatpush1.msra.mxu0 0.0
  %992 = vmatprep.subr.mxu0 0.0
  %993 = vmatpush1.msra.mxu0 0.0
  %994 = vmatprep.subr.mxu0 0.0
  %995 = vmatpush1.msra.mxu0 0.0
  %996 = vmatprep.subr.mxu0 0.0
  %997 = vmatpush1.msra.mxu0 0.0
  %998 = vmatprep.subr.mxu0 0.0
  %999 = vmatpush1.msra.mxu0 0.0
  %1000 = vmatprep.subr.mxu0 0.0
  %1001 = vmatpush1.msra.mxu0 0.0
  %1002 = vmatprep.subr.mxu0 0.0
  %1003 = vmatpush1.msra.mxu0 0.0
  %1004 = vmatprep.subr.mxu0 0.0
  %1005 = vmatpush1.msra.mxu0 0.0
  %1006 = vmatprep.subr.mxu0 0.0
  %1007 = vmatpush1.msra.mxu0 0.0
  %1008 = vmatprep.subr.mxu0 0.0
  %1009 = vmatpush1.msra.mxu0 0.0
  %1010 = vmatprep.mubr.f32.mxu0 0.0
  %1011 = vmatmul.mubr.f32.gmra.mrb[0].mxu0 %v846
  %v1012 = vpop.f32.mrb[0].mxu0
  %v1013 = vadd.f32 0.0, %v1012
  %v1014 = vpop.f32.mrb[0].mxu0
  %v1015 = vadd.f32 0.0, %v1014
  %1016 = vmatprep.mubr.f32.mxu0 0.0
  %1017 = vmatmul.mubr.f32.gmra.mrb[0].mxu0 %v849
  %v1018 = vpop.f32.mrb[0].mxu0
  %v1019 = vadd.f32 0.0, %v1018
  %v1020 = vpop.f32.mrb[0].mxu0
  %v1021 = vadd.f32 0.0, %v1020
  %1022 = vmatprep.mubr.f32.mxu0 0.0
  %1023 = vmatmul.mubr.f32.gmra.mrb[0].mxu0 %v852
  %v1024 = vpop.f32.mrb[0].mxu0
  %v1025 = vadd.f32 0.0, %v1024
  %v1026 = vpop.f32.mrb[0].mxu0
  %v1027 = vadd.f32 0.0, %v1026
  %1028 = vmatprep.mubr.f32.mxu0 0.0
  %1029 = vmatmul.mubr.f32.gmra.mrb[0].mxu0 %v855
  %v1030 = vpop.f32.mrb[0].mxu0
  %v1031 = vadd.f32 0.0, %v1030
  %v1032 = vpop.f32.mrb[0].mxu0
  %v1033 = vadd.f32 0.0, %v1032
  %1034 = vdwg.mxu0
  %v1035 = vadd.f32 %v807, %v924
  %v1036 = vadd.f32 %v808, %v926
  %v1037 = vadd.f32 %v809, %v1013
  %v1038 = vadd.f32 %v810, %v1015
  %v1039 = vadd.f32 %v811, %v930
  %v1040 = vadd.f32 %v812, %v932
  %v1041 = vadd.f32 %v813, %v1019
  %v1042 = vadd.f32 %v814, %v1021
  %v1043 = vadd.f32 %v815, %v936
  %v1044 = vadd.f32 %v816, %v938
  %v1045 = vadd.f32 %v817, %v1025
  %v1046 = vadd.f32 %v818, %v1027
  %v1047 = vadd.f32 %v819, %v942
  %v1048 = vadd.f32 %v820, %v944
  %v1049 = vadd.f32 %v821, %v1031
  %v1050 = vadd.f32 %v822, %v1033
  %s1051 = scalar_lea.vmem %s1, 128
  %v1052 = vld [vmem:[%s1051] sm:$0xff]
  %v1053 = vld [vmem:[%s1051 + $0x8] sm:$0xff]
  %v1054 = vld [vmem:[%s1051 + $0x10] sm:$0xff]
  %v1055 = vld [vmem:[%s1051 + $0x18] sm:$0xff]
  %v1057 = vsel %vm214, %v1052, 0
  %v1060 = vsel %vm214, %v1053, 0
  %v1063 = vsel %vm214, %v1054, 0
  %v1066 = vsel %vm214, %v1055, 0
  %1068 = vmatprep.subr.mxu0 %v168
  %1069 = vmatpush1.msra.mxu0 %v167
  %1070 = vmatprep.subr.mxu0 0.0
  %1071 = vmatpush1.msra.mxu0 0.0
  %1072 = vmatprep.subr.mxu0 0.0
  %1073 = vmatpush1.msra.mxu0 0.0
  %1074 = vmatprep.subr.mxu0 0.0
  %1075 = vmatpush1.msra.mxu0 0.0
  %1076 = vmatprep.subr.mxu0 0.0
  %1077 = vmatpush1.msra.mxu0 0.0
  %1078 = vmatprep.subr.mxu0 0.0
  %1079 = vmatpush1.msra.mxu0 0.0
  %1080 = vmatprep.subr.mxu0 0.0
  %1081 = vmatpush1.msra.mxu0 0.0
  %1082 = vmatprep.subr.mxu0 0.0
  %1083 = vmatpush1.msra.mxu0 0.0
  %1084 = vmatprep.subr.mxu0 0.0
  %1085 = vmatpush1.msra.mxu0 0.0
  %1086 = vmatprep.subr.mxu0 0.0
  %1087 = vmatpush1.msra.mxu0 0.0
  %1088 = vmatprep.subr.mxu0 0.0
  %1089 = vmatpush1.msra.mxu0 0.0
  %1090 = vmatprep.subr.mxu0 0.0
  %1091 = vmatpush1.msra.mxu0 0.0
  %1092 = vmatprep.subr.mxu0 0.0
  %1093 = vmatpush1.msra.mxu0 0.0
  %1094 = vmatprep.subr.mxu0 0.0
  %1095 = vmatpush1.msra.mxu0 0.0
  %1096 = vmatprep.subr.mxu0 0.0
  %1097 = vmatpush1.msra.mxu0 0.0
  %1098 = vmatprep.subr.mxu0 0.0
  %1099 = vmatpush1.msra.mxu0 0.0
  %1100 = vmatprep.subr.mxu0 0.0
  %1101 = vmatpush1.msra.mxu0 0.0
  %1102 = vmatprep.subr.mxu0 0.0
  %1103 = vmatpush1.msra.mxu0 0.0
  %1104 = vmatprep.subr.mxu0 0.0
  %1105 = vmatpush1.msra.mxu0 0.0
  %1106 = vmatprep.subr.mxu0 0.0
  %1107 = vmatpush1.msra.mxu0 0.0
  %1108 = vmatprep.subr.mxu0 0.0
  %1109 = vmatpush1.msra.mxu0 0.0
  %1110 = vmatprep.subr.mxu0 0.0
  %1111 = vmatpush1.msra.mxu0 0.0
  %1112 = vmatprep.subr.mxu0 0.0
  %1113 = vmatpush1.msra.mxu0 0.0
  %1114 = vmatprep.subr.mxu0 0.0
  %1115 = vmatpush1.msra.mxu0 0.0
  %1116 = vmatprep.subr.mxu0 0.0
  %1117 = vmatpush1.msra.mxu0 0.0
  %1118 = vmatprep.subr.mxu0 0.0
  %1119 = vmatpush1.msra.mxu0 0.0
  %1120 = vmatprep.subr.mxu0 0.0
  %1121 = vmatpush1.msra.mxu0 0.0
  %1122 = vmatprep.subr.mxu0 0.0
  %1123 = vmatpush1.msra.mxu0 0.0
  %1124 = vmatprep.subr.mxu0 0.0
  %1125 = vmatpush1.msra.mxu0 0.0
  %1126 = vmatprep.subr.mxu0 0.0
  %1127 = vmatpush1.msra.mxu0 0.0
  %1128 = vmatprep.subr.mxu0 0.0
  %1129 = vmatpush1.msra.mxu0 0.0
  %1130 = vmatprep.subr.mxu0 0.0
  %1131 = vmatpush1.msra.mxu0 0.0
  %1132 = vmatprep.mubr.f32.mxu0 0.0
  %1133 = vmatmul.mubr.f32.gmra.mrb[0].mxu0 %v1057
  %v1134 = vpop.f32.mrb[0].mxu0
  %v1135 = vadd.f32 0.0, %v1134
  %v1136 = vpop.f32.mrb[0].mxu0
  %v1137 = vadd.f32 0.0, %v1136
  %1138 = vmatprep.mubr.f32.mxu0 0.0
  %1139 = vmatmul.mubr.f32.gmra.mrb[0].mxu0 %v1060
  %v1140 = vpop.f32.mrb[0].mxu0
  %v1141 = vadd.f32 0.0, %v1140
  %v1142 = vpop.f32.mrb[0].mxu0
  %v1143 = vadd.f32 0.0, %v1142
  %1144 = vmatprep.mubr.f32.mxu0 0.0
  %1145 = vmatmul.mubr.f32.gmra.mrb[0].mxu0 %v1063
  %v1146 = vpop.f32.mrb[0].mxu0
  %v1147 = vadd.f32 0.0, %v1146
  %v1148 = vpop.f32.mrb[0].mxu0
  %v1149 = vadd.f32 0.0, %v1148
  %1150 = vmatprep.mubr.f32.mxu0 0.0
  %1151 = vmatmul.mubr.f32.gmra.mrb[0].mxu0 %v1066
  %v1152 = vpop.f32.mrb[0].mxu0
  %v1153 = vadd.f32 0.0, %v1152
  %v1154 = vpop.f32.mrb[0].mxu0
  %v1155 = vadd.f32 0.0, %v1154
  %1156 = vdwg.mxu0
  %1157 = vmatprep.subr.mxu0 %v170
  %1158 = vmatpush1.msra.mxu0 %v169
  %1159 = vmatprep.subr.mxu0 0.0
  %1160 = vmatpush1.msra.mxu0 0.0
  %1161 = vmatprep.subr.mxu0 0.0
  %1162 = vmatpush1.msra.mxu0 0.0
  %1163 = vmatprep.subr.mxu0 0.0
  %1164 = vmatpush1.msra.mxu0 0.0
  %1165 = vmatprep.subr.mxu0 0.0
  %1166 = vmatpush1.msra.mxu0 0.0
  %1167 = vmatprep.subr.mxu0 0.0
  %1168 = vmatpush1.msra.mxu0 0.0
  %1169 = vmatprep.subr.mxu0 0.0
  %1170 = vmatpush1.msra.mxu0 0.0
  %1171 = vmatprep.subr.mxu0 0.0
  %1172 = vmatpush1.msra.mxu0 0.0
  %1173 = vmatprep.subr.mxu0 0.0
  %1174 = vmatpush1.msra.mxu0 0.0
  %1175 = vmatprep.subr.mxu0 0.0
  %1176 = vmatpush1.msra.mxu0 0.0
  %1177 = vmatprep.subr.mxu0 0.0
  %1178 = vmatpush1.msra.mxu0 0.0
  %1179 = vmatprep.subr.mxu0 0.0
  %1180 = vmatpush1.msra.mxu0 0.0
  %1181 = vmatprep.subr.mxu0 0.0
  %1182 = vmatpush1.msra.mxu0 0.0
  %1183 = vmatprep.subr.mxu0 0.0
  %1184 = vmatpush1.msra.mxu0 0.0
  %1185 = vmatprep.subr.mxu0 0.0
  %1186 = vmatpush1.msra.mxu0 0.0
  %1187 = vmatprep.subr.mxu0 0.0
  %1188 = vmatpush1.msra.mxu0 0.0
  %1189 = vmatprep.subr.mxu0 0.0
  %1190 = vmatpush1.msra.mxu0 0.0
  %1191 = vmatprep.subr.mxu0 0.0
  %1192 = vmatpush1.msra.mxu0 0.0
  %1193 = vmatprep.subr.mxu0 0.0
  %1194 = vmatpush1.msra.mxu0 0.0
  %1195 = vmatprep.subr.mxu0 0.0
  %1196 = vmatpush1.msra.mxu0 0.0
  %1197 = vmatprep.subr.mxu0 0.0
  %1198 = vmatpush1.msra.mxu0 0.0
  %1199 = vmatprep.subr.mxu0 0.0
  %1200 = vmatpush1.msra.mxu0 0.0
  %1201 = vmatprep.subr.mxu0 0.0
  %1202 = vmatpush1.msra.mxu0 0.0
  %1203 = vmatprep.subr.mxu0 0.0
  %1204 = vmatpush1.msra.mxu0 0.0
  %1205 = vmatprep.subr.mxu0 0.0
  %1206 = vmatpush1.msra.mxu0 0.0
  %1207 = vmatprep.subr.mxu0 0.0
  %1208 = vmatpush1.msra.mxu0 0.0
  %1209 = vmatprep.subr.mxu0 0.0
  %1210 = vmatpush1.msra.mxu0 0.0
  %1211 = vmatprep.subr.mxu0 0.0
  %1212 = vmatpush1.msra.mxu0 0.0
  %1213 = vmatprep.subr.mxu0 0.0
  %1214 = vmatpush1.msra.mxu0 0.0
  %1215 = vmatprep.subr.mxu0 0.0
  %1216 = vmatpush1.msra.mxu0 0.0
  %1217 = vmatprep.subr.mxu0 0.0
  %1218 = vmatpush1.msra.mxu0 0.0
  %1219 = vmatprep.subr.mxu0 0.0
  %1220 = vmatpush1.msra.mxu0 0.0
  %1221 = vmatprep.mubr.f32.mxu0 0.0
  %1222 = vmatmul.mubr.f32.gmra.mrb[0].mxu0 %v1057
  %v1223 = vpop.f32.mrb[0].mxu0
  %v1224 = vadd.f32 0.0, %v1223
  %v1225 = vpop.f32.mrb[0].mxu0
  %v1226 = vadd.f32 0.0, %v1225
  %1227 = vmatprep.mubr.f32.mxu0 0.0
  %1228 = vmatmul.mubr.f32.gmra.mrb[0].mxu0 %v1060
  %v1229 = vpop.f32.mrb[0].mxu0
  %v1230 = vadd.f32 0.0, %v1229
  %v1231 = vpop.f32.mrb[0].mxu0
  %v1232 = vadd.f32 0.0, %v1231
  %1233 = vmatprep.mubr.f32.mxu0 0.0
  %1234 = vmatmul.mubr.f32.gmra.mrb[0].mxu0 %v1063
  %v1235 = vpop.f32.mrb[0].mxu0
  %v1236 = vadd.f32 0.0, %v1235
  %v1237 = vpop.f32.mrb[0].mxu0
  %v1238 = vadd.f32 0.0, %v1237
  %1239 = vmatprep.mubr.f32.mxu0 0.0
  %1240 = vmatmul.mubr.f32.gmra.mrb[0].mxu0 %v1066
  %v1241 = vpop.f32.mrb[0].mxu0
  %v1242 = vadd.f32 0.0, %v1241
  %v1243 = vpop.f32.mrb[0].mxu0
  %v1244 = vadd.f32 0.0, %v1243
  %1245 = vdwg.mxu0
  %v1246 = vadd.f32 %v1035, %v1135
  %v1247 = vadd.f32 %v1036, %v1137
  %v1248 = vadd.f32 %v1037, %v1224
  %v1249 = vadd.f32 %v1038, %v1226
  %v1250 = vadd.f32 %v1039, %v1141
  %v1251 = vadd.f32 %v1040, %v1143
  %v1252 = vadd.f32 %v1041, %v1230
  %v1253 = vadd.f32 %v1042, %v1232
  %v1254 = vadd.f32 %v1043, %v1147
  %v1255 = vadd.f32 %v1044, %v1149
  %v1256 = vadd.f32 %v1045, %v1236
  %v1257 = vadd.f32 %v1046, %v1238
  %v1258 = vadd.f32 %v1047, %v1153
  %v1259 = vadd.f32 %v1048, %v1155
  %v1260 = vadd.f32 %v1049, %v1242
  %v1261 = vadd.f32 %v1050, %v1244
  %1262 = vrot.lane.b32.xlu0 %v167, 127
  %v1263 = vpop.permute.xlu0 %1262
  %1264 = vrot.lane.b32.xlu0 %v168, 127
  %v1265 = vpop.permute.xlu0 %1264
  %1266 = vrot.lane.b32.xlu0 %v169, 127
  %v1267 = vpop.permute.xlu0 %1266
  %1268 = vrot.lane.b32.xlu0 %v170, 127
  %v1269 = vpop.permute.xlu0 %1268
  %vm1270 = vcmp.lt.s32.totalorder %v24, 127
  %v1271 = vsel %vm1270, %v1267, %v1269
  %v1272 = vsel %vm1270, %v1265, %v1267
  %v1273 = vsel %vm1270, %v1263, %v1265
  %v1274 = vsel %vm1270, %v1269, %v1263
  %v1275 = vmul.f32 %v1273, %v132
  %v1276 = vmul.f32 %v1272, %v133
  %v1277 = vmul.f32 %v1271, %v134
  %v1278 = vmul.f32 %v1274, %v135
  %s1279 = scalar_lea.vmem %s1, 160
  %v1280 = vld [vmem:[%s1279] sm:$0xff]
  %v1281 = vld [vmem:[%s1279 + $0x8] sm:$0xff]
  %v1282 = vld [vmem:[%s1279 + $0x10] sm:$0xff]
  %v1283 = vld [vmem:[%s1279 + $0x18] sm:$0xff]
  %v1285 = vsel %vm214, %v1280, 0
  %v1288 = vsel %vm214, %v1281, 0
  %v1291 = vsel %vm214, %v1282, 0
  %v1294 = vsel %vm214, %v1283, 0
  %1296 = vmatprep.subr.mxu0 %v1276
  %1297 = vmatpush1.msra.mxu0 %v1275
  %1298 = vmatprep.subr.mxu0 0.0
  %1299 = vmatpush1.msra.mxu0 0.0
  %1300 = vmatprep.subr.mxu0 0.0
  %1301 = vmatpush1.msra.mxu0 0.0
  %1302 = vmatprep.subr.mxu0 0.0
  %1303 = vmatpush1.msra.mxu0 0.0
  %1304 = vmatprep.subr.mxu0 0.0
  %1305 = vmatpush1.msra.mxu0 0.0
  %1306 = vmatprep.subr.mxu0 0.0
  %1307 = vmatpush1.msra.mxu0 0.0
  %1308 = vmatprep.subr.mxu0 0.0
  %1309 = vmatpush1.msra.mxu0 0.0
  %1310 = vmatprep.subr.mxu0 0.0
  %1311 = vmatpush1.msra.mxu0 0.0
  %1312 = vmatprep.subr.mxu0 0.0
  %1313 = vmatpush1.msra.mxu0 0.0
  %1314 = vmatprep.subr.mxu0 0.0
  %1315 = vmatpush1.msra.mxu0 0.0
  %1316 = vmatprep.subr.mxu0 0.0
  %1317 = vmatpush1.msra.mxu0 0.0
  %1318 = vmatprep.subr.mxu0 0.0
  %1319 = vmatpush1.msra.mxu0 0.0
  %1320 = vmatprep.subr.mxu0 0.0
  %1321 = vmatpush1.msra.mxu0 0.0
  %1322 = vmatprep.subr.mxu0 0.0
  %1323 = vmatpush1.msra.mxu0 0.0
  %1324 = vmatprep.subr.mxu0 0.0
  %1325 = vmatpush1.msra.mxu0 0.0
  %1326 = vmatprep.subr.mxu0 0.0
  %1327 = vmatpush1.msra.mxu0 0.0
  %1328 = vmatprep.subr.mxu0 0.0
  %1329 = vmatpush1.msra.mxu0 0.0
  %1330 = vmatprep.subr.mxu0 0.0
  %1331 = vmatpush1.msra.mxu0 0.0
  %1332 = vmatprep.subr.mxu0 0.0
  %1333 = vmatpush1.msra.mxu0 0.0
  %1334 = vmatprep.subr.mxu0 0.0
  %1335 = vmatpush1.msra.mxu0 0.0
  %1336 = vmatprep.subr.mxu0 0.0
  %1337 = vmatpush1.msra.mxu0 0.0
  %1338 = vmatprep.subr.mxu0 0.0
  %1339 = vmatpush1.msra.mxu0 0.0
  %1340 = vmatprep.subr.mxu0 0.0
  %1341 = vmatpush1.msra.mxu0 0.0
  %1342 = vmatprep.subr.mxu0 0.0
  %1343 = vmatpush1.msra.mxu0 0.0
  %1344 = vmatprep.subr.mxu0 0.0
  %1345 = vmatpush1.msra.mxu0 0.0
  %1346 = vmatprep.subr.mxu0 0.0
  %1347 = vmatpush1.msra.mxu0 0.0
  %1348 = vmatprep.subr.mxu0 0.0
  %1349 = vmatpush1.msra.mxu0 0.0
  %1350 = vmatprep.subr.mxu0 0.0
  %1351 = vmatpush1.msra.mxu0 0.0
  %1352 = vmatprep.subr.mxu0 0.0
  %1353 = vmatpush1.msra.mxu0 0.0
  %1354 = vmatprep.subr.mxu0 0.0
  %1355 = vmatpush1.msra.mxu0 0.0
  %1356 = vmatprep.subr.mxu0 0.0
  %1357 = vmatpush1.msra.mxu0 0.0
  %1358 = vmatprep.subr.mxu0 0.0
  %1359 = vmatpush1.msra.mxu0 0.0
  %1360 = vmatprep.mubr.f32.mxu0 0.0
  %1361 = vmatmul.mubr.f32.gmra.mrb[0].mxu0 %v1285
  %v1362 = vpop.f32.mrb[0].mxu0
  %v1363 = vadd.f32 0.0, %v1362
  %v1364 = vpop.f32.mrb[0].mxu0
  %v1365 = vadd.f32 0.0, %v1364
  %1366 = vmatprep.mubr.f32.mxu0 0.0
  %1367 = vmatmul.mubr.f32.gmra.mrb[0].mxu0 %v1288
  %v1368 = vpop.f32.mrb[0].mxu0
  %v1369 = vadd.f32 0.0, %v1368
  %v1370 = vpop.f32.mrb[0].mxu0
  %v1371 = vadd.f32 0.0, %v1370
  %1372 = vmatprep.mubr.f32.mxu0 0.0
  %1373 = vmatmul.mubr.f32.gmra.mrb[0].mxu0 %v1291
  %v1374 = vpop.f32.mrb[0].mxu0
  %v1375 = vadd.f32 0.0, %v1374
  %v1376 = vpop.f32.mrb[0].mxu0
  %v1377 = vadd.f32 0.0, %v1376
  %1378 = vmatprep.mubr.f32.mxu0 0.0
  %1379 = vmatmul.mubr.f32.gmra.mrb[0].mxu0 %v1294
  %v1380 = vpop.f32.mrb[0].mxu0
  %v1381 = vadd.f32 0.0, %v1380
  %v1382 = vpop.f32.mrb[0].mxu0
  %v1383 = vadd.f32 0.0, %v1382
  %1384 = vdwg.mxu0
  %1385 = vmatprep.subr.mxu0 %v1278
  %1386 = vmatpush1.msra.mxu0 %v1277
  %1387 = vmatprep.subr.mxu0 0.0
  %1388 = vmatpush1.msra.mxu0 0.0
  %1389 = vmatprep.subr.mxu0 0.0
  %1390 = vmatpush1.msra.mxu0 0.0
  %1391 = vmatprep.subr.mxu0 0.0
  %1392 = vmatpush1.msra.mxu0 0.0
  %1393 = vmatprep.subr.mxu0 0.0
  %1394 = vmatpush1.msra.mxu0 0.0
  %1395 = vmatprep.subr.mxu0 0.0
  %1396 = vmatpush1.msra.mxu0 0.0
  %1397 = vmatprep.subr.mxu0 0.0
  %1398 = vmatpush1.msra.mxu0 0.0
  %1399 = vmatprep.subr.mxu0 0.0
  %1400 = vmatpush1.msra.mxu0 0.0
  %1401 = vmatprep.subr.mxu0 0.0
  %1402 = vmatpush1.msra.mxu0 0.0
  %1403 = vmatprep.subr.mxu0 0.0
  %1404 = vmatpush1.msra.mxu0 0.0
  %1405 = vmatprep.subr.mxu0 0.0
  %1406 = vmatpush1.msra.mxu0 0.0
  %1407 = vmatprep.subr.mxu0 0.0
  %1408 = vmatpush1.msra.mxu0 0.0
  %1409 = vmatprep.subr.mxu0 0.0
  %1410 = vmatpush1.msra.mxu0 0.0
  %1411 = vmatprep.subr.mxu0 0.0
  %1412 = vmatpush1.msra.mxu0 0.0
  %1413 = vmatprep.subr.mxu0 0.0
  %1414 = vmatpush1.msra.mxu0 0.0
  %1415 = vmatprep.subr.mxu0 0.0
  %1416 = vmatpush1.msra.mxu0 0.0
  %1417 = vmatprep.subr.mxu0 0.0
  %1418 = vmatpush1.msra.mxu0 0.0
  %1419 = vmatprep.subr.mxu0 0.0
  %1420 = vmatpush1.msra.mxu0 0.0
  %1421 = vmatprep.subr.mxu0 0.0
  %1422 = vmatpush1.msra.mxu0 0.0
  %1423 = vmatprep.subr.mxu0 0.0
  %1424 = vmatpush1.msra.mxu0 0.0
  %1425 = vmatprep.subr.mxu0 0.0
  %1426 = vmatpush1.msra.mxu0 0.0
  %1427 = vmatprep.subr.mxu0 0.0
  %1428 = vmatpush1.msra.mxu0 0.0
  %1429 = vmatprep.subr.mxu0 0.0
  %1430 = vmatpush1.msra.mxu0 0.0
  %1431 = vmatprep.subr.mxu0 0.0
  %1432 = vmatpush1.msra.mxu0 0.0
  %1433 = vmatprep.subr.mxu0 0.0
  %1434 = vmatpush1.msra.mxu0 0.0
  %1435 = vmatprep.subr.mxu0 0.0
  %1436 = vmatpush1.msra.mxu0 0.0
  %1437 = vmatprep.subr.mxu0 0.0
  %1438 = vmatpush1.msra.mxu0 0.0
  %1439 = vmatprep.subr.mxu0 0.0
  %1440 = vmatpush1.msra.mxu0 0.0
  %1441 = vmatprep.subr.mxu0 0.0
  %1442 = vmatpush1.msra.mxu0 0.0
  %1443 = vmatprep.subr.mxu0 0.0
  %1444 = vmatpush1.msra.mxu0 0.0
  %1445 = vmatprep.subr.mxu0 0.0
  %1446 = vmatpush1.msra.mxu0 0.0
  %1447 = vmatprep.subr.mxu0 0.0
  %1448 = vmatpush1.msra.mxu0 0.0
  %1449 = vmatprep.mubr.f32.mxu0 0.0
  %1450 = vmatmul.mubr.f32.gmra.mrb[0].mxu0 %v1285
  %v1451 = vpop.f32.mrb[0].mxu0
  %v1452 = vadd.f32 0.0, %v1451
  %v1453 = vpop.f32.mrb[0].mxu0
  %v1454 = vadd.f32 0.0, %v1453
  %1455 = vmatprep.mubr.f32.mxu0 0.0
  %1456 = vmatmul.mubr.f32.gmra.mrb[0].mxu0 %v1288
  %v1457 = vpop.f32.mrb[0].mxu0
  %v1458 = vadd.f32 0.0, %v1457
  %v1459 = vpop.f32.mrb[0].mxu0
  %v1460 = vadd.f32 0.0, %v1459
  %1461 = vmatprep.mubr.f32.mxu0 0.0
  %1462 = vmatmul.mubr.f32.gmra.mrb[0].mxu0 %v1291
  %v1463 = vpop.f32.mrb[0].mxu0
  %v1464 = vadd.f32 0.0, %v1463
  %v1465 = vpop.f32.mrb[0].mxu0
  %v1466 = vadd.f32 0.0, %v1465
  %1467 = vmatprep.mubr.f32.mxu0 0.0
  %1468 = vmatmul.mubr.f32.gmra.mrb[0].mxu0 %v1294
  %v1469 = vpop.f32.mrb[0].mxu0
  %v1470 = vadd.f32 0.0, %v1469
  %v1471 = vpop.f32.mrb[0].mxu0
  %v1472 = vadd.f32 0.0, %v1471
  %1473 = vdwg.mxu0
  %v1474 = vadd.f32 %v1246, %v1363
  %v1475 = vadd.f32 %v1247, %v1365
  %v1476 = vadd.f32 %v1248, %v1452
  %v1477 = vadd.f32 %v1249, %v1454
  %v1478 = vadd.f32 %v1250, %v1369
  %v1479 = vadd.f32 %v1251, %v1371
  %v1480 = vadd.f32 %v1252, %v1458
  %v1481 = vadd.f32 %v1253, %v1460
  %v1482 = vadd.f32 %v1254, %v1375
  %v1483 = vadd.f32 %v1255, %v1377
  %v1484 = vadd.f32 %v1256, %v1464
  %v1485 = vadd.f32 %v1257, %v1466
  %v1486 = vadd.f32 %v1258, %v1381
  %v1487 = vadd.f32 %v1259, %v1383
  %v1488 = vadd.f32 %v1260, %v1470
  %v1489 = vadd.f32 %v1261, %v1472
  %1490 = vrot.lane.b32.xlu0 %v167, 113
  %v1491 = vpop.permute.xlu0 %1490
  %1492 = vrot.lane.b32.xlu0 %v168, 113
  %v1493 = vpop.permute.xlu0 %1492
  %1494 = vrot.lane.b32.xlu0 %v169, 113
  %v1495 = vpop.permute.xlu0 %1494
  %1496 = vrot.lane.b32.xlu0 %v170, 113
  %v1497 = vpop.permute.xlu0 %1496
  %vm1498 = vcmp.lt.s32.totalorder %v24, 113
  %v1499 = vsel %vm1498, %v1495, %v1497
  %v1500 = vsel %vm1498, %v1493, %v1495
  %v1501 = vsel %vm1498, %v1491, %v1493
  %v1502 = vsel %vm1498, %v1497, %v1491
  %v1503 = vmul.f32 %v1501, %v144
  %v1504 = vmul.f32 %v1500, %v145
  %v1505 = vmul.f32 %v1499, %v146
  %v1506 = vmul.f32 %v1502, %v147
  %s1507 = scalar_lea.vmem %s1, 192
  %v1508 = vld [vmem:[%s1507] sm:$0xff]
  %v1509 = vld [vmem:[%s1507 + $0x8] sm:$0xff]
  %v1510 = vld [vmem:[%s1507 + $0x10] sm:$0xff]
  %v1511 = vld [vmem:[%s1507 + $0x18] sm:$0xff]
  %v1513 = vsel %vm214, %v1508, 0
  %v1516 = vsel %vm214, %v1509, 0
  %v1519 = vsel %vm214, %v1510, 0
  %v1522 = vsel %vm214, %v1511, 0
  %1524 = vmatprep.subr.mxu0 %v1504
  %1525 = vmatpush1.msra.mxu0 %v1503
  %1526 = vmatprep.subr.mxu0 0.0
  %1527 = vmatpush1.msra.mxu0 0.0
  %1528 = vmatprep.subr.mxu0 0.0
  %1529 = vmatpush1.msra.mxu0 0.0
  %1530 = vmatprep.subr.mxu0 0.0
  %1531 = vmatpush1.msra.mxu0 0.0
  %1532 = vmatprep.subr.mxu0 0.0
  %1533 = vmatpush1.msra.mxu0 0.0
  %1534 = vmatprep.subr.mxu0 0.0
  %1535 = vmatpush1.msra.mxu0 0.0
  %1536 = vmatprep.subr.mxu0 0.0
  %1537 = vmatpush1.msra.mxu0 0.0
  %1538 = vmatprep.subr.mxu0 0.0
  %1539 = vmatpush1.msra.mxu0 0.0
  %1540 = vmatprep.subr.mxu0 0.0
  %1541 = vmatpush1.msra.mxu0 0.0
  %1542 = vmatprep.subr.mxu0 0.0
  %1543 = vmatpush1.msra.mxu0 0.0
  %1544 = vmatprep.subr.mxu0 0.0
  %1545 = vmatpush1.msra.mxu0 0.0
  %1546 = vmatprep.subr.mxu0 0.0
  %1547 = vmatpush1.msra.mxu0 0.0
  %1548 = vmatprep.subr.mxu0 0.0
  %1549 = vmatpush1.msra.mxu0 0.0
  %1550 = vmatprep.subr.mxu0 0.0
  %1551 = vmatpush1.msra.mxu0 0.0
  %1552 = vmatprep.subr.mxu0 0.0
  %1553 = vmatpush1.msra.mxu0 0.0
  %1554 = vmatprep.subr.mxu0 0.0
  %1555 = vmatpush1.msra.mxu0 0.0
  %1556 = vmatprep.subr.mxu0 0.0
  %1557 = vmatpush1.msra.mxu0 0.0
  %1558 = vmatprep.subr.mxu0 0.0
  %1559 = vmatpush1.msra.mxu0 0.0
  %1560 = vmatprep.subr.mxu0 0.0
  %1561 = vmatpush1.msra.mxu0 0.0
  %1562 = vmatprep.subr.mxu0 0.0
  %1563 = vmatpush1.msra.mxu0 0.0
  %1564 = vmatprep.subr.mxu0 0.0
  %1565 = vmatpush1.msra.mxu0 0.0
  %1566 = vmatprep.subr.mxu0 0.0
  %1567 = vmatpush1.msra.mxu0 0.0
  %1568 = vmatprep.subr.mxu0 0.0
  %1569 = vmatpush1.msra.mxu0 0.0
  %1570 = vmatprep.subr.mxu0 0.0
  %1571 = vmatpush1.msra.mxu0 0.0
  %1572 = vmatprep.subr.mxu0 0.0
  %1573 = vmatpush1.msra.mxu0 0.0
  %1574 = vmatprep.subr.mxu0 0.0
  %1575 = vmatpush1.msra.mxu0 0.0
  %1576 = vmatprep.subr.mxu0 0.0
  %1577 = vmatpush1.msra.mxu0 0.0
  %1578 = vmatprep.subr.mxu0 0.0
  %1579 = vmatpush1.msra.mxu0 0.0
  %1580 = vmatprep.subr.mxu0 0.0
  %1581 = vmatpush1.msra.mxu0 0.0
  %1582 = vmatprep.subr.mxu0 0.0
  %1583 = vmatpush1.msra.mxu0 0.0
  %1584 = vmatprep.subr.mxu0 0.0
  %1585 = vmatpush1.msra.mxu0 0.0
  %1586 = vmatprep.subr.mxu0 0.0
  %1587 = vmatpush1.msra.mxu0 0.0
  %1588 = vmatprep.mubr.f32.mxu0 0.0
  %1589 = vmatmul.mubr.f32.gmra.mrb[0].mxu0 %v1513
  %v1590 = vpop.f32.mrb[0].mxu0
  %v1591 = vadd.f32 0.0, %v1590
  %v1592 = vpop.f32.mrb[0].mxu0
  %v1593 = vadd.f32 0.0, %v1592
  %1594 = vmatprep.mubr.f32.mxu0 0.0
  %1595 = vmatmul.mubr.f32.gmra.mrb[0].mxu0 %v1516
  %v1596 = vpop.f32.mrb[0].mxu0
  %v1597 = vadd.f32 0.0, %v1596
  %v1598 = vpop.f32.mrb[0].mxu0
  %v1599 = vadd.f32 0.0, %v1598
  %1600 = vmatprep.mubr.f32.mxu0 0.0
  %1601 = vmatmul.mubr.f32.gmra.mrb[0].mxu0 %v1519
  %v1602 = vpop.f32.mrb[0].mxu0
  %v1603 = vadd.f32 0.0, %v1602
  %v1604 = vpop.f32.mrb[0].mxu0
  %v1605 = vadd.f32 0.0, %v1604
  %1606 = vmatprep.mubr.f32.mxu0 0.0
  %1607 = vmatmul.mubr.f32.gmra.mrb[0].mxu0 %v1522
  %v1608 = vpop.f32.mrb[0].mxu0
  %v1609 = vadd.f32 0.0, %v1608
  %v1610 = vpop.f32.mrb[0].mxu0
  %v1611 = vadd.f32 0.0, %v1610
  %1612 = vdwg.mxu0
  %1613 = vmatprep.subr.mxu0 %v1506
  %1614 = vmatpush1.msra.mxu0 %v1505
  %1615 = vmatprep.subr.mxu0 0.0
  %1616 = vmatpush1.msra.mxu0 0.0
  %1617 = vmatprep.subr.mxu0 0.0
  %1618 = vmatpush1.msra.mxu0 0.0
  %1619 = vmatprep.subr.mxu0 0.0
  %1620 = vmatpush1.msra.mxu0 0.0
  %1621 = vmatprep.subr.mxu0 0.0
  %1622 = vmatpush1.msra.mxu0 0.0
  %1623 = vmatprep.subr.mxu0 0.0
  %1624 = vmatpush1.msra.mxu0 0.0
  %1625 = vmatprep.subr.mxu0 0.0
  %1626 = vmatpush1.msra.mxu0 0.0
  %1627 = vmatprep.subr.mxu0 0.0
  %1628 = vmatpush1.msra.mxu0 0.0
  %1629 = vmatprep.subr.mxu0 0.0
  %1630 = vmatpush1.msra.mxu0 0.0
  %1631 = vmatprep.subr.mxu0 0.0
  %1632 = vmatpush1.msra.mxu0 0.0
  %1633 = vmatprep.subr.mxu0 0.0
  %1634 = vmatpush1.msra.mxu0 0.0
  %1635 = vmatprep.subr.mxu0 0.0
  %1636 = vmatpush1.msra.mxu0 0.0
  %1637 = vmatprep.subr.mxu0 0.0
  %1638 = vmatpush1.msra.mxu0 0.0
  %1639 = vmatprep.subr.mxu0 0.0
  %1640 = vmatpush1.msra.mxu0 0.0
  %1641 = vmatprep.subr.mxu0 0.0
  %1642 = vmatpush1.msra.mxu0 0.0
  %1643 = vmatprep.subr.mxu0 0.0
  %1644 = vmatpush1.msra.mxu0 0.0
  %1645 = vmatprep.subr.mxu0 0.0
  %1646 = vmatpush1.msra.mxu0 0.0
  %1647 = vmatprep.subr.mxu0 0.0
  %1648 = vmatpush1.msra.mxu0 0.0
  %1649 = vmatprep.subr.mxu0 0.0
  %1650 = vmatpush1.msra.mxu0 0.0
  %1651 = vmatprep.subr.mxu0 0.0
  %1652 = vmatpush1.msra.mxu0 0.0
  %1653 = vmatprep.subr.mxu0 0.0
  %1654 = vmatpush1.msra.mxu0 0.0
  %1655 = vmatprep.subr.mxu0 0.0
  %1656 = vmatpush1.msra.mxu0 0.0
  %1657 = vmatprep.subr.mxu0 0.0
  %1658 = vmatpush1.msra.mxu0 0.0
  %1659 = vmatprep.subr.mxu0 0.0
  %1660 = vmatpush1.msra.mxu0 0.0
  %1661 = vmatprep.subr.mxu0 0.0
  %1662 = vmatpush1.msra.mxu0 0.0
  %1663 = vmatprep.subr.mxu0 0.0
  %1664 = vmatpush1.msra.mxu0 0.0
  %1665 = vmatprep.subr.mxu0 0.0
  %1666 = vmatpush1.msra.mxu0 0.0
  %1667 = vmatprep.subr.mxu0 0.0
  %1668 = vmatpush1.msra.mxu0 0.0
  %1669 = vmatprep.subr.mxu0 0.0
  %1670 = vmatpush1.msra.mxu0 0.0
  %1671 = vmatprep.subr.mxu0 0.0
  %1672 = vmatpush1.msra.mxu0 0.0
  %1673 = vmatprep.subr.mxu0 0.0
  %1674 = vmatpush1.msra.mxu0 0.0
  %1675 = vmatprep.subr.mxu0 0.0
  %1676 = vmatpush1.msra.mxu0 0.0
  %1677 = vmatprep.mubr.f32.mxu0 0.0
  %1678 = vmatmul.mubr.f32.gmra.mrb[0].mxu0 %v1513
  %v1679 = vpop.f32.mrb[0].mxu0
  %v1680 = vadd.f32 0.0, %v1679
  %v1681 = vpop.f32.mrb[0].mxu0
  %v1682 = vadd.f32 0.0, %v1681
  %1683 = vmatprep.mubr.f32.mxu0 0.0
  %1684 = vmatmul.mubr.f32.gmra.mrb[0].mxu0 %v1516
  %v1685 = vpop.f32.mrb[0].mxu0
  %v1686 = vadd.f32 0.0, %v1685
  %v1687 = vpop.f32.mrb[0].mxu0
  %v1688 = vadd.f32 0.0, %v1687
  %1689 = vmatprep.mubr.f32.mxu0 0.0
  %1690 = vmatmul.mubr.f32.gmra.mrb[0].mxu0 %v1519
  %v1691 = vpop.f32.mrb[0].mxu0
  %v1692 = vadd.f32 0.0, %v1691
  %v1693 = vpop.f32.mrb[0].mxu0
  %v1694 = vadd.f32 0.0, %v1693
  %1695 = vmatprep.mubr.f32.mxu0 0.0
  %1696 = vmatmul.mubr.f32.gmra.mrb[0].mxu0 %v1522
  %v1697 = vpop.f32.mrb[0].mxu0
  %v1698 = vadd.f32 0.0, %v1697
  %v1699 = vpop.f32.mrb[0].mxu0
  %v1700 = vadd.f32 0.0, %v1699
  %1701 = vdwg.mxu0
  %v1702 = vadd.f32 %v1474, %v1591
  %v1703 = vadd.f32 %v1475, %v1593
  %v1704 = vadd.f32 %v1476, %v1680
  %v1705 = vadd.f32 %v1477, %v1682
  %v1706 = vadd.f32 %v1478, %v1597
  %v1707 = vadd.f32 %v1479, %v1599
  %v1708 = vadd.f32 %v1480, %v1686
  %v1709 = vadd.f32 %v1481, %v1688
  %v1710 = vadd.f32 %v1482, %v1603
  %v1711 = vadd.f32 %v1483, %v1605
  %v1712 = vadd.f32 %v1484, %v1692
  %v1713 = vadd.f32 %v1485, %v1694
  %v1714 = vadd.f32 %v1486, %v1609
  %v1715 = vadd.f32 %v1487, %v1611
  %v1716 = vadd.f32 %v1488, %v1698
  %v1717 = vadd.f32 %v1489, %v1700
  %1718 = vrot.lane.b32.xlu0 %v167, 112
  %v1719 = vpop.permute.xlu0 %1718
  %1720 = vrot.lane.b32.xlu0 %v168, 112
  %v1721 = vpop.permute.xlu0 %1720
  %1722 = vrot.lane.b32.xlu0 %v169, 112
  %v1723 = vpop.permute.xlu0 %1722
  %1724 = vrot.lane.b32.xlu0 %v170, 112
  %v1725 = vpop.permute.xlu0 %1724
  %vm1726 = vcmp.lt.s32.totalorder %v24, 112
  %v1727 = vsel %vm1726, %v1723, %v1725
  %v1728 = vsel %vm1726, %v1721, %v1723
  %v1729 = vsel %vm1726, %v1719, %v1721
  %v1730 = vsel %vm1726, %v1725, %v1719
  %v1731 = vmul.f32 %v1729, %v84
  %v1732 = vmul.f32 %v1728, %v85
  %v1733 = vmul.f32 %v1727, %v86
  %v1734 = vmul.f32 %v1730, %v87
  %s1735 = scalar_lea.vmem %s1, 224
  %v1736 = vld [vmem:[%s1735] sm:$0xff]
  %v1737 = vld [vmem:[%s1735 + $0x8] sm:$0xff]
  %v1738 = vld [vmem:[%s1735 + $0x10] sm:$0xff]
  %v1739 = vld [vmem:[%s1735 + $0x18] sm:$0xff]
  %v1741 = vsel %vm214, %v1736, 0
  %v1744 = vsel %vm214, %v1737, 0
  %v1747 = vsel %vm214, %v1738, 0
  %v1750 = vsel %vm214, %v1739, 0
  %1752 = vmatprep.subr.mxu0 %v1732
  %1753 = vmatpush1.msra.mxu0 %v1731
  %1754 = vmatprep.subr.mxu0 0.0
  %1755 = vmatpush1.msra.mxu0 0.0
  %1756 = vmatprep.subr.mxu0 0.0
  %1757 = vmatpush1.msra.mxu0 0.0
  %1758 = vmatprep.subr.mxu0 0.0
  %1759 = vmatpush1.msra.mxu0 0.0
  %1760 = vmatprep.subr.mxu0 0.0
  %1761 = vmatpush1.msra.mxu0 0.0
  %1762 = vmatprep.subr.mxu0 0.0
  %1763 = vmatpush1.msra.mxu0 0.0
  %1764 = vmatprep.subr.mxu0 0.0
  %1765 = vmatpush1.msra.mxu0 0.0
  %1766 = vmatprep.subr.mxu0 0.0
  %1767 = vmatpush1.msra.mxu0 0.0
  %1768 = vmatprep.subr.mxu0 0.0
  %1769 = vmatpush1.msra.mxu0 0.0
  %1770 = vmatprep.subr.mxu0 0.0
  %1771 = vmatpush1.msra.mxu0 0.0
  %1772 = vmatprep.subr.mxu0 0.0
  %1773 = vmatpush1.msra.mxu0 0.0
  %1774 = vmatprep.subr.mxu0 0.0
  %1775 = vmatpush1.msra.mxu0 0.0
  %1776 = vmatprep.subr.mxu0 0.0
  %1777 = vmatpush1.msra.mxu0 0.0
  %1778 = vmatprep.subr.mxu0 0.0
  %1779 = vmatpush1.msra.mxu0 0.0
  %1780 = vmatprep.subr.mxu0 0.0
  %1781 = vmatpush1.msra.mxu0 0.0
  %1782 = vmatprep.subr.mxu0 0.0
  %1783 = vmatpush1.msra.mxu0 0.0
  %1784 = vmatprep.subr.mxu0 0.0
  %1785 = vmatpush1.msra.mxu0 0.0
  %1786 = vmatprep.subr.mxu0 0.0
  %1787 = vmatpush1.msra.mxu0 0.0
  %1788 = vmatprep.subr.mxu0 0.0
  %1789 = vmatpush1.msra.mxu0 0.0
  %1790 = vmatprep.subr.mxu0 0.0
  %1791 = vmatpush1.msra.mxu0 0.0
  %1792 = vmatprep.subr.mxu0 0.0
  %1793 = vmatpush1.msra.mxu0 0.0
  %1794 = vmatprep.subr.mxu0 0.0
  %1795 = vmatpush1.msra.mxu0 0.0
  %1796 = vmatprep.subr.mxu0 0.0
  %1797 = vmatpush1.msra.mxu0 0.0
  %1798 = vmatprep.subr.mxu0 0.0
  %1799 = vmatpush1.msra.mxu0 0.0
  %1800 = vmatprep.subr.mxu0 0.0
  %1801 = vmatpush1.msra.mxu0 0.0
  %1802 = vmatprep.subr.mxu0 0.0
  %1803 = vmatpush1.msra.mxu0 0.0
  %1804 = vmatprep.subr.mxu0 0.0
  %1805 = vmatpush1.msra.mxu0 0.0
  %1806 = vmatprep.subr.mxu0 0.0
  %1807 = vmatpush1.msra.mxu0 0.0
  %1808 = vmatprep.subr.mxu0 0.0
  %1809 = vmatpush1.msra.mxu0 0.0
  %1810 = vmatprep.subr.mxu0 0.0
  %1811 = vmatpush1.msra.mxu0 0.0
  %1812 = vmatprep.subr.mxu0 0.0
  %1813 = vmatpush1.msra.mxu0 0.0
  %1814 = vmatprep.subr.mxu0 0.0
  %1815 = vmatpush1.msra.mxu0 0.0
  %1816 = vmatprep.mubr.f32.mxu0 0.0
  %1817 = vmatmul.mubr.f32.gmra.mrb[0].mxu0 %v1741
  %v1818 = vpop.f32.mrb[0].mxu0
  %v1819 = vadd.f32 0.0, %v1818
  %v1820 = vpop.f32.mrb[0].mxu0
  %v1821 = vadd.f32 0.0, %v1820
  %1822 = vmatprep.mubr.f32.mxu0 0.0
  %1823 = vmatmul.mubr.f32.gmra.mrb[0].mxu0 %v1744
  %v1824 = vpop.f32.mrb[0].mxu0
  %v1825 = vadd.f32 0.0, %v1824
  %v1826 = vpop.f32.mrb[0].mxu0
  %v1827 = vadd.f32 0.0, %v1826
  %1828 = vmatprep.mubr.f32.mxu0 0.0
  %1829 = vmatmul.mubr.f32.gmra.mrb[0].mxu0 %v1747
  %v1830 = vpop.f32.mrb[0].mxu0
  %v1831 = vadd.f32 0.0, %v1830
  %v1832 = vpop.f32.mrb[0].mxu0
  %v1833 = vadd.f32 0.0, %v1832
  %1834 = vmatprep.mubr.f32.mxu0 0.0
  %1835 = vmatmul.mubr.f32.gmra.mrb[0].mxu0 %v1750
  %v1836 = vpop.f32.mrb[0].mxu0
  %v1837 = vadd.f32 0.0, %v1836
  %v1838 = vpop.f32.mrb[0].mxu0
  %v1839 = vadd.f32 0.0, %v1838
  %1840 = vdwg.mxu0
  %1841 = vmatprep.subr.mxu0 %v1734
  %1842 = vmatpush1.msra.mxu0 %v1733
  %1843 = vmatprep.subr.mxu0 0.0
  %1844 = vmatpush1.msra.mxu0 0.0
  %1845 = vmatprep.subr.mxu0 0.0
  %1846 = vmatpush1.msra.mxu0 0.0
  %1847 = vmatprep.subr.mxu0 0.0
  %1848 = vmatpush1.msra.mxu0 0.0
  %1849 = vmatprep.subr.mxu0 0.0
  %1850 = vmatpush1.msra.mxu0 0.0
  %1851 = vmatprep.subr.mxu0 0.0
  %1852 = vmatpush1.msra.mxu0 0.0
  %1853 = vmatprep.subr.mxu0 0.0
  %1854 = vmatpush1.msra.mxu0 0.0
  %1855 = vmatprep.subr.mxu0 0.0
  %1856 = vmatpush1.msra.mxu0 0.0
  %1857 = vmatprep.subr.mxu0 0.0
  %1858 = vmatpush1.msra.mxu0 0.0
  %1859 = vmatprep.subr.mxu0 0.0
  %1860 = vmatpush1.msra.mxu0 0.0
  %1861 = vmatprep.subr.mxu0 0.0
  %1862 = vmatpush1.msra.mxu0 0.0
  %1863 = vmatprep.subr.mxu0 0.0
  %1864 = vmatpush1.msra.mxu0 0.0
  %1865 = vmatprep.subr.mxu0 0.0
  %1866 = vmatpush1.msra.mxu0 0.0
  %1867 = vmatprep.subr.mxu0 0.0
  %1868 = vmatpush1.msra.mxu0 0.0
  %1869 = vmatprep.subr.mxu0 0.0
  %1870 = vmatpush1.msra.mxu0 0.0
  %1871 = vmatprep.subr.mxu0 0.0
  %1872 = vmatpush1.msra.mxu0 0.0
  %1873 = vmatprep.subr.mxu0 0.0
  %1874 = vmatpush1.msra.mxu0 0.0
  %1875 = vmatprep.subr.mxu0 0.0
  %1876 = vmatpush1.msra.mxu0 0.0
  %1877 = vmatprep.subr.mxu0 0.0
  %1878 = vmatpush1.msra.mxu0 0.0
  %1879 = vmatprep.subr.mxu0 0.0
  %1880 = vmatpush1.msra.mxu0 0.0
  %1881 = vmatprep.subr.mxu0 0.0
  %1882 = vmatpush1.msra.mxu0 0.0
  %1883 = vmatprep.subr.mxu0 0.0
  %1884 = vmatpush1.msra.mxu0 0.0
  %1885 = vmatprep.subr.mxu0 0.0
  %1886 = vmatpush1.msra.mxu0 0.0
  %1887 = vmatprep.subr.mxu0 0.0
  %1888 = vmatpush1.msra.mxu0 0.0
  %1889 = vmatprep.subr.mxu0 0.0
  %1890 = vmatpush1.msra.mxu0 0.0
  %1891 = vmatprep.subr.mxu0 0.0
  %1892 = vmatpush1.msra.mxu0 0.0
  %1893 = vmatprep.subr.mxu0 0.0
  %1894 = vmatpush1.msra.mxu0 0.0
  %1895 = vmatprep.subr.mxu0 0.0
  %1896 = vmatpush1.msra.mxu0 0.0
  %1897 = vmatprep.subr.mxu0 0.0
  %1898 = vmatpush1.msra.mxu0 0.0
  %1899 = vmatprep.subr.mxu0 0.0
  %1900 = vmatpush1.msra.mxu0 0.0
  %1901 = vmatprep.subr.mxu0 0.0
  %1902 = vmatpush1.msra.mxu0 0.0
  %1903 = vmatprep.subr.mxu0 0.0
  %1904 = vmatpush1.msra.mxu0 0.0
  %1905 = vmatprep.mubr.f32.mxu0 0.0
  %1906 = vmatmul.mubr.f32.gmra.mrb[0].mxu0 %v1741
  %v1907 = vpop.f32.mrb[0].mxu0
  %v1908 = vadd.f32 0.0, %v1907
  %v1909 = vpop.f32.mrb[0].mxu0
  %v1910 = vadd.f32 0.0, %v1909
  %1911 = vmatprep.mubr.f32.mxu0 0.0
  %1912 = vmatmul.mubr.f32.gmra.mrb[0].mxu0 %v1744
  %v1913 = vpop.f32.mrb[0].mxu0
  %v1914 = vadd.f32 0.0, %v1913
  %v1915 = vpop.f32.mrb[0].mxu0
  %v1916 = vadd.f32 0.0, %v1915
  %1917 = vmatprep.mubr.f32.mxu0 0.0
  %1918 = vmatmul.mubr.f32.gmra.mrb[0].mxu0 %v1747
  %v1919 = vpop.f32.mrb[0].mxu0
  %v1920 = vadd.f32 0.0, %v1919
  %v1921 = vpop.f32.mrb[0].mxu0
  %v1922 = vadd.f32 0.0, %v1921
  %1923 = vmatprep.mubr.f32.mxu0 0.0
  %1924 = vmatmul.mubr.f32.gmra.mrb[0].mxu0 %v1750
  %v1925 = vpop.f32.mrb[0].mxu0
  %v1926 = vadd.f32 0.0, %v1925
  %v1927 = vpop.f32.mrb[0].mxu0
  %v1928 = vadd.f32 0.0, %v1927
  %1929 = vdwg.mxu0
  %v1930 = vadd.f32 %v1702, %v1819
  %v1931 = vadd.f32 %v1703, %v1821
  %v1932 = vadd.f32 %v1704, %v1908
  %v1933 = vadd.f32 %v1705, %v1910
  %v1934 = vadd.f32 %v1706, %v1825
  %v1935 = vadd.f32 %v1707, %v1827
  %v1936 = vadd.f32 %v1708, %v1914
  %v1937 = vadd.f32 %v1709, %v1916
  %v1938 = vadd.f32 %v1710, %v1831
  %v1939 = vadd.f32 %v1711, %v1833
  %v1940 = vadd.f32 %v1712, %v1920
  %v1941 = vadd.f32 %v1713, %v1922
  %v1942 = vadd.f32 %v1714, %v1837
  %v1943 = vadd.f32 %v1715, %v1839
  %v1944 = vadd.f32 %v1716, %v1926
  %v1945 = vadd.f32 %v1717, %v1928
  %1946 = vrot.lane.b32.xlu0 %v167, 111
  %v1947 = vpop.permute.xlu0 %1946
  %1948 = vrot.lane.b32.xlu0 %v168, 111
  %v1949 = vpop.permute.xlu0 %1948
  %1950 = vrot.lane.b32.xlu0 %v169, 111
  %v1951 = vpop.permute.xlu0 %1950
  %1952 = vrot.lane.b32.xlu0 %v170, 111
  %v1953 = vpop.permute.xlu0 %1952
  %vm1954 = vcmp.lt.s32.totalorder %v24, 111
  %v1955 = vsel %vm1954, %v1951, %v1953
  %v1956 = vsel %vm1954, %v1949, %v1951
  %v1957 = vsel %vm1954, %v1947, %v1949
  %v1958 = vsel %vm1954, %v1953, %v1947
  %v1959 = vmul.f32 %v1957, %v148
  %v1960 = vmul.f32 %v1956, %v149
  %v1961 = vmul.f32 %v1955, %v150
  %v1962 = vmul.f32 %v1958, %v151
  %s1963 = scalar_lea.vmem %s1, 256
  %v1964 = vld [vmem:[%s1963] sm:$0xff]
  %v1965 = vld [vmem:[%s1963 + $0x8] sm:$0xff]
  %v1966 = vld [vmem:[%s1963 + $0x10] sm:$0xff]
  %v1967 = vld [vmem:[%s1963 + $0x18] sm:$0xff]
  %v1969 = vsel %vm214, %v1964, 0
  %v1972 = vsel %vm214, %v1965, 0
  %v1975 = vsel %vm214, %v1966, 0
  %v1978 = vsel %vm214, %v1967, 0
  %1980 = vmatprep.subr.mxu0 %v1960
  %1981 = vmatpush1.msra.mxu0 %v1959
  %1982 = vmatprep.subr.mxu0 0.0
  %1983 = vmatpush1.msra.mxu0 0.0
  %1984 = vmatprep.subr.mxu0 0.0
  %1985 = vmatpush1.msra.mxu0 0.0
  %1986 = vmatprep.subr.mxu0 0.0
  %1987 = vmatpush1.msra.mxu0 0.0
  %1988 = vmatprep.subr.mxu0 0.0
  %1989 = vmatpush1.msra.mxu0 0.0
  %1990 = vmatprep.subr.mxu0 0.0
  %1991 = vmatpush1.msra.mxu0 0.0
  %1992 = vmatprep.subr.mxu0 0.0
  %1993 = vmatpush1.msra.mxu0 0.0
  %1994 = vmatprep.subr.mxu0 0.0
  %1995 = vmatpush1.msra.mxu0 0.0
  %1996 = vmatprep.subr.mxu0 0.0
  %1997 = vmatpush1.msra.mxu0 0.0
  %1998 = vmatprep.subr.mxu0 0.0
  %1999 = vmatpush1.msra.mxu0 0.0
  %2000 = vmatprep.subr.mxu0 0.0
  %2001 = vmatpush1.msra.mxu0 0.0
  %2002 = vmatprep.subr.mxu0 0.0
  %2003 = vmatpush1.msra.mxu0 0.0
  %2004 = vmatprep.subr.mxu0 0.0
  %2005 = vmatpush1.msra.mxu0 0.0
  %2006 = vmatprep.subr.mxu0 0.0
  %2007 = vmatpush1.msra.mxu0 0.0
  %2008 = vmatprep.subr.mxu0 0.0
  %2009 = vmatpush1.msra.mxu0 0.0
  %2010 = vmatprep.subr.mxu0 0.0
  %2011 = vmatpush1.msra.mxu0 0.0
  %2012 = vmatprep.subr.mxu0 0.0
  %2013 = vmatpush1.msra.mxu0 0.0
  %2014 = vmatprep.subr.mxu0 0.0
  %2015 = vmatpush1.msra.mxu0 0.0
  %2016 = vmatprep.subr.mxu0 0.0
  %2017 = vmatpush1.msra.mxu0 0.0
  %2018 = vmatprep.subr.mxu0 0.0
  %2019 = vmatpush1.msra.mxu0 0.0
  %2020 = vmatprep.subr.mxu0 0.0
  %2021 = vmatpush1.msra.mxu0 0.0
  %2022 = vmatprep.subr.mxu0 0.0
  %2023 = vmatpush1.msra.mxu0 0.0
  %2024 = vmatprep.subr.mxu0 0.0
  %2025 = vmatpush1.msra.mxu0 0.0
  %2026 = vmatprep.subr.mxu0 0.0
  %2027 = vmatpush1.msra.mxu0 0.0
  %2028 = vmatprep.subr.mxu0 0.0
  %2029 = vmatpush1.msra.mxu0 0.0
  %2030 = vmatprep.subr.mxu0 0.0
  %2031 = vmatpush1.msra.mxu0 0.0
  %2032 = vmatprep.subr.mxu0 0.0
  %2033 = vmatpush1.msra.mxu0 0.0
  %2034 = vmatprep.subr.mxu0 0.0
  %2035 = vmatpush1.msra.mxu0 0.0
  %2036 = vmatprep.subr.mxu0 0.0
  %2037 = vmatpush1.msra.mxu0 0.0
  %2038 = vmatprep.subr.mxu0 0.0
  %2039 = vmatpush1.msra.mxu0 0.0
  %2040 = vmatprep.subr.mxu0 0.0
  %2041 = vmatpush1.msra.mxu0 0.0
  %2042 = vmatprep.subr.mxu0 0.0
  %2043 = vmatpush1.msra.mxu0 0.0
  %2044 = vmatprep.mubr.f32.mxu0 0.0
  %2045 = vmatmul.mubr.f32.gmra.mrb[0].mxu0 %v1969
  %v2046 = vpop.f32.mrb[0].mxu0
  %v2047 = vadd.f32 0.0, %v2046
  %v2048 = vpop.f32.mrb[0].mxu0
  %v2049 = vadd.f32 0.0, %v2048
  %2050 = vmatprep.mubr.f32.mxu0 0.0
  %2051 = vmatmul.mubr.f32.gmra.mrb[0].mxu0 %v1972
  %v2052 = vpop.f32.mrb[0].mxu0
  %v2053 = vadd.f32 0.0, %v2052
  %v2054 = vpop.f32.mrb[0].mxu0
  %v2055 = vadd.f32 0.0, %v2054
  %2056 = vmatprep.mubr.f32.mxu0 0.0
  %2057 = vmatmul.mubr.f32.gmra.mrb[0].mxu0 %v1975
  %v2058 = vpop.f32.mrb[0].mxu0
  %v2059 = vadd.f32 0.0, %v2058
  %v2060 = vpop.f32.mrb[0].mxu0
  %v2061 = vadd.f32 0.0, %v2060
  %2062 = vmatprep.mubr.f32.mxu0 0.0
  %2063 = vmatmul.mubr.f32.gmra.mrb[0].mxu0 %v1978
  %v2064 = vpop.f32.mrb[0].mxu0
  %v2065 = vadd.f32 0.0, %v2064
  %v2066 = vpop.f32.mrb[0].mxu0
  %v2067 = vadd.f32 0.0, %v2066
  %2068 = vdwg.mxu0
  %2069 = vmatprep.subr.mxu0 %v1962
  %2070 = vmatpush1.msra.mxu0 %v1961
  %2071 = vmatprep.subr.mxu0 0.0
  %2072 = vmatpush1.msra.mxu0 0.0
  %2073 = vmatprep.subr.mxu0 0.0
  %2074 = vmatpush1.msra.mxu0 0.0
  %2075 = vmatprep.subr.mxu0 0.0
  %2076 = vmatpush1.msra.mxu0 0.0
  %2077 = vmatprep.subr.mxu0 0.0
  %2078 = vmatpush1.msra.mxu0 0.0
  %2079 = vmatprep.subr.mxu0 0.0
  %2080 = vmatpush1.msra.mxu0 0.0
  %2081 = vmatprep.subr.mxu0 0.0
  %2082 = vmatpush1.msra.mxu0 0.0
  %2083 = vmatprep.subr.mxu0 0.0
  %2084 = vmatpush1.msra.mxu0 0.0
  %2085 = vmatprep.subr.mxu0 0.0
  %2086 = vmatpush1.msra.mxu0 0.0
  %2087 = vmatprep.subr.mxu0 0.0
  %2088 = vmatpush1.msra.mxu0 0.0
  %2089 = vmatprep.subr.mxu0 0.0
  %2090 = vmatpush1.msra.mxu0 0.0
  %2091 = vmatprep.subr.mxu0 0.0
  %2092 = vmatpush1.msra.mxu0 0.0
  %2093 = vmatprep.subr.mxu0 0.0
  %2094 = vmatpush1.msra.mxu0 0.0
  %2095 = vmatprep.subr.mxu0 0.0
  %2096 = vmatpush1.msra.mxu0 0.0
  %2097 = vmatprep.subr.mxu0 0.0
  %2098 = vmatpush1.msra.mxu0 0.0
  %2099 = vmatprep.subr.mxu0 0.0
  %2100 = vmatpush1.msra.mxu0 0.0
  %2101 = vmatprep.subr.mxu0 0.0
  %2102 = vmatpush1.msra.mxu0 0.0
  %2103 = vmatprep.subr.mxu0 0.0
  %2104 = vmatpush1.msra.mxu0 0.0
  %2105 = vmatprep.subr.mxu0 0.0
  %2106 = vmatpush1.msra.mxu0 0.0
  %2107 = vmatprep.subr.mxu0 0.0
  %2108 = vmatpush1.msra.mxu0 0.0
  %2109 = vmatprep.subr.mxu0 0.0
  %2110 = vmatpush1.msra.mxu0 0.0
  %2111 = vmatprep.subr.mxu0 0.0
  %2112 = vmatpush1.msra.mxu0 0.0
  %2113 = vmatprep.subr.mxu0 0.0
  %2114 = vmatpush1.msra.mxu0 0.0
  %2115 = vmatprep.subr.mxu0 0.0
  %2116 = vmatpush1.msra.mxu0 0.0
  %2117 = vmatprep.subr.mxu0 0.0
  %2118 = vmatpush1.msra.mxu0 0.0
  %2119 = vmatprep.subr.mxu0 0.0
  %2120 = vmatpush1.msra.mxu0 0.0
  %2121 = vmatprep.subr.mxu0 0.0
  %2122 = vmatpush1.msra.mxu0 0.0
  %2123 = vmatprep.subr.mxu0 0.0
  %2124 = vmatpush1.msra.mxu0 0.0
  %2125 = vmatprep.subr.mxu0 0.0
  %2126 = vmatpush1.msra.mxu0 0.0
  %2127 = vmatprep.subr.mxu0 0.0
  %2128 = vmatpush1.msra.mxu0 0.0
  %2129 = vmatprep.subr.mxu0 0.0
  %2130 = vmatpush1.msra.mxu0 0.0
  %2131 = vmatprep.subr.mxu0 0.0
  %2132 = vmatpush1.msra.mxu0 0.0
  %2133 = vmatprep.mubr.f32.mxu0 0.0
  %2134 = vmatmul.mubr.f32.gmra.mrb[0].mxu0 %v1969
  %v2135 = vpop.f32.mrb[0].mxu0
  %v2136 = vadd.f32 0.0, %v2135
  %v2137 = vpop.f32.mrb[0].mxu0
  %v2138 = vadd.f32 0.0, %v2137
  %2139 = vmatprep.mubr.f32.mxu0 0.0
  %2140 = vmatmul.mubr.f32.gmra.mrb[0].mxu0 %v1972
  %v2141 = vpop.f32.mrb[0].mxu0
  %v2142 = vadd.f32 0.0, %v2141
  %v2143 = vpop.f32.mrb[0].mxu0
  %v2144 = vadd.f32 0.0, %v2143
  %2145 = vmatprep.mubr.f32.mxu0 0.0
  %2146 = vmatmul.mubr.f32.gmra.mrb[0].mxu0 %v1975
  %v2147 = vpop.f32.mrb[0].mxu0
  %v2148 = vadd.f32 0.0, %v2147
  %v2149 = vpop.f32.mrb[0].mxu0
  %v2150 = vadd.f32 0.0, %v2149
  %2151 = vmatprep.mubr.f32.mxu0 0.0
  %2152 = vmatmul.mubr.f32.gmra.mrb[0].mxu0 %v1978
  %v2153 = vpop.f32.mrb[0].mxu0
  %v2154 = vadd.f32 0.0, %v2153
  %v2155 = vpop.f32.mrb[0].mxu0
  %v2156 = vadd.f32 0.0, %v2155
  %2157 = vdwg.mxu0
  %v2158 = vadd.f32 %v1930, %v2047
  %v2159 = vadd.f32 %v1931, %v2049
  %v2160 = vadd.f32 %v1932, %v2136
  %v2161 = vadd.f32 %v1933, %v2138
  %v2162 = vadd.f32 %v1934, %v2053
  %v2163 = vadd.f32 %v1935, %v2055
  %v2164 = vadd.f32 %v1936, %v2142
  %v2165 = vadd.f32 %v1937, %v2144
  %v2166 = vadd.f32 %v1938, %v2059
  %v2167 = vadd.f32 %v1939, %v2061
  %v2168 = vadd.f32 %v1940, %v2148
  %v2169 = vadd.f32 %v1941, %v2150
  %v2170 = vadd.f32 %v1942, %v2065
  %v2171 = vadd.f32 %v1943, %v2067
  %v2172 = vadd.f32 %v1944, %v2154
  %v2173 = vadd.f32 %v1945, %v2156
  %2174 = vmatprep.subr.mxu0 0.0
  %2175 = vmatpush1.msra.mxu0 1.0
  %2176 = vmatprep.subr.mxu0 0.0
  %2177 = vmatpush1.msra.mxu0 1.0
  %2178 = vmatprep.subr.mxu0 0.0
  %2179 = vmatpush1.msra.mxu0 1.0
  %2180 = vmatprep.subr.mxu0 0.0
  %2181 = vmatpush1.msra.mxu0 1.0
  %2182 = vmatprep.subr.mxu0 0.0
  %2183 = vmatpush1.msra.mxu0 1.0
  %2184 = vmatprep.subr.mxu0 0.0
  %2185 = vmatpush1.msra.mxu0 1.0
  %2186 = vmatprep.subr.mxu0 0.0
  %2187 = vmatpush1.msra.mxu0 1.0
  %2188 = vmatprep.subr.mxu0 0.0
  %2189 = vmatpush1.msra.mxu0 1.0
  %2190 = vmatprep.subr.mxu0 0.0
  %2191 = vmatpush1.msra.mxu0 1.0
  %2192 = vmatprep.subr.mxu0 0.0
  %2193 = vmatpush1.msra.mxu0 1.0
  %2194 = vmatprep.subr.mxu0 0.0
  %2195 = vmatpush1.msra.mxu0 1.0
  %2196 = vmatprep.subr.mxu0 0.0
  %2197 = vmatpush1.msra.mxu0 1.0
  %2198 = vmatprep.subr.mxu0 0.0
  %2199 = vmatpush1.msra.mxu0 1.0
  %2200 = vmatprep.subr.mxu0 0.0
  %2201 = vmatpush1.msra.mxu0 1.0
  %2202 = vmatprep.subr.mxu0 0.0
  %2203 = vmatpush1.msra.mxu0 1.0
  %2204 = vmatprep.subr.mxu0 0.0
  %2205 = vmatpush1.msra.mxu0 1.0
  %2206 = vmatprep.subr.mxu0 0.0
  %2207 = vmatpush1.msra.mxu0 1.0
  %2208 = vmatprep.subr.mxu0 0.0
  %2209 = vmatpush1.msra.mxu0 1.0
  %2210 = vmatprep.subr.mxu0 0.0
  %2211 = vmatpush1.msra.mxu0 1.0
  %2212 = vmatprep.subr.mxu0 0.0
  %2213 = vmatpush1.msra.mxu0 1.0
  %2214 = vmatprep.subr.mxu0 0.0
  %2215 = vmatpush1.msra.mxu0 1.0
  %2216 = vmatprep.subr.mxu0 0.0
  %2217 = vmatpush1.msra.mxu0 1.0
  %2218 = vmatprep.subr.mxu0 0.0
  %2219 = vmatpush1.msra.mxu0 1.0
  %2220 = vmatprep.subr.mxu0 0.0
  %2221 = vmatpush1.msra.mxu0 1.0
  %2222 = vmatprep.subr.mxu0 0.0
  %2223 = vmatpush1.msra.mxu0 1.0
  %2224 = vmatprep.subr.mxu0 0.0
  %2225 = vmatpush1.msra.mxu0 1.0
  %2226 = vmatprep.subr.mxu0 0.0
  %2227 = vmatpush1.msra.mxu0 1.0
  %2228 = vmatprep.subr.mxu0 0.0
  %2229 = vmatpush1.msra.mxu0 1.0
  %2230 = vmatprep.subr.mxu0 0.0
  %2231 = vmatpush1.msra.mxu0 1.0
  %2232 = vmatprep.subr.mxu0 0.0
  %2233 = vmatpush1.msra.mxu0 1.0
  %2234 = vmatprep.subr.mxu0 0.0
  %2235 = vmatpush1.msra.mxu0 1.0
  %2236 = vmatprep.subr.mxu0 0.0
  %2237 = vmatpush1.msra.mxu0 1.0
  %2238 = vmatprep.mubr.f32.mxu0 %v2159
  %2239 = vmatmul.mubr.f32.gmra.mrb[0].mxu0 %v2158
  %v2240 = vpop.f32.mrb[0].mxu0
  %v2241 = vadd.f32 0.0, %v2240
  %v2242 = vpop.f32.mrb[0].mxu0
  %2243 = vmatprep.mubr.f32.mxu0 %v2163
  %2244 = vmatmul.mubr.f32.gmra.mrb[0].mxu0 %v2162
  %v2245 = vpop.f32.mrb[0].mxu0
  %v2246 = vadd.f32 0.0, %v2245
  %v2247 = vpop.f32.mrb[0].mxu0
  %2248 = vmatprep.mubr.f32.mxu0 %v2167
  %2249 = vmatmul.mubr.f32.gmra.mrb[0].mxu0 %v2166
  %v2250 = vpop.f32.mrb[0].mxu0
  %v2251 = vadd.f32 0.0, %v2250
  %v2252 = vpop.f32.mrb[0].mxu0
  %2253 = vmatprep.mubr.f32.mxu0 %v2171
  %2254 = vmatmul.mubr.f32.gmra.mrb[0].mxu0 %v2170
  %v2255 = vpop.f32.mrb[0].mxu0
  %v2256 = vadd.f32 0.0, %v2255
  %v2257 = vpop.f32.mrb[0].mxu0
  %2258 = vdwg.mxu0
  %2259 = vmatprep.subr.mxu0 0.0
  %2260 = vmatpush1.msra.mxu0 1.0
  %2261 = vmatprep.subr.mxu0 0.0
  %2262 = vmatpush1.msra.mxu0 1.0
  %2263 = vmatprep.subr.mxu0 0.0
  %2264 = vmatpush1.msra.mxu0 1.0
  %2265 = vmatprep.subr.mxu0 0.0
  %2266 = vmatpush1.msra.mxu0 1.0
  %2267 = vmatprep.subr.mxu0 0.0
  %2268 = vmatpush1.msra.mxu0 1.0
  %2269 = vmatprep.subr.mxu0 0.0
  %2270 = vmatpush1.msra.mxu0 1.0
  %2271 = vmatprep.subr.mxu0 0.0
  %2272 = vmatpush1.msra.mxu0 1.0
  %2273 = vmatprep.subr.mxu0 0.0
  %2274 = vmatpush1.msra.mxu0 1.0
  %2275 = vmatprep.subr.mxu0 0.0
  %2276 = vmatpush1.msra.mxu0 1.0
  %2277 = vmatprep.subr.mxu0 0.0
  %2278 = vmatpush1.msra.mxu0 1.0
  %2279 = vmatprep.subr.mxu0 0.0
  %2280 = vmatpush1.msra.mxu0 1.0
  %2281 = vmatprep.subr.mxu0 0.0
  %2282 = vmatpush1.msra.mxu0 1.0
  %2283 = vmatprep.subr.mxu0 0.0
  %2284 = vmatpush1.msra.mxu0 1.0
  %2285 = vmatprep.subr.mxu0 0.0
  %2286 = vmatpush1.msra.mxu0 1.0
  %2287 = vmatprep.subr.mxu0 0.0
  %2288 = vmatpush1.msra.mxu0 1.0
  %2289 = vmatprep.subr.mxu0 0.0
  %2290 = vmatpush1.msra.mxu0 1.0
  %2291 = vmatprep.subr.mxu0 0.0
  %2292 = vmatpush1.msra.mxu0 1.0
  %2293 = vmatprep.subr.mxu0 0.0
  %2294 = vmatpush1.msra.mxu0 1.0
  %2295 = vmatprep.subr.mxu0 0.0
  %2296 = vmatpush1.msra.mxu0 1.0
  %2297 = vmatprep.subr.mxu0 0.0
  %2298 = vmatpush1.msra.mxu0 1.0
  %2299 = vmatprep.subr.mxu0 0.0
  %2300 = vmatpush1.msra.mxu0 1.0
  %2301 = vmatprep.subr.mxu0 0.0
  %2302 = vmatpush1.msra.mxu0 1.0
  %2303 = vmatprep.subr.mxu0 0.0
  %2304 = vmatpush1.msra.mxu0 1.0
  %2305 = vmatprep.subr.mxu0 0.0
  %2306 = vmatpush1.msra.mxu0 1.0
  %2307 = vmatprep.subr.mxu0 0.0
  %2308 = vmatpush1.msra.mxu0 1.0
  %2309 = vmatprep.subr.mxu0 0.0
  %2310 = vmatpush1.msra.mxu0 1.0
  %2311 = vmatprep.subr.mxu0 0.0
  %2312 = vmatpush1.msra.mxu0 1.0
  %2313 = vmatprep.subr.mxu0 0.0
  %2314 = vmatpush1.msra.mxu0 1.0
  %2315 = vmatprep.subr.mxu0 0.0
  %2316 = vmatpush1.msra.mxu0 1.0
  %2317 = vmatprep.subr.mxu0 0.0
  %2318 = vmatpush1.msra.mxu0 1.0
  %2319 = vmatprep.subr.mxu0 0.0
  %2320 = vmatpush1.msra.mxu0 1.0
  %2321 = vmatprep.subr.mxu0 0.0
  %2322 = vmatpush1.msra.mxu0 1.0
  %2323 = vmatprep.mubr.f32.mxu0 %v2161
  %2324 = vmatmul.mubr.f32.gmra.mrb[0].mxu0 %v2160
  %v2325 = vpop.f32.mrb[0].mxu0
  %v2326 = vadd.f32 %v2241, %v2325
  %v2327 = vpop.f32.mrb[0].mxu0
  %2328 = vmatprep.mubr.f32.mxu0 %v2165
  %2329 = vmatmul.mubr.f32.gmra.mrb[0].mxu0 %v2164
  %v2330 = vpop.f32.mrb[0].mxu0
  %v2331 = vadd.f32 %v2246, %v2330
  %v2332 = vpop.f32.mrb[0].mxu0
  %2333 = vmatprep.mubr.f32.mxu0 %v2169
  %2334 = vmatmul.mubr.f32.gmra.mrb[0].mxu0 %v2168
  %v2335 = vpop.f32.mrb[0].mxu0
  %v2336 = vadd.f32 %v2251, %v2335
  %v2337 = vpop.f32.mrb[0].mxu0
  %2338 = vmatprep.mubr.f32.mxu0 %v2173
  %2339 = vmatmul.mubr.f32.gmra.mrb[0].mxu0 %v2172
  %v2340 = vpop.f32.mrb[0].mxu0
  %v2341 = vadd.f32 %v2256, %v2340
  %v2342 = vpop.f32.mrb[0].mxu0
  %2343 = vdwg.mxu0
  %v2344 = vmul.f32 %v2158, %v2158
  %v2345 = vmul.f32 %v2159, %v2159
  %v2346 = vmul.f32 %v2160, %v2160
  %v2347 = vmul.f32 %v2161, %v2161
  %v2348 = vmul.f32 %v2162, %v2162
  %v2349 = vmul.f32 %v2163, %v2163
  %v2350 = vmul.f32 %v2164, %v2164
  %v2351 = vmul.f32 %v2165, %v2165
  %v2352 = vmul.f32 %v2166, %v2166
  %v2353 = vmul.f32 %v2167, %v2167
  %v2354 = vmul.f32 %v2168, %v2168
  %v2355 = vmul.f32 %v2169, %v2169
  %v2356 = vmul.f32 %v2170, %v2170
  %v2357 = vmul.f32 %v2171, %v2171
  %v2358 = vmul.f32 %v2172, %v2172
  %v2359 = vmul.f32 %v2173, %v2173
  %2360 = vmatprep.subr.mxu0 0.0
  %2361 = vmatpush1.msra.mxu0 1.0
  %2362 = vmatprep.subr.mxu0 0.0
  %2363 = vmatpush1.msra.mxu0 1.0
  %2364 = vmatprep.subr.mxu0 0.0
  %2365 = vmatpush1.msra.mxu0 1.0
  %2366 = vmatprep.subr.mxu0 0.0
  %2367 = vmatpush1.msra.mxu0 1.0
  %2368 = vmatprep.subr.mxu0 0.0
  %2369 = vmatpush1.msra.mxu0 1.0
  %2370 = vmatprep.subr.mxu0 0.0
  %2371 = vmatpush1.msra.mxu0 1.0
  %2372 = vmatprep.subr.mxu0 0.0
  %2373 = vmatpush1.msra.mxu0 1.0
  %2374 = vmatprep.subr.mxu0 0.0
  %2375 = vmatpush1.msra.mxu0 1.0
  %2376 = vmatprep.subr.mxu0 0.0
  %2377 = vmatpush1.msra.mxu0 1.0
  %2378 = vmatprep.subr.mxu0 0.0
  %2379 = vmatpush1.msra.mxu0 1.0
  %2380 = vmatprep.subr.mxu0 0.0
  %2381 = vmatpush1.msra.mxu0 1.0
  %2382 = vmatprep.subr.mxu0 0.0
  %2383 = vmatpush1.msra.mxu0 1.0
  %2384 = vmatprep.subr.mxu0 0.0
  %2385 = vmatpush1.msra.mxu0 1.0
  %2386 = vmatprep.subr.mxu0 0.0
  %2387 = vmatpush1.msra.mxu0 1.0
  %2388 = vmatprep.subr.mxu0 0.0
  %2389 = vmatpush1.msra.mxu0 1.0
  %2390 = vmatprep.subr.mxu0 0.0
  %2391 = vmatpush1.msra.mxu0 1.0
  %2392 = vmatprep.subr.mxu0 0.0
  %2393 = vmatpush1.msra.mxu0 1.0
  %2394 = vmatprep.subr.mxu0 0.0
  %2395 = vmatpush1.msra.mxu0 1.0
  %2396 = vmatprep.subr.mxu0 0.0
  %2397 = vmatpush1.msra.mxu0 1.0
  %2398 = vmatprep.subr.mxu0 0.0
  %2399 = vmatpush1.msra.mxu0 1.0
  %2400 = vmatprep.subr.mxu0 0.0
  %2401 = vmatpush1.msra.mxu0 1.0
  %2402 = vmatprep.subr.mxu0 0.0
  %2403 = vmatpush1.msra.mxu0 1.0
  %2404 = vmatprep.subr.mxu0 0.0
  %2405 = vmatpush1.msra.mxu0 1.0
  %2406 = vmatprep.subr.mxu0 0.0
  %2407 = vmatpush1.msra.mxu0 1.0
  %2408 = vmatprep.subr.mxu0 0.0
  %2409 = vmatpush1.msra.mxu0 1.0
  %2410 = vmatprep.subr.mxu0 0.0
  %2411 = vmatpush1.msra.mxu0 1.0
  %2412 = vmatprep.subr.mxu0 0.0
  %2413 = vmatpush1.msra.mxu0 1.0
  %2414 = vmatprep.subr.mxu0 0.0
  %2415 = vmatpush1.msra.mxu0 1.0
  %2416 = vmatprep.subr.mxu0 0.0
  %2417 = vmatpush1.msra.mxu0 1.0
  %2418 = vmatprep.subr.mxu0 0.0
  %2419 = vmatpush1.msra.mxu0 1.0
  %2420 = vmatprep.subr.mxu0 0.0
  %2421 = vmatpush1.msra.mxu0 1.0
  %2422 = vmatprep.subr.mxu0 0.0
  %2423 = vmatpush1.msra.mxu0 1.0
  %2424 = vmatprep.mubr.f32.mxu0 %v2345
  %2425 = vmatmul.mubr.f32.gmra.mrb[0].mxu0 %v2344
  %v2426 = vpop.f32.mrb[0].mxu0
  %v2427 = vadd.f32 0.0, %v2426
  %v2428 = vpop.f32.mrb[0].mxu0
  %2429 = vmatprep.mubr.f32.mxu0 %v2349
  %2430 = vmatmul.mubr.f32.gmra.mrb[0].mxu0 %v2348
  %v2431 = vpop.f32.mrb[0].mxu0
  %v2432 = vadd.f32 0.0, %v2431
  %v2433 = vpop.f32.mrb[0].mxu0
  %2434 = vmatprep.mubr.f32.mxu0 %v2353
  %2435 = vmatmul.mubr.f32.gmra.mrb[0].mxu0 %v2352
  %v2436 = vpop.f32.mrb[0].mxu0
  %v2437 = vadd.f32 0.0, %v2436
  %v2438 = vpop.f32.mrb[0].mxu0
  %2439 = vmatprep.mubr.f32.mxu0 %v2357
  %2440 = vmatmul.mubr.f32.gmra.mrb[0].mxu0 %v2356
  %v2441 = vpop.f32.mrb[0].mxu0
  %v2442 = vadd.f32 0.0, %v2441
  %v2443 = vpop.f32.mrb[0].mxu0
  %2444 = vdwg.mxu0
  %2445 = vmatprep.subr.mxu0 0.0
  %2446 = vmatpush1.msra.mxu0 1.0
  %2447 = vmatprep.subr.mxu0 0.0
  %2448 = vmatpush1.msra.mxu0 1.0
  %2449 = vmatprep.subr.mxu0 0.0
  %2450 = vmatpush1.msra.mxu0 1.0
  %2451 = vmatprep.subr.mxu0 0.0
  %2452 = vmatpush1.msra.mxu0 1.0
  %2453 = vmatprep.subr.mxu0 0.0
  %2454 = vmatpush1.msra.mxu0 1.0
  %2455 = vmatprep.subr.mxu0 0.0
  %2456 = vmatpush1.msra.mxu0 1.0
  %2457 = vmatprep.subr.mxu0 0.0
  %2458 = vmatpush1.msra.mxu0 1.0
  %2459 = vmatprep.subr.mxu0 0.0
  %2460 = vmatpush1.msra.mxu0 1.0
  %2461 = vmatprep.subr.mxu0 0.0
  %2462 = vmatpush1.msra.mxu0 1.0
  %2463 = vmatprep.subr.mxu0 0.0
  %2464 = vmatpush1.msra.mxu0 1.0
  %2465 = vmatprep.subr.mxu0 0.0
  %2466 = vmatpush1.msra.mxu0 1.0
  %2467 = vmatprep.subr.mxu0 0.0
  %2468 = vmatpush1.msra.mxu0 1.0
  %2469 = vmatprep.subr.mxu0 0.0
  %2470 = vmatpush1.msra.mxu0 1.0
  %2471 = vmatprep.subr.mxu0 0.0
  %2472 = vmatpush1.msra.mxu0 1.0
  %2473 = vmatprep.subr.mxu0 0.0
  %2474 = vmatpush1.msra.mxu0 1.0
  %2475 = vmatprep.subr.mxu0 0.0
  %2476 = vmatpush1.msra.mxu0 1.0
  %2477 = vmatprep.subr.mxu0 0.0
  %2478 = vmatpush1.msra.mxu0 1.0
  %2479 = vmatprep.subr.mxu0 0.0
  %2480 = vmatpush1.msra.mxu0 1.0
  %2481 = vmatprep.subr.mxu0 0.0
  %2482 = vmatpush1.msra.mxu0 1.0
  %2483 = vmatprep.subr.mxu0 0.0
  %2484 = vmatpush1.msra.mxu0 1.0
  %2485 = vmatprep.subr.mxu0 0.0
  %2486 = vmatpush1.msra.mxu0 1.0
  %2487 = vmatprep.subr.mxu0 0.0
  %2488 = vmatpush1.msra.mxu0 1.0
  %2489 = vmatprep.subr.mxu0 0.0
  %2490 = vmatpush1.msra.mxu0 1.0
  %2491 = vmatprep.subr.mxu0 0.0
  %2492 = vmatpush1.msra.mxu0 1.0
  %2493 = vmatprep.subr.mxu0 0.0
  %2494 = vmatpush1.msra.mxu0 1.0
  %2495 = vmatprep.subr.mxu0 0.0
  %2496 = vmatpush1.msra.mxu0 1.0
  %2497 = vmatprep.subr.mxu0 0.0
  %2498 = vmatpush1.msra.mxu0 1.0
  %2499 = vmatprep.subr.mxu0 0.0
  %2500 = vmatpush1.msra.mxu0 1.0
  %2501 = vmatprep.subr.mxu0 0.0
  %2502 = vmatpush1.msra.mxu0 1.0
  %2503 = vmatprep.subr.mxu0 0.0
  %2504 = vmatpush1.msra.mxu0 1.0
  %2505 = vmatprep.subr.mxu0 0.0
  %2506 = vmatpush1.msra.mxu0 1.0
  %2507 = vmatprep.subr.mxu0 0.0
  %2508 = vmatpush1.msra.mxu0 1.0
  %2509 = vmatprep.mubr.f32.mxu0 %v2347
  %2510 = vmatmul.mubr.f32.gmra.mrb[0].mxu0 %v2346
  %v2511 = vpop.f32.mrb[0].mxu0
  %v2512 = vadd.f32 %v2427, %v2511
  %v2513 = vpop.f32.mrb[0].mxu0
  %2514 = vmatprep.mubr.f32.mxu0 %v2351
  %2515 = vmatmul.mubr.f32.gmra.mrb[0].mxu0 %v2350
  %v2516 = vpop.f32.mrb[0].mxu0
  %v2517 = vadd.f32 %v2432, %v2516
  %v2518 = vpop.f32.mrb[0].mxu0
  %2519 = vmatprep.mubr.f32.mxu0 %v2355
  %2520 = vmatmul.mubr.f32.gmra.mrb[0].mxu0 %v2354
  %v2521 = vpop.f32.mrb[0].mxu0
  %v2522 = vadd.f32 %v2437, %v2521
  %v2523 = vpop.f32.mrb[0].mxu0
  %2524 = vmatprep.mubr.f32.mxu0 %v2359
  %2525 = vmatmul.mubr.f32.gmra.mrb[0].mxu0 %v2358
  %v2526 = vpop.f32.mrb[0].mxu0
  %v2527 = vadd.f32 %v2442, %v2526
  %v2528 = vpop.f32.mrb[0].mxu0
  %2529 = vdwg.mxu0
  %v2530 = vmul.f32 %v2326, 0.001953125
  %v2531 = vmul.f32 %v2331, 0.001953125
  %v2532 = vmul.f32 %v2336, 0.001953125
  %v2533 = vmul.f32 %v2341, 0.001953125
  %v2534 = vmul.f32 %v2512, 0.001953125
  %v2535 = vmul.f32 %v2517, 0.001953125
  %v2536 = vmul.f32 %v2522, 0.001953125
  %v2537 = vmul.f32 %v2527, 0.001953125
  %v2538 = vmul.f32 %v2530, %v2530
  %v2539 = vmul.f32 %v2531, %v2531
  %v2540 = vmul.f32 %v2532, %v2532
  %v2541 = vmul.f32 %v2533, %v2533
  %v2542 = vsub.f32 %v2534, %v2538
  %v2543 = vsub.f32 %v2535, %v2539
  %v2544 = vsub.f32 %v2536, %v2540
  %v2545 = vsub.f32 %v2537, %v2541
  %v2546 = vmax.f32 %v2542, 0.0
  %v2547 = vmax.f32 %v2543, 0.0
  %v2548 = vmax.f32 %v2544, 0.0
  %v2549 = vmax.f32 %v2545, 0.0
  %v2550 = vadd.f32 %v2546, 1e-05
  %v2551 = vadd.f32 %v2547, 1e-05
  %v2552 = vadd.f32 %v2548, 1e-05
  %v2553 = vadd.f32 %v2549, 1e-05
  %v2554 = vrsqrt.pop %v2550
  %v2555 = vrsqrt.pop %v2551
  %v2556 = vrsqrt.pop %v2552
  %v2557 = vrsqrt.pop %v2553
  %v2558 = vmul.f32 %v152, %v2554
  %v2559 = vmul.f32 %v153, %v2555
  %v2560 = vmul.f32 %v154, %v2556
  %v2561 = vmul.f32 %v155, %v2557
  %v2562 = vmul.f32 %v2530, %v2558
  %v2563 = vmul.f32 %v2531, %v2559
  %v2564 = vmul.f32 %v2532, %v2560
  %v2565 = vmul.f32 %v2533, %v2561
  %2570 = vrot.lane.b32.xlu0 %v2562, 1
  %v2571 = vpop.permute.xlu0 %2570
  %2572 = vrot.lane.b32.xlu0 %v2563, 1
  %v2573 = vpop.permute.xlu0 %2572
  %2574 = vrot.lane.b32.xlu0 %v2564, 1
  %v2575 = vpop.permute.xlu0 %2574
  %2576 = vrot.lane.b32.xlu0 %v2565, 1
  %v2577 = vpop.permute.xlu0 %2576
  %v2582 = vsub.f32 %v152, %v2571
  %v2583 = vsub.f32 %v153, %v2573
  %v2584 = vsub.f32 %v154, %v2575
  %v2585 = vsub.f32 %v155, %v2577
  %2587 = vset.pattern.permute.xlu0 0
  %2588 = vperm.xlu0 %2587, %v2558
  %v2589 = vpop.permute.xlu0 %2588
  %2592 = vset.pattern.permute.xlu0 0
  %2593 = vperm.xlu0 %2592, %v2559
  %v2594 = vpop.permute.xlu0 %2593
  %2597 = vset.pattern.permute.xlu0 0
  %2598 = vperm.xlu0 %2597, %v2560
  %v2599 = vpop.permute.xlu0 %2598
  %2602 = vset.pattern.permute.xlu0 0
  %2603 = vperm.xlu0 %2602, %v2561
  %v2604 = vpop.permute.xlu0 %2603
  %v2606 = vmul.f32 %v2158, %v2589
  %v2607 = vmul.f32 %v2159, %v2589
  %v2608 = vmul.f32 %v2160, %v2589
  %v2609 = vmul.f32 %v2161, %v2589
  %v2610 = vmul.f32 %v2162, %v2594
  %v2611 = vmul.f32 %v2163, %v2594
  %v2612 = vmul.f32 %v2164, %v2594
  %v2613 = vmul.f32 %v2165, %v2594
  %v2614 = vmul.f32 %v2166, %v2599
  %v2615 = vmul.f32 %v2167, %v2599
  %v2616 = vmul.f32 %v2168, %v2599
  %v2617 = vmul.f32 %v2169, %v2599
  %v2618 = vmul.f32 %v2170, %v2604
  %v2619 = vmul.f32 %v2171, %v2604
  %v2620 = vmul.f32 %v2172, %v2604
  %v2621 = vmul.f32 %v2173, %v2604
  %2623 = vset.pattern.permute.xlu0 1
  %2624 = vperm.xlu0 %2623, %v2582
  %v2625 = vpop.permute.xlu0 %2624
  %2628 = vset.pattern.permute.xlu0 1
  %2629 = vperm.xlu0 %2628, %v2583
  %v2630 = vpop.permute.xlu0 %2629
  %2633 = vset.pattern.permute.xlu0 1
  %2634 = vperm.xlu0 %2633, %v2584
  %v2635 = vpop.permute.xlu0 %2634
  %2638 = vset.pattern.permute.xlu0 1
  %2639 = vperm.xlu0 %2638, %v2585
  %v2640 = vpop.permute.xlu0 %2639
  %v2642 = vadd.f32 %v2606, %v2625
  %v2643 = vadd.f32 %v2607, %v2625
  %v2644 = vadd.f32 %v2608, %v2625
  %v2645 = vadd.f32 %v2609, %v2625
  %v2646 = vadd.f32 %v2610, %v2630
  %v2647 = vadd.f32 %v2611, %v2630
  %v2648 = vadd.f32 %v2612, %v2630
  %v2649 = vadd.f32 %v2613, %v2630
  %v2650 = vadd.f32 %v2614, %v2635
  %v2651 = vadd.f32 %v2615, %v2635
  %v2652 = vadd.f32 %v2616, %v2635
  %v2653 = vadd.f32 %v2617, %v2635
  %v2654 = vadd.f32 %v2618, %v2640
  %v2655 = vadd.f32 %v2619, %v2640
  %v2656 = vadd.f32 %v2620, %v2640
  %v2657 = vadd.f32 %v2621, %v2640
  %v2658 = vmax.f32 %v2642, 0.0
  %v2659 = vmax.f32 %v2643, 0.0
  %v2660 = vmax.f32 %v2644, 0.0
  %v2661 = vmax.f32 %v2645, 0.0
  %v2662 = vmax.f32 %v2646, 0.0
  %v2663 = vmax.f32 %v2647, 0.0
  %v2664 = vmax.f32 %v2648, 0.0
  %v2665 = vmax.f32 %v2649, 0.0
  %v2666 = vmax.f32 %v2650, 0.0
  %v2667 = vmax.f32 %v2651, 0.0
  %v2668 = vmax.f32 %v2652, 0.0
  %v2669 = vmax.f32 %v2653, 0.0
  %v2670 = vmax.f32 %v2654, 0.0
  %v2671 = vmax.f32 %v2655, 0.0
  %v2672 = vmax.f32 %v2656, 0.0
  %v2673 = vmax.f32 %v2657, 0.0
  %2674 = vrot.lane.b32.xlu0 %v2658, 17
  %v2675 = vpop.permute.xlu0 %2674
  %2676 = vrot.lane.b32.xlu0 %v2662, 17
  %v2677 = vpop.permute.xlu0 %2676
  %2678 = vrot.lane.b32.xlu0 %v2666, 17
  %v2679 = vpop.permute.xlu0 %2678
  %2680 = vrot.lane.b32.xlu0 %v2670, 17
  %v2681 = vpop.permute.xlu0 %2680
  %2682 = vrot.lane.b32.xlu0 %v2659, 17
  %v2683 = vpop.permute.xlu0 %2682
  %2684 = vrot.lane.b32.xlu0 %v2663, 17
  %v2685 = vpop.permute.xlu0 %2684
  %2686 = vrot.lane.b32.xlu0 %v2667, 17
  %v2687 = vpop.permute.xlu0 %2686
  %2688 = vrot.lane.b32.xlu0 %v2671, 17
  %v2689 = vpop.permute.xlu0 %2688
  %2690 = vrot.lane.b32.xlu0 %v2660, 17
  %v2691 = vpop.permute.xlu0 %2690
  %2692 = vrot.lane.b32.xlu0 %v2664, 17
  %v2693 = vpop.permute.xlu0 %2692
  %2694 = vrot.lane.b32.xlu0 %v2668, 17
  %v2695 = vpop.permute.xlu0 %2694
  %2696 = vrot.lane.b32.xlu0 %v2672, 17
  %v2697 = vpop.permute.xlu0 %2696
  %2698 = vrot.lane.b32.xlu0 %v2661, 17
  %v2699 = vpop.permute.xlu0 %2698
  %2700 = vrot.lane.b32.xlu0 %v2665, 17
  %v2701 = vpop.permute.xlu0 %2700
  %2702 = vrot.lane.b32.xlu0 %v2669, 17
  %v2703 = vpop.permute.xlu0 %2702
  %2704 = vrot.lane.b32.xlu0 %v2673, 17
  %v2705 = vpop.permute.xlu0 %2704
  %v2706 = vsel %vm179, %v2691, %v2699
  %v2707 = vsel %vm179, %v2693, %v2701
  %v2708 = vsel %vm179, %v2695, %v2703
  %v2709 = vsel %vm179, %v2697, %v2705
  %v2710 = vsel %vm179, %v2683, %v2691
  %v2711 = vsel %vm179, %v2685, %v2693
  %v2712 = vsel %vm179, %v2687, %v2695
  %v2713 = vsel %vm179, %v2689, %v2697
  %v2714 = vsel %vm179, %v2675, %v2683
  %v2715 = vsel %vm179, %v2677, %v2685
  %v2716 = vsel %vm179, %v2679, %v2687
  %v2717 = vsel %vm179, %v2681, %v2689
  %v2718 = vsel %vm179, %v2699, %v2675
  %v2719 = vsel %vm179, %v2701, %v2677
  %v2720 = vsel %vm179, %v2703, %v2679
  %v2721 = vsel %vm179, %v2705, %v2681
  %v2722 = vmul.f32 %v2718, %v136
  %v2723 = vmul.f32 %v2714, %v137
  %v2724 = vmul.f32 %v2710, %v138
  %v2725 = vmul.f32 %v2706, %v139
  %v2726 = vmul.f32 %v2719, %v136
  %v2727 = vmul.f32 %v2715, %v137
  %v2728 = vmul.f32 %v2711, %v138
  %v2729 = vmul.f32 %v2707, %v139
  %v2730 = vmul.f32 %v2720, %v136
  %v2731 = vmul.f32 %v2716, %v137
  %v2732 = vmul.f32 %v2712, %v138
  %v2733 = vmul.f32 %v2708, %v139
  %v2734 = vmul.f32 %v2721, %v136
  %v2735 = vmul.f32 %v2717, %v137
  %v2736 = vmul.f32 %v2713, %v138
  %v2737 = vmul.f32 %v2709, %v139
  %v2738 = vld [vmem:[%s2] sm:$0xff]
  %v2739 = vld [vmem:[%s2 + $0x8] sm:$0xff]
  %v2740 = vld [vmem:[%s2 + $0x10] sm:$0xff]
  %v2741 = vld [vmem:[%s2 + $0x18] sm:$0xff]
  %2742 = vrot.lane.b32.xlu0 %v2658, 16
  %v2743 = vpop.permute.xlu0 %2742
  %2744 = vrot.lane.b32.xlu0 %v2662, 16
  %v2745 = vpop.permute.xlu0 %2744
  %2746 = vrot.lane.b32.xlu0 %v2666, 16
  %v2747 = vpop.permute.xlu0 %2746
  %2748 = vrot.lane.b32.xlu0 %v2670, 16
  %v2749 = vpop.permute.xlu0 %2748
  %2750 = vrot.lane.b32.xlu0 %v2659, 16
  %v2751 = vpop.permute.xlu0 %2750
  %2752 = vrot.lane.b32.xlu0 %v2663, 16
  %v2753 = vpop.permute.xlu0 %2752
  %2754 = vrot.lane.b32.xlu0 %v2667, 16
  %v2755 = vpop.permute.xlu0 %2754
  %2756 = vrot.lane.b32.xlu0 %v2671, 16
  %v2757 = vpop.permute.xlu0 %2756
  %2758 = vrot.lane.b32.xlu0 %v2660, 16
  %v2759 = vpop.permute.xlu0 %2758
  %2760 = vrot.lane.b32.xlu0 %v2664, 16
  %v2761 = vpop.permute.xlu0 %2760
  %2762 = vrot.lane.b32.xlu0 %v2668, 16
  %v2763 = vpop.permute.xlu0 %2762
  %2764 = vrot.lane.b32.xlu0 %v2672, 16
  %v2765 = vpop.permute.xlu0 %2764
  %2766 = vrot.lane.b32.xlu0 %v2661, 16
  %v2767 = vpop.permute.xlu0 %2766
  %2768 = vrot.lane.b32.xlu0 %v2665, 16
  %v2769 = vpop.permute.xlu0 %2768
  %2770 = vrot.lane.b32.xlu0 %v2669, 16
  %v2771 = vpop.permute.xlu0 %2770
  %2772 = vrot.lane.b32.xlu0 %v2673, 16
  %v2773 = vpop.permute.xlu0 %2772
  %v2774 = vsel %vm200, %v2759, %v2767
  %v2775 = vsel %vm200, %v2761, %v2769
  %v2776 = vsel %vm200, %v2763, %v2771
  %v2777 = vsel %vm200, %v2765, %v2773
  %v2778 = vsel %vm200, %v2751, %v2759
  %v2779 = vsel %vm200, %v2753, %v2761
  %v2780 = vsel %vm200, %v2755, %v2763
  %v2781 = vsel %vm200, %v2757, %v2765
  %v2782 = vsel %vm200, %v2743, %v2751
  %v2783 = vsel %vm200, %v2745, %v2753
  %v2784 = vsel %vm200, %v2747, %v2755
  %v2785 = vsel %vm200, %v2749, %v2757
  %v2786 = vsel %vm200, %v2767, %v2743
  %v2787 = vsel %vm200, %v2769, %v2745
  %v2788 = vsel %vm200, %v2771, %v2747
  %v2789 = vsel %vm200, %v2773, %v2749
  %v2790 = vmul.f32 %v2786, %v60
  %v2791 = vmul.f32 %v2782, %v61
  %v2792 = vmul.f32 %v2778, %v62
  %v2793 = vmul.f32 %v2774, %v63
  %v2794 = vmul.f32 %v2787, %v60
  %v2795 = vmul.f32 %v2783, %v61
  %v2796 = vmul.f32 %v2779, %v62
  %v2797 = vmul.f32 %v2775, %v63
  %v2798 = vmul.f32 %v2788, %v60
  %v2799 = vmul.f32 %v2784, %v61
  %v2800 = vmul.f32 %v2780, %v62
  %v2801 = vmul.f32 %v2776, %v63
  %v2802 = vmul.f32 %v2789, %v60
  %v2803 = vmul.f32 %v2785, %v61
  %v2804 = vmul.f32 %v2781, %v62
  %v2805 = vmul.f32 %v2777, %v63
  %s2806 = scalar_lea.vmem %s2, 32
  %v2807 = vld [vmem:[%s2806] sm:$0xff]
  %v2808 = vld [vmem:[%s2806 + $0x8] sm:$0xff]
  %v2809 = vld [vmem:[%s2806 + $0x10] sm:$0xff]
  %v2810 = vld [vmem:[%s2806 + $0x18] sm:$0xff]
  %vm2811 = vcmask 261120
  %v2813 = vsel %vm2811, %v2807, 0
  %v2816 = vsel %vm2811, %v2808, 0
  %v2819 = vsel %vm2811, %v2809, 0
  %v2822 = vsel %vm2811, %v2810, 0
  %2824 = vmatprep.subr.mxu0 %v2791
  %2825 = vmatpush1.msra.mxu0 %v2790
  %2826 = vmatprep.subr.mxu0 %v2795
  %2827 = vmatpush1.msra.mxu0 %v2794
  %2828 = vmatprep.subr.mxu0 %v2799
  %2829 = vmatpush1.msra.mxu0 %v2798
  %2830 = vmatprep.subr.mxu0 %v2803
  %2831 = vmatpush1.msra.mxu0 %v2802
  %2832 = vmatprep.subr.mxu0 0.0
  %2833 = vmatpush1.msra.mxu0 0.0
  %2834 = vmatprep.subr.mxu0 0.0
  %2835 = vmatpush1.msra.mxu0 0.0
  %2836 = vmatprep.subr.mxu0 0.0
  %2837 = vmatpush1.msra.mxu0 0.0
  %2838 = vmatprep.subr.mxu0 0.0
  %2839 = vmatpush1.msra.mxu0 0.0
  %2840 = vmatprep.subr.mxu0 0.0
  %2841 = vmatpush1.msra.mxu0 0.0
  %2842 = vmatprep.subr.mxu0 0.0
  %2843 = vmatpush1.msra.mxu0 0.0
  %2844 = vmatprep.subr.mxu0 0.0
  %2845 = vmatpush1.msra.mxu0 0.0
  %2846 = vmatprep.subr.mxu0 0.0
  %2847 = vmatpush1.msra.mxu0 0.0
  %2848 = vmatprep.subr.mxu0 0.0
  %2849 = vmatpush1.msra.mxu0 0.0
  %2850 = vmatprep.subr.mxu0 0.0
  %2851 = vmatpush1.msra.mxu0 0.0
  %2852 = vmatprep.subr.mxu0 0.0
  %2853 = vmatpush1.msra.mxu0 0.0
  %2854 = vmatprep.subr.mxu0 0.0
  %2855 = vmatpush1.msra.mxu0 0.0
  %2856 = vmatprep.subr.mxu0 0.0
  %2857 = vmatpush1.msra.mxu0 0.0
  %2858 = vmatprep.subr.mxu0 0.0
  %2859 = vmatpush1.msra.mxu0 0.0
  %2860 = vmatprep.subr.mxu0 0.0
  %2861 = vmatpush1.msra.mxu0 0.0
  %2862 = vmatprep.subr.mxu0 0.0
  %2863 = vmatpush1.msra.mxu0 0.0
  %2864 = vmatprep.subr.mxu0 0.0
  %2865 = vmatpush1.msra.mxu0 0.0
  %2866 = vmatprep.subr.mxu0 0.0
  %2867 = vmatpush1.msra.mxu0 0.0
  %2868 = vmatprep.subr.mxu0 0.0
  %2869 = vmatpush1.msra.mxu0 0.0
  %2870 = vmatprep.subr.mxu0 0.0
  %2871 = vmatpush1.msra.mxu0 0.0
  %2872 = vmatprep.subr.mxu0 0.0
  %2873 = vmatpush1.msra.mxu0 0.0
  %2874 = vmatprep.subr.mxu0 0.0
  %2875 = vmatpush1.msra.mxu0 0.0
  %2876 = vmatprep.subr.mxu0 0.0
  %2877 = vmatpush1.msra.mxu0 0.0
  %2878 = vmatprep.subr.mxu0 0.0
  %2879 = vmatpush1.msra.mxu0 0.0
  %2880 = vmatprep.subr.mxu0 0.0
  %2881 = vmatpush1.msra.mxu0 0.0
  %2882 = vmatprep.subr.mxu0 0.0
  %2883 = vmatpush1.msra.mxu0 0.0
  %2884 = vmatprep.subr.mxu0 0.0
  %2885 = vmatpush1.msra.mxu0 0.0
  %2886 = vmatprep.subr.mxu0 0.0
  %2887 = vmatpush1.msra.mxu0 0.0
  %2888 = vmatprep.mubr.f32.mxu0 0.0
  %2889 = vmatmul.mubr.f32.gmra.mrb[0].mxu0 %v2813
  %v2890 = vpop.f32.mrb[0].mxu0
  %v2891 = vadd.f32 0.0, %v2890
  %v2892 = vpop.f32.mrb[0].mxu0
  %v2893 = vadd.f32 0.0, %v2892
  %2894 = vmatprep.mubr.f32.mxu0 0.0
  %2895 = vmatmul.mubr.f32.gmra.mrb[0].mxu0 %v2816
  %v2896 = vpop.f32.mrb[0].mxu0
  %v2897 = vadd.f32 0.0, %v2896
  %v2898 = vpop.f32.mrb[0].mxu0
  %v2899 = vadd.f32 0.0, %v2898
  %2900 = vmatprep.mubr.f32.mxu0 0.0
  %2901 = vmatmul.mubr.f32.gmra.mrb[0].mxu0 %v2819
  %v2902 = vpop.f32.mrb[0].mxu0
  %v2903 = vadd.f32 0.0, %v2902
  %v2904 = vpop.f32.mrb[0].mxu0
  %v2905 = vadd.f32 0.0, %v2904
  %2906 = vmatprep.mubr.f32.mxu0 0.0
  %2907 = vmatmul.mubr.f32.gmra.mrb[0].mxu0 %v2822
  %v2908 = vpop.f32.mrb[0].mxu0
  %v2909 = vadd.f32 0.0, %v2908
  %v2910 = vpop.f32.mrb[0].mxu0
  %v2911 = vadd.f32 0.0, %v2910
  %2912 = vdwg.mxu0
  %2913 = vmatprep.subr.mxu0 %v2793
  %2914 = vmatpush1.msra.mxu0 %v2792
  %2915 = vmatprep.subr.mxu0 %v2797
  %2916 = vmatpush1.msra.mxu0 %v2796
  %2917 = vmatprep.subr.mxu0 %v2801
  %2918 = vmatpush1.msra.mxu0 %v2800
  %2919 = vmatprep.subr.mxu0 %v2805
  %2920 = vmatpush1.msra.mxu0 %v2804
  %2921 = vmatprep.subr.mxu0 0.0
  %2922 = vmatpush1.msra.mxu0 0.0
  %2923 = vmatprep.subr.mxu0 0.0
  %2924 = vmatpush1.msra.mxu0 0.0
  %2925 = vmatprep.subr.mxu0 0.0
  %2926 = vmatpush1.msra.mxu0 0.0
  %2927 = vmatprep.subr.mxu0 0.0
  %2928 = vmatpush1.msra.mxu0 0.0
  %2929 = vmatprep.subr.mxu0 0.0
  %2930 = vmatpush1.msra.mxu0 0.0
  %2931 = vmatprep.subr.mxu0 0.0
  %2932 = vmatpush1.msra.mxu0 0.0
  %2933 = vmatprep.subr.mxu0 0.0
  %2934 = vmatpush1.msra.mxu0 0.0
  %2935 = vmatprep.subr.mxu0 0.0
  %2936 = vmatpush1.msra.mxu0 0.0
  %2937 = vmatprep.subr.mxu0 0.0
  %2938 = vmatpush1.msra.mxu0 0.0
  %2939 = vmatprep.subr.mxu0 0.0
  %2940 = vmatpush1.msra.mxu0 0.0
  %2941 = vmatprep.subr.mxu0 0.0
  %2942 = vmatpush1.msra.mxu0 0.0
  %2943 = vmatprep.subr.mxu0 0.0
  %2944 = vmatpush1.msra.mxu0 0.0
  %2945 = vmatprep.subr.mxu0 0.0
  %2946 = vmatpush1.msra.mxu0 0.0
  %2947 = vmatprep.subr.mxu0 0.0
  %2948 = vmatpush1.msra.mxu0 0.0
  %2949 = vmatprep.subr.mxu0 0.0
  %2950 = vmatpush1.msra.mxu0 0.0
  %2951 = vmatprep.subr.mxu0 0.0
  %2952 = vmatpush1.msra.mxu0 0.0
  %2953 = vmatprep.subr.mxu0 0.0
  %2954 = vmatpush1.msra.mxu0 0.0
  %2955 = vmatprep.subr.mxu0 0.0
  %2956 = vmatpush1.msra.mxu0 0.0
  %2957 = vmatprep.subr.mxu0 0.0
  %2958 = vmatpush1.msra.mxu0 0.0
  %2959 = vmatprep.subr.mxu0 0.0
  %2960 = vmatpush1.msra.mxu0 0.0
  %2961 = vmatprep.subr.mxu0 0.0
  %2962 = vmatpush1.msra.mxu0 0.0
  %2963 = vmatprep.subr.mxu0 0.0
  %2964 = vmatpush1.msra.mxu0 0.0
  %2965 = vmatprep.subr.mxu0 0.0
  %2966 = vmatpush1.msra.mxu0 0.0
  %2967 = vmatprep.subr.mxu0 0.0
  %2968 = vmatpush1.msra.mxu0 0.0
  %2969 = vmatprep.subr.mxu0 0.0
  %2970 = vmatpush1.msra.mxu0 0.0
  %2971 = vmatprep.subr.mxu0 0.0
  %2972 = vmatpush1.msra.mxu0 0.0
  %2973 = vmatprep.subr.mxu0 0.0
  %2974 = vmatpush1.msra.mxu0 0.0
  %2975 = vmatprep.subr.mxu0 0.0
  %2976 = vmatpush1.msra.mxu0 0.0
  %2977 = vmatprep.mubr.f32.mxu0 0.0
  %2978 = vmatmul.mubr.f32.gmra.mrb[0].mxu0 %v2813
  %v2979 = vpop.f32.mrb[0].mxu0
  %v2980 = vadd.f32 0.0, %v2979
  %v2981 = vpop.f32.mrb[0].mxu0
  %v2982 = vadd.f32 0.0, %v2981
  %2983 = vmatprep.mubr.f32.mxu0 0.0
  %2984 = vmatmul.mubr.f32.gmra.mrb[0].mxu0 %v2816
  %v2985 = vpop.f32.mrb[0].mxu0
  %v2986 = vadd.f32 0.0, %v2985
  %v2987 = vpop.f32.mrb[0].mxu0
  %v2988 = vadd.f32 0.0, %v2987
  %2989 = vmatprep.mubr.f32.mxu0 0.0
  %2990 = vmatmul.mubr.f32.gmra.mrb[0].mxu0 %v2819
  %v2991 = vpop.f32.mrb[0].mxu0
  %v2992 = vadd.f32 0.0, %v2991
  %v2993 = vpop.f32.mrb[0].mxu0
  %v2994 = vadd.f32 0.0, %v2993
  %2995 = vmatprep.mubr.f32.mxu0 0.0
  %2996 = vmatmul.mubr.f32.gmra.mrb[0].mxu0 %v2822
  %v2997 = vpop.f32.mrb[0].mxu0
  %v2998 = vadd.f32 0.0, %v2997
  %v2999 = vpop.f32.mrb[0].mxu0
  %v3000 = vadd.f32 0.0, %v2999
  %3001 = vdwg.mxu0
  %v3003 = vsel %vm2811, %v2738, 0
  %v3006 = vsel %vm2811, %v2739, 0
  %v3009 = vsel %vm2811, %v2740, 0
  %v3012 = vsel %vm2811, %v2741, 0
  %3014 = vmatprep.subr.mxu0 %v2723
  %3015 = vmatpush1.msra.mxu0 %v2722
  %3016 = vmatprep.subr.mxu0 %v2727
  %3017 = vmatpush1.msra.mxu0 %v2726
  %3018 = vmatprep.subr.mxu0 %v2731
  %3019 = vmatpush1.msra.mxu0 %v2730
  %3020 = vmatprep.subr.mxu0 %v2735
  %3021 = vmatpush1.msra.mxu0 %v2734
  %3022 = vmatprep.subr.mxu0 0.0
  %3023 = vmatpush1.msra.mxu0 0.0
  %3024 = vmatprep.subr.mxu0 0.0
  %3025 = vmatpush1.msra.mxu0 0.0
  %3026 = vmatprep.subr.mxu0 0.0
  %3027 = vmatpush1.msra.mxu0 0.0
  %3028 = vmatprep.subr.mxu0 0.0
  %3029 = vmatpush1.msra.mxu0 0.0
  %3030 = vmatprep.subr.mxu0 0.0
  %3031 = vmatpush1.msra.mxu0 0.0
  %3032 = vmatprep.subr.mxu0 0.0
  %3033 = vmatpush1.msra.mxu0 0.0
  %3034 = vmatprep.subr.mxu0 0.0
  %3035 = vmatpush1.msra.mxu0 0.0
  %3036 = vmatprep.subr.mxu0 0.0
  %3037 = vmatpush1.msra.mxu0 0.0
  %3038 = vmatprep.subr.mxu0 0.0
  %3039 = vmatpush1.msra.mxu0 0.0
  %3040 = vmatprep.subr.mxu0 0.0
  %3041 = vmatpush1.msra.mxu0 0.0
  %3042 = vmatprep.subr.mxu0 0.0
  %3043 = vmatpush1.msra.mxu0 0.0
  %3044 = vmatprep.subr.mxu0 0.0
  %3045 = vmatpush1.msra.mxu0 0.0
  %3046 = vmatprep.subr.mxu0 0.0
  %3047 = vmatpush1.msra.mxu0 0.0
  %3048 = vmatprep.subr.mxu0 0.0
  %3049 = vmatpush1.msra.mxu0 0.0
  %3050 = vmatprep.subr.mxu0 0.0
  %3051 = vmatpush1.msra.mxu0 0.0
  %3052 = vmatprep.subr.mxu0 0.0
  %3053 = vmatpush1.msra.mxu0 0.0
  %3054 = vmatprep.subr.mxu0 0.0
  %3055 = vmatpush1.msra.mxu0 0.0
  %3056 = vmatprep.subr.mxu0 0.0
  %3057 = vmatpush1.msra.mxu0 0.0
  %3058 = vmatprep.subr.mxu0 0.0
  %3059 = vmatpush1.msra.mxu0 0.0
  %3060 = vmatprep.subr.mxu0 0.0
  %3061 = vmatpush1.msra.mxu0 0.0
  %3062 = vmatprep.subr.mxu0 0.0
  %3063 = vmatpush1.msra.mxu0 0.0
  %3064 = vmatprep.subr.mxu0 0.0
  %3065 = vmatpush1.msra.mxu0 0.0
  %3066 = vmatprep.subr.mxu0 0.0
  %3067 = vmatpush1.msra.mxu0 0.0
  %3068 = vmatprep.subr.mxu0 0.0
  %3069 = vmatpush1.msra.mxu0 0.0
  %3070 = vmatprep.subr.mxu0 0.0
  %3071 = vmatpush1.msra.mxu0 0.0
  %3072 = vmatprep.subr.mxu0 0.0
  %3073 = vmatpush1.msra.mxu0 0.0
  %3074 = vmatprep.subr.mxu0 0.0
  %3075 = vmatpush1.msra.mxu0 0.0
  %3076 = vmatprep.subr.mxu0 0.0
  %3077 = vmatpush1.msra.mxu0 0.0
  %3078 = vmatprep.mubr.f32.mxu0 0.0
  %3079 = vmatmul.mubr.f32.gmra.mrb[0].mxu0 %v3003
  %v3080 = vpop.f32.mrb[0].mxu0
  %v3081 = vadd.f32 %v2891, %v3080
  %v3082 = vpop.f32.mrb[0].mxu0
  %v3083 = vadd.f32 %v2893, %v3082
  %3084 = vmatprep.mubr.f32.mxu0 0.0
  %3085 = vmatmul.mubr.f32.gmra.mrb[0].mxu0 %v3006
  %v3086 = vpop.f32.mrb[0].mxu0
  %v3087 = vadd.f32 %v2897, %v3086
  %v3088 = vpop.f32.mrb[0].mxu0
  %v3089 = vadd.f32 %v2899, %v3088
  %3090 = vmatprep.mubr.f32.mxu0 0.0
  %3091 = vmatmul.mubr.f32.gmra.mrb[0].mxu0 %v3009
  %v3092 = vpop.f32.mrb[0].mxu0
  %v3093 = vadd.f32 %v2903, %v3092
  %v3094 = vpop.f32.mrb[0].mxu0
  %v3095 = vadd.f32 %v2905, %v3094
  %3096 = vmatprep.mubr.f32.mxu0 0.0
  %3097 = vmatmul.mubr.f32.gmra.mrb[0].mxu0 %v3012
  %v3098 = vpop.f32.mrb[0].mxu0
  %v3099 = vadd.f32 %v2909, %v3098
  %v3100 = vpop.f32.mrb[0].mxu0
  %v3101 = vadd.f32 %v2911, %v3100
  %3102 = vdwg.mxu0
  %3103 = vmatprep.subr.mxu0 %v2725
  %3104 = vmatpush1.msra.mxu0 %v2724
  %3105 = vmatprep.subr.mxu0 %v2729
  %3106 = vmatpush1.msra.mxu0 %v2728
  %3107 = vmatprep.subr.mxu0 %v2733
  %3108 = vmatpush1.msra.mxu0 %v2732
  %3109 = vmatprep.subr.mxu0 %v2737
  %3110 = vmatpush1.msra.mxu0 %v2736
  %3111 = vmatprep.subr.mxu0 0.0
  %3112 = vmatpush1.msra.mxu0 0.0
  %3113 = vmatprep.subr.mxu0 0.0
  %3114 = vmatpush1.msra.mxu0 0.0
  %3115 = vmatprep.subr.mxu0 0.0
  %3116 = vmatpush1.msra.mxu0 0.0
  %3117 = vmatprep.subr.mxu0 0.0
  %3118 = vmatpush1.msra.mxu0 0.0
  %3119 = vmatprep.subr.mxu0 0.0
  %3120 = vmatpush1.msra.mxu0 0.0
  %3121 = vmatprep.subr.mxu0 0.0
  %3122 = vmatpush1.msra.mxu0 0.0
  %3123 = vmatprep.subr.mxu0 0.0
  %3124 = vmatpush1.msra.mxu0 0.0
  %3125 = vmatprep.subr.mxu0 0.0
  %3126 = vmatpush1.msra.mxu0 0.0
  %3127 = vmatprep.subr.mxu0 0.0
  %3128 = vmatpush1.msra.mxu0 0.0
  %3129 = vmatprep.subr.mxu0 0.0
  %3130 = vmatpush1.msra.mxu0 0.0
  %3131 = vmatprep.subr.mxu0 0.0
  %3132 = vmatpush1.msra.mxu0 0.0
  %3133 = vmatprep.subr.mxu0 0.0
  %3134 = vmatpush1.msra.mxu0 0.0
  %3135 = vmatprep.subr.mxu0 0.0
  %3136 = vmatpush1.msra.mxu0 0.0
  %3137 = vmatprep.subr.mxu0 0.0
  %3138 = vmatpush1.msra.mxu0 0.0
  %3139 = vmatprep.subr.mxu0 0.0
  %3140 = vmatpush1.msra.mxu0 0.0
  %3141 = vmatprep.subr.mxu0 0.0
  %3142 = vmatpush1.msra.mxu0 0.0
  %3143 = vmatprep.subr.mxu0 0.0
  %3144 = vmatpush1.msra.mxu0 0.0
  %3145 = vmatprep.subr.mxu0 0.0
  %3146 = vmatpush1.msra.mxu0 0.0
  %3147 = vmatprep.subr.mxu0 0.0
  %3148 = vmatpush1.msra.mxu0 0.0
  %3149 = vmatprep.subr.mxu0 0.0
  %3150 = vmatpush1.msra.mxu0 0.0
  %3151 = vmatprep.subr.mxu0 0.0
  %3152 = vmatpush1.msra.mxu0 0.0
  %3153 = vmatprep.subr.mxu0 0.0
  %3154 = vmatpush1.msra.mxu0 0.0
  %3155 = vmatprep.subr.mxu0 0.0
  %3156 = vmatpush1.msra.mxu0 0.0
  %3157 = vmatprep.subr.mxu0 0.0
  %3158 = vmatpush1.msra.mxu0 0.0
  %3159 = vmatprep.subr.mxu0 0.0
  %3160 = vmatpush1.msra.mxu0 0.0
  %3161 = vmatprep.subr.mxu0 0.0
  %3162 = vmatpush1.msra.mxu0 0.0
  %3163 = vmatprep.subr.mxu0 0.0
  %3164 = vmatpush1.msra.mxu0 0.0
  %3165 = vmatprep.subr.mxu0 0.0
  %3166 = vmatpush1.msra.mxu0 0.0
  %3167 = vmatprep.mubr.f32.mxu0 0.0
  %3168 = vmatmul.mubr.f32.gmra.mrb[0].mxu0 %v3003
  %v3169 = vpop.f32.mrb[0].mxu0
  %v3170 = vadd.f32 %v2980, %v3169
  %v3171 = vpop.f32.mrb[0].mxu0
  %v3172 = vadd.f32 %v2982, %v3171
  %3173 = vmatprep.mubr.f32.mxu0 0.0
  %3174 = vmatmul.mubr.f32.gmra.mrb[0].mxu0 %v3006
  %v3175 = vpop.f32.mrb[0].mxu0
  %v3176 = vadd.f32 %v2986, %v3175
  %v3177 = vpop.f32.mrb[0].mxu0
  %v3178 = vadd.f32 %v2988, %v3177
  %3179 = vmatprep.mubr.f32.mxu0 0.0
  %3180 = vmatmul.mubr.f32.gmra.mrb[0].mxu0 %v3009
  %v3181 = vpop.f32.mrb[0].mxu0
  %v3182 = vadd.f32 %v2992, %v3181
  %v3183 = vpop.f32.mrb[0].mxu0
  %v3184 = vadd.f32 %v2994, %v3183
  %3185 = vmatprep.mubr.f32.mxu0 0.0
  %3186 = vmatmul.mubr.f32.gmra.mrb[0].mxu0 %v3012
  %v3187 = vpop.f32.mrb[0].mxu0
  %v3188 = vadd.f32 %v2998, %v3187
  %v3189 = vpop.f32.mrb[0].mxu0
  %v3190 = vadd.f32 %v3000, %v3189
  %3191 = vdwg.mxu0
  %3192 = vrot.lane.b32.xlu0 %v2658, 15
  %v3193 = vpop.permute.xlu0 %3192
  %3194 = vrot.lane.b32.xlu0 %v2662, 15
  %v3195 = vpop.permute.xlu0 %3194
  %3196 = vrot.lane.b32.xlu0 %v2666, 15
  %v3197 = vpop.permute.xlu0 %3196
  %3198 = vrot.lane.b32.xlu0 %v2670, 15
  %v3199 = vpop.permute.xlu0 %3198
  %3200 = vrot.lane.b32.xlu0 %v2659, 15
  %v3201 = vpop.permute.xlu0 %3200
  %3202 = vrot.lane.b32.xlu0 %v2663, 15
  %v3203 = vpop.permute.xlu0 %3202
  %3204 = vrot.lane.b32.xlu0 %v2667, 15
  %v3205 = vpop.permute.xlu0 %3204
  %3206 = vrot.lane.b32.xlu0 %v2671, 15
  %v3207 = vpop.permute.xlu0 %3206
  %3208 = vrot.lane.b32.xlu0 %v2660, 15
  %v3209 = vpop.permute.xlu0 %3208
  %3210 = vrot.lane.b32.xlu0 %v2664, 15
  %v3211 = vpop.permute.xlu0 %3210
  %3212 = vrot.lane.b32.xlu0 %v2668, 15
  %v3213 = vpop.permute.xlu0 %3212
  %3214 = vrot.lane.b32.xlu0 %v2672, 15
  %v3215 = vpop.permute.xlu0 %3214
  %3216 = vrot.lane.b32.xlu0 %v2661, 15
  %v3217 = vpop.permute.xlu0 %3216
  %3218 = vrot.lane.b32.xlu0 %v2665, 15
  %v3219 = vpop.permute.xlu0 %3218
  %3220 = vrot.lane.b32.xlu0 %v2669, 15
  %v3221 = vpop.permute.xlu0 %3220
  %3222 = vrot.lane.b32.xlu0 %v2673, 15
  %v3223 = vpop.permute.xlu0 %3222
  %v3224 = vsel %vm603, %v3209, %v3217
  %v3225 = vsel %vm603, %v3211, %v3219
  %v3226 = vsel %vm603, %v3213, %v3221
  %v3227 = vsel %vm603, %v3215, %v3223
  %v3228 = vsel %vm603, %v3201, %v3209
  %v3229 = vsel %vm603, %v3203, %v3211
  %v3230 = vsel %vm603, %v3205, %v3213
  %v3231 = vsel %vm603, %v3207, %v3215
  %v3232 = vsel %vm603, %v3193, %v3201
  %v3233 = vsel %vm603, %v3195, %v3203
  %v3234 = vsel %vm603, %v3197, %v3205
  %v3235 = vsel %vm603, %v3199, %v3207
  %v3236 = vsel %vm603, %v3217, %v3193
  %v3237 = vsel %vm603, %v3219, %v3195
  %v3238 = vsel %vm603, %v3221, %v3197
  %v3239 = vsel %vm603, %v3223, %v3199
  %v3240 = vmul.f32 %v3236, %v140
  %v3241 = vmul.f32 %v3232, %v141
  %v3242 = vmul.f32 %v3228, %v142
  %v3243 = vmul.f32 %v3224, %v143
  %v3244 = vmul.f32 %v3237, %v140
  %v3245 = vmul.f32 %v3233, %v141
  %v3246 = vmul.f32 %v3229, %v142
  %v3247 = vmul.f32 %v3225, %v143
  %v3248 = vmul.f32 %v3238, %v140
  %v3249 = vmul.f32 %v3234, %v141
  %v3250 = vmul.f32 %v3230, %v142
  %v3251 = vmul.f32 %v3226, %v143
  %v3252 = vmul.f32 %v3239, %v140
  %v3253 = vmul.f32 %v3235, %v141
  %v3254 = vmul.f32 %v3231, %v142
  %v3255 = vmul.f32 %v3227, %v143
  %s3256 = scalar_lea.vmem %s2, 64
  %v3257 = vld [vmem:[%s3256] sm:$0xff]
  %v3258 = vld [vmem:[%s3256 + $0x8] sm:$0xff]
  %v3259 = vld [vmem:[%s3256 + $0x10] sm:$0xff]
  %v3260 = vld [vmem:[%s3256 + $0x18] sm:$0xff]
  %v3262 = vsel %vm2811, %v3257, 0
  %v3265 = vsel %vm2811, %v3258, 0
  %v3268 = vsel %vm2811, %v3259, 0
  %v3271 = vsel %vm2811, %v3260, 0
  %3273 = vmatprep.subr.mxu0 %v3241
  %3274 = vmatpush1.msra.mxu0 %v3240
  %3275 = vmatprep.subr.mxu0 %v3245
  %3276 = vmatpush1.msra.mxu0 %v3244
  %3277 = vmatprep.subr.mxu0 %v3249
  %3278 = vmatpush1.msra.mxu0 %v3248
  %3279 = vmatprep.subr.mxu0 %v3253
  %3280 = vmatpush1.msra.mxu0 %v3252
  %3281 = vmatprep.subr.mxu0 0.0
  %3282 = vmatpush1.msra.mxu0 0.0
  %3283 = vmatprep.subr.mxu0 0.0
  %3284 = vmatpush1.msra.mxu0 0.0
  %3285 = vmatprep.subr.mxu0 0.0
  %3286 = vmatpush1.msra.mxu0 0.0
  %3287 = vmatprep.subr.mxu0 0.0
  %3288 = vmatpush1.msra.mxu0 0.0
  %3289 = vmatprep.subr.mxu0 0.0
  %3290 = vmatpush1.msra.mxu0 0.0
  %3291 = vmatprep.subr.mxu0 0.0
  %3292 = vmatpush1.msra.mxu0 0.0
  %3293 = vmatprep.subr.mxu0 0.0
  %3294 = vmatpush1.msra.mxu0 0.0
  %3295 = vmatprep.subr.mxu0 0.0
  %3296 = vmatpush1.msra.mxu0 0.0
  %3297 = vmatprep.subr.mxu0 0.0
  %3298 = vmatpush1.msra.mxu0 0.0
  %3299 = vmatprep.subr.mxu0 0.0
  %3300 = vmatpush1.msra.mxu0 0.0
  %3301 = vmatprep.subr.mxu0 0.0
  %3302 = vmatpush1.msra.mxu0 0.0
  %3303 = vmatprep.subr.mxu0 0.0
  %3304 = vmatpush1.msra.mxu0 0.0
  %3305 = vmatprep.subr.mxu0 0.0
  %3306 = vmatpush1.msra.mxu0 0.0
  %3307 = vmatprep.subr.mxu0 0.0
  %3308 = vmatpush1.msra.mxu0 0.0
  %3309 = vmatprep.subr.mxu0 0.0
  %3310 = vmatpush1.msra.mxu0 0.0
  %3311 = vmatprep.subr.mxu0 0.0
  %3312 = vmatpush1.msra.mxu0 0.0
  %3313 = vmatprep.subr.mxu0 0.0
  %3314 = vmatpush1.msra.mxu0 0.0
  %3315 = vmatprep.subr.mxu0 0.0
  %3316 = vmatpush1.msra.mxu0 0.0
  %3317 = vmatprep.subr.mxu0 0.0
  %3318 = vmatpush1.msra.mxu0 0.0
  %3319 = vmatprep.subr.mxu0 0.0
  %3320 = vmatpush1.msra.mxu0 0.0
  %3321 = vmatprep.subr.mxu0 0.0
  %3322 = vmatpush1.msra.mxu0 0.0
  %3323 = vmatprep.subr.mxu0 0.0
  %3324 = vmatpush1.msra.mxu0 0.0
  %3325 = vmatprep.subr.mxu0 0.0
  %3326 = vmatpush1.msra.mxu0 0.0
  %3327 = vmatprep.subr.mxu0 0.0
  %3328 = vmatpush1.msra.mxu0 0.0
  %3329 = vmatprep.subr.mxu0 0.0
  %3330 = vmatpush1.msra.mxu0 0.0
  %3331 = vmatprep.subr.mxu0 0.0
  %3332 = vmatpush1.msra.mxu0 0.0
  %3333 = vmatprep.subr.mxu0 0.0
  %3334 = vmatpush1.msra.mxu0 0.0
  %3335 = vmatprep.subr.mxu0 0.0
  %3336 = vmatpush1.msra.mxu0 0.0
  %3337 = vmatprep.mubr.f32.mxu0 0.0
  %3338 = vmatmul.mubr.f32.gmra.mrb[0].mxu0 %v3262
  %v3339 = vpop.f32.mrb[0].mxu0
  %v3340 = vadd.f32 0.0, %v3339
  %v3341 = vpop.f32.mrb[0].mxu0
  %v3342 = vadd.f32 0.0, %v3341
  %3343 = vmatprep.mubr.f32.mxu0 0.0
  %3344 = vmatmul.mubr.f32.gmra.mrb[0].mxu0 %v3265
  %v3345 = vpop.f32.mrb[0].mxu0
  %v3346 = vadd.f32 0.0, %v3345
  %v3347 = vpop.f32.mrb[0].mxu0
  %v3348 = vadd.f32 0.0, %v3347
  %3349 = vmatprep.mubr.f32.mxu0 0.0
  %3350 = vmatmul.mubr.f32.gmra.mrb[0].mxu0 %v3268
  %v3351 = vpop.f32.mrb[0].mxu0
  %v3352 = vadd.f32 0.0, %v3351
  %v3353 = vpop.f32.mrb[0].mxu0
  %v3354 = vadd.f32 0.0, %v3353
  %3355 = vmatprep.mubr.f32.mxu0 0.0
  %3356 = vmatmul.mubr.f32.gmra.mrb[0].mxu0 %v3271
  %v3357 = vpop.f32.mrb[0].mxu0
  %v3358 = vadd.f32 0.0, %v3357
  %v3359 = vpop.f32.mrb[0].mxu0
  %v3360 = vadd.f32 0.0, %v3359
  %3361 = vdwg.mxu0
  %3362 = vmatprep.subr.mxu0 %v3243
  %3363 = vmatpush1.msra.mxu0 %v3242
  %3364 = vmatprep.subr.mxu0 %v3247
  %3365 = vmatpush1.msra.mxu0 %v3246
  %3366 = vmatprep.subr.mxu0 %v3251
  %3367 = vmatpush1.msra.mxu0 %v3250
  %3368 = vmatprep.subr.mxu0 %v3255
  %3369 = vmatpush1.msra.mxu0 %v3254
  %3370 = vmatprep.subr.mxu0 0.0
  %3371 = vmatpush1.msra.mxu0 0.0
  %3372 = vmatprep.subr.mxu0 0.0
  %3373 = vmatpush1.msra.mxu0 0.0
  %3374 = vmatprep.subr.mxu0 0.0
  %3375 = vmatpush1.msra.mxu0 0.0
  %3376 = vmatprep.subr.mxu0 0.0
  %3377 = vmatpush1.msra.mxu0 0.0
  %3378 = vmatprep.subr.mxu0 0.0
  %3379 = vmatpush1.msra.mxu0 0.0
  %3380 = vmatprep.subr.mxu0 0.0
  %3381 = vmatpush1.msra.mxu0 0.0
  %3382 = vmatprep.subr.mxu0 0.0
  %3383 = vmatpush1.msra.mxu0 0.0
  %3384 = vmatprep.subr.mxu0 0.0
  %3385 = vmatpush1.msra.mxu0 0.0
  %3386 = vmatprep.subr.mxu0 0.0
  %3387 = vmatpush1.msra.mxu0 0.0
  %3388 = vmatprep.subr.mxu0 0.0
  %3389 = vmatpush1.msra.mxu0 0.0
  %3390 = vmatprep.subr.mxu0 0.0
  %3391 = vmatpush1.msra.mxu0 0.0
  %3392 = vmatprep.subr.mxu0 0.0
  %3393 = vmatpush1.msra.mxu0 0.0
  %3394 = vmatprep.subr.mxu0 0.0
  %3395 = vmatpush1.msra.mxu0 0.0
  %3396 = vmatprep.subr.mxu0 0.0
  %3397 = vmatpush1.msra.mxu0 0.0
  %3398 = vmatprep.subr.mxu0 0.0
  %3399 = vmatpush1.msra.mxu0 0.0
  %3400 = vmatprep.subr.mxu0 0.0
  %3401 = vmatpush1.msra.mxu0 0.0
  %3402 = vmatprep.subr.mxu0 0.0
  %3403 = vmatpush1.msra.mxu0 0.0
  %3404 = vmatprep.subr.mxu0 0.0
  %3405 = vmatpush1.msra.mxu0 0.0
  %3406 = vmatprep.subr.mxu0 0.0
  %3407 = vmatpush1.msra.mxu0 0.0
  %3408 = vmatprep.subr.mxu0 0.0
  %3409 = vmatpush1.msra.mxu0 0.0
  %3410 = vmatprep.subr.mxu0 0.0
  %3411 = vmatpush1.msra.mxu0 0.0
  %3412 = vmatprep.subr.mxu0 0.0
  %3413 = vmatpush1.msra.mxu0 0.0
  %3414 = vmatprep.subr.mxu0 0.0
  %3415 = vmatpush1.msra.mxu0 0.0
  %3416 = vmatprep.subr.mxu0 0.0
  %3417 = vmatpush1.msra.mxu0 0.0
  %3418 = vmatprep.subr.mxu0 0.0
  %3419 = vmatpush1.msra.mxu0 0.0
  %3420 = vmatprep.subr.mxu0 0.0
  %3421 = vmatpush1.msra.mxu0 0.0
  %3422 = vmatprep.subr.mxu0 0.0
  %3423 = vmatpush1.msra.mxu0 0.0
  %3424 = vmatprep.subr.mxu0 0.0
  %3425 = vmatpush1.msra.mxu0 0.0
  %3426 = vmatprep.mubr.f32.mxu0 0.0
  %3427 = vmatmul.mubr.f32.gmra.mrb[0].mxu0 %v3262
  %v3428 = vpop.f32.mrb[0].mxu0
  %v3429 = vadd.f32 0.0, %v3428
  %v3430 = vpop.f32.mrb[0].mxu0
  %v3431 = vadd.f32 0.0, %v3430
  %3432 = vmatprep.mubr.f32.mxu0 0.0
  %3433 = vmatmul.mubr.f32.gmra.mrb[0].mxu0 %v3265
  %v3434 = vpop.f32.mrb[0].mxu0
  %v3435 = vadd.f32 0.0, %v3434
  %v3436 = vpop.f32.mrb[0].mxu0
  %v3437 = vadd.f32 0.0, %v3436
  %3438 = vmatprep.mubr.f32.mxu0 0.0
  %3439 = vmatmul.mubr.f32.gmra.mrb[0].mxu0 %v3268
  %v3440 = vpop.f32.mrb[0].mxu0
  %v3441 = vadd.f32 0.0, %v3440
  %v3442 = vpop.f32.mrb[0].mxu0
  %v3443 = vadd.f32 0.0, %v3442
  %3444 = vmatprep.mubr.f32.mxu0 0.0
  %3445 = vmatmul.mubr.f32.gmra.mrb[0].mxu0 %v3271
  %v3446 = vpop.f32.mrb[0].mxu0
  %v3447 = vadd.f32 0.0, %v3446
  %v3448 = vpop.f32.mrb[0].mxu0
  %v3449 = vadd.f32 0.0, %v3448
  %3450 = vdwg.mxu0
  %v3451 = vadd.f32 %v3081, %v3340
  %v3452 = vadd.f32 %v3083, %v3342
  %v3453 = vadd.f32 %v3170, %v3429
  %v3454 = vadd.f32 %v3172, %v3431
  %v3455 = vadd.f32 %v3087, %v3346
  %v3456 = vadd.f32 %v3089, %v3348
  %v3457 = vadd.f32 %v3176, %v3435
  %v3458 = vadd.f32 %v3178, %v3437
  %v3459 = vadd.f32 %v3093, %v3352
  %v3460 = vadd.f32 %v3095, %v3354
  %v3461 = vadd.f32 %v3182, %v3441
  %v3462 = vadd.f32 %v3184, %v3443
  %v3463 = vadd.f32 %v3099, %v3358
  %v3464 = vadd.f32 %v3101, %v3360
  %v3465 = vadd.f32 %v3188, %v3447
  %v3466 = vadd.f32 %v3190, %v3449
  %3467 = vrot.lane.b32.xlu0 %v2658, 1
  %v3468 = vpop.permute.xlu0 %3467
  %3469 = vrot.lane.b32.xlu0 %v2662, 1
  %v3470 = vpop.permute.xlu0 %3469
  %3471 = vrot.lane.b32.xlu0 %v2666, 1
  %v3472 = vpop.permute.xlu0 %3471
  %3473 = vrot.lane.b32.xlu0 %v2670, 1
  %v3474 = vpop.permute.xlu0 %3473
  %3475 = vrot.lane.b32.xlu0 %v2659, 1
  %v3476 = vpop.permute.xlu0 %3475
  %3477 = vrot.lane.b32.xlu0 %v2663, 1
  %v3478 = vpop.permute.xlu0 %3477
  %3479 = vrot.lane.b32.xlu0 %v2667, 1
  %v3480 = vpop.permute.xlu0 %3479
  %3481 = vrot.lane.b32.xlu0 %v2671, 1
  %v3482 = vpop.permute.xlu0 %3481
  %3483 = vrot.lane.b32.xlu0 %v2660, 1
  %v3484 = vpop.permute.xlu0 %3483
  %3485 = vrot.lane.b32.xlu0 %v2664, 1
  %v3486 = vpop.permute.xlu0 %3485
  %3487 = vrot.lane.b32.xlu0 %v2668, 1
  %v3488 = vpop.permute.xlu0 %3487
  %3489 = vrot.lane.b32.xlu0 %v2672, 1
  %v3490 = vpop.permute.xlu0 %3489
  %3491 = vrot.lane.b32.xlu0 %v2661, 1
  %v3492 = vpop.permute.xlu0 %3491
  %3493 = vrot.lane.b32.xlu0 %v2665, 1
  %v3494 = vpop.permute.xlu0 %3493
  %3495 = vrot.lane.b32.xlu0 %v2669, 1
  %v3496 = vpop.permute.xlu0 %3495
  %3497 = vrot.lane.b32.xlu0 %v2673, 1
  %v3498 = vpop.permute.xlu0 %3497
  %v3499 = vsel %vm831, %v3484, %v3492
  %v3500 = vsel %vm831, %v3486, %v3494
  %v3501 = vsel %vm831, %v3488, %v3496
  %v3502 = vsel %vm831, %v3490, %v3498
  %v3503 = vsel %vm831, %v3476, %v3484
  %v3504 = vsel %vm831, %v3478, %v3486
  %v3505 = vsel %vm831, %v3480, %v3488
  %v3506 = vsel %vm831, %v3482, %v3490
  %v3507 = vsel %vm831, %v3468, %v3476
  %v3508 = vsel %vm831, %v3470, %v3478
  %v3509 = vsel %vm831, %v3472, %v3480
  %v3510 = vsel %vm831, %v3474, %v3482
  %v3511 = vsel %vm831, %v3492, %v3468
  %v3512 = vsel %vm831, %v3494, %v3470
  %v3513 = vsel %vm831, %v3496, %v3472
  %v3514 = vsel %vm831, %v3498, %v3474
  %v3515 = vmul.f32 %v3511, %v108
  %v3516 = vmul.f32 %v3507, %v109
  %v3517 = vmul.f32 %v3503, %v110
  %v3518 = vmul.f32 %v3499, %v111
  %v3519 = vmul.f32 %v3512, %v108
  %v3520 = vmul.f32 %v3508, %v109
  %v3521 = vmul.f32 %v3504, %v110
  %v3522 = vmul.f32 %v3500, %v111
  %v3523 = vmul.f32 %v3513, %v108
  %v3524 = vmul.f32 %v3509, %v109
  %v3525 = vmul.f32 %v3505, %v110
  %v3526 = vmul.f32 %v3501, %v111
  %v3527 = vmul.f32 %v3514, %v108
  %v3528 = vmul.f32 %v3510, %v109
  %v3529 = vmul.f32 %v3506, %v110
  %v3530 = vmul.f32 %v3502, %v111
  %s3531 = scalar_lea.vmem %s2, 96
  %v3532 = vld [vmem:[%s3531] sm:$0xff]
  %v3533 = vld [vmem:[%s3531 + $0x8] sm:$0xff]
  %v3534 = vld [vmem:[%s3531 + $0x10] sm:$0xff]
  %v3535 = vld [vmem:[%s3531 + $0x18] sm:$0xff]
  %v3537 = vsel %vm2811, %v3532, 0
  %v3540 = vsel %vm2811, %v3533, 0
  %v3543 = vsel %vm2811, %v3534, 0
  %v3546 = vsel %vm2811, %v3535, 0
  %3548 = vmatprep.subr.mxu0 %v3516
  %3549 = vmatpush1.msra.mxu0 %v3515
  %3550 = vmatprep.subr.mxu0 %v3520
  %3551 = vmatpush1.msra.mxu0 %v3519
  %3552 = vmatprep.subr.mxu0 %v3524
  %3553 = vmatpush1.msra.mxu0 %v3523
  %3554 = vmatprep.subr.mxu0 %v3528
  %3555 = vmatpush1.msra.mxu0 %v3527
  %3556 = vmatprep.subr.mxu0 0.0
  %3557 = vmatpush1.msra.mxu0 0.0
  %3558 = vmatprep.subr.mxu0 0.0
  %3559 = vmatpush1.msra.mxu0 0.0
  %3560 = vmatprep.subr.mxu0 0.0
  %3561 = vmatpush1.msra.mxu0 0.0
  %3562 = vmatprep.subr.mxu0 0.0
  %3563 = vmatpush1.msra.mxu0 0.0
  %3564 = vmatprep.subr.mxu0 0.0
  %3565 = vmatpush1.msra.mxu0 0.0
  %3566 = vmatprep.subr.mxu0 0.0
  %3567 = vmatpush1.msra.mxu0 0.0
  %3568 = vmatprep.subr.mxu0 0.0
  %3569 = vmatpush1.msra.mxu0 0.0
  %3570 = vmatprep.subr.mxu0 0.0
  %3571 = vmatpush1.msra.mxu0 0.0
  %3572 = vmatprep.subr.mxu0 0.0
  %3573 = vmatpush1.msra.mxu0 0.0
  %3574 = vmatprep.subr.mxu0 0.0
  %3575 = vmatpush1.msra.mxu0 0.0
  %3576 = vmatprep.subr.mxu0 0.0
  %3577 = vmatpush1.msra.mxu0 0.0
  %3578 = vmatprep.subr.mxu0 0.0
  %3579 = vmatpush1.msra.mxu0 0.0
  %3580 = vmatprep.subr.mxu0 0.0
  %3581 = vmatpush1.msra.mxu0 0.0
  %3582 = vmatprep.subr.mxu0 0.0
  %3583 = vmatpush1.msra.mxu0 0.0
  %3584 = vmatprep.subr.mxu0 0.0
  %3585 = vmatpush1.msra.mxu0 0.0
  %3586 = vmatprep.subr.mxu0 0.0
  %3587 = vmatpush1.msra.mxu0 0.0
  %3588 = vmatprep.subr.mxu0 0.0
  %3589 = vmatpush1.msra.mxu0 0.0
  %3590 = vmatprep.subr.mxu0 0.0
  %3591 = vmatpush1.msra.mxu0 0.0
  %3592 = vmatprep.subr.mxu0 0.0
  %3593 = vmatpush1.msra.mxu0 0.0
  %3594 = vmatprep.subr.mxu0 0.0
  %3595 = vmatpush1.msra.mxu0 0.0
  %3596 = vmatprep.subr.mxu0 0.0
  %3597 = vmatpush1.msra.mxu0 0.0
  %3598 = vmatprep.subr.mxu0 0.0
  %3599 = vmatpush1.msra.mxu0 0.0
  %3600 = vmatprep.subr.mxu0 0.0
  %3601 = vmatpush1.msra.mxu0 0.0
  %3602 = vmatprep.subr.mxu0 0.0
  %3603 = vmatpush1.msra.mxu0 0.0
  %3604 = vmatprep.subr.mxu0 0.0
  %3605 = vmatpush1.msra.mxu0 0.0
  %3606 = vmatprep.subr.mxu0 0.0
  %3607 = vmatpush1.msra.mxu0 0.0
  %3608 = vmatprep.subr.mxu0 0.0
  %3609 = vmatpush1.msra.mxu0 0.0
  %3610 = vmatprep.subr.mxu0 0.0
  %3611 = vmatpush1.msra.mxu0 0.0
  %3612 = vmatprep.mubr.f32.mxu0 0.0
  %3613 = vmatmul.mubr.f32.gmra.mrb[0].mxu0 %v3537
  %v3614 = vpop.f32.mrb[0].mxu0
  %v3615 = vadd.f32 0.0, %v3614
  %v3616 = vpop.f32.mrb[0].mxu0
  %v3617 = vadd.f32 0.0, %v3616
  %3618 = vmatprep.mubr.f32.mxu0 0.0
  %3619 = vmatmul.mubr.f32.gmra.mrb[0].mxu0 %v3540
  %v3620 = vpop.f32.mrb[0].mxu0
  %v3621 = vadd.f32 0.0, %v3620
  %v3622 = vpop.f32.mrb[0].mxu0
  %v3623 = vadd.f32 0.0, %v3622
  %3624 = vmatprep.mubr.f32.mxu0 0.0
  %3625 = vmatmul.mubr.f32.gmra.mrb[0].mxu0 %v3543
  %v3626 = vpop.f32.mrb[0].mxu0
  %v3627 = vadd.f32 0.0, %v3626
  %v3628 = vpop.f32.mrb[0].mxu0
  %v3629 = vadd.f32 0.0, %v3628
  %3630 = vmatprep.mubr.f32.mxu0 0.0
  %3631 = vmatmul.mubr.f32.gmra.mrb[0].mxu0 %v3546
  %v3632 = vpop.f32.mrb[0].mxu0
  %v3633 = vadd.f32 0.0, %v3632
  %v3634 = vpop.f32.mrb[0].mxu0
  %v3635 = vadd.f32 0.0, %v3634
  %3636 = vdwg.mxu0
  %3637 = vmatprep.subr.mxu0 %v3518
  %3638 = vmatpush1.msra.mxu0 %v3517
  %3639 = vmatprep.subr.mxu0 %v3522
  %3640 = vmatpush1.msra.mxu0 %v3521
  %3641 = vmatprep.subr.mxu0 %v3526
  %3642 = vmatpush1.msra.mxu0 %v3525
  %3643 = vmatprep.subr.mxu0 %v3530
  %3644 = vmatpush1.msra.mxu0 %v3529
  %3645 = vmatprep.subr.mxu0 0.0
  %3646 = vmatpush1.msra.mxu0 0.0
  %3647 = vmatprep.subr.mxu0 0.0
  %3648 = vmatpush1.msra.mxu0 0.0
  %3649 = vmatprep.subr.mxu0 0.0
  %3650 = vmatpush1.msra.mxu0 0.0
  %3651 = vmatprep.subr.mxu0 0.0
  %3652 = vmatpush1.msra.mxu0 0.0
  %3653 = vmatprep.subr.mxu0 0.0
  %3654 = vmatpush1.msra.mxu0 0.0
  %3655 = vmatprep.subr.mxu0 0.0
  %3656 = vmatpush1.msra.mxu0 0.0
  %3657 = vmatprep.subr.mxu0 0.0
  %3658 = vmatpush1.msra.mxu0 0.0
  %3659 = vmatprep.subr.mxu0 0.0
  %3660 = vmatpush1.msra.mxu0 0.0
  %3661 = vmatprep.subr.mxu0 0.0
  %3662 = vmatpush1.msra.mxu0 0.0
  %3663 = vmatprep.subr.mxu0 0.0
  %3664 = vmatpush1.msra.mxu0 0.0
  %3665 = vmatprep.subr.mxu0 0.0
  %3666 = vmatpush1.msra.mxu0 0.0
  %3667 = vmatprep.subr.mxu0 0.0
  %3668 = vmatpush1.msra.mxu0 0.0
  %3669 = vmatprep.subr.mxu0 0.0
  %3670 = vmatpush1.msra.mxu0 0.0
  %3671 = vmatprep.subr.mxu0 0.0
  %3672 = vmatpush1.msra.mxu0 0.0
  %3673 = vmatprep.subr.mxu0 0.0
  %3674 = vmatpush1.msra.mxu0 0.0
  %3675 = vmatprep.subr.mxu0 0.0
  %3676 = vmatpush1.msra.mxu0 0.0
  %3677 = vmatprep.subr.mxu0 0.0
  %3678 = vmatpush1.msra.mxu0 0.0
  %3679 = vmatprep.subr.mxu0 0.0
  %3680 = vmatpush1.msra.mxu0 0.0
  %3681 = vmatprep.subr.mxu0 0.0
  %3682 = vmatpush1.msra.mxu0 0.0
  %3683 = vmatprep.subr.mxu0 0.0
  %3684 = vmatpush1.msra.mxu0 0.0
  %3685 = vmatprep.subr.mxu0 0.0
  %3686 = vmatpush1.msra.mxu0 0.0
  %3687 = vmatprep.subr.mxu0 0.0
  %3688 = vmatpush1.msra.mxu0 0.0
  %3689 = vmatprep.subr.mxu0 0.0
  %3690 = vmatpush1.msra.mxu0 0.0
  %3691 = vmatprep.subr.mxu0 0.0
  %3692 = vmatpush1.msra.mxu0 0.0
  %3693 = vmatprep.subr.mxu0 0.0
  %3694 = vmatpush1.msra.mxu0 0.0
  %3695 = vmatprep.subr.mxu0 0.0
  %3696 = vmatpush1.msra.mxu0 0.0
  %3697 = vmatprep.subr.mxu0 0.0
  %3698 = vmatpush1.msra.mxu0 0.0
  %3699 = vmatprep.subr.mxu0 0.0
  %3700 = vmatpush1.msra.mxu0 0.0
  %3701 = vmatprep.mubr.f32.mxu0 0.0
  %3702 = vmatmul.mubr.f32.gmra.mrb[0].mxu0 %v3537
  %v3703 = vpop.f32.mrb[0].mxu0
  %v3704 = vadd.f32 0.0, %v3703
  %v3705 = vpop.f32.mrb[0].mxu0
  %v3706 = vadd.f32 0.0, %v3705
  %3707 = vmatprep.mubr.f32.mxu0 0.0
  %3708 = vmatmul.mubr.f32.gmra.mrb[0].mxu0 %v3540
  %v3709 = vpop.f32.mrb[0].mxu0
  %v3710 = vadd.f32 0.0, %v3709
  %v3711 = vpop.f32.mrb[0].mxu0
  %v3712 = vadd.f32 0.0, %v3711
  %3713 = vmatprep.mubr.f32.mxu0 0.0
  %3714 = vmatmul.mubr.f32.gmra.mrb[0].mxu0 %v3543
  %v3715 = vpop.f32.mrb[0].mxu0
  %v3716 = vadd.f32 0.0, %v3715
  %v3717 = vpop.f32.mrb[0].mxu0
  %v3718 = vadd.f32 0.0, %v3717
  %3719 = vmatprep.mubr.f32.mxu0 0.0
  %3720 = vmatmul.mubr.f32.gmra.mrb[0].mxu0 %v3546
  %v3721 = vpop.f32.mrb[0].mxu0
  %v3722 = vadd.f32 0.0, %v3721
  %v3723 = vpop.f32.mrb[0].mxu0
  %v3724 = vadd.f32 0.0, %v3723
  %3725 = vdwg.mxu0
  %v3726 = vadd.f32 %v3451, %v3615
  %v3727 = vadd.f32 %v3452, %v3617
  %v3728 = vadd.f32 %v3453, %v3704
  %v3729 = vadd.f32 %v3454, %v3706
  %v3730 = vadd.f32 %v3455, %v3621
  %v3731 = vadd.f32 %v3456, %v3623
  %v3732 = vadd.f32 %v3457, %v3710
  %v3733 = vadd.f32 %v3458, %v3712
  %v3734 = vadd.f32 %v3459, %v3627
  %v3735 = vadd.f32 %v3460, %v3629
  %v3736 = vadd.f32 %v3461, %v3716
  %v3737 = vadd.f32 %v3462, %v3718
  %v3738 = vadd.f32 %v3463, %v3633
  %v3739 = vadd.f32 %v3464, %v3635
  %v3740 = vadd.f32 %v3465, %v3722
  %v3741 = vadd.f32 %v3466, %v3724
  %s3742 = scalar_lea.vmem %s2, 128
  %v3743 = vld [vmem:[%s3742] sm:$0xff]
  %v3744 = vld [vmem:[%s3742 + $0x8] sm:$0xff]
  %v3745 = vld [vmem:[%s3742 + $0x10] sm:$0xff]
  %v3746 = vld [vmem:[%s3742 + $0x18] sm:$0xff]
  %v3748 = vsel %vm2811, %v3743, 0
  %v3751 = vsel %vm2811, %v3744, 0
  %v3754 = vsel %vm2811, %v3745, 0
  %v3757 = vsel %vm2811, %v3746, 0
  %3759 = vmatprep.subr.mxu0 %v2659
  %3760 = vmatpush1.msra.mxu0 %v2658
  %3761 = vmatprep.subr.mxu0 %v2663
  %3762 = vmatpush1.msra.mxu0 %v2662
  %3763 = vmatprep.subr.mxu0 %v2667
  %3764 = vmatpush1.msra.mxu0 %v2666
  %3765 = vmatprep.subr.mxu0 %v2671
  %3766 = vmatpush1.msra.mxu0 %v2670
  %3767 = vmatprep.subr.mxu0 0.0
  %3768 = vmatpush1.msra.mxu0 0.0
  %3769 = vmatprep.subr.mxu0 0.0
  %3770 = vmatpush1.msra.mxu0 0.0
  %3771 = vmatprep.subr.mxu0 0.0
  %3772 = vmatpush1.msra.mxu0 0.0
  %3773 = vmatprep.subr.mxu0 0.0
  %3774 = vmatpush1.msra.mxu0 0.0
  %3775 = vmatprep.subr.mxu0 0.0
  %3776 = vmatpush1.msra.mxu0 0.0
  %3777 = vmatprep.subr.mxu0 0.0
  %3778 = vmatpush1.msra.mxu0 0.0
  %3779 = vmatprep.subr.mxu0 0.0
  %3780 = vmatpush1.msra.mxu0 0.0
  %3781 = vmatprep.subr.mxu0 0.0
  %3782 = vmatpush1.msra.mxu0 0.0
  %3783 = vmatprep.subr.mxu0 0.0
  %3784 = vmatpush1.msra.mxu0 0.0
  %3785 = vmatprep.subr.mxu0 0.0
  %3786 = vmatpush1.msra.mxu0 0.0
  %3787 = vmatprep.subr.mxu0 0.0
  %3788 = vmatpush1.msra.mxu0 0.0
  %3789 = vmatprep.subr.mxu0 0.0
  %3790 = vmatpush1.msra.mxu0 0.0
  %3791 = vmatprep.subr.mxu0 0.0
  %3792 = vmatpush1.msra.mxu0 0.0
  %3793 = vmatprep.subr.mxu0 0.0
  %3794 = vmatpush1.msra.mxu0 0.0
  %3795 = vmatprep.subr.mxu0 0.0
  %3796 = vmatpush1.msra.mxu0 0.0
  %3797 = vmatprep.subr.mxu0 0.0
  %3798 = vmatpush1.msra.mxu0 0.0
  %3799 = vmatprep.subr.mxu0 0.0
  %3800 = vmatpush1.msra.mxu0 0.0
  %3801 = vmatprep.subr.mxu0 0.0
  %3802 = vmatpush1.msra.mxu0 0.0
  %3803 = vmatprep.subr.mxu0 0.0
  %3804 = vmatpush1.msra.mxu0 0.0
  %3805 = vmatprep.subr.mxu0 0.0
  %3806 = vmatpush1.msra.mxu0 0.0
  %3807 = vmatprep.subr.mxu0 0.0
  %3808 = vmatpush1.msra.mxu0 0.0
  %3809 = vmatprep.subr.mxu0 0.0
  %3810 = vmatpush1.msra.mxu0 0.0
  %3811 = vmatprep.subr.mxu0 0.0
  %3812 = vmatpush1.msra.mxu0 0.0
  %3813 = vmatprep.subr.mxu0 0.0
  %3814 = vmatpush1.msra.mxu0 0.0
  %3815 = vmatprep.subr.mxu0 0.0
  %3816 = vmatpush1.msra.mxu0 0.0
  %3817 = vmatprep.subr.mxu0 0.0
  %3818 = vmatpush1.msra.mxu0 0.0
  %3819 = vmatprep.subr.mxu0 0.0
  %3820 = vmatpush1.msra.mxu0 0.0
  %3821 = vmatprep.subr.mxu0 0.0
  %3822 = vmatpush1.msra.mxu0 0.0
  %3823 = vmatprep.mubr.f32.mxu0 0.0
  %3824 = vmatmul.mubr.f32.gmra.mrb[0].mxu0 %v3748
  %v3825 = vpop.f32.mrb[0].mxu0
  %v3826 = vadd.f32 0.0, %v3825
  %v3827 = vpop.f32.mrb[0].mxu0
  %v3828 = vadd.f32 0.0, %v3827
  %3829 = vmatprep.mubr.f32.mxu0 0.0
  %3830 = vmatmul.mubr.f32.gmra.mrb[0].mxu0 %v3751
  %v3831 = vpop.f32.mrb[0].mxu0
  %v3832 = vadd.f32 0.0, %v3831
  %v3833 = vpop.f32.mrb[0].mxu0
  %v3834 = vadd.f32 0.0, %v3833
  %3835 = vmatprep.mubr.f32.mxu0 0.0
  %3836 = vmatmul.mubr.f32.gmra.mrb[0].mxu0 %v3754
  %v3837 = vpop.f32.mrb[0].mxu0
  %v3838 = vadd.f32 0.0, %v3837
  %v3839 = vpop.f32.mrb[0].mxu0
  %v3840 = vadd.f32 0.0, %v3839
  %3841 = vmatprep.mubr.f32.mxu0 0.0
  %3842 = vmatmul.mubr.f32.gmra.mrb[0].mxu0 %v3757
  %v3843 = vpop.f32.mrb[0].mxu0
  %v3844 = vadd.f32 0.0, %v3843
  %v3845 = vpop.f32.mrb[0].mxu0
  %v3846 = vadd.f32 0.0, %v3845
  %3847 = vdwg.mxu0
  %3848 = vmatprep.subr.mxu0 %v2661
  %3849 = vmatpush1.msra.mxu0 %v2660
  %3850 = vmatprep.subr.mxu0 %v2665
  %3851 = vmatpush1.msra.mxu0 %v2664
  %3852 = vmatprep.subr.mxu0 %v2669
  %3853 = vmatpush1.msra.mxu0 %v2668
  %3854 = vmatprep.subr.mxu0 %v2673
  %3855 = vmatpush1.msra.mxu0 %v2672
  %3856 = vmatprep.subr.mxu0 0.0
  %3857 = vmatpush1.msra.mxu0 0.0
  %3858 = vmatprep.subr.mxu0 0.0
  %3859 = vmatpush1.msra.mxu0 0.0
  %3860 = vmatprep.subr.mxu0 0.0
  %3861 = vmatpush1.msra.mxu0 0.0
  %3862 = vmatprep.subr.mxu0 0.0
  %3863 = vmatpush1.msra.mxu0 0.0
  %3864 = vmatprep.subr.mxu0 0.0
  %3865 = vmatpush1.msra.mxu0 0.0
  %3866 = vmatprep.subr.mxu0 0.0
  %3867 = vmatpush1.msra.mxu0 0.0
  %3868 = vmatprep.subr.mxu0 0.0
  %3869 = vmatpush1.msra.mxu0 0.0
  %3870 = vmatprep.subr.mxu0 0.0
  %3871 = vmatpush1.msra.mxu0 0.0
  %3872 = vmatprep.subr.mxu0 0.0
  %3873 = vmatpush1.msra.mxu0 0.0
  %3874 = vmatprep.subr.mxu0 0.0
  %3875 = vmatpush1.msra.mxu0 0.0
  %3876 = vmatprep.subr.mxu0 0.0
  %3877 = vmatpush1.msra.mxu0 0.0
  %3878 = vmatprep.subr.mxu0 0.0
  %3879 = vmatpush1.msra.mxu0 0.0
  %3880 = vmatprep.subr.mxu0 0.0
  %3881 = vmatpush1.msra.mxu0 0.0
  %3882 = vmatprep.subr.mxu0 0.0
  %3883 = vmatpush1.msra.mxu0 0.0
  %3884 = vmatprep.subr.mxu0 0.0
  %3885 = vmatpush1.msra.mxu0 0.0
  %3886 = vmatprep.subr.mxu0 0.0
  %3887 = vmatpush1.msra.mxu0 0.0
  %3888 = vmatprep.subr.mxu0 0.0
  %3889 = vmatpush1.msra.mxu0 0.0
  %3890 = vmatprep.subr.mxu0 0.0
  %3891 = vmatpush1.msra.mxu0 0.0
  %3892 = vmatprep.subr.mxu0 0.0
  %3893 = vmatpush1.msra.mxu0 0.0
  %3894 = vmatprep.subr.mxu0 0.0
  %3895 = vmatpush1.msra.mxu0 0.0
  %3896 = vmatprep.subr.mxu0 0.0
  %3897 = vmatpush1.msra.mxu0 0.0
  %3898 = vmatprep.subr.mxu0 0.0
  %3899 = vmatpush1.msra.mxu0 0.0
  %3900 = vmatprep.subr.mxu0 0.0
  %3901 = vmatpush1.msra.mxu0 0.0
  %3902 = vmatprep.subr.mxu0 0.0
  %3903 = vmatpush1.msra.mxu0 0.0
  %3904 = vmatprep.subr.mxu0 0.0
  %3905 = vmatpush1.msra.mxu0 0.0
  %3906 = vmatprep.subr.mxu0 0.0
  %3907 = vmatpush1.msra.mxu0 0.0
  %3908 = vmatprep.subr.mxu0 0.0
  %3909 = vmatpush1.msra.mxu0 0.0
  %3910 = vmatprep.subr.mxu0 0.0
  %3911 = vmatpush1.msra.mxu0 0.0
  %3912 = vmatprep.mubr.f32.mxu0 0.0
  %3913 = vmatmul.mubr.f32.gmra.mrb[0].mxu0 %v3748
  %v3914 = vpop.f32.mrb[0].mxu0
  %v3915 = vadd.f32 0.0, %v3914
  %v3916 = vpop.f32.mrb[0].mxu0
  %v3917 = vadd.f32 0.0, %v3916
  %3918 = vmatprep.mubr.f32.mxu0 0.0
  %3919 = vmatmul.mubr.f32.gmra.mrb[0].mxu0 %v3751
  %v3920 = vpop.f32.mrb[0].mxu0
  %v3921 = vadd.f32 0.0, %v3920
  %v3922 = vpop.f32.mrb[0].mxu0
  %v3923 = vadd.f32 0.0, %v3922
  %3924 = vmatprep.mubr.f32.mxu0 0.0
  %3925 = vmatmul.mubr.f32.gmra.mrb[0].mxu0 %v3754
  %v3926 = vpop.f32.mrb[0].mxu0
  %v3927 = vadd.f32 0.0, %v3926
  %v3928 = vpop.f32.mrb[0].mxu0
  %v3929 = vadd.f32 0.0, %v3928
  %3930 = vmatprep.mubr.f32.mxu0 0.0
  %3931 = vmatmul.mubr.f32.gmra.mrb[0].mxu0 %v3757
  %v3932 = vpop.f32.mrb[0].mxu0
  %v3933 = vadd.f32 0.0, %v3932
  %v3934 = vpop.f32.mrb[0].mxu0
  %v3935 = vadd.f32 0.0, %v3934
  %3936 = vdwg.mxu0
  %v3937 = vadd.f32 %v3726, %v3826
  %v3938 = vadd.f32 %v3727, %v3828
  %v3939 = vadd.f32 %v3728, %v3915
  %v3940 = vadd.f32 %v3729, %v3917
  %v3941 = vadd.f32 %v3730, %v3832
  %v3942 = vadd.f32 %v3731, %v3834
  %v3943 = vadd.f32 %v3732, %v3921
  %v3944 = vadd.f32 %v3733, %v3923
  %v3945 = vadd.f32 %v3734, %v3838
  %v3946 = vadd.f32 %v3735, %v3840
  %v3947 = vadd.f32 %v3736, %v3927
  %v3948 = vadd.f32 %v3737, %v3929
  %v3949 = vadd.f32 %v3738, %v3844
  %v3950 = vadd.f32 %v3739, %v3846
  %v3951 = vadd.f32 %v3740, %v3933
  %v3952 = vadd.f32 %v3741, %v3935
  %3953 = vrot.lane.b32.xlu0 %v2658, 127
  %v3954 = vpop.permute.xlu0 %3953
  %3955 = vrot.lane.b32.xlu0 %v2662, 127
  %v3956 = vpop.permute.xlu0 %3955
  %3957 = vrot.lane.b32.xlu0 %v2666, 127
  %v3958 = vpop.permute.xlu0 %3957
  %3959 = vrot.lane.b32.xlu0 %v2670, 127
  %v3960 = vpop.permute.xlu0 %3959
  %3961 = vrot.lane.b32.xlu0 %v2659, 127
  %v3962 = vpop.permute.xlu0 %3961
  %3963 = vrot.lane.b32.xlu0 %v2663, 127
  %v3964 = vpop.permute.xlu0 %3963
  %3965 = vrot.lane.b32.xlu0 %v2667, 127
  %v3966 = vpop.permute.xlu0 %3965
  %3967 = vrot.lane.b32.xlu0 %v2671, 127
  %v3968 = vpop.permute.xlu0 %3967
  %3969 = vrot.lane.b32.xlu0 %v2660, 127
  %v3970 = vpop.permute.xlu0 %3969
  %3971 = vrot.lane.b32.xlu0 %v2664, 127
  %v3972 = vpop.permute.xlu0 %3971
  %3973 = vrot.lane.b32.xlu0 %v2668, 127
  %v3974 = vpop.permute.xlu0 %3973
  %3975 = vrot.lane.b32.xlu0 %v2672, 127
  %v3976 = vpop.permute.xlu0 %3975
  %3977 = vrot.lane.b32.xlu0 %v2661, 127
  %v3978 = vpop.permute.xlu0 %3977
  %3979 = vrot.lane.b32.xlu0 %v2665, 127
  %v3980 = vpop.permute.xlu0 %3979
  %3981 = vrot.lane.b32.xlu0 %v2669, 127
  %v3982 = vpop.permute.xlu0 %3981
  %3983 = vrot.lane.b32.xlu0 %v2673, 127
  %v3984 = vpop.permute.xlu0 %3983
  %v3985 = vsel %vm1270, %v3970, %v3978
  %v3986 = vsel %vm1270, %v3972, %v3980
  %v3987 = vsel %vm1270, %v3974, %v3982
  %v3988 = vsel %vm1270, %v3976, %v3984
  %v3989 = vsel %vm1270, %v3962, %v3970
  %v3990 = vsel %vm1270, %v3964, %v3972
  %v3991 = vsel %vm1270, %v3966, %v3974
  %v3992 = vsel %vm1270, %v3968, %v3976
  %v3993 = vsel %vm1270, %v3954, %v3962
  %v3994 = vsel %vm1270, %v3956, %v3964
  %v3995 = vsel %vm1270, %v3958, %v3966
  %v3996 = vsel %vm1270, %v3960, %v3968
  %v3997 = vsel %vm1270, %v3978, %v3954
  %v3998 = vsel %vm1270, %v3980, %v3956
  %v3999 = vsel %vm1270, %v3982, %v3958
  %v4000 = vsel %vm1270, %v3984, %v3960
  %v4001 = vmul.f32 %v3993, %v132
  %v4002 = vmul.f32 %v3989, %v133
  %v4003 = vmul.f32 %v3985, %v134
  %v4004 = vmul.f32 %v3997, %v135
  %v4005 = vmul.f32 %v3994, %v132
  %v4006 = vmul.f32 %v3990, %v133
  %v4007 = vmul.f32 %v3986, %v134
  %v4008 = vmul.f32 %v3998, %v135
  %v4009 = vmul.f32 %v3995, %v132
  %v4010 = vmul.f32 %v3991, %v133
  %v4011 = vmul.f32 %v3987, %v134
  %v4012 = vmul.f32 %v3999, %v135
  %v4013 = vmul.f32 %v3996, %v132
  %v4014 = vmul.f32 %v3992, %v133
  %v4015 = vmul.f32 %v3988, %v134
  %v4016 = vmul.f32 %v4000, %v135
  %s4017 = scalar_lea.vmem %s2, 160
  %v4018 = vld [vmem:[%s4017] sm:$0xff]
  %v4019 = vld [vmem:[%s4017 + $0x8] sm:$0xff]
  %v4020 = vld [vmem:[%s4017 + $0x10] sm:$0xff]
  %v4021 = vld [vmem:[%s4017 + $0x18] sm:$0xff]
  %v4023 = vsel %vm2811, %v4018, 0
  %v4026 = vsel %vm2811, %v4019, 0
  %v4029 = vsel %vm2811, %v4020, 0
  %v4032 = vsel %vm2811, %v4021, 0
  %4034 = vmatprep.subr.mxu0 %v4002
  %4035 = vmatpush1.msra.mxu0 %v4001
  %4036 = vmatprep.subr.mxu0 %v4006
  %4037 = vmatpush1.msra.mxu0 %v4005
  %4038 = vmatprep.subr.mxu0 %v4010
  %4039 = vmatpush1.msra.mxu0 %v4009
  %4040 = vmatprep.subr.mxu0 %v4014
  %4041 = vmatpush1.msra.mxu0 %v4013
  %4042 = vmatprep.subr.mxu0 0.0
  %4043 = vmatpush1.msra.mxu0 0.0
  %4044 = vmatprep.subr.mxu0 0.0
  %4045 = vmatpush1.msra.mxu0 0.0
  %4046 = vmatprep.subr.mxu0 0.0
  %4047 = vmatpush1.msra.mxu0 0.0
  %4048 = vmatprep.subr.mxu0 0.0
  %4049 = vmatpush1.msra.mxu0 0.0
  %4050 = vmatprep.subr.mxu0 0.0
  %4051 = vmatpush1.msra.mxu0 0.0
  %4052 = vmatprep.subr.mxu0 0.0
  %4053 = vmatpush1.msra.mxu0 0.0
  %4054 = vmatprep.subr.mxu0 0.0
  %4055 = vmatpush1.msra.mxu0 0.0
  %4056 = vmatprep.subr.mxu0 0.0
  %4057 = vmatpush1.msra.mxu0 0.0
  %4058 = vmatprep.subr.mxu0 0.0
  %4059 = vmatpush1.msra.mxu0 0.0
  %4060 = vmatprep.subr.mxu0 0.0
  %4061 = vmatpush1.msra.mxu0 0.0
  %4062 = vmatprep.subr.mxu0 0.0
  %4063 = vmatpush1.msra.mxu0 0.0
  %4064 = vmatprep.subr.mxu0 0.0
  %4065 = vmatpush1.msra.mxu0 0.0
  %4066 = vmatprep.subr.mxu0 0.0
  %4067 = vmatpush1.msra.mxu0 0.0
  %4068 = vmatprep.subr.mxu0 0.0
  %4069 = vmatpush1.msra.mxu0 0.0
  %4070 = vmatprep.subr.mxu0 0.0
  %4071 = vmatpush1.msra.mxu0 0.0
  %4072 = vmatprep.subr.mxu0 0.0
  %4073 = vmatpush1.msra.mxu0 0.0
  %4074 = vmatprep.subr.mxu0 0.0
  %4075 = vmatpush1.msra.mxu0 0.0
  %4076 = vmatprep.subr.mxu0 0.0
  %4077 = vmatpush1.msra.mxu0 0.0
  %4078 = vmatprep.subr.mxu0 0.0
  %4079 = vmatpush1.msra.mxu0 0.0
  %4080 = vmatprep.subr.mxu0 0.0
  %4081 = vmatpush1.msra.mxu0 0.0
  %4082 = vmatprep.subr.mxu0 0.0
  %4083 = vmatpush1.msra.mxu0 0.0
  %4084 = vmatprep.subr.mxu0 0.0
  %4085 = vmatpush1.msra.mxu0 0.0
  %4086 = vmatprep.subr.mxu0 0.0
  %4087 = vmatpush1.msra.mxu0 0.0
  %4088 = vmatprep.subr.mxu0 0.0
  %4089 = vmatpush1.msra.mxu0 0.0
  %4090 = vmatprep.subr.mxu0 0.0
  %4091 = vmatpush1.msra.mxu0 0.0
  %4092 = vmatprep.subr.mxu0 0.0
  %4093 = vmatpush1.msra.mxu0 0.0
  %4094 = vmatprep.subr.mxu0 0.0
  %4095 = vmatpush1.msra.mxu0 0.0
  %4096 = vmatprep.subr.mxu0 0.0
  %4097 = vmatpush1.msra.mxu0 0.0
  %4098 = vmatprep.mubr.f32.mxu0 0.0
  %4099 = vmatmul.mubr.f32.gmra.mrb[0].mxu0 %v4023
  %v4100 = vpop.f32.mrb[0].mxu0
  %v4101 = vadd.f32 0.0, %v4100
  %v4102 = vpop.f32.mrb[0].mxu0
  %v4103 = vadd.f32 0.0, %v4102
  %4104 = vmatprep.mubr.f32.mxu0 0.0
  %4105 = vmatmul.mubr.f32.gmra.mrb[0].mxu0 %v4026
  %v4106 = vpop.f32.mrb[0].mxu0
  %v4107 = vadd.f32 0.0, %v4106
  %v4108 = vpop.f32.mrb[0].mxu0
  %v4109 = vadd.f32 0.0, %v4108
  %4110 = vmatprep.mubr.f32.mxu0 0.0
  %4111 = vmatmul.mubr.f32.gmra.mrb[0].mxu0 %v4029
  %v4112 = vpop.f32.mrb[0].mxu0
  %v4113 = vadd.f32 0.0, %v4112
  %v4114 = vpop.f32.mrb[0].mxu0
  %v4115 = vadd.f32 0.0, %v4114
  %4116 = vmatprep.mubr.f32.mxu0 0.0
  %4117 = vmatmul.mubr.f32.gmra.mrb[0].mxu0 %v4032
  %v4118 = vpop.f32.mrb[0].mxu0
  %v4119 = vadd.f32 0.0, %v4118
  %v4120 = vpop.f32.mrb[0].mxu0
  %v4121 = vadd.f32 0.0, %v4120
  %4122 = vdwg.mxu0
  %4123 = vmatprep.subr.mxu0 %v4004
  %4124 = vmatpush1.msra.mxu0 %v4003
  %4125 = vmatprep.subr.mxu0 %v4008
  %4126 = vmatpush1.msra.mxu0 %v4007
  %4127 = vmatprep.subr.mxu0 %v4012
  %4128 = vmatpush1.msra.mxu0 %v4011
  %4129 = vmatprep.subr.mxu0 %v4016
  %4130 = vmatpush1.msra.mxu0 %v4015
  %4131 = vmatprep.subr.mxu0 0.0
  %4132 = vmatpush1.msra.mxu0 0.0
  %4133 = vmatprep.subr.mxu0 0.0
  %4134 = vmatpush1.msra.mxu0 0.0
  %4135 = vmatprep.subr.mxu0 0.0
  %4136 = vmatpush1.msra.mxu0 0.0
  %4137 = vmatprep.subr.mxu0 0.0
  %4138 = vmatpush1.msra.mxu0 0.0
  %4139 = vmatprep.subr.mxu0 0.0
  %4140 = vmatpush1.msra.mxu0 0.0
  %4141 = vmatprep.subr.mxu0 0.0
  %4142 = vmatpush1.msra.mxu0 0.0
  %4143 = vmatprep.subr.mxu0 0.0
  %4144 = vmatpush1.msra.mxu0 0.0
  %4145 = vmatprep.subr.mxu0 0.0
  %4146 = vmatpush1.msra.mxu0 0.0
  %4147 = vmatprep.subr.mxu0 0.0
  %4148 = vmatpush1.msra.mxu0 0.0
  %4149 = vmatprep.subr.mxu0 0.0
  %4150 = vmatpush1.msra.mxu0 0.0
  %4151 = vmatprep.subr.mxu0 0.0
  %4152 = vmatpush1.msra.mxu0 0.0
  %4153 = vmatprep.subr.mxu0 0.0
  %4154 = vmatpush1.msra.mxu0 0.0
  %4155 = vmatprep.subr.mxu0 0.0
  %4156 = vmatpush1.msra.mxu0 0.0
  %4157 = vmatprep.subr.mxu0 0.0
  %4158 = vmatpush1.msra.mxu0 0.0
  %4159 = vmatprep.subr.mxu0 0.0
  %4160 = vmatpush1.msra.mxu0 0.0
  %4161 = vmatprep.subr.mxu0 0.0
  %4162 = vmatpush1.msra.mxu0 0.0
  %4163 = vmatprep.subr.mxu0 0.0
  %4164 = vmatpush1.msra.mxu0 0.0
  %4165 = vmatprep.subr.mxu0 0.0
  %4166 = vmatpush1.msra.mxu0 0.0
  %4167 = vmatprep.subr.mxu0 0.0
  %4168 = vmatpush1.msra.mxu0 0.0
  %4169 = vmatprep.subr.mxu0 0.0
  %4170 = vmatpush1.msra.mxu0 0.0
  %4171 = vmatprep.subr.mxu0 0.0
  %4172 = vmatpush1.msra.mxu0 0.0
  %4173 = vmatprep.subr.mxu0 0.0
  %4174 = vmatpush1.msra.mxu0 0.0
  %4175 = vmatprep.subr.mxu0 0.0
  %4176 = vmatpush1.msra.mxu0 0.0
  %4177 = vmatprep.subr.mxu0 0.0
  %4178 = vmatpush1.msra.mxu0 0.0
  %4179 = vmatprep.subr.mxu0 0.0
  %4180 = vmatpush1.msra.mxu0 0.0
  %4181 = vmatprep.subr.mxu0 0.0
  %4182 = vmatpush1.msra.mxu0 0.0
  %4183 = vmatprep.subr.mxu0 0.0
  %4184 = vmatpush1.msra.mxu0 0.0
  %4185 = vmatprep.subr.mxu0 0.0
  %4186 = vmatpush1.msra.mxu0 0.0
  %4187 = vmatprep.mubr.f32.mxu0 0.0
  %4188 = vmatmul.mubr.f32.gmra.mrb[0].mxu0 %v4023
  %v4189 = vpop.f32.mrb[0].mxu0
  %v4190 = vadd.f32 0.0, %v4189
  %v4191 = vpop.f32.mrb[0].mxu0
  %v4192 = vadd.f32 0.0, %v4191
  %4193 = vmatprep.mubr.f32.mxu0 0.0
  %4194 = vmatmul.mubr.f32.gmra.mrb[0].mxu0 %v4026
  %v4195 = vpop.f32.mrb[0].mxu0
  %v4196 = vadd.f32 0.0, %v4195
  %v4197 = vpop.f32.mrb[0].mxu0
  %v4198 = vadd.f32 0.0, %v4197
  %4199 = vmatprep.mubr.f32.mxu0 0.0
  %4200 = vmatmul.mubr.f32.gmra.mrb[0].mxu0 %v4029
  %v4201 = vpop.f32.mrb[0].mxu0
  %v4202 = vadd.f32 0.0, %v4201
  %v4203 = vpop.f32.mrb[0].mxu0
  %v4204 = vadd.f32 0.0, %v4203
  %4205 = vmatprep.mubr.f32.mxu0 0.0
  %4206 = vmatmul.mubr.f32.gmra.mrb[0].mxu0 %v4032
  %v4207 = vpop.f32.mrb[0].mxu0
  %v4208 = vadd.f32 0.0, %v4207
  %v4209 = vpop.f32.mrb[0].mxu0
  %v4210 = vadd.f32 0.0, %v4209
  %4211 = vdwg.mxu0
  %v4212 = vadd.f32 %v3937, %v4101
  %v4213 = vadd.f32 %v3938, %v4103
  %v4214 = vadd.f32 %v3939, %v4190
  %v4215 = vadd.f32 %v3940, %v4192
  %v4216 = vadd.f32 %v3941, %v4107
  %v4217 = vadd.f32 %v3942, %v4109
  %v4218 = vadd.f32 %v3943, %v4196
  %v4219 = vadd.f32 %v3944, %v4198
  %v4220 = vadd.f32 %v3945, %v4113
  %v4221 = vadd.f32 %v3946, %v4115
  %v4222 = vadd.f32 %v3947, %v4202
  %v4223 = vadd.f32 %v3948, %v4204
  %v4224 = vadd.f32 %v3949, %v4119
  %v4225 = vadd.f32 %v3950, %v4121
  %v4226 = vadd.f32 %v3951, %v4208
  %v4227 = vadd.f32 %v3952, %v4210
  %4228 = vrot.lane.b32.xlu0 %v2658, 113
  %v4229 = vpop.permute.xlu0 %4228
  %4230 = vrot.lane.b32.xlu0 %v2662, 113
  %v4231 = vpop.permute.xlu0 %4230
  %4232 = vrot.lane.b32.xlu0 %v2666, 113
  %v4233 = vpop.permute.xlu0 %4232
  %4234 = vrot.lane.b32.xlu0 %v2670, 113
  %v4235 = vpop.permute.xlu0 %4234
  %4236 = vrot.lane.b32.xlu0 %v2659, 113
  %v4237 = vpop.permute.xlu0 %4236
  %4238 = vrot.lane.b32.xlu0 %v2663, 113
  %v4239 = vpop.permute.xlu0 %4238
  %4240 = vrot.lane.b32.xlu0 %v2667, 113
  %v4241 = vpop.permute.xlu0 %4240
  %4242 = vrot.lane.b32.xlu0 %v2671, 113
  %v4243 = vpop.permute.xlu0 %4242
  %4244 = vrot.lane.b32.xlu0 %v2660, 113
  %v4245 = vpop.permute.xlu0 %4244
  %4246 = vrot.lane.b32.xlu0 %v2664, 113
  %v4247 = vpop.permute.xlu0 %4246
  %4248 = vrot.lane.b32.xlu0 %v2668, 113
  %v4249 = vpop.permute.xlu0 %4248
  %4250 = vrot.lane.b32.xlu0 %v2672, 113
  %v4251 = vpop.permute.xlu0 %4250
  %4252 = vrot.lane.b32.xlu0 %v2661, 113
  %v4253 = vpop.permute.xlu0 %4252
  %4254 = vrot.lane.b32.xlu0 %v2665, 113
  %v4255 = vpop.permute.xlu0 %4254
  %4256 = vrot.lane.b32.xlu0 %v2669, 113
  %v4257 = vpop.permute.xlu0 %4256
  %4258 = vrot.lane.b32.xlu0 %v2673, 113
  %v4259 = vpop.permute.xlu0 %4258
  %v4260 = vsel %vm1498, %v4245, %v4253
  %v4261 = vsel %vm1498, %v4247, %v4255
  %v4262 = vsel %vm1498, %v4249, %v4257
  %v4263 = vsel %vm1498, %v4251, %v4259
  %v4264 = vsel %vm1498, %v4237, %v4245
  %v4265 = vsel %vm1498, %v4239, %v4247
  %v4266 = vsel %vm1498, %v4241, %v4249
  %v4267 = vsel %vm1498, %v4243, %v4251
  %v4268 = vsel %vm1498, %v4229, %v4237
  %v4269 = vsel %vm1498, %v4231, %v4239
  %v4270 = vsel %vm1498, %v4233, %v4241
  %v4271 = vsel %vm1498, %v4235, %v4243
  %v4272 = vsel %vm1498, %v4253, %v4229
  %v4273 = vsel %vm1498, %v4255, %v4231
  %v4274 = vsel %vm1498, %v4257, %v4233
  %v4275 = vsel %vm1498, %v4259, %v4235
  %v4276 = vmul.f32 %v4268, %v144
  %v4277 = vmul.f32 %v4264, %v145
  %v4278 = vmul.f32 %v4260, %v146
  %v4279 = vmul.f32 %v4272, %v147
  %v4280 = vmul.f32 %v4269, %v144
  %v4281 = vmul.f32 %v4265, %v145
  %v4282 = vmul.f32 %v4261, %v146
  %v4283 = vmul.f32 %v4273, %v147
  %v4284 = vmul.f32 %v4270, %v144
  %v4285 = vmul.f32 %v4266, %v145
  %v4286 = vmul.f32 %v4262, %v146
  %v4287 = vmul.f32 %v4274, %v147
  %v4288 = vmul.f32 %v4271, %v144
  %v4289 = vmul.f32 %v4267, %v145
  %v4290 = vmul.f32 %v4263, %v146
  %v4291 = vmul.f32 %v4275, %v147
  %s4292 = scalar_lea.vmem %s2, 192
  %v4293 = vld [vmem:[%s4292] sm:$0xff]
  %v4294 = vld [vmem:[%s4292 + $0x8] sm:$0xff]
  %v4295 = vld [vmem:[%s4292 + $0x10] sm:$0xff]
  %v4296 = vld [vmem:[%s4292 + $0x18] sm:$0xff]
  %v4298 = vsel %vm2811, %v4293, 0
  %v4301 = vsel %vm2811, %v4294, 0
  %v4304 = vsel %vm2811, %v4295, 0
  %v4307 = vsel %vm2811, %v4296, 0
  %4309 = vmatprep.subr.mxu0 %v4277
  %4310 = vmatpush1.msra.mxu0 %v4276
  %4311 = vmatprep.subr.mxu0 %v4281
  %4312 = vmatpush1.msra.mxu0 %v4280
  %4313 = vmatprep.subr.mxu0 %v4285
  %4314 = vmatpush1.msra.mxu0 %v4284
  %4315 = vmatprep.subr.mxu0 %v4289
  %4316 = vmatpush1.msra.mxu0 %v4288
  %4317 = vmatprep.subr.mxu0 0.0
  %4318 = vmatpush1.msra.mxu0 0.0
  %4319 = vmatprep.subr.mxu0 0.0
  %4320 = vmatpush1.msra.mxu0 0.0
  %4321 = vmatprep.subr.mxu0 0.0
  %4322 = vmatpush1.msra.mxu0 0.0
  %4323 = vmatprep.subr.mxu0 0.0
  %4324 = vmatpush1.msra.mxu0 0.0
  %4325 = vmatprep.subr.mxu0 0.0
  %4326 = vmatpush1.msra.mxu0 0.0
  %4327 = vmatprep.subr.mxu0 0.0
  %4328 = vmatpush1.msra.mxu0 0.0
  %4329 = vmatprep.subr.mxu0 0.0
  %4330 = vmatpush1.msra.mxu0 0.0
  %4331 = vmatprep.subr.mxu0 0.0
  %4332 = vmatpush1.msra.mxu0 0.0
  %4333 = vmatprep.subr.mxu0 0.0
  %4334 = vmatpush1.msra.mxu0 0.0
  %4335 = vmatprep.subr.mxu0 0.0
  %4336 = vmatpush1.msra.mxu0 0.0
  %4337 = vmatprep.subr.mxu0 0.0
  %4338 = vmatpush1.msra.mxu0 0.0
  %4339 = vmatprep.subr.mxu0 0.0
  %4340 = vmatpush1.msra.mxu0 0.0
  %4341 = vmatprep.subr.mxu0 0.0
  %4342 = vmatpush1.msra.mxu0 0.0
  %4343 = vmatprep.subr.mxu0 0.0
  %4344 = vmatpush1.msra.mxu0 0.0
  %4345 = vmatprep.subr.mxu0 0.0
  %4346 = vmatpush1.msra.mxu0 0.0
  %4347 = vmatprep.subr.mxu0 0.0
  %4348 = vmatpush1.msra.mxu0 0.0
  %4349 = vmatprep.subr.mxu0 0.0
  %4350 = vmatpush1.msra.mxu0 0.0
  %4351 = vmatprep.subr.mxu0 0.0
  %4352 = vmatpush1.msra.mxu0 0.0
  %4353 = vmatprep.subr.mxu0 0.0
  %4354 = vmatpush1.msra.mxu0 0.0
  %4355 = vmatprep.subr.mxu0 0.0
  %4356 = vmatpush1.msra.mxu0 0.0
  %4357 = vmatprep.subr.mxu0 0.0
  %4358 = vmatpush1.msra.mxu0 0.0
  %4359 = vmatprep.subr.mxu0 0.0
  %4360 = vmatpush1.msra.mxu0 0.0
  %4361 = vmatprep.subr.mxu0 0.0
  %4362 = vmatpush1.msra.mxu0 0.0
  %4363 = vmatprep.subr.mxu0 0.0
  %4364 = vmatpush1.msra.mxu0 0.0
  %4365 = vmatprep.subr.mxu0 0.0
  %4366 = vmatpush1.msra.mxu0 0.0
  %4367 = vmatprep.subr.mxu0 0.0
  %4368 = vmatpush1.msra.mxu0 0.0
  %4369 = vmatprep.subr.mxu0 0.0
  %4370 = vmatpush1.msra.mxu0 0.0
  %4371 = vmatprep.subr.mxu0 0.0
  %4372 = vmatpush1.msra.mxu0 0.0
  %4373 = vmatprep.mubr.f32.mxu0 0.0
  %4374 = vmatmul.mubr.f32.gmra.mrb[0].mxu0 %v4298
  %v4375 = vpop.f32.mrb[0].mxu0
  %v4376 = vadd.f32 0.0, %v4375
  %v4377 = vpop.f32.mrb[0].mxu0
  %v4378 = vadd.f32 0.0, %v4377
  %4379 = vmatprep.mubr.f32.mxu0 0.0
  %4380 = vmatmul.mubr.f32.gmra.mrb[0].mxu0 %v4301
  %v4381 = vpop.f32.mrb[0].mxu0
  %v4382 = vadd.f32 0.0, %v4381
  %v4383 = vpop.f32.mrb[0].mxu0
  %v4384 = vadd.f32 0.0, %v4383
  %4385 = vmatprep.mubr.f32.mxu0 0.0
  %4386 = vmatmul.mubr.f32.gmra.mrb[0].mxu0 %v4304
  %v4387 = vpop.f32.mrb[0].mxu0
  %v4388 = vadd.f32 0.0, %v4387
  %v4389 = vpop.f32.mrb[0].mxu0
  %v4390 = vadd.f32 0.0, %v4389
  %4391 = vmatprep.mubr.f32.mxu0 0.0
  %4392 = vmatmul.mubr.f32.gmra.mrb[0].mxu0 %v4307
  %v4393 = vpop.f32.mrb[0].mxu0
  %v4394 = vadd.f32 0.0, %v4393
  %v4395 = vpop.f32.mrb[0].mxu0
  %v4396 = vadd.f32 0.0, %v4395
  %4397 = vdwg.mxu0
  %4398 = vmatprep.subr.mxu0 %v4279
  %4399 = vmatpush1.msra.mxu0 %v4278
  %4400 = vmatprep.subr.mxu0 %v4283
  %4401 = vmatpush1.msra.mxu0 %v4282
  %4402 = vmatprep.subr.mxu0 %v4287
  %4403 = vmatpush1.msra.mxu0 %v4286
  %4404 = vmatprep.subr.mxu0 %v4291
  %4405 = vmatpush1.msra.mxu0 %v4290
  %4406 = vmatprep.subr.mxu0 0.0
  %4407 = vmatpush1.msra.mxu0 0.0
  %4408 = vmatprep.subr.mxu0 0.0
  %4409 = vmatpush1.msra.mxu0 0.0
  %4410 = vmatprep.subr.mxu0 0.0
  %4411 = vmatpush1.msra.mxu0 0.0
  %4412 = vmatprep.subr.mxu0 0.0
  %4413 = vmatpush1.msra.mxu0 0.0
  %4414 = vmatprep.subr.mxu0 0.0
  %4415 = vmatpush1.msra.mxu0 0.0
  %4416 = vmatprep.subr.mxu0 0.0
  %4417 = vmatpush1.msra.mxu0 0.0
  %4418 = vmatprep.subr.mxu0 0.0
  %4419 = vmatpush1.msra.mxu0 0.0
  %4420 = vmatprep.subr.mxu0 0.0
  %4421 = vmatpush1.msra.mxu0 0.0
  %4422 = vmatprep.subr.mxu0 0.0
  %4423 = vmatpush1.msra.mxu0 0.0
  %4424 = vmatprep.subr.mxu0 0.0
  %4425 = vmatpush1.msra.mxu0 0.0
  %4426 = vmatprep.subr.mxu0 0.0
  %4427 = vmatpush1.msra.mxu0 0.0
  %4428 = vmatprep.subr.mxu0 0.0
  %4429 = vmatpush1.msra.mxu0 0.0
  %4430 = vmatprep.subr.mxu0 0.0
  %4431 = vmatpush1.msra.mxu0 0.0
  %4432 = vmatprep.subr.mxu0 0.0
  %4433 = vmatpush1.msra.mxu0 0.0
  %4434 = vmatprep.subr.mxu0 0.0
  %4435 = vmatpush1.msra.mxu0 0.0
  %4436 = vmatprep.subr.mxu0 0.0
  %4437 = vmatpush1.msra.mxu0 0.0
  %4438 = vmatprep.subr.mxu0 0.0
  %4439 = vmatpush1.msra.mxu0 0.0
  %4440 = vmatprep.subr.mxu0 0.0
  %4441 = vmatpush1.msra.mxu0 0.0
  %4442 = vmatprep.subr.mxu0 0.0
  %4443 = vmatpush1.msra.mxu0 0.0
  %4444 = vmatprep.subr.mxu0 0.0
  %4445 = vmatpush1.msra.mxu0 0.0
  %4446 = vmatprep.subr.mxu0 0.0
  %4447 = vmatpush1.msra.mxu0 0.0
  %4448 = vmatprep.subr.mxu0 0.0
  %4449 = vmatpush1.msra.mxu0 0.0
  %4450 = vmatprep.subr.mxu0 0.0
  %4451 = vmatpush1.msra.mxu0 0.0
  %4452 = vmatprep.subr.mxu0 0.0
  %4453 = vmatpush1.msra.mxu0 0.0
  %4454 = vmatprep.subr.mxu0 0.0
  %4455 = vmatpush1.msra.mxu0 0.0
  %4456 = vmatprep.subr.mxu0 0.0
  %4457 = vmatpush1.msra.mxu0 0.0
  %4458 = vmatprep.subr.mxu0 0.0
  %4459 = vmatpush1.msra.mxu0 0.0
  %4460 = vmatprep.subr.mxu0 0.0
  %4461 = vmatpush1.msra.mxu0 0.0
  %4462 = vmatprep.mubr.f32.mxu0 0.0
  %4463 = vmatmul.mubr.f32.gmra.mrb[0].mxu0 %v4298
  %v4464 = vpop.f32.mrb[0].mxu0
  %v4465 = vadd.f32 0.0, %v4464
  %v4466 = vpop.f32.mrb[0].mxu0
  %v4467 = vadd.f32 0.0, %v4466
  %4468 = vmatprep.mubr.f32.mxu0 0.0
  %4469 = vmatmul.mubr.f32.gmra.mrb[0].mxu0 %v4301
  %v4470 = vpop.f32.mrb[0].mxu0
  %v4471 = vadd.f32 0.0, %v4470
  %v4472 = vpop.f32.mrb[0].mxu0
  %v4473 = vadd.f32 0.0, %v4472
  %4474 = vmatprep.mubr.f32.mxu0 0.0
  %4475 = vmatmul.mubr.f32.gmra.mrb[0].mxu0 %v4304
  %v4476 = vpop.f32.mrb[0].mxu0
  %v4477 = vadd.f32 0.0, %v4476
  %v4478 = vpop.f32.mrb[0].mxu0
  %v4479 = vadd.f32 0.0, %v4478
  %4480 = vmatprep.mubr.f32.mxu0 0.0
  %4481 = vmatmul.mubr.f32.gmra.mrb[0].mxu0 %v4307
  %v4482 = vpop.f32.mrb[0].mxu0
  %v4483 = vadd.f32 0.0, %v4482
  %v4484 = vpop.f32.mrb[0].mxu0
  %v4485 = vadd.f32 0.0, %v4484
  %4486 = vdwg.mxu0
  %v4487 = vadd.f32 %v4212, %v4376
  %v4488 = vadd.f32 %v4213, %v4378
  %v4489 = vadd.f32 %v4214, %v4465
  %v4490 = vadd.f32 %v4215, %v4467
  %v4491 = vadd.f32 %v4216, %v4382
  %v4492 = vadd.f32 %v4217, %v4384
  %v4493 = vadd.f32 %v4218, %v4471
  %v4494 = vadd.f32 %v4219, %v4473
  %v4495 = vadd.f32 %v4220, %v4388
  %v4496 = vadd.f32 %v4221, %v4390
  %v4497 = vadd.f32 %v4222, %v4477
  %v4498 = vadd.f32 %v4223, %v4479
  %v4499 = vadd.f32 %v4224, %v4394
  %v4500 = vadd.f32 %v4225, %v4396
  %v4501 = vadd.f32 %v4226, %v4483
  %v4502 = vadd.f32 %v4227, %v4485
  %4503 = vrot.lane.b32.xlu0 %v2658, 112
  %v4504 = vpop.permute.xlu0 %4503
  %4505 = vrot.lane.b32.xlu0 %v2662, 112
  %v4506 = vpop.permute.xlu0 %4505
  %4507 = vrot.lane.b32.xlu0 %v2666, 112
  %v4508 = vpop.permute.xlu0 %4507
  %4509 = vrot.lane.b32.xlu0 %v2670, 112
  %v4510 = vpop.permute.xlu0 %4509
  %4511 = vrot.lane.b32.xlu0 %v2659, 112
  %v4512 = vpop.permute.xlu0 %4511
  %4513 = vrot.lane.b32.xlu0 %v2663, 112
  %v4514 = vpop.permute.xlu0 %4513
  %4515 = vrot.lane.b32.xlu0 %v2667, 112
  %v4516 = vpop.permute.xlu0 %4515
  %4517 = vrot.lane.b32.xlu0 %v2671, 112
  %v4518 = vpop.permute.xlu0 %4517
  %4519 = vrot.lane.b32.xlu0 %v2660, 112
  %v4520 = vpop.permute.xlu0 %4519
  %4521 = vrot.lane.b32.xlu0 %v2664, 112
  %v4522 = vpop.permute.xlu0 %4521
  %4523 = vrot.lane.b32.xlu0 %v2668, 112
  %v4524 = vpop.permute.xlu0 %4523
  %4525 = vrot.lane.b32.xlu0 %v2672, 112
  %v4526 = vpop.permute.xlu0 %4525
  %4527 = vrot.lane.b32.xlu0 %v2661, 112
  %v4528 = vpop.permute.xlu0 %4527
  %4529 = vrot.lane.b32.xlu0 %v2665, 112
  %v4530 = vpop.permute.xlu0 %4529
  %4531 = vrot.lane.b32.xlu0 %v2669, 112
  %v4532 = vpop.permute.xlu0 %4531
  %4533 = vrot.lane.b32.xlu0 %v2673, 112
  %v4534 = vpop.permute.xlu0 %4533
  %v4535 = vsel %vm1726, %v4520, %v4528
  %v4536 = vsel %vm1726, %v4522, %v4530
  %v4537 = vsel %vm1726, %v4524, %v4532
  %v4538 = vsel %vm1726, %v4526, %v4534
  %v4539 = vsel %vm1726, %v4512, %v4520
  %v4540 = vsel %vm1726, %v4514, %v4522
  %v4541 = vsel %vm1726, %v4516, %v4524
  %v4542 = vsel %vm1726, %v4518, %v4526
  %v4543 = vsel %vm1726, %v4504, %v4512
  %v4544 = vsel %vm1726, %v4506, %v4514
  %v4545 = vsel %vm1726, %v4508, %v4516
  %v4546 = vsel %vm1726, %v4510, %v4518
  %v4547 = vsel %vm1726, %v4528, %v4504
  %v4548 = vsel %vm1726, %v4530, %v4506
  %v4549 = vsel %vm1726, %v4532, %v4508
  %v4550 = vsel %vm1726, %v4534, %v4510
  %v4551 = vmul.f32 %v4543, %v84
  %v4552 = vmul.f32 %v4539, %v85
  %v4553 = vmul.f32 %v4535, %v86
  %v4554 = vmul.f32 %v4547, %v87
  %v4555 = vmul.f32 %v4544, %v84
  %v4556 = vmul.f32 %v4540, %v85
  %v4557 = vmul.f32 %v4536, %v86
  %v4558 = vmul.f32 %v4548, %v87
  %v4559 = vmul.f32 %v4545, %v84
  %v4560 = vmul.f32 %v4541, %v85
  %v4561 = vmul.f32 %v4537, %v86
  %v4562 = vmul.f32 %v4549, %v87
  %v4563 = vmul.f32 %v4546, %v84
  %v4564 = vmul.f32 %v4542, %v85
  %v4565 = vmul.f32 %v4538, %v86
  %v4566 = vmul.f32 %v4550, %v87
  %s4567 = scalar_lea.vmem %s2, 224
  %v4568 = vld [vmem:[%s4567] sm:$0xff]
  %v4569 = vld [vmem:[%s4567 + $0x8] sm:$0xff]
  %v4570 = vld [vmem:[%s4567 + $0x10] sm:$0xff]
  %v4571 = vld [vmem:[%s4567 + $0x18] sm:$0xff]
  %v4573 = vsel %vm2811, %v4568, 0
  %v4576 = vsel %vm2811, %v4569, 0
  %v4579 = vsel %vm2811, %v4570, 0
  %v4582 = vsel %vm2811, %v4571, 0
  %4584 = vmatprep.subr.mxu0 %v4552
  %4585 = vmatpush1.msra.mxu0 %v4551
  %4586 = vmatprep.subr.mxu0 %v4556
  %4587 = vmatpush1.msra.mxu0 %v4555
  %4588 = vmatprep.subr.mxu0 %v4560
  %4589 = vmatpush1.msra.mxu0 %v4559
  %4590 = vmatprep.subr.mxu0 %v4564
  %4591 = vmatpush1.msra.mxu0 %v4563
  %4592 = vmatprep.subr.mxu0 0.0
  %4593 = vmatpush1.msra.mxu0 0.0
  %4594 = vmatprep.subr.mxu0 0.0
  %4595 = vmatpush1.msra.mxu0 0.0
  %4596 = vmatprep.subr.mxu0 0.0
  %4597 = vmatpush1.msra.mxu0 0.0
  %4598 = vmatprep.subr.mxu0 0.0
  %4599 = vmatpush1.msra.mxu0 0.0
  %4600 = vmatprep.subr.mxu0 0.0
  %4601 = vmatpush1.msra.mxu0 0.0
  %4602 = vmatprep.subr.mxu0 0.0
  %4603 = vmatpush1.msra.mxu0 0.0
  %4604 = vmatprep.subr.mxu0 0.0
  %4605 = vmatpush1.msra.mxu0 0.0
  %4606 = vmatprep.subr.mxu0 0.0
  %4607 = vmatpush1.msra.mxu0 0.0
  %4608 = vmatprep.subr.mxu0 0.0
  %4609 = vmatpush1.msra.mxu0 0.0
  %4610 = vmatprep.subr.mxu0 0.0
  %4611 = vmatpush1.msra.mxu0 0.0
  %4612 = vmatprep.subr.mxu0 0.0
  %4613 = vmatpush1.msra.mxu0 0.0
  %4614 = vmatprep.subr.mxu0 0.0
  %4615 = vmatpush1.msra.mxu0 0.0
  %4616 = vmatprep.subr.mxu0 0.0
  %4617 = vmatpush1.msra.mxu0 0.0
  %4618 = vmatprep.subr.mxu0 0.0
  %4619 = vmatpush1.msra.mxu0 0.0
  %4620 = vmatprep.subr.mxu0 0.0
  %4621 = vmatpush1.msra.mxu0 0.0
  %4622 = vmatprep.subr.mxu0 0.0
  %4623 = vmatpush1.msra.mxu0 0.0
  %4624 = vmatprep.subr.mxu0 0.0
  %4625 = vmatpush1.msra.mxu0 0.0
  %4626 = vmatprep.subr.mxu0 0.0
  %4627 = vmatpush1.msra.mxu0 0.0
  %4628 = vmatprep.subr.mxu0 0.0
  %4629 = vmatpush1.msra.mxu0 0.0
  %4630 = vmatprep.subr.mxu0 0.0
  %4631 = vmatpush1.msra.mxu0 0.0
  %4632 = vmatprep.subr.mxu0 0.0
  %4633 = vmatpush1.msra.mxu0 0.0
  %4634 = vmatprep.subr.mxu0 0.0
  %4635 = vmatpush1.msra.mxu0 0.0
  %4636 = vmatprep.subr.mxu0 0.0
  %4637 = vmatpush1.msra.mxu0 0.0
  %4638 = vmatprep.subr.mxu0 0.0
  %4639 = vmatpush1.msra.mxu0 0.0
  %4640 = vmatprep.subr.mxu0 0.0
  %4641 = vmatpush1.msra.mxu0 0.0
  %4642 = vmatprep.subr.mxu0 0.0
  %4643 = vmatpush1.msra.mxu0 0.0
  %4644 = vmatprep.subr.mxu0 0.0
  %4645 = vmatpush1.msra.mxu0 0.0
  %4646 = vmatprep.subr.mxu0 0.0
  %4647 = vmatpush1.msra.mxu0 0.0
  %4648 = vmatprep.mubr.f32.mxu0 0.0
  %4649 = vmatmul.mubr.f32.gmra.mrb[0].mxu0 %v4573
  %v4650 = vpop.f32.mrb[0].mxu0
  %v4651 = vadd.f32 0.0, %v4650
  %v4652 = vpop.f32.mrb[0].mxu0
  %v4653 = vadd.f32 0.0, %v4652
  %4654 = vmatprep.mubr.f32.mxu0 0.0
  %4655 = vmatmul.mubr.f32.gmra.mrb[0].mxu0 %v4576
  %v4656 = vpop.f32.mrb[0].mxu0
  %v4657 = vadd.f32 0.0, %v4656
  %v4658 = vpop.f32.mrb[0].mxu0
  %v4659 = vadd.f32 0.0, %v4658
  %4660 = vmatprep.mubr.f32.mxu0 0.0
  %4661 = vmatmul.mubr.f32.gmra.mrb[0].mxu0 %v4579
  %v4662 = vpop.f32.mrb[0].mxu0
  %v4663 = vadd.f32 0.0, %v4662
  %v4664 = vpop.f32.mrb[0].mxu0
  %v4665 = vadd.f32 0.0, %v4664
  %4666 = vmatprep.mubr.f32.mxu0 0.0
  %4667 = vmatmul.mubr.f32.gmra.mrb[0].mxu0 %v4582
  %v4668 = vpop.f32.mrb[0].mxu0
  %v4669 = vadd.f32 0.0, %v4668
  %v4670 = vpop.f32.mrb[0].mxu0
  %v4671 = vadd.f32 0.0, %v4670
  %4672 = vdwg.mxu0
  %4673 = vmatprep.subr.mxu0 %v4554
  %4674 = vmatpush1.msra.mxu0 %v4553
  %4675 = vmatprep.subr.mxu0 %v4558
  %4676 = vmatpush1.msra.mxu0 %v4557
  %4677 = vmatprep.subr.mxu0 %v4562
  %4678 = vmatpush1.msra.mxu0 %v4561
  %4679 = vmatprep.subr.mxu0 %v4566
  %4680 = vmatpush1.msra.mxu0 %v4565
  %4681 = vmatprep.subr.mxu0 0.0
  %4682 = vmatpush1.msra.mxu0 0.0
  %4683 = vmatprep.subr.mxu0 0.0
  %4684 = vmatpush1.msra.mxu0 0.0
  %4685 = vmatprep.subr.mxu0 0.0
  %4686 = vmatpush1.msra.mxu0 0.0
  %4687 = vmatprep.subr.mxu0 0.0
  %4688 = vmatpush1.msra.mxu0 0.0
  %4689 = vmatprep.subr.mxu0 0.0
  %4690 = vmatpush1.msra.mxu0 0.0
  %4691 = vmatprep.subr.mxu0 0.0
  %4692 = vmatpush1.msra.mxu0 0.0
  %4693 = vmatprep.subr.mxu0 0.0
  %4694 = vmatpush1.msra.mxu0 0.0
  %4695 = vmatprep.subr.mxu0 0.0
  %4696 = vmatpush1.msra.mxu0 0.0
  %4697 = vmatprep.subr.mxu0 0.0
  %4698 = vmatpush1.msra.mxu0 0.0
  %4699 = vmatprep.subr.mxu0 0.0
  %4700 = vmatpush1.msra.mxu0 0.0
  %4701 = vmatprep.subr.mxu0 0.0
  %4702 = vmatpush1.msra.mxu0 0.0
  %4703 = vmatprep.subr.mxu0 0.0
  %4704 = vmatpush1.msra.mxu0 0.0
  %4705 = vmatprep.subr.mxu0 0.0
  %4706 = vmatpush1.msra.mxu0 0.0
  %4707 = vmatprep.subr.mxu0 0.0
  %4708 = vmatpush1.msra.mxu0 0.0
  %4709 = vmatprep.subr.mxu0 0.0
  %4710 = vmatpush1.msra.mxu0 0.0
  %4711 = vmatprep.subr.mxu0 0.0
  %4712 = vmatpush1.msra.mxu0 0.0
  %4713 = vmatprep.subr.mxu0 0.0
  %4714 = vmatpush1.msra.mxu0 0.0
  %4715 = vmatprep.subr.mxu0 0.0
  %4716 = vmatpush1.msra.mxu0 0.0
  %4717 = vmatprep.subr.mxu0 0.0
  %4718 = vmatpush1.msra.mxu0 0.0
  %4719 = vmatprep.subr.mxu0 0.0
  %4720 = vmatpush1.msra.mxu0 0.0
  %4721 = vmatprep.subr.mxu0 0.0
  %4722 = vmatpush1.msra.mxu0 0.0
  %4723 = vmatprep.subr.mxu0 0.0
  %4724 = vmatpush1.msra.mxu0 0.0
  %4725 = vmatprep.subr.mxu0 0.0
  %4726 = vmatpush1.msra.mxu0 0.0
  %4727 = vmatprep.subr.mxu0 0.0
  %4728 = vmatpush1.msra.mxu0 0.0
  %4729 = vmatprep.subr.mxu0 0.0
  %4730 = vmatpush1.msra.mxu0 0.0
  %4731 = vmatprep.subr.mxu0 0.0
  %4732 = vmatpush1.msra.mxu0 0.0
  %4733 = vmatprep.subr.mxu0 0.0
  %4734 = vmatpush1.msra.mxu0 0.0
  %4735 = vmatprep.subr.mxu0 0.0
  %4736 = vmatpush1.msra.mxu0 0.0
  %4737 = vmatprep.mubr.f32.mxu0 0.0
  %4738 = vmatmul.mubr.f32.gmra.mrb[0].mxu0 %v4573
  %v4739 = vpop.f32.mrb[0].mxu0
  %v4740 = vadd.f32 0.0, %v4739
  %v4741 = vpop.f32.mrb[0].mxu0
  %v4742 = vadd.f32 0.0, %v4741
  %4743 = vmatprep.mubr.f32.mxu0 0.0
  %4744 = vmatmul.mubr.f32.gmra.mrb[0].mxu0 %v4576
  %v4745 = vpop.f32.mrb[0].mxu0
  %v4746 = vadd.f32 0.0, %v4745
  %v4747 = vpop.f32.mrb[0].mxu0
  %v4748 = vadd.f32 0.0, %v4747
  %4749 = vmatprep.mubr.f32.mxu0 0.0
  %4750 = vmatmul.mubr.f32.gmra.mrb[0].mxu0 %v4579
  %v4751 = vpop.f32.mrb[0].mxu0
  %v4752 = vadd.f32 0.0, %v4751
  %v4753 = vpop.f32.mrb[0].mxu0
  %v4754 = vadd.f32 0.0, %v4753
  %4755 = vmatprep.mubr.f32.mxu0 0.0
  %4756 = vmatmul.mubr.f32.gmra.mrb[0].mxu0 %v4582
  %v4757 = vpop.f32.mrb[0].mxu0
  %v4758 = vadd.f32 0.0, %v4757
  %v4759 = vpop.f32.mrb[0].mxu0
  %v4760 = vadd.f32 0.0, %v4759
  %4761 = vdwg.mxu0
  %v4762 = vadd.f32 %v4487, %v4651
  %v4763 = vadd.f32 %v4488, %v4653
  %v4764 = vadd.f32 %v4489, %v4740
  %v4765 = vadd.f32 %v4490, %v4742
  %v4766 = vadd.f32 %v4491, %v4657
  %v4767 = vadd.f32 %v4492, %v4659
  %v4768 = vadd.f32 %v4493, %v4746
  %v4769 = vadd.f32 %v4494, %v4748
  %v4770 = vadd.f32 %v4495, %v4663
  %v4771 = vadd.f32 %v4496, %v4665
  %v4772 = vadd.f32 %v4497, %v4752
  %v4773 = vadd.f32 %v4498, %v4754
  %v4774 = vadd.f32 %v4499, %v4669
  %v4775 = vadd.f32 %v4500, %v4671
  %v4776 = vadd.f32 %v4501, %v4758
  %v4777 = vadd.f32 %v4502, %v4760
  %4778 = vrot.lane.b32.xlu0 %v2658, 111
  %v4779 = vpop.permute.xlu0 %4778
  %4780 = vrot.lane.b32.xlu0 %v2662, 111
  %v4781 = vpop.permute.xlu0 %4780
  %4782 = vrot.lane.b32.xlu0 %v2666, 111
  %v4783 = vpop.permute.xlu0 %4782
  %4784 = vrot.lane.b32.xlu0 %v2670, 111
  %v4785 = vpop.permute.xlu0 %4784
  %4786 = vrot.lane.b32.xlu0 %v2659, 111
  %v4787 = vpop.permute.xlu0 %4786
  %4788 = vrot.lane.b32.xlu0 %v2663, 111
  %v4789 = vpop.permute.xlu0 %4788
  %4790 = vrot.lane.b32.xlu0 %v2667, 111
  %v4791 = vpop.permute.xlu0 %4790
  %4792 = vrot.lane.b32.xlu0 %v2671, 111
  %v4793 = vpop.permute.xlu0 %4792
  %4794 = vrot.lane.b32.xlu0 %v2660, 111
  %v4795 = vpop.permute.xlu0 %4794
  %4796 = vrot.lane.b32.xlu0 %v2664, 111
  %v4797 = vpop.permute.xlu0 %4796
  %4798 = vrot.lane.b32.xlu0 %v2668, 111
  %v4799 = vpop.permute.xlu0 %4798
  %4800 = vrot.lane.b32.xlu0 %v2672, 111
  %v4801 = vpop.permute.xlu0 %4800
  %4802 = vrot.lane.b32.xlu0 %v2661, 111
  %v4803 = vpop.permute.xlu0 %4802
  %4804 = vrot.lane.b32.xlu0 %v2665, 111
  %v4805 = vpop.permute.xlu0 %4804
  %4806 = vrot.lane.b32.xlu0 %v2669, 111
  %v4807 = vpop.permute.xlu0 %4806
  %4808 = vrot.lane.b32.xlu0 %v2673, 111
  %v4809 = vpop.permute.xlu0 %4808
  %v4810 = vsel %vm1954, %v4795, %v4803
  %v4811 = vsel %vm1954, %v4797, %v4805
  %v4812 = vsel %vm1954, %v4799, %v4807
  %v4813 = vsel %vm1954, %v4801, %v4809
  %v4814 = vsel %vm1954, %v4787, %v4795
  %v4815 = vsel %vm1954, %v4789, %v4797
  %v4816 = vsel %vm1954, %v4791, %v4799
  %v4817 = vsel %vm1954, %v4793, %v4801
  %v4818 = vsel %vm1954, %v4779, %v4787
  %v4819 = vsel %vm1954, %v4781, %v4789
  %v4820 = vsel %vm1954, %v4783, %v4791
  %v4821 = vsel %vm1954, %v4785, %v4793
  %v4822 = vsel %vm1954, %v4803, %v4779
  %v4823 = vsel %vm1954, %v4805, %v4781
  %v4824 = vsel %vm1954, %v4807, %v4783
  %v4825 = vsel %vm1954, %v4809, %v4785
  %v4826 = vmul.f32 %v4818, %v148
  %v4827 = vmul.f32 %v4814, %v149
  %v4828 = vmul.f32 %v4810, %v150
  %v4829 = vmul.f32 %v4822, %v151
  %v4830 = vmul.f32 %v4819, %v148
  %v4831 = vmul.f32 %v4815, %v149
  %v4832 = vmul.f32 %v4811, %v150
  %v4833 = vmul.f32 %v4823, %v151
  %v4834 = vmul.f32 %v4820, %v148
  %v4835 = vmul.f32 %v4816, %v149
  %v4836 = vmul.f32 %v4812, %v150
  %v4837 = vmul.f32 %v4824, %v151
  %v4838 = vmul.f32 %v4821, %v148
  %v4839 = vmul.f32 %v4817, %v149
  %v4840 = vmul.f32 %v4813, %v150
  %v4841 = vmul.f32 %v4825, %v151
  %s4842 = scalar_lea.vmem %s2, 256
  %v4843 = vld [vmem:[%s4842] sm:$0xff]
  %v4844 = vld [vmem:[%s4842 + $0x8] sm:$0xff]
  %v4845 = vld [vmem:[%s4842 + $0x10] sm:$0xff]
  %v4846 = vld [vmem:[%s4842 + $0x18] sm:$0xff]
  %v4848 = vsel %vm2811, %v4843, 0
  %v4851 = vsel %vm2811, %v4844, 0
  %v4854 = vsel %vm2811, %v4845, 0
  %v4857 = vsel %vm2811, %v4846, 0
  %4859 = vmatprep.subr.mxu0 %v4827
  %4860 = vmatpush1.msra.mxu0 %v4826
  %4861 = vmatprep.subr.mxu0 %v4831
  %4862 = vmatpush1.msra.mxu0 %v4830
  %4863 = vmatprep.subr.mxu0 %v4835
  %4864 = vmatpush1.msra.mxu0 %v4834
  %4865 = vmatprep.subr.mxu0 %v4839
  %4866 = vmatpush1.msra.mxu0 %v4838
  %4867 = vmatprep.subr.mxu0 0.0
  %4868 = vmatpush1.msra.mxu0 0.0
  %4869 = vmatprep.subr.mxu0 0.0
  %4870 = vmatpush1.msra.mxu0 0.0
  %4871 = vmatprep.subr.mxu0 0.0
  %4872 = vmatpush1.msra.mxu0 0.0
  %4873 = vmatprep.subr.mxu0 0.0
  %4874 = vmatpush1.msra.mxu0 0.0
  %4875 = vmatprep.subr.mxu0 0.0
  %4876 = vmatpush1.msra.mxu0 0.0
  %4877 = vmatprep.subr.mxu0 0.0
  %4878 = vmatpush1.msra.mxu0 0.0
  %4879 = vmatprep.subr.mxu0 0.0
  %4880 = vmatpush1.msra.mxu0 0.0
  %4881 = vmatprep.subr.mxu0 0.0
  %4882 = vmatpush1.msra.mxu0 0.0
  %4883 = vmatprep.subr.mxu0 0.0
  %4884 = vmatpush1.msra.mxu0 0.0
  %4885 = vmatprep.subr.mxu0 0.0
  %4886 = vmatpush1.msra.mxu0 0.0
  %4887 = vmatprep.subr.mxu0 0.0
  %4888 = vmatpush1.msra.mxu0 0.0
  %4889 = vmatprep.subr.mxu0 0.0
  %4890 = vmatpush1.msra.mxu0 0.0
  %4891 = vmatprep.subr.mxu0 0.0
  %4892 = vmatpush1.msra.mxu0 0.0
  %4893 = vmatprep.subr.mxu0 0.0
  %4894 = vmatpush1.msra.mxu0 0.0
  %4895 = vmatprep.subr.mxu0 0.0
  %4896 = vmatpush1.msra.mxu0 0.0
  %4897 = vmatprep.subr.mxu0 0.0
  %4898 = vmatpush1.msra.mxu0 0.0
  %4899 = vmatprep.subr.mxu0 0.0
  %4900 = vmatpush1.msra.mxu0 0.0
  %4901 = vmatprep.subr.mxu0 0.0
  %4902 = vmatpush1.msra.mxu0 0.0
  %4903 = vmatprep.subr.mxu0 0.0
  %4904 = vmatpush1.msra.mxu0 0.0
  %4905 = vmatprep.subr.mxu0 0.0
  %4906 = vmatpush1.msra.mxu0 0.0
  %4907 = vmatprep.subr.mxu0 0.0
  %4908 = vmatpush1.msra.mxu0 0.0
  %4909 = vmatprep.subr.mxu0 0.0
  %4910 = vmatpush1.msra.mxu0 0.0
  %4911 = vmatprep.subr.mxu0 0.0
  %4912 = vmatpush1.msra.mxu0 0.0
  %4913 = vmatprep.subr.mxu0 0.0
  %4914 = vmatpush1.msra.mxu0 0.0
  %4915 = vmatprep.subr.mxu0 0.0
  %4916 = vmatpush1.msra.mxu0 0.0
  %4917 = vmatprep.subr.mxu0 0.0
  %4918 = vmatpush1.msra.mxu0 0.0
  %4919 = vmatprep.subr.mxu0 0.0
  %4920 = vmatpush1.msra.mxu0 0.0
  %4921 = vmatprep.subr.mxu0 0.0
  %4922 = vmatpush1.msra.mxu0 0.0
  %4923 = vmatprep.mubr.f32.mxu0 0.0
  %4924 = vmatmul.mubr.f32.gmra.mrb[0].mxu0 %v4848
  %v4925 = vpop.f32.mrb[0].mxu0
  %v4926 = vadd.f32 0.0, %v4925
  %v4927 = vpop.f32.mrb[0].mxu0
  %v4928 = vadd.f32 0.0, %v4927
  %4929 = vmatprep.mubr.f32.mxu0 0.0
  %4930 = vmatmul.mubr.f32.gmra.mrb[0].mxu0 %v4851
  %v4931 = vpop.f32.mrb[0].mxu0
  %v4932 = vadd.f32 0.0, %v4931
  %v4933 = vpop.f32.mrb[0].mxu0
  %v4934 = vadd.f32 0.0, %v4933
  %4935 = vmatprep.mubr.f32.mxu0 0.0
  %4936 = vmatmul.mubr.f32.gmra.mrb[0].mxu0 %v4854
  %v4937 = vpop.f32.mrb[0].mxu0
  %v4938 = vadd.f32 0.0, %v4937
  %v4939 = vpop.f32.mrb[0].mxu0
  %v4940 = vadd.f32 0.0, %v4939
  %4941 = vmatprep.mubr.f32.mxu0 0.0
  %4942 = vmatmul.mubr.f32.gmra.mrb[0].mxu0 %v4857
  %v4943 = vpop.f32.mrb[0].mxu0
  %v4944 = vadd.f32 0.0, %v4943
  %v4945 = vpop.f32.mrb[0].mxu0
  %v4946 = vadd.f32 0.0, %v4945
  %4947 = vdwg.mxu0
  %4948 = vmatprep.subr.mxu0 %v4829
  %4949 = vmatpush1.msra.mxu0 %v4828
  %4950 = vmatprep.subr.mxu0 %v4833
  %4951 = vmatpush1.msra.mxu0 %v4832
  %4952 = vmatprep.subr.mxu0 %v4837
  %4953 = vmatpush1.msra.mxu0 %v4836
  %4954 = vmatprep.subr.mxu0 %v4841
  %4955 = vmatpush1.msra.mxu0 %v4840
  %4956 = vmatprep.subr.mxu0 0.0
  %4957 = vmatpush1.msra.mxu0 0.0
  %4958 = vmatprep.subr.mxu0 0.0
  %4959 = vmatpush1.msra.mxu0 0.0
  %4960 = vmatprep.subr.mxu0 0.0
  %4961 = vmatpush1.msra.mxu0 0.0
  %4962 = vmatprep.subr.mxu0 0.0
  %4963 = vmatpush1.msra.mxu0 0.0
  %4964 = vmatprep.subr.mxu0 0.0
  %4965 = vmatpush1.msra.mxu0 0.0
  %4966 = vmatprep.subr.mxu0 0.0
  %4967 = vmatpush1.msra.mxu0 0.0
  %4968 = vmatprep.subr.mxu0 0.0
  %4969 = vmatpush1.msra.mxu0 0.0
  %4970 = vmatprep.subr.mxu0 0.0
  %4971 = vmatpush1.msra.mxu0 0.0
  %4972 = vmatprep.subr.mxu0 0.0
  %4973 = vmatpush1.msra.mxu0 0.0
  %4974 = vmatprep.subr.mxu0 0.0
  %4975 = vmatpush1.msra.mxu0 0.0
  %4976 = vmatprep.subr.mxu0 0.0
  %4977 = vmatpush1.msra.mxu0 0.0
  %4978 = vmatprep.subr.mxu0 0.0
  %4979 = vmatpush1.msra.mxu0 0.0
  %4980 = vmatprep.subr.mxu0 0.0
  %4981 = vmatpush1.msra.mxu0 0.0
  %4982 = vmatprep.subr.mxu0 0.0
  %4983 = vmatpush1.msra.mxu0 0.0
  %4984 = vmatprep.subr.mxu0 0.0
  %4985 = vmatpush1.msra.mxu0 0.0
  %4986 = vmatprep.subr.mxu0 0.0
  %4987 = vmatpush1.msra.mxu0 0.0
  %4988 = vmatprep.subr.mxu0 0.0
  %4989 = vmatpush1.msra.mxu0 0.0
  %4990 = vmatprep.subr.mxu0 0.0
  %4991 = vmatpush1.msra.mxu0 0.0
  %4992 = vmatprep.subr.mxu0 0.0
  %4993 = vmatpush1.msra.mxu0 0.0
  %4994 = vmatprep.subr.mxu0 0.0
  %4995 = vmatpush1.msra.mxu0 0.0
  %4996 = vmatprep.subr.mxu0 0.0
  %4997 = vmatpush1.msra.mxu0 0.0
  %4998 = vmatprep.subr.mxu0 0.0
  %4999 = vmatpush1.msra.mxu0 0.0
  %5000 = vmatprep.subr.mxu0 0.0
  %5001 = vmatpush1.msra.mxu0 0.0
  %5002 = vmatprep.subr.mxu0 0.0
  %5003 = vmatpush1.msra.mxu0 0.0
  %5004 = vmatprep.subr.mxu0 0.0
  %5005 = vmatpush1.msra.mxu0 0.0
  %5006 = vmatprep.subr.mxu0 0.0
  %5007 = vmatpush1.msra.mxu0 0.0
  %5008 = vmatprep.subr.mxu0 0.0
  %5009 = vmatpush1.msra.mxu0 0.0
  %5010 = vmatprep.subr.mxu0 0.0
  %5011 = vmatpush1.msra.mxu0 0.0
  %5012 = vmatprep.mubr.f32.mxu0 0.0
  %5013 = vmatmul.mubr.f32.gmra.mrb[0].mxu0 %v4848
  %v5014 = vpop.f32.mrb[0].mxu0
  %v5015 = vadd.f32 0.0, %v5014
  %v5016 = vpop.f32.mrb[0].mxu0
  %v5017 = vadd.f32 0.0, %v5016
  %5018 = vmatprep.mubr.f32.mxu0 0.0
  %5019 = vmatmul.mubr.f32.gmra.mrb[0].mxu0 %v4851
  %v5020 = vpop.f32.mrb[0].mxu0
  %v5021 = vadd.f32 0.0, %v5020
  %v5022 = vpop.f32.mrb[0].mxu0
  %v5023 = vadd.f32 0.0, %v5022
  %5024 = vmatprep.mubr.f32.mxu0 0.0
  %5025 = vmatmul.mubr.f32.gmra.mrb[0].mxu0 %v4854
  %v5026 = vpop.f32.mrb[0].mxu0
  %v5027 = vadd.f32 0.0, %v5026
  %v5028 = vpop.f32.mrb[0].mxu0
  %v5029 = vadd.f32 0.0, %v5028
  %5030 = vmatprep.mubr.f32.mxu0 0.0
  %5031 = vmatmul.mubr.f32.gmra.mrb[0].mxu0 %v4857
  %v5032 = vpop.f32.mrb[0].mxu0
  %v5033 = vadd.f32 0.0, %v5032
  %v5034 = vpop.f32.mrb[0].mxu0
  %v5035 = vadd.f32 0.0, %v5034
  %5036 = vdwg.mxu0
  %v5037 = vadd.f32 %v4762, %v4926
  %v5038 = vadd.f32 %v4763, %v4928
  %v5039 = vadd.f32 %v4764, %v5015
  %v5040 = vadd.f32 %v4765, %v5017
  %v5041 = vadd.f32 %v4766, %v4932
  %v5042 = vadd.f32 %v4767, %v4934
  %v5043 = vadd.f32 %v4768, %v5021
  %v5044 = vadd.f32 %v4769, %v5023
  %v5045 = vadd.f32 %v4770, %v4938
  %v5046 = vadd.f32 %v4771, %v4940
  %v5047 = vadd.f32 %v4772, %v5027
  %v5048 = vadd.f32 %v4773, %v5029
  %v5049 = vadd.f32 %v4774, %v4944
  %v5050 = vadd.f32 %v4775, %v4946
  %v5051 = vadd.f32 %v4776, %v5033
  %v5052 = vadd.f32 %v4777, %v5035
  %5053 = vmatprep.subr.mxu0 0.0
  %5054 = vmatpush1.msra.mxu0 1.0
  %5055 = vmatprep.subr.mxu0 0.0
  %5056 = vmatpush1.msra.mxu0 1.0
  %5057 = vmatprep.subr.mxu0 0.0
  %5058 = vmatpush1.msra.mxu0 1.0
  %5059 = vmatprep.subr.mxu0 0.0
  %5060 = vmatpush1.msra.mxu0 1.0
  %5061 = vmatprep.subr.mxu0 0.0
  %5062 = vmatpush1.msra.mxu0 1.0
  %5063 = vmatprep.subr.mxu0 0.0
  %5064 = vmatpush1.msra.mxu0 1.0
  %5065 = vmatprep.subr.mxu0 0.0
  %5066 = vmatpush1.msra.mxu0 1.0
  %5067 = vmatprep.subr.mxu0 0.0
  %5068 = vmatpush1.msra.mxu0 1.0
  %5069 = vmatprep.subr.mxu0 0.0
  %5070 = vmatpush1.msra.mxu0 1.0
  %5071 = vmatprep.subr.mxu0 0.0
  %5072 = vmatpush1.msra.mxu0 1.0
  %5073 = vmatprep.subr.mxu0 0.0
  %5074 = vmatpush1.msra.mxu0 1.0
  %5075 = vmatprep.subr.mxu0 0.0
  %5076 = vmatpush1.msra.mxu0 1.0
  %5077 = vmatprep.subr.mxu0 0.0
  %5078 = vmatpush1.msra.mxu0 1.0
  %5079 = vmatprep.subr.mxu0 0.0
  %5080 = vmatpush1.msra.mxu0 1.0
  %5081 = vmatprep.subr.mxu0 0.0
  %5082 = vmatpush1.msra.mxu0 1.0
  %5083 = vmatprep.subr.mxu0 0.0
  %5084 = vmatpush1.msra.mxu0 1.0
  %5085 = vmatprep.subr.mxu0 0.0
  %5086 = vmatpush1.msra.mxu0 1.0
  %5087 = vmatprep.subr.mxu0 0.0
  %5088 = vmatpush1.msra.mxu0 1.0
  %5089 = vmatprep.subr.mxu0 0.0
  %5090 = vmatpush1.msra.mxu0 1.0
  %5091 = vmatprep.subr.mxu0 0.0
  %5092 = vmatpush1.msra.mxu0 1.0
  %5093 = vmatprep.subr.mxu0 0.0
  %5094 = vmatpush1.msra.mxu0 1.0
  %5095 = vmatprep.subr.mxu0 0.0
  %5096 = vmatpush1.msra.mxu0 1.0
  %5097 = vmatprep.subr.mxu0 0.0
  %5098 = vmatpush1.msra.mxu0 1.0
  %5099 = vmatprep.subr.mxu0 0.0
  %5100 = vmatpush1.msra.mxu0 1.0
  %5101 = vmatprep.subr.mxu0 0.0
  %5102 = vmatpush1.msra.mxu0 1.0
  %5103 = vmatprep.subr.mxu0 0.0
  %5104 = vmatpush1.msra.mxu0 1.0
  %5105 = vmatprep.subr.mxu0 0.0
  %5106 = vmatpush1.msra.mxu0 1.0
  %5107 = vmatprep.subr.mxu0 0.0
  %5108 = vmatpush1.msra.mxu0 1.0
  %5109 = vmatprep.subr.mxu0 0.0
  %5110 = vmatpush1.msra.mxu0 1.0
  %5111 = vmatprep.subr.mxu0 0.0
  %5112 = vmatpush1.msra.mxu0 1.0
  %5113 = vmatprep.subr.mxu0 0.0
  %5114 = vmatpush1.msra.mxu0 1.0
  %5115 = vmatprep.subr.mxu0 0.0
  %5116 = vmatpush1.msra.mxu0 1.0
  %5117 = vmatprep.mubr.f32.mxu0 %v5038
  %5118 = vmatmul.mubr.f32.gmra.mrb[0].mxu0 %v5037
  %v5119 = vpop.f32.mrb[0].mxu0
  %v5120 = vadd.f32 0.0, %v5119
  %v5121 = vpop.f32.mrb[0].mxu0
  %5122 = vmatprep.mubr.f32.mxu0 %v5042
  %5123 = vmatmul.mubr.f32.gmra.mrb[0].mxu0 %v5041
  %v5124 = vpop.f32.mrb[0].mxu0
  %v5125 = vadd.f32 0.0, %v5124
  %v5126 = vpop.f32.mrb[0].mxu0
  %5127 = vmatprep.mubr.f32.mxu0 %v5046
  %5128 = vmatmul.mubr.f32.gmra.mrb[0].mxu0 %v5045
  %v5129 = vpop.f32.mrb[0].mxu0
  %v5130 = vadd.f32 0.0, %v5129
  %v5131 = vpop.f32.mrb[0].mxu0
  %5132 = vmatprep.mubr.f32.mxu0 %v5050
  %5133 = vmatmul.mubr.f32.gmra.mrb[0].mxu0 %v5049
  %v5134 = vpop.f32.mrb[0].mxu0
  %v5135 = vadd.f32 0.0, %v5134
  %v5136 = vpop.f32.mrb[0].mxu0
  %5137 = vdwg.mxu0
  %5138 = vmatprep.subr.mxu0 0.0
  %5139 = vmatpush1.msra.mxu0 1.0
  %5140 = vmatprep.subr.mxu0 0.0
  %5141 = vmatpush1.msra.mxu0 1.0
  %5142 = vmatprep.subr.mxu0 0.0
  %5143 = vmatpush1.msra.mxu0 1.0
  %5144 = vmatprep.subr.mxu0 0.0
  %5145 = vmatpush1.msra.mxu0 1.0
  %5146 = vmatprep.subr.mxu0 0.0
  %5147 = vmatpush1.msra.mxu0 1.0
  %5148 = vmatprep.subr.mxu0 0.0
  %5149 = vmatpush1.msra.mxu0 1.0
  %5150 = vmatprep.subr.mxu0 0.0
  %5151 = vmatpush1.msra.mxu0 1.0
  %5152 = vmatprep.subr.mxu0 0.0
  %5153 = vmatpush1.msra.mxu0 1.0
  %5154 = vmatprep.subr.mxu0 0.0
  %5155 = vmatpush1.msra.mxu0 1.0
  %5156 = vmatprep.subr.mxu0 0.0
  %5157 = vmatpush1.msra.mxu0 1.0
  %5158 = vmatprep.subr.mxu0 0.0
  %5159 = vmatpush1.msra.mxu0 1.0
  %5160 = vmatprep.subr.mxu0 0.0
  %5161 = vmatpush1.msra.mxu0 1.0
  %5162 = vmatprep.subr.mxu0 0.0
  %5163 = vmatpush1.msra.mxu0 1.0
  %5164 = vmatprep.subr.mxu0 0.0
  %5165 = vmatpush1.msra.mxu0 1.0
  %5166 = vmatprep.subr.mxu0 0.0
  %5167 = vmatpush1.msra.mxu0 1.0
  %5168 = vmatprep.subr.mxu0 0.0
  %5169 = vmatpush1.msra.mxu0 1.0
  %5170 = vmatprep.subr.mxu0 0.0
  %5171 = vmatpush1.msra.mxu0 1.0
  %5172 = vmatprep.subr.mxu0 0.0
  %5173 = vmatpush1.msra.mxu0 1.0
  %5174 = vmatprep.subr.mxu0 0.0
  %5175 = vmatpush1.msra.mxu0 1.0
  %5176 = vmatprep.subr.mxu0 0.0
  %5177 = vmatpush1.msra.mxu0 1.0
  %5178 = vmatprep.subr.mxu0 0.0
  %5179 = vmatpush1.msra.mxu0 1.0
  %5180 = vmatprep.subr.mxu0 0.0
  %5181 = vmatpush1.msra.mxu0 1.0
  %5182 = vmatprep.subr.mxu0 0.0
  %5183 = vmatpush1.msra.mxu0 1.0
  %5184 = vmatprep.subr.mxu0 0.0
  %5185 = vmatpush1.msra.mxu0 1.0
  %5186 = vmatprep.subr.mxu0 0.0
  %5187 = vmatpush1.msra.mxu0 1.0
  %5188 = vmatprep.subr.mxu0 0.0
  %5189 = vmatpush1.msra.mxu0 1.0
  %5190 = vmatprep.subr.mxu0 0.0
  %5191 = vmatpush1.msra.mxu0 1.0
  %5192 = vmatprep.subr.mxu0 0.0
  %5193 = vmatpush1.msra.mxu0 1.0
  %5194 = vmatprep.subr.mxu0 0.0
  %5195 = vmatpush1.msra.mxu0 1.0
  %5196 = vmatprep.subr.mxu0 0.0
  %5197 = vmatpush1.msra.mxu0 1.0
  %5198 = vmatprep.subr.mxu0 0.0
  %5199 = vmatpush1.msra.mxu0 1.0
  %5200 = vmatprep.subr.mxu0 0.0
  %5201 = vmatpush1.msra.mxu0 1.0
  %5202 = vmatprep.mubr.f32.mxu0 %v5040
  %5203 = vmatmul.mubr.f32.gmra.mrb[0].mxu0 %v5039
  %v5204 = vpop.f32.mrb[0].mxu0
  %v5205 = vadd.f32 %v5120, %v5204
  %v5206 = vpop.f32.mrb[0].mxu0
  %5207 = vmatprep.mubr.f32.mxu0 %v5044
  %5208 = vmatmul.mubr.f32.gmra.mrb[0].mxu0 %v5043
  %v5209 = vpop.f32.mrb[0].mxu0
  %v5210 = vadd.f32 %v5125, %v5209
  %v5211 = vpop.f32.mrb[0].mxu0
  %5212 = vmatprep.mubr.f32.mxu0 %v5048
  %5213 = vmatmul.mubr.f32.gmra.mrb[0].mxu0 %v5047
  %v5214 = vpop.f32.mrb[0].mxu0
  %v5215 = vadd.f32 %v5130, %v5214
  %v5216 = vpop.f32.mrb[0].mxu0
  %5217 = vmatprep.mubr.f32.mxu0 %v5052
  %5218 = vmatmul.mubr.f32.gmra.mrb[0].mxu0 %v5051
  %v5219 = vpop.f32.mrb[0].mxu0
  %v5220 = vadd.f32 %v5135, %v5219
  %v5221 = vpop.f32.mrb[0].mxu0
  %5222 = vdwg.mxu0
  %v5223 = vmul.f32 %v5037, %v5037
  %v5224 = vmul.f32 %v5038, %v5038
  %v5225 = vmul.f32 %v5039, %v5039
  %v5226 = vmul.f32 %v5040, %v5040
  %v5227 = vmul.f32 %v5041, %v5041
  %v5228 = vmul.f32 %v5042, %v5042
  %v5229 = vmul.f32 %v5043, %v5043
  %v5230 = vmul.f32 %v5044, %v5044
  %v5231 = vmul.f32 %v5045, %v5045
  %v5232 = vmul.f32 %v5046, %v5046
  %v5233 = vmul.f32 %v5047, %v5047
  %v5234 = vmul.f32 %v5048, %v5048
  %v5235 = vmul.f32 %v5049, %v5049
  %v5236 = vmul.f32 %v5050, %v5050
  %v5237 = vmul.f32 %v5051, %v5051
  %v5238 = vmul.f32 %v5052, %v5052
  %5239 = vmatprep.subr.mxu0 0.0
  %5240 = vmatpush1.msra.mxu0 1.0
  %5241 = vmatprep.subr.mxu0 0.0
  %5242 = vmatpush1.msra.mxu0 1.0
  %5243 = vmatprep.subr.mxu0 0.0
  %5244 = vmatpush1.msra.mxu0 1.0
  %5245 = vmatprep.subr.mxu0 0.0
  %5246 = vmatpush1.msra.mxu0 1.0
  %5247 = vmatprep.subr.mxu0 0.0
  %5248 = vmatpush1.msra.mxu0 1.0
  %5249 = vmatprep.subr.mxu0 0.0
  %5250 = vmatpush1.msra.mxu0 1.0
  %5251 = vmatprep.subr.mxu0 0.0
  %5252 = vmatpush1.msra.mxu0 1.0
  %5253 = vmatprep.subr.mxu0 0.0
  %5254 = vmatpush1.msra.mxu0 1.0
  %5255 = vmatprep.subr.mxu0 0.0
  %5256 = vmatpush1.msra.mxu0 1.0
  %5257 = vmatprep.subr.mxu0 0.0
  %5258 = vmatpush1.msra.mxu0 1.0
  %5259 = vmatprep.subr.mxu0 0.0
  %5260 = vmatpush1.msra.mxu0 1.0
  %5261 = vmatprep.subr.mxu0 0.0
  %5262 = vmatpush1.msra.mxu0 1.0
  %5263 = vmatprep.subr.mxu0 0.0
  %5264 = vmatpush1.msra.mxu0 1.0
  %5265 = vmatprep.subr.mxu0 0.0
  %5266 = vmatpush1.msra.mxu0 1.0
  %5267 = vmatprep.subr.mxu0 0.0
  %5268 = vmatpush1.msra.mxu0 1.0
  %5269 = vmatprep.subr.mxu0 0.0
  %5270 = vmatpush1.msra.mxu0 1.0
  %5271 = vmatprep.subr.mxu0 0.0
  %5272 = vmatpush1.msra.mxu0 1.0
  %5273 = vmatprep.subr.mxu0 0.0
  %5274 = vmatpush1.msra.mxu0 1.0
  %5275 = vmatprep.subr.mxu0 0.0
  %5276 = vmatpush1.msra.mxu0 1.0
  %5277 = vmatprep.subr.mxu0 0.0
  %5278 = vmatpush1.msra.mxu0 1.0
  %5279 = vmatprep.subr.mxu0 0.0
  %5280 = vmatpush1.msra.mxu0 1.0
  %5281 = vmatprep.subr.mxu0 0.0
  %5282 = vmatpush1.msra.mxu0 1.0
  %5283 = vmatprep.subr.mxu0 0.0
  %5284 = vmatpush1.msra.mxu0 1.0
  %5285 = vmatprep.subr.mxu0 0.0
  %5286 = vmatpush1.msra.mxu0 1.0
  %5287 = vmatprep.subr.mxu0 0.0
  %5288 = vmatpush1.msra.mxu0 1.0
  %5289 = vmatprep.subr.mxu0 0.0
  %5290 = vmatpush1.msra.mxu0 1.0
  %5291 = vmatprep.subr.mxu0 0.0
  %5292 = vmatpush1.msra.mxu0 1.0
  %5293 = vmatprep.subr.mxu0 0.0
  %5294 = vmatpush1.msra.mxu0 1.0
  %5295 = vmatprep.subr.mxu0 0.0
  %5296 = vmatpush1.msra.mxu0 1.0
  %5297 = vmatprep.subr.mxu0 0.0
  %5298 = vmatpush1.msra.mxu0 1.0
  %5299 = vmatprep.subr.mxu0 0.0
  %5300 = vmatpush1.msra.mxu0 1.0
  %5301 = vmatprep.subr.mxu0 0.0
  %5302 = vmatpush1.msra.mxu0 1.0
  %5303 = vmatprep.mubr.f32.mxu0 %v5224
  %5304 = vmatmul.mubr.f32.gmra.mrb[0].mxu0 %v5223
  %v5305 = vpop.f32.mrb[0].mxu0
  %v5306 = vadd.f32 0.0, %v5305
  %v5307 = vpop.f32.mrb[0].mxu0
  %5308 = vmatprep.mubr.f32.mxu0 %v5228
  %5309 = vmatmul.mubr.f32.gmra.mrb[0].mxu0 %v5227
  %v5310 = vpop.f32.mrb[0].mxu0
  %v5311 = vadd.f32 0.0, %v5310
  %v5312 = vpop.f32.mrb[0].mxu0
  %5313 = vmatprep.mubr.f32.mxu0 %v5232
  %5314 = vmatmul.mubr.f32.gmra.mrb[0].mxu0 %v5231
  %v5315 = vpop.f32.mrb[0].mxu0
  %v5316 = vadd.f32 0.0, %v5315
  %v5317 = vpop.f32.mrb[0].mxu0
  %5318 = vmatprep.mubr.f32.mxu0 %v5236
  %5319 = vmatmul.mubr.f32.gmra.mrb[0].mxu0 %v5235
  %v5320 = vpop.f32.mrb[0].mxu0
  %v5321 = vadd.f32 0.0, %v5320
  %v5322 = vpop.f32.mrb[0].mxu0
  %5323 = vdwg.mxu0
  %5324 = vmatprep.subr.mxu0 0.0
  %5325 = vmatpush1.msra.mxu0 1.0
  %5326 = vmatprep.subr.mxu0 0.0
  %5327 = vmatpush1.msra.mxu0 1.0
  %5328 = vmatprep.subr.mxu0 0.0
  %5329 = vmatpush1.msra.mxu0 1.0
  %5330 = vmatprep.subr.mxu0 0.0
  %5331 = vmatpush1.msra.mxu0 1.0
  %5332 = vmatprep.subr.mxu0 0.0
  %5333 = vmatpush1.msra.mxu0 1.0
  %5334 = vmatprep.subr.mxu0 0.0
  %5335 = vmatpush1.msra.mxu0 1.0
  %5336 = vmatprep.subr.mxu0 0.0
  %5337 = vmatpush1.msra.mxu0 1.0
  %5338 = vmatprep.subr.mxu0 0.0
  %5339 = vmatpush1.msra.mxu0 1.0
  %5340 = vmatprep.subr.mxu0 0.0
  %5341 = vmatpush1.msra.mxu0 1.0
  %5342 = vmatprep.subr.mxu0 0.0
  %5343 = vmatpush1.msra.mxu0 1.0
  %5344 = vmatprep.subr.mxu0 0.0
  %5345 = vmatpush1.msra.mxu0 1.0
  %5346 = vmatprep.subr.mxu0 0.0
  %5347 = vmatpush1.msra.mxu0 1.0
  %5348 = vmatprep.subr.mxu0 0.0
  %5349 = vmatpush1.msra.mxu0 1.0
  %5350 = vmatprep.subr.mxu0 0.0
  %5351 = vmatpush1.msra.mxu0 1.0
  %5352 = vmatprep.subr.mxu0 0.0
  %5353 = vmatpush1.msra.mxu0 1.0
  %5354 = vmatprep.subr.mxu0 0.0
  %5355 = vmatpush1.msra.mxu0 1.0
  %5356 = vmatprep.subr.mxu0 0.0
  %5357 = vmatpush1.msra.mxu0 1.0
  %5358 = vmatprep.subr.mxu0 0.0
  %5359 = vmatpush1.msra.mxu0 1.0
  %5360 = vmatprep.subr.mxu0 0.0
  %5361 = vmatpush1.msra.mxu0 1.0
  %5362 = vmatprep.subr.mxu0 0.0
  %5363 = vmatpush1.msra.mxu0 1.0
  %5364 = vmatprep.subr.mxu0 0.0
  %5365 = vmatpush1.msra.mxu0 1.0
  %5366 = vmatprep.subr.mxu0 0.0
  %5367 = vmatpush1.msra.mxu0 1.0
  %5368 = vmatprep.subr.mxu0 0.0
  %5369 = vmatpush1.msra.mxu0 1.0
  %5370 = vmatprep.subr.mxu0 0.0
  %5371 = vmatpush1.msra.mxu0 1.0
  %5372 = vmatprep.subr.mxu0 0.0
  %5373 = vmatpush1.msra.mxu0 1.0
  %5374 = vmatprep.subr.mxu0 0.0
  %5375 = vmatpush1.msra.mxu0 1.0
  %5376 = vmatprep.subr.mxu0 0.0
  %5377 = vmatpush1.msra.mxu0 1.0
  %5378 = vmatprep.subr.mxu0 0.0
  %5379 = vmatpush1.msra.mxu0 1.0
  %5380 = vmatprep.subr.mxu0 0.0
  %5381 = vmatpush1.msra.mxu0 1.0
  %5382 = vmatprep.subr.mxu0 0.0
  %5383 = vmatpush1.msra.mxu0 1.0
  %5384 = vmatprep.subr.mxu0 0.0
  %5385 = vmatpush1.msra.mxu0 1.0
  %5386 = vmatprep.subr.mxu0 0.0
  %5387 = vmatpush1.msra.mxu0 1.0
  %5388 = vmatprep.mubr.f32.mxu0 %v5226
  %5389 = vmatmul.mubr.f32.gmra.mrb[0].mxu0 %v5225
  %v5390 = vpop.f32.mrb[0].mxu0
  %v5391 = vadd.f32 %v5306, %v5390
  %v5392 = vpop.f32.mrb[0].mxu0
  %5393 = vmatprep.mubr.f32.mxu0 %v5230
  %5394 = vmatmul.mubr.f32.gmra.mrb[0].mxu0 %v5229
  %v5395 = vpop.f32.mrb[0].mxu0
  %v5396 = vadd.f32 %v5311, %v5395
  %v5397 = vpop.f32.mrb[0].mxu0
  %5398 = vmatprep.mubr.f32.mxu0 %v5234
  %5399 = vmatmul.mubr.f32.gmra.mrb[0].mxu0 %v5233
  %v5400 = vpop.f32.mrb[0].mxu0
  %v5401 = vadd.f32 %v5316, %v5400
  %v5402 = vpop.f32.mrb[0].mxu0
  %5403 = vmatprep.mubr.f32.mxu0 %v5238
  %5404 = vmatmul.mubr.f32.gmra.mrb[0].mxu0 %v5237
  %v5405 = vpop.f32.mrb[0].mxu0
  %v5406 = vadd.f32 %v5321, %v5405
  %v5407 = vpop.f32.mrb[0].mxu0
  %5408 = vdwg.mxu0
  %v5409 = vmul.f32 %v5205, 0.001953125
  %v5410 = vmul.f32 %v5210, 0.001953125
  %v5411 = vmul.f32 %v5215, 0.001953125
  %v5412 = vmul.f32 %v5220, 0.001953125
  %v5413 = vmul.f32 %v5391, 0.001953125
  %v5414 = vmul.f32 %v5396, 0.001953125
  %v5415 = vmul.f32 %v5401, 0.001953125
  %v5416 = vmul.f32 %v5406, 0.001953125
  %v5417 = vmul.f32 %v5409, %v5409
  %v5418 = vmul.f32 %v5410, %v5410
  %v5419 = vmul.f32 %v5411, %v5411
  %v5420 = vmul.f32 %v5412, %v5412
  %v5421 = vsub.f32 %v5413, %v5417
  %v5422 = vsub.f32 %v5414, %v5418
  %v5423 = vsub.f32 %v5415, %v5419
  %v5424 = vsub.f32 %v5416, %v5420
  %v5425 = vmax.f32 %v5421, 0.0
  %v5426 = vmax.f32 %v5422, 0.0
  %v5427 = vmax.f32 %v5423, 0.0
  %v5428 = vmax.f32 %v5424, 0.0
  %v5429 = vadd.f32 %v5425, 1e-05
  %v5430 = vadd.f32 %v5426, 1e-05
  %v5431 = vadd.f32 %v5427, 1e-05
  %v5432 = vadd.f32 %v5428, 1e-05
  %v5433 = vrsqrt.pop %v5429
  %v5434 = vrsqrt.pop %v5430
  %v5435 = vrsqrt.pop %v5431
  %v5436 = vrsqrt.pop %v5432
  %5441 = vrot.lane.b32.xlu0 %v5433, 2
  %v5442 = vpop.permute.xlu0 %5441
  %5443 = vrot.lane.b32.xlu0 %v5434, 2
  %v5444 = vpop.permute.xlu0 %5443
  %5445 = vrot.lane.b32.xlu0 %v5435, 2
  %v5446 = vpop.permute.xlu0 %5445
  %5447 = vrot.lane.b32.xlu0 %v5436, 2
  %v5448 = vpop.permute.xlu0 %5447
  %v5453 = vmul.f32 %v152, %v5442
  %v5454 = vmul.f32 %v153, %v5444
  %v5455 = vmul.f32 %v154, %v5446
  %v5456 = vmul.f32 %v155, %v5448
  %5461 = vrot.lane.b32.xlu0 %v5453, 126
  %v5462 = vpop.permute.xlu0 %5461
  %5463 = vrot.lane.b32.xlu0 %v5454, 126
  %v5464 = vpop.permute.xlu0 %5463
  %5465 = vrot.lane.b32.xlu0 %v5455, 126
  %v5466 = vpop.permute.xlu0 %5465
  %5467 = vrot.lane.b32.xlu0 %v5456, 126
  %v5468 = vpop.permute.xlu0 %5467
  %v5473 = vmul.f32 %v5409, %v5462
  %v5474 = vmul.f32 %v5410, %v5464
  %v5475 = vmul.f32 %v5411, %v5466
  %v5476 = vmul.f32 %v5412, %v5468
  %5481 = vrot.lane.b32.xlu0 %v5473, 3
  %v5482 = vpop.permute.xlu0 %5481
  %5483 = vrot.lane.b32.xlu0 %v5474, 3
  %v5484 = vpop.permute.xlu0 %5483
  %5485 = vrot.lane.b32.xlu0 %v5475, 3
  %v5486 = vpop.permute.xlu0 %5485
  %5487 = vrot.lane.b32.xlu0 %v5476, 3
  %v5488 = vpop.permute.xlu0 %5487
  %v5493 = vsub.f32 %v152, %v5482
  %v5494 = vsub.f32 %v153, %v5484
  %v5495 = vsub.f32 %v154, %v5486
  %v5496 = vsub.f32 %v155, %v5488
  %5497 = vset.pattern.permute.xlu0 2
  %5498 = vperm.xlu0 %5497, %v5453
  %v5499 = vpop.permute.xlu0 %5498
  %5501 = vset.pattern.permute.xlu0 2
  %5502 = vperm.xlu0 %5501, %v5454
  %v5503 = vpop.permute.xlu0 %5502
  %5505 = vset.pattern.permute.xlu0 2
  %5506 = vperm.xlu0 %5505, %v5455
  %v5507 = vpop.permute.xlu0 %5506
  %5509 = vset.pattern.permute.xlu0 2
  %5510 = vperm.xlu0 %5509, %v5456
  %v5511 = vpop.permute.xlu0 %5510
  %v5513 = vmul.f32 %v5037, %v5499
  %v5514 = vmul.f32 %v5038, %v5499
  %v5515 = vmul.f32 %v5039, %v5499
  %v5516 = vmul.f32 %v5040, %v5499
  %v5517 = vmul.f32 %v5041, %v5503
  %v5518 = vmul.f32 %v5042, %v5503
  %v5519 = vmul.f32 %v5043, %v5503
  %v5520 = vmul.f32 %v5044, %v5503
  %v5521 = vmul.f32 %v5045, %v5507
  %v5522 = vmul.f32 %v5046, %v5507
  %v5523 = vmul.f32 %v5047, %v5507
  %v5524 = vmul.f32 %v5048, %v5507
  %v5525 = vmul.f32 %v5049, %v5511
  %v5526 = vmul.f32 %v5050, %v5511
  %v5527 = vmul.f32 %v5051, %v5511
  %v5528 = vmul.f32 %v5052, %v5511
  %5530 = vset.pattern.permute.xlu0 3
  %5531 = vperm.xlu0 %5530, %v5493
  %v5532 = vpop.permute.xlu0 %5531
  %5535 = vset.pattern.permute.xlu0 3
  %5536 = vperm.xlu0 %5535, %v5494
  %v5537 = vpop.permute.xlu0 %5536
  %5540 = vset.pattern.permute.xlu0 3
  %5541 = vperm.xlu0 %5540, %v5495
  %v5542 = vpop.permute.xlu0 %5541
  %5545 = vset.pattern.permute.xlu0 3
  %5546 = vperm.xlu0 %5545, %v5496
  %v5547 = vpop.permute.xlu0 %5546
  %v5549 = vadd.f32 %v5513, %v5532
  %v5550 = vadd.f32 %v5514, %v5532
  %v5551 = vadd.f32 %v5515, %v5532
  %v5552 = vadd.f32 %v5516, %v5532
  %v5553 = vadd.f32 %v5517, %v5537
  %v5554 = vadd.f32 %v5518, %v5537
  %v5555 = vadd.f32 %v5519, %v5537
  %v5556 = vadd.f32 %v5520, %v5537
  %v5557 = vadd.f32 %v5521, %v5542
  %v5558 = vadd.f32 %v5522, %v5542
  %v5559 = vadd.f32 %v5523, %v5542
  %v5560 = vadd.f32 %v5524, %v5542
  %v5561 = vadd.f32 %v5525, %v5547
  %v5562 = vadd.f32 %v5526, %v5547
  %v5563 = vadd.f32 %v5527, %v5547
  %v5564 = vadd.f32 %v5528, %v5547
  %v5565 = vmax.f32 %v5549, 0.0
  %v5566 = vmax.f32 %v5550, 0.0
  %v5567 = vmax.f32 %v5551, 0.0
  %v5568 = vmax.f32 %v5552, 0.0
  %v5569 = vmax.f32 %v5553, 0.0
  %v5570 = vmax.f32 %v5554, 0.0
  %v5571 = vmax.f32 %v5555, 0.0
  %v5572 = vmax.f32 %v5556, 0.0
  %v5573 = vmax.f32 %v5557, 0.0
  %v5574 = vmax.f32 %v5558, 0.0
  %v5575 = vmax.f32 %v5559, 0.0
  %v5576 = vmax.f32 %v5560, 0.0
  %v5577 = vmax.f32 %v5561, 0.0
  %v5578 = vmax.f32 %v5562, 0.0
  %v5579 = vmax.f32 %v5563, 0.0
  %v5580 = vmax.f32 %v5564, 0.0
  %5581 = vrot.lane.b32.xlu0 %v5565, 17
  %v5582 = vpop.permute.xlu0 %5581
  %5583 = vrot.lane.b32.xlu0 %v5569, 17
  %v5584 = vpop.permute.xlu0 %5583
  %5585 = vrot.lane.b32.xlu0 %v5573, 17
  %v5586 = vpop.permute.xlu0 %5585
  %5587 = vrot.lane.b32.xlu0 %v5577, 17
  %v5588 = vpop.permute.xlu0 %5587
  %5589 = vrot.lane.b32.xlu0 %v5566, 17
  %v5590 = vpop.permute.xlu0 %5589
  %5591 = vrot.lane.b32.xlu0 %v5570, 17
  %v5592 = vpop.permute.xlu0 %5591
  %5593 = vrot.lane.b32.xlu0 %v5574, 17
  %v5594 = vpop.permute.xlu0 %5593
  %5595 = vrot.lane.b32.xlu0 %v5578, 17
  %v5596 = vpop.permute.xlu0 %5595
  %5597 = vrot.lane.b32.xlu0 %v5567, 17
  %v5598 = vpop.permute.xlu0 %5597
  %5599 = vrot.lane.b32.xlu0 %v5571, 17
  %v5600 = vpop.permute.xlu0 %5599
  %5601 = vrot.lane.b32.xlu0 %v5575, 17
  %v5602 = vpop.permute.xlu0 %5601
  %5603 = vrot.lane.b32.xlu0 %v5579, 17
  %v5604 = vpop.permute.xlu0 %5603
  %5605 = vrot.lane.b32.xlu0 %v5568, 17
  %v5606 = vpop.permute.xlu0 %5605
  %5607 = vrot.lane.b32.xlu0 %v5572, 17
  %v5608 = vpop.permute.xlu0 %5607
  %5609 = vrot.lane.b32.xlu0 %v5576, 17
  %v5610 = vpop.permute.xlu0 %5609
  %5611 = vrot.lane.b32.xlu0 %v5580, 17
  %v5612 = vpop.permute.xlu0 %5611
  %v5613 = vsel %vm179, %v5598, %v5606
  %v5614 = vsel %vm179, %v5600, %v5608
  %v5615 = vsel %vm179, %v5602, %v5610
  %v5616 = vsel %vm179, %v5604, %v5612
  %v5617 = vsel %vm179, %v5590, %v5598
  %v5618 = vsel %vm179, %v5592, %v5600
  %v5619 = vsel %vm179, %v5594, %v5602
  %v5620 = vsel %vm179, %v5596, %v5604
  %v5621 = vsel %vm179, %v5582, %v5590
  %v5622 = vsel %vm179, %v5584, %v5592
  %v5623 = vsel %vm179, %v5586, %v5594
  %v5624 = vsel %vm179, %v5588, %v5596
  %v5625 = vsel %vm179, %v5606, %v5582
  %v5626 = vsel %vm179, %v5608, %v5584
  %v5627 = vsel %vm179, %v5610, %v5586
  %v5628 = vsel %vm179, %v5612, %v5588
  %v5629 = vmul.f32 %v5625, %v136
  %v5630 = vmul.f32 %v5621, %v137
  %v5631 = vmul.f32 %v5617, %v138
  %v5632 = vmul.f32 %v5613, %v139
  %v5633 = vmul.f32 %v5626, %v136
  %v5634 = vmul.f32 %v5622, %v137
  %v5635 = vmul.f32 %v5618, %v138
  %v5636 = vmul.f32 %v5614, %v139
  %v5637 = vmul.f32 %v5627, %v136
  %v5638 = vmul.f32 %v5623, %v137
  %v5639 = vmul.f32 %v5619, %v138
  %v5640 = vmul.f32 %v5615, %v139
  %v5641 = vmul.f32 %v5628, %v136
  %v5642 = vmul.f32 %v5624, %v137
  %v5643 = vmul.f32 %v5620, %v138
  %v5644 = vmul.f32 %v5616, %v139
  %v5645 = vld [vmem:[%s3] sm:$0xff]
  %v5646 = vld [vmem:[%s3 + $0x8] sm:$0xff]
  %5647 = vrot.lane.b32.xlu0 %v5565, 16
  %v5648 = vpop.permute.xlu0 %5647
  %5649 = vrot.lane.b32.xlu0 %v5569, 16
  %v5650 = vpop.permute.xlu0 %5649
  %5651 = vrot.lane.b32.xlu0 %v5573, 16
  %v5652 = vpop.permute.xlu0 %5651
  %5653 = vrot.lane.b32.xlu0 %v5577, 16
  %v5654 = vpop.permute.xlu0 %5653
  %5655 = vrot.lane.b32.xlu0 %v5566, 16
  %v5656 = vpop.permute.xlu0 %5655
  %5657 = vrot.lane.b32.xlu0 %v5570, 16
  %v5658 = vpop.permute.xlu0 %5657
  %5659 = vrot.lane.b32.xlu0 %v5574, 16
  %v5660 = vpop.permute.xlu0 %5659
  %5661 = vrot.lane.b32.xlu0 %v5578, 16
  %v5662 = vpop.permute.xlu0 %5661
  %5663 = vrot.lane.b32.xlu0 %v5567, 16
  %v5664 = vpop.permute.xlu0 %5663
  %5665 = vrot.lane.b32.xlu0 %v5571, 16
  %v5666 = vpop.permute.xlu0 %5665
  %5667 = vrot.lane.b32.xlu0 %v5575, 16
  %v5668 = vpop.permute.xlu0 %5667
  %5669 = vrot.lane.b32.xlu0 %v5579, 16
  %v5670 = vpop.permute.xlu0 %5669
  %5671 = vrot.lane.b32.xlu0 %v5568, 16
  %v5672 = vpop.permute.xlu0 %5671
  %5673 = vrot.lane.b32.xlu0 %v5572, 16
  %v5674 = vpop.permute.xlu0 %5673
  %5675 = vrot.lane.b32.xlu0 %v5576, 16
  %v5676 = vpop.permute.xlu0 %5675
  %5677 = vrot.lane.b32.xlu0 %v5580, 16
  %v5678 = vpop.permute.xlu0 %5677
  %v5679 = vsel %vm200, %v5664, %v5672
  %v5680 = vsel %vm200, %v5666, %v5674
  %v5681 = vsel %vm200, %v5668, %v5676
  %v5682 = vsel %vm200, %v5670, %v5678
  %v5683 = vsel %vm200, %v5656, %v5664
  %v5684 = vsel %vm200, %v5658, %v5666
  %v5685 = vsel %vm200, %v5660, %v5668
  %v5686 = vsel %vm200, %v5662, %v5670
  %v5687 = vsel %vm200, %v5648, %v5656
  %v5688 = vsel %vm200, %v5650, %v5658
  %v5689 = vsel %vm200, %v5652, %v5660
  %v5690 = vsel %vm200, %v5654, %v5662
  %v5691 = vsel %vm200, %v5672, %v5648
  %v5692 = vsel %vm200, %v5674, %v5650
  %v5693 = vsel %vm200, %v5676, %v5652
  %v5694 = vsel %vm200, %v5678, %v5654
  %v5695 = vmul.f32 %v5691, %v60
  %v5696 = vmul.f32 %v5687, %v61
  %v5697 = vmul.f32 %v5683, %v62
  %v5698 = vmul.f32 %v5679, %v63
  %v5699 = vmul.f32 %v5692, %v60
  %v5700 = vmul.f32 %v5688, %v61
  %v5701 = vmul.f32 %v5684, %v62
  %v5702 = vmul.f32 %v5680, %v63
  %v5703 = vmul.f32 %v5693, %v60
  %v5704 = vmul.f32 %v5689, %v61
  %v5705 = vmul.f32 %v5685, %v62
  %v5706 = vmul.f32 %v5681, %v63
  %v5707 = vmul.f32 %v5694, %v60
  %v5708 = vmul.f32 %v5690, %v61
  %v5709 = vmul.f32 %v5686, %v62
  %v5710 = vmul.f32 %v5682, %v63
  %s5711 = scalar_lea.vmem %s3, 16
  %v5712 = vld [vmem:[%s5711] sm:$0xff]
  %v5713 = vld [vmem:[%s5711 + $0x8] sm:$0xff]
  %v5715 = vsel %vm2811, %v5712, 0
  %v5718 = vsel %vm2811, %v5713, 0
  %5720 = vmatprep.subr.mxu0 %v5696
  %5721 = vmatpush1.msra.mxu0 %v5695
  %5722 = vmatprep.subr.mxu0 %v5700
  %5723 = vmatpush1.msra.mxu0 %v5699
  %5724 = vmatprep.subr.mxu0 %v5704
  %5725 = vmatpush1.msra.mxu0 %v5703
  %5726 = vmatprep.subr.mxu0 %v5708
  %5727 = vmatpush1.msra.mxu0 %v5707
  %5728 = vmatprep.subr.mxu0 0.0
  %5729 = vmatpush1.msra.mxu0 0.0
  %5730 = vmatprep.subr.mxu0 0.0
  %5731 = vmatpush1.msra.mxu0 0.0
  %5732 = vmatprep.subr.mxu0 0.0
  %5733 = vmatpush1.msra.mxu0 0.0
  %5734 = vmatprep.subr.mxu0 0.0
  %5735 = vmatpush1.msra.mxu0 0.0
  %5736 = vmatprep.subr.mxu0 0.0
  %5737 = vmatpush1.msra.mxu0 0.0
  %5738 = vmatprep.subr.mxu0 0.0
  %5739 = vmatpush1.msra.mxu0 0.0
  %5740 = vmatprep.subr.mxu0 0.0
  %5741 = vmatpush1.msra.mxu0 0.0
  %5742 = vmatprep.subr.mxu0 0.0
  %5743 = vmatpush1.msra.mxu0 0.0
  %5744 = vmatprep.subr.mxu0 0.0
  %5745 = vmatpush1.msra.mxu0 0.0
  %5746 = vmatprep.subr.mxu0 0.0
  %5747 = vmatpush1.msra.mxu0 0.0
  %5748 = vmatprep.subr.mxu0 0.0
  %5749 = vmatpush1.msra.mxu0 0.0
  %5750 = vmatprep.subr.mxu0 0.0
  %5751 = vmatpush1.msra.mxu0 0.0
  %5752 = vmatprep.subr.mxu0 0.0
  %5753 = vmatpush1.msra.mxu0 0.0
  %5754 = vmatprep.subr.mxu0 0.0
  %5755 = vmatpush1.msra.mxu0 0.0
  %5756 = vmatprep.subr.mxu0 0.0
  %5757 = vmatpush1.msra.mxu0 0.0
  %5758 = vmatprep.subr.mxu0 0.0
  %5759 = vmatpush1.msra.mxu0 0.0
  %5760 = vmatprep.subr.mxu0 0.0
  %5761 = vmatpush1.msra.mxu0 0.0
  %5762 = vmatprep.subr.mxu0 0.0
  %5763 = vmatpush1.msra.mxu0 0.0
  %5764 = vmatprep.subr.mxu0 0.0
  %5765 = vmatpush1.msra.mxu0 0.0
  %5766 = vmatprep.subr.mxu0 0.0
  %5767 = vmatpush1.msra.mxu0 0.0
  %5768 = vmatprep.subr.mxu0 0.0
  %5769 = vmatpush1.msra.mxu0 0.0
  %5770 = vmatprep.subr.mxu0 0.0
  %5771 = vmatpush1.msra.mxu0 0.0
  %5772 = vmatprep.subr.mxu0 0.0
  %5773 = vmatpush1.msra.mxu0 0.0
  %5774 = vmatprep.subr.mxu0 0.0
  %5775 = vmatpush1.msra.mxu0 0.0
  %5776 = vmatprep.subr.mxu0 0.0
  %5777 = vmatpush1.msra.mxu0 0.0
  %5778 = vmatprep.subr.mxu0 0.0
  %5779 = vmatpush1.msra.mxu0 0.0
  %5780 = vmatprep.subr.mxu0 0.0
  %5781 = vmatpush1.msra.mxu0 0.0
  %5782 = vmatprep.subr.mxu0 0.0
  %5783 = vmatpush1.msra.mxu0 0.0
  %5784 = vmatprep.mubr.f32.mxu0 0.0
  %5785 = vmatmul.mubr.f32.gmra.mrb[0].mxu0 %v5715
  %v5786 = vpop.f32.mrb[0].mxu0
  %v5787 = vadd.f32 0.0, %v5786
  %v5788 = vpop.f32.mrb[0].mxu0
  %v5789 = vadd.f32 0.0, %v5788
  %5790 = vmatprep.mubr.f32.mxu0 0.0
  %5791 = vmatmul.mubr.f32.gmra.mrb[0].mxu0 %v5718
  %v5792 = vpop.f32.mrb[0].mxu0
  %v5793 = vadd.f32 0.0, %v5792
  %v5794 = vpop.f32.mrb[0].mxu0
  %v5795 = vadd.f32 0.0, %v5794
  %5796 = vdwg.mxu0
  %5797 = vmatprep.subr.mxu0 %v5698
  %5798 = vmatpush1.msra.mxu0 %v5697
  %5799 = vmatprep.subr.mxu0 %v5702
  %5800 = vmatpush1.msra.mxu0 %v5701
  %5801 = vmatprep.subr.mxu0 %v5706
  %5802 = vmatpush1.msra.mxu0 %v5705
  %5803 = vmatprep.subr.mxu0 %v5710
  %5804 = vmatpush1.msra.mxu0 %v5709
  %5805 = vmatprep.subr.mxu0 0.0
  %5806 = vmatpush1.msra.mxu0 0.0
  %5807 = vmatprep.subr.mxu0 0.0
  %5808 = vmatpush1.msra.mxu0 0.0
  %5809 = vmatprep.subr.mxu0 0.0
  %5810 = vmatpush1.msra.mxu0 0.0
  %5811 = vmatprep.subr.mxu0 0.0
  %5812 = vmatpush1.msra.mxu0 0.0
  %5813 = vmatprep.subr.mxu0 0.0
  %5814 = vmatpush1.msra.mxu0 0.0
  %5815 = vmatprep.subr.mxu0 0.0
  %5816 = vmatpush1.msra.mxu0 0.0
  %5817 = vmatprep.subr.mxu0 0.0
  %5818 = vmatpush1.msra.mxu0 0.0
  %5819 = vmatprep.subr.mxu0 0.0
  %5820 = vmatpush1.msra.mxu0 0.0
  %5821 = vmatprep.subr.mxu0 0.0
  %5822 = vmatpush1.msra.mxu0 0.0
  %5823 = vmatprep.subr.mxu0 0.0
  %5824 = vmatpush1.msra.mxu0 0.0
  %5825 = vmatprep.subr.mxu0 0.0
  %5826 = vmatpush1.msra.mxu0 0.0
  %5827 = vmatprep.subr.mxu0 0.0
  %5828 = vmatpush1.msra.mxu0 0.0
  %5829 = vmatprep.subr.mxu0 0.0
  %5830 = vmatpush1.msra.mxu0 0.0
  %5831 = vmatprep.subr.mxu0 0.0
  %5832 = vmatpush1.msra.mxu0 0.0
  %5833 = vmatprep.subr.mxu0 0.0
  %5834 = vmatpush1.msra.mxu0 0.0
  %5835 = vmatprep.subr.mxu0 0.0
  %5836 = vmatpush1.msra.mxu0 0.0
  %5837 = vmatprep.subr.mxu0 0.0
  %5838 = vmatpush1.msra.mxu0 0.0
  %5839 = vmatprep.subr.mxu0 0.0
  %5840 = vmatpush1.msra.mxu0 0.0
  %5841 = vmatprep.subr.mxu0 0.0
  %5842 = vmatpush1.msra.mxu0 0.0
  %5843 = vmatprep.subr.mxu0 0.0
  %5844 = vmatpush1.msra.mxu0 0.0
  %5845 = vmatprep.subr.mxu0 0.0
  %5846 = vmatpush1.msra.mxu0 0.0
  %5847 = vmatprep.subr.mxu0 0.0
  %5848 = vmatpush1.msra.mxu0 0.0
  %5849 = vmatprep.subr.mxu0 0.0
  %5850 = vmatpush1.msra.mxu0 0.0
  %5851 = vmatprep.subr.mxu0 0.0
  %5852 = vmatpush1.msra.mxu0 0.0
  %5853 = vmatprep.subr.mxu0 0.0
  %5854 = vmatpush1.msra.mxu0 0.0
  %5855 = vmatprep.subr.mxu0 0.0
  %5856 = vmatpush1.msra.mxu0 0.0
  %5857 = vmatprep.subr.mxu0 0.0
  %5858 = vmatpush1.msra.mxu0 0.0
  %5859 = vmatprep.subr.mxu0 0.0
  %5860 = vmatpush1.msra.mxu0 0.0
  %5861 = vmatprep.mubr.f32.mxu0 0.0
  %5862 = vmatmul.mubr.f32.gmra.mrb[0].mxu0 %v5715
  %v5863 = vpop.f32.mrb[0].mxu0
  %v5864 = vadd.f32 0.0, %v5863
  %v5865 = vpop.f32.mrb[0].mxu0
  %v5866 = vadd.f32 0.0, %v5865
  %5867 = vmatprep.mubr.f32.mxu0 0.0
  %5868 = vmatmul.mubr.f32.gmra.mrb[0].mxu0 %v5718
  %v5869 = vpop.f32.mrb[0].mxu0
  %v5870 = vadd.f32 0.0, %v5869
  %v5871 = vpop.f32.mrb[0].mxu0
  %v5872 = vadd.f32 0.0, %v5871
  %5873 = vdwg.mxu0
  %v5875 = vsel %vm2811, %v5645, 0
  %v5878 = vsel %vm2811, %v5646, 0
  %5880 = vmatprep.subr.mxu0 %v5630
  %5881 = vmatpush1.msra.mxu0 %v5629
  %5882 = vmatprep.subr.mxu0 %v5634
  %5883 = vmatpush1.msra.mxu0 %v5633
  %5884 = vmatprep.subr.mxu0 %v5638
  %5885 = vmatpush1.msra.mxu0 %v5637
  %5886 = vmatprep.subr.mxu0 %v5642
  %5887 = vmatpush1.msra.mxu0 %v5641
  %5888 = vmatprep.subr.mxu0 0.0
  %5889 = vmatpush1.msra.mxu0 0.0
  %5890 = vmatprep.subr.mxu0 0.0
  %5891 = vmatpush1.msra.mxu0 0.0
  %5892 = vmatprep.subr.mxu0 0.0
  %5893 = vmatpush1.msra.mxu0 0.0
  %5894 = vmatprep.subr.mxu0 0.0
  %5895 = vmatpush1.msra.mxu0 0.0
  %5896 = vmatprep.subr.mxu0 0.0
  %5897 = vmatpush1.msra.mxu0 0.0
  %5898 = vmatprep.subr.mxu0 0.0
  %5899 = vmatpush1.msra.mxu0 0.0
  %5900 = vmatprep.subr.mxu0 0.0
  %5901 = vmatpush1.msra.mxu0 0.0
  %5902 = vmatprep.subr.mxu0 0.0
  %5903 = vmatpush1.msra.mxu0 0.0
  %5904 = vmatprep.subr.mxu0 0.0
  %5905 = vmatpush1.msra.mxu0 0.0
  %5906 = vmatprep.subr.mxu0 0.0
  %5907 = vmatpush1.msra.mxu0 0.0
  %5908 = vmatprep.subr.mxu0 0.0
  %5909 = vmatpush1.msra.mxu0 0.0
  %5910 = vmatprep.subr.mxu0 0.0
  %5911 = vmatpush1.msra.mxu0 0.0
  %5912 = vmatprep.subr.mxu0 0.0
  %5913 = vmatpush1.msra.mxu0 0.0
  %5914 = vmatprep.subr.mxu0 0.0
  %5915 = vmatpush1.msra.mxu0 0.0
  %5916 = vmatprep.subr.mxu0 0.0
  %5917 = vmatpush1.msra.mxu0 0.0
  %5918 = vmatprep.subr.mxu0 0.0
  %5919 = vmatpush1.msra.mxu0 0.0
  %5920 = vmatprep.subr.mxu0 0.0
  %5921 = vmatpush1.msra.mxu0 0.0
  %5922 = vmatprep.subr.mxu0 0.0
  %5923 = vmatpush1.msra.mxu0 0.0
  %5924 = vmatprep.subr.mxu0 0.0
  %5925 = vmatpush1.msra.mxu0 0.0
  %5926 = vmatprep.subr.mxu0 0.0
  %5927 = vmatpush1.msra.mxu0 0.0
  %5928 = vmatprep.subr.mxu0 0.0
  %5929 = vmatpush1.msra.mxu0 0.0
  %5930 = vmatprep.subr.mxu0 0.0
  %5931 = vmatpush1.msra.mxu0 0.0
  %5932 = vmatprep.subr.mxu0 0.0
  %5933 = vmatpush1.msra.mxu0 0.0
  %5934 = vmatprep.subr.mxu0 0.0
  %5935 = vmatpush1.msra.mxu0 0.0
  %5936 = vmatprep.subr.mxu0 0.0
  %5937 = vmatpush1.msra.mxu0 0.0
  %5938 = vmatprep.subr.mxu0 0.0
  %5939 = vmatpush1.msra.mxu0 0.0
  %5940 = vmatprep.subr.mxu0 0.0
  %5941 = vmatpush1.msra.mxu0 0.0
  %5942 = vmatprep.subr.mxu0 0.0
  %5943 = vmatpush1.msra.mxu0 0.0
  %5944 = vmatprep.mubr.f32.mxu0 0.0
  %5945 = vmatmul.mubr.f32.gmra.mrb[0].mxu0 %v5875
  %v5946 = vpop.f32.mrb[0].mxu0
  %v5947 = vadd.f32 %v5787, %v5946
  %v5948 = vpop.f32.mrb[0].mxu0
  %v5949 = vadd.f32 %v5789, %v5948
  %5950 = vmatprep.mubr.f32.mxu0 0.0
  %5951 = vmatmul.mubr.f32.gmra.mrb[0].mxu0 %v5878
  %v5952 = vpop.f32.mrb[0].mxu0
  %v5953 = vadd.f32 %v5793, %v5952
  %v5954 = vpop.f32.mrb[0].mxu0
  %v5955 = vadd.f32 %v5795, %v5954
  %5956 = vdwg.mxu0
  %5957 = vmatprep.subr.mxu0 %v5632
  %5958 = vmatpush1.msra.mxu0 %v5631
  %5959 = vmatprep.subr.mxu0 %v5636
  %5960 = vmatpush1.msra.mxu0 %v5635
  %5961 = vmatprep.subr.mxu0 %v5640
  %5962 = vmatpush1.msra.mxu0 %v5639
  %5963 = vmatprep.subr.mxu0 %v5644
  %5964 = vmatpush1.msra.mxu0 %v5643
  %5965 = vmatprep.subr.mxu0 0.0
  %5966 = vmatpush1.msra.mxu0 0.0
  %5967 = vmatprep.subr.mxu0 0.0
  %5968 = vmatpush1.msra.mxu0 0.0
  %5969 = vmatprep.subr.mxu0 0.0
  %5970 = vmatpush1.msra.mxu0 0.0
  %5971 = vmatprep.subr.mxu0 0.0
  %5972 = vmatpush1.msra.mxu0 0.0
  %5973 = vmatprep.subr.mxu0 0.0
  %5974 = vmatpush1.msra.mxu0 0.0
  %5975 = vmatprep.subr.mxu0 0.0
  %5976 = vmatpush1.msra.mxu0 0.0
  %5977 = vmatprep.subr.mxu0 0.0
  %5978 = vmatpush1.msra.mxu0 0.0
  %5979 = vmatprep.subr.mxu0 0.0
  %5980 = vmatpush1.msra.mxu0 0.0
  %5981 = vmatprep.subr.mxu0 0.0
  %5982 = vmatpush1.msra.mxu0 0.0
  %5983 = vmatprep.subr.mxu0 0.0
  %5984 = vmatpush1.msra.mxu0 0.0
  %5985 = vmatprep.subr.mxu0 0.0
  %5986 = vmatpush1.msra.mxu0 0.0
  %5987 = vmatprep.subr.mxu0 0.0
  %5988 = vmatpush1.msra.mxu0 0.0
  %5989 = vmatprep.subr.mxu0 0.0
  %5990 = vmatpush1.msra.mxu0 0.0
  %5991 = vmatprep.subr.mxu0 0.0
  %5992 = vmatpush1.msra.mxu0 0.0
  %5993 = vmatprep.subr.mxu0 0.0
  %5994 = vmatpush1.msra.mxu0 0.0
  %5995 = vmatprep.subr.mxu0 0.0
  %5996 = vmatpush1.msra.mxu0 0.0
  %5997 = vmatprep.subr.mxu0 0.0
  %5998 = vmatpush1.msra.mxu0 0.0
  %5999 = vmatprep.subr.mxu0 0.0
  %6000 = vmatpush1.msra.mxu0 0.0
  %6001 = vmatprep.subr.mxu0 0.0
  %6002 = vmatpush1.msra.mxu0 0.0
  %6003 = vmatprep.subr.mxu0 0.0
  %6004 = vmatpush1.msra.mxu0 0.0
  %6005 = vmatprep.subr.mxu0 0.0
  %6006 = vmatpush1.msra.mxu0 0.0
  %6007 = vmatprep.subr.mxu0 0.0
  %6008 = vmatpush1.msra.mxu0 0.0
  %6009 = vmatprep.subr.mxu0 0.0
  %6010 = vmatpush1.msra.mxu0 0.0
  %6011 = vmatprep.subr.mxu0 0.0
  %6012 = vmatpush1.msra.mxu0 0.0
  %6013 = vmatprep.subr.mxu0 0.0
  %6014 = vmatpush1.msra.mxu0 0.0
  %6015 = vmatprep.subr.mxu0 0.0
  %6016 = vmatpush1.msra.mxu0 0.0
  %6017 = vmatprep.subr.mxu0 0.0
  %6018 = vmatpush1.msra.mxu0 0.0
  %6019 = vmatprep.subr.mxu0 0.0
  %6020 = vmatpush1.msra.mxu0 0.0
  %6021 = vmatprep.mubr.f32.mxu0 0.0
  %6022 = vmatmul.mubr.f32.gmra.mrb[0].mxu0 %v5875
  %v6023 = vpop.f32.mrb[0].mxu0
  %v6024 = vadd.f32 %v5864, %v6023
  %v6025 = vpop.f32.mrb[0].mxu0
  %v6026 = vadd.f32 %v5866, %v6025
  %6027 = vmatprep.mubr.f32.mxu0 0.0
  %6028 = vmatmul.mubr.f32.gmra.mrb[0].mxu0 %v5878
  %v6029 = vpop.f32.mrb[0].mxu0
  %v6030 = vadd.f32 %v5870, %v6029
  %v6031 = vpop.f32.mrb[0].mxu0
  %v6032 = vadd.f32 %v5872, %v6031
  %6033 = vdwg.mxu0
  %6034 = vrot.lane.b32.xlu0 %v5565, 15
  %v6035 = vpop.permute.xlu0 %6034
  %6036 = vrot.lane.b32.xlu0 %v5569, 15
  %v6037 = vpop.permute.xlu0 %6036
  %6038 = vrot.lane.b32.xlu0 %v5573, 15
  %v6039 = vpop.permute.xlu0 %6038
  %6040 = vrot.lane.b32.xlu0 %v5577, 15
  %v6041 = vpop.permute.xlu0 %6040
  %6042 = vrot.lane.b32.xlu0 %v5566, 15
  %v6043 = vpop.permute.xlu0 %6042
  %6044 = vrot.lane.b32.xlu0 %v5570, 15
  %v6045 = vpop.permute.xlu0 %6044
  %6046 = vrot.lane.b32.xlu0 %v5574, 15
  %v6047 = vpop.permute.xlu0 %6046
  %6048 = vrot.lane.b32.xlu0 %v5578, 15
  %v6049 = vpop.permute.xlu0 %6048
  %6050 = vrot.lane.b32.xlu0 %v5567, 15
  %v6051 = vpop.permute.xlu0 %6050
  %6052 = vrot.lane.b32.xlu0 %v5571, 15
  %v6053 = vpop.permute.xlu0 %6052
  %6054 = vrot.lane.b32.xlu0 %v5575, 15
  %v6055 = vpop.permute.xlu0 %6054
  %6056 = vrot.lane.b32.xlu0 %v5579, 15
  %v6057 = vpop.permute.xlu0 %6056
  %6058 = vrot.lane.b32.xlu0 %v5568, 15
  %v6059 = vpop.permute.xlu0 %6058
  %6060 = vrot.lane.b32.xlu0 %v5572, 15
  %v6061 = vpop.permute.xlu0 %6060
  %6062 = vrot.lane.b32.xlu0 %v5576, 15
  %v6063 = vpop.permute.xlu0 %6062
  %6064 = vrot.lane.b32.xlu0 %v5580, 15
  %v6065 = vpop.permute.xlu0 %6064
  %v6066 = vsel %vm603, %v6051, %v6059
  %v6067 = vsel %vm603, %v6053, %v6061
  %v6068 = vsel %vm603, %v6055, %v6063
  %v6069 = vsel %vm603, %v6057, %v6065
  %v6070 = vsel %vm603, %v6043, %v6051
  %v6071 = vsel %vm603, %v6045, %v6053
  %v6072 = vsel %vm603, %v6047, %v6055
  %v6073 = vsel %vm603, %v6049, %v6057
  %v6074 = vsel %vm603, %v6035, %v6043
  %v6075 = vsel %vm603, %v6037, %v6045
  %v6076 = vsel %vm603, %v6039, %v6047
  %v6077 = vsel %vm603, %v6041, %v6049
  %v6078 = vsel %vm603, %v6059, %v6035
  %v6079 = vsel %vm603, %v6061, %v6037
  %v6080 = vsel %vm603, %v6063, %v6039
  %v6081 = vsel %vm603, %v6065, %v6041
  %v6082 = vmul.f32 %v6078, %v140
  %v6083 = vmul.f32 %v6074, %v141
  %v6084 = vmul.f32 %v6070, %v142
  %v6085 = vmul.f32 %v6066, %v143
  %v6086 = vmul.f32 %v6079, %v140
  %v6087 = vmul.f32 %v6075, %v141
  %v6088 = vmul.f32 %v6071, %v142
  %v6089 = vmul.f32 %v6067, %v143
  %v6090 = vmul.f32 %v6080, %v140
  %v6091 = vmul.f32 %v6076, %v141
  %v6092 = vmul.f32 %v6072, %v142
  %v6093 = vmul.f32 %v6068, %v143
  %v6094 = vmul.f32 %v6081, %v140
  %v6095 = vmul.f32 %v6077, %v141
  %v6096 = vmul.f32 %v6073, %v142
  %v6097 = vmul.f32 %v6069, %v143
  %s6098 = scalar_lea.vmem %s3, 32
  %v6099 = vld [vmem:[%s6098] sm:$0xff]
  %v6100 = vld [vmem:[%s6098 + $0x8] sm:$0xff]
  %v6102 = vsel %vm2811, %v6099, 0
  %v6105 = vsel %vm2811, %v6100, 0
  %6107 = vmatprep.subr.mxu0 %v6083
  %6108 = vmatpush1.msra.mxu0 %v6082
  %6109 = vmatprep.subr.mxu0 %v6087
  %6110 = vmatpush1.msra.mxu0 %v6086
  %6111 = vmatprep.subr.mxu0 %v6091
  %6112 = vmatpush1.msra.mxu0 %v6090
  %6113 = vmatprep.subr.mxu0 %v6095
  %6114 = vmatpush1.msra.mxu0 %v6094
  %6115 = vmatprep.subr.mxu0 0.0
  %6116 = vmatpush1.msra.mxu0 0.0
  %6117 = vmatprep.subr.mxu0 0.0
  %6118 = vmatpush1.msra.mxu0 0.0
  %6119 = vmatprep.subr.mxu0 0.0
  %6120 = vmatpush1.msra.mxu0 0.0
  %6121 = vmatprep.subr.mxu0 0.0
  %6122 = vmatpush1.msra.mxu0 0.0
  %6123 = vmatprep.subr.mxu0 0.0
  %6124 = vmatpush1.msra.mxu0 0.0
  %6125 = vmatprep.subr.mxu0 0.0
  %6126 = vmatpush1.msra.mxu0 0.0
  %6127 = vmatprep.subr.mxu0 0.0
  %6128 = vmatpush1.msra.mxu0 0.0
  %6129 = vmatprep.subr.mxu0 0.0
  %6130 = vmatpush1.msra.mxu0 0.0
  %6131 = vmatprep.subr.mxu0 0.0
  %6132 = vmatpush1.msra.mxu0 0.0
  %6133 = vmatprep.subr.mxu0 0.0
  %6134 = vmatpush1.msra.mxu0 0.0
  %6135 = vmatprep.subr.mxu0 0.0
  %6136 = vmatpush1.msra.mxu0 0.0
  %6137 = vmatprep.subr.mxu0 0.0
  %6138 = vmatpush1.msra.mxu0 0.0
  %6139 = vmatprep.subr.mxu0 0.0
  %6140 = vmatpush1.msra.mxu0 0.0
  %6141 = vmatprep.subr.mxu0 0.0
  %6142 = vmatpush1.msra.mxu0 0.0
  %6143 = vmatprep.subr.mxu0 0.0
  %6144 = vmatpush1.msra.mxu0 0.0
  %6145 = vmatprep.subr.mxu0 0.0
  %6146 = vmatpush1.msra.mxu0 0.0
  %6147 = vmatprep.subr.mxu0 0.0
  %6148 = vmatpush1.msra.mxu0 0.0
  %6149 = vmatprep.subr.mxu0 0.0
  %6150 = vmatpush1.msra.mxu0 0.0
  %6151 = vmatprep.subr.mxu0 0.0
  %6152 = vmatpush1.msra.mxu0 0.0
  %6153 = vmatprep.subr.mxu0 0.0
  %6154 = vmatpush1.msra.mxu0 0.0
  %6155 = vmatprep.subr.mxu0 0.0
  %6156 = vmatpush1.msra.mxu0 0.0
  %6157 = vmatprep.subr.mxu0 0.0
  %6158 = vmatpush1.msra.mxu0 0.0
  %6159 = vmatprep.subr.mxu0 0.0
  %6160 = vmatpush1.msra.mxu0 0.0
  %6161 = vmatprep.subr.mxu0 0.0
  %6162 = vmatpush1.msra.mxu0 0.0
  %6163 = vmatprep.subr.mxu0 0.0
  %6164 = vmatpush1.msra.mxu0 0.0
  %6165 = vmatprep.subr.mxu0 0.0
  %6166 = vmatpush1.msra.mxu0 0.0
  %6167 = vmatprep.subr.mxu0 0.0
  %6168 = vmatpush1.msra.mxu0 0.0
  %6169 = vmatprep.subr.mxu0 0.0
  %6170 = vmatpush1.msra.mxu0 0.0
  %6171 = vmatprep.mubr.f32.mxu0 0.0
  %6172 = vmatmul.mubr.f32.gmra.mrb[0].mxu0 %v6102
  %v6173 = vpop.f32.mrb[0].mxu0
  %v6174 = vadd.f32 0.0, %v6173
  %v6175 = vpop.f32.mrb[0].mxu0
  %v6176 = vadd.f32 0.0, %v6175
  %6177 = vmatprep.mubr.f32.mxu0 0.0
  %6178 = vmatmul.mubr.f32.gmra.mrb[0].mxu0 %v6105
  %v6179 = vpop.f32.mrb[0].mxu0
  %v6180 = vadd.f32 0.0, %v6179
  %v6181 = vpop.f32.mrb[0].mxu0
  %v6182 = vadd.f32 0.0, %v6181
  %6183 = vdwg.mxu0
  %6184 = vmatprep.subr.mxu0 %v6085
  %6185 = vmatpush1.msra.mxu0 %v6084
  %6186 = vmatprep.subr.mxu0 %v6089
  %6187 = vmatpush1.msra.mxu0 %v6088
  %6188 = vmatprep.subr.mxu0 %v6093
  %6189 = vmatpush1.msra.mxu0 %v6092
  %6190 = vmatprep.subr.mxu0 %v6097
  %6191 = vmatpush1.msra.mxu0 %v6096
  %6192 = vmatprep.subr.mxu0 0.0
  %6193 = vmatpush1.msra.mxu0 0.0
  %6194 = vmatprep.subr.mxu0 0.0
  %6195 = vmatpush1.msra.mxu0 0.0
  %6196 = vmatprep.subr.mxu0 0.0
  %6197 = vmatpush1.msra.mxu0 0.0
  %6198 = vmatprep.subr.mxu0 0.0
  %6199 = vmatpush1.msra.mxu0 0.0
  %6200 = vmatprep.subr.mxu0 0.0
  %6201 = vmatpush1.msra.mxu0 0.0
  %6202 = vmatprep.subr.mxu0 0.0
  %6203 = vmatpush1.msra.mxu0 0.0
  %6204 = vmatprep.subr.mxu0 0.0
  %6205 = vmatpush1.msra.mxu0 0.0
  %6206 = vmatprep.subr.mxu0 0.0
  %6207 = vmatpush1.msra.mxu0 0.0
  %6208 = vmatprep.subr.mxu0 0.0
  %6209 = vmatpush1.msra.mxu0 0.0
  %6210 = vmatprep.subr.mxu0 0.0
  %6211 = vmatpush1.msra.mxu0 0.0
  %6212 = vmatprep.subr.mxu0 0.0
  %6213 = vmatpush1.msra.mxu0 0.0
  %6214 = vmatprep.subr.mxu0 0.0
  %6215 = vmatpush1.msra.mxu0 0.0
  %6216 = vmatprep.subr.mxu0 0.0
  %6217 = vmatpush1.msra.mxu0 0.0
  %6218 = vmatprep.subr.mxu0 0.0
  %6219 = vmatpush1.msra.mxu0 0.0
  %6220 = vmatprep.subr.mxu0 0.0
  %6221 = vmatpush1.msra.mxu0 0.0
  %6222 = vmatprep.subr.mxu0 0.0
  %6223 = vmatpush1.msra.mxu0 0.0
  %6224 = vmatprep.subr.mxu0 0.0
  %6225 = vmatpush1.msra.mxu0 0.0
  %6226 = vmatprep.subr.mxu0 0.0
  %6227 = vmatpush1.msra.mxu0 0.0
  %6228 = vmatprep.subr.mxu0 0.0
  %6229 = vmatpush1.msra.mxu0 0.0
  %6230 = vmatprep.subr.mxu0 0.0
  %6231 = vmatpush1.msra.mxu0 0.0
  %6232 = vmatprep.subr.mxu0 0.0
  %6233 = vmatpush1.msra.mxu0 0.0
  %6234 = vmatprep.subr.mxu0 0.0
  %6235 = vmatpush1.msra.mxu0 0.0
  %6236 = vmatprep.subr.mxu0 0.0
  %6237 = vmatpush1.msra.mxu0 0.0
  %6238 = vmatprep.subr.mxu0 0.0
  %6239 = vmatpush1.msra.mxu0 0.0
  %6240 = vmatprep.subr.mxu0 0.0
  %6241 = vmatpush1.msra.mxu0 0.0
  %6242 = vmatprep.subr.mxu0 0.0
  %6243 = vmatpush1.msra.mxu0 0.0
  %6244 = vmatprep.subr.mxu0 0.0
  %6245 = vmatpush1.msra.mxu0 0.0
  %6246 = vmatprep.subr.mxu0 0.0
  %6247 = vmatpush1.msra.mxu0 0.0
  %6248 = vmatprep.mubr.f32.mxu0 0.0
  %6249 = vmatmul.mubr.f32.gmra.mrb[0].mxu0 %v6102
  %v6250 = vpop.f32.mrb[0].mxu0
  %v6251 = vadd.f32 0.0, %v6250
  %v6252 = vpop.f32.mrb[0].mxu0
  %v6253 = vadd.f32 0.0, %v6252
  %6254 = vmatprep.mubr.f32.mxu0 0.0
  %6255 = vmatmul.mubr.f32.gmra.mrb[0].mxu0 %v6105
  %v6256 = vpop.f32.mrb[0].mxu0
  %v6257 = vadd.f32 0.0, %v6256
  %v6258 = vpop.f32.mrb[0].mxu0
  %v6259 = vadd.f32 0.0, %v6258
  %6260 = vdwg.mxu0
  %v6261 = vadd.f32 %v5947, %v6174
  %v6262 = vadd.f32 %v5949, %v6176
  %v6263 = vadd.f32 %v6024, %v6251
  %v6264 = vadd.f32 %v6026, %v6253
  %v6265 = vadd.f32 %v5953, %v6180
  %v6266 = vadd.f32 %v5955, %v6182
  %v6267 = vadd.f32 %v6030, %v6257
  %v6268 = vadd.f32 %v6032, %v6259
  %6269 = vrot.lane.b32.xlu0 %v5565, 1
  %v6270 = vpop.permute.xlu0 %6269
  %6271 = vrot.lane.b32.xlu0 %v5569, 1
  %v6272 = vpop.permute.xlu0 %6271
  %6273 = vrot.lane.b32.xlu0 %v5573, 1
  %v6274 = vpop.permute.xlu0 %6273
  %6275 = vrot.lane.b32.xlu0 %v5577, 1
  %v6276 = vpop.permute.xlu0 %6275
  %6277 = vrot.lane.b32.xlu0 %v5566, 1
  %v6278 = vpop.permute.xlu0 %6277
  %6279 = vrot.lane.b32.xlu0 %v5570, 1
  %v6280 = vpop.permute.xlu0 %6279
  %6281 = vrot.lane.b32.xlu0 %v5574, 1
  %v6282 = vpop.permute.xlu0 %6281
  %6283 = vrot.lane.b32.xlu0 %v5578, 1
  %v6284 = vpop.permute.xlu0 %6283
  %6285 = vrot.lane.b32.xlu0 %v5567, 1
  %v6286 = vpop.permute.xlu0 %6285
  %6287 = vrot.lane.b32.xlu0 %v5571, 1
  %v6288 = vpop.permute.xlu0 %6287
  %6289 = vrot.lane.b32.xlu0 %v5575, 1
  %v6290 = vpop.permute.xlu0 %6289
  %6291 = vrot.lane.b32.xlu0 %v5579, 1
  %v6292 = vpop.permute.xlu0 %6291
  %6293 = vrot.lane.b32.xlu0 %v5568, 1
  %v6294 = vpop.permute.xlu0 %6293
  %6295 = vrot.lane.b32.xlu0 %v5572, 1
  %v6296 = vpop.permute.xlu0 %6295
  %6297 = vrot.lane.b32.xlu0 %v5576, 1
  %v6298 = vpop.permute.xlu0 %6297
  %6299 = vrot.lane.b32.xlu0 %v5580, 1
  %v6300 = vpop.permute.xlu0 %6299
  %v6301 = vsel %vm831, %v6286, %v6294
  %v6302 = vsel %vm831, %v6288, %v6296
  %v6303 = vsel %vm831, %v6290, %v6298
  %v6304 = vsel %vm831, %v6292, %v6300
  %v6305 = vsel %vm831, %v6278, %v6286
  %v6306 = vsel %vm831, %v6280, %v6288
  %v6307 = vsel %vm831, %v6282, %v6290
  %v6308 = vsel %vm831, %v6284, %v6292
  %v6309 = vsel %vm831, %v6270, %v6278
  %v6310 = vsel %vm831, %v6272, %v6280
  %v6311 = vsel %vm831, %v6274, %v6282
  %v6312 = vsel %vm831, %v6276, %v6284
  %v6313 = vsel %vm831, %v6294, %v6270
  %v6314 = vsel %vm831, %v6296, %v6272
  %v6315 = vsel %vm831, %v6298, %v6274
  %v6316 = vsel %vm831, %v6300, %v6276
  %v6317 = vmul.f32 %v6313, %v108
  %v6318 = vmul.f32 %v6309, %v109
  %v6319 = vmul.f32 %v6305, %v110
  %v6320 = vmul.f32 %v6301, %v111
  %v6321 = vmul.f32 %v6314, %v108
  %v6322 = vmul.f32 %v6310, %v109
  %v6323 = vmul.f32 %v6306, %v110
  %v6324 = vmul.f32 %v6302, %v111
  %v6325 = vmul.f32 %v6315, %v108
  %v6326 = vmul.f32 %v6311, %v109
  %v6327 = vmul.f32 %v6307, %v110
  %v6328 = vmul.f32 %v6303, %v111
  %v6329 = vmul.f32 %v6316, %v108
  %v6330 = vmul.f32 %v6312, %v109
  %v6331 = vmul.f32 %v6308, %v110
  %v6332 = vmul.f32 %v6304, %v111
  %s6333 = scalar_lea.vmem %s3, 48
  %v6334 = vld [vmem:[%s6333] sm:$0xff]
  %v6335 = vld [vmem:[%s6333 + $0x8] sm:$0xff]
  %v6337 = vsel %vm2811, %v6334, 0
  %v6340 = vsel %vm2811, %v6335, 0
  %6342 = vmatprep.subr.mxu0 %v6318
  %6343 = vmatpush1.msra.mxu0 %v6317
  %6344 = vmatprep.subr.mxu0 %v6322
  %6345 = vmatpush1.msra.mxu0 %v6321
  %6346 = vmatprep.subr.mxu0 %v6326
  %6347 = vmatpush1.msra.mxu0 %v6325
  %6348 = vmatprep.subr.mxu0 %v6330
  %6349 = vmatpush1.msra.mxu0 %v6329
  %6350 = vmatprep.subr.mxu0 0.0
  %6351 = vmatpush1.msra.mxu0 0.0
  %6352 = vmatprep.subr.mxu0 0.0
  %6353 = vmatpush1.msra.mxu0 0.0
  %6354 = vmatprep.subr.mxu0 0.0
  %6355 = vmatpush1.msra.mxu0 0.0
  %6356 = vmatprep.subr.mxu0 0.0
  %6357 = vmatpush1.msra.mxu0 0.0
  %6358 = vmatprep.subr.mxu0 0.0
  %6359 = vmatpush1.msra.mxu0 0.0
  %6360 = vmatprep.subr.mxu0 0.0
  %6361 = vmatpush1.msra.mxu0 0.0
  %6362 = vmatprep.subr.mxu0 0.0
  %6363 = vmatpush1.msra.mxu0 0.0
  %6364 = vmatprep.subr.mxu0 0.0
  %6365 = vmatpush1.msra.mxu0 0.0
  %6366 = vmatprep.subr.mxu0 0.0
  %6367 = vmatpush1.msra.mxu0 0.0
  %6368 = vmatprep.subr.mxu0 0.0
  %6369 = vmatpush1.msra.mxu0 0.0
  %6370 = vmatprep.subr.mxu0 0.0
  %6371 = vmatpush1.msra.mxu0 0.0
  %6372 = vmatprep.subr.mxu0 0.0
  %6373 = vmatpush1.msra.mxu0 0.0
  %6374 = vmatprep.subr.mxu0 0.0
  %6375 = vmatpush1.msra.mxu0 0.0
  %6376 = vmatprep.subr.mxu0 0.0
  %6377 = vmatpush1.msra.mxu0 0.0
  %6378 = vmatprep.subr.mxu0 0.0
  %6379 = vmatpush1.msra.mxu0 0.0
  %6380 = vmatprep.subr.mxu0 0.0
  %6381 = vmatpush1.msra.mxu0 0.0
  %6382 = vmatprep.subr.mxu0 0.0
  %6383 = vmatpush1.msra.mxu0 0.0
  %6384 = vmatprep.subr.mxu0 0.0
  %6385 = vmatpush1.msra.mxu0 0.0
  %6386 = vmatprep.subr.mxu0 0.0
  %6387 = vmatpush1.msra.mxu0 0.0
  %6388 = vmatprep.subr.mxu0 0.0
  %6389 = vmatpush1.msra.mxu0 0.0
  %6390 = vmatprep.subr.mxu0 0.0
  %6391 = vmatpush1.msra.mxu0 0.0
  %6392 = vmatprep.subr.mxu0 0.0
  %6393 = vmatpush1.msra.mxu0 0.0
  %6394 = vmatprep.subr.mxu0 0.0
  %6395 = vmatpush1.msra.mxu0 0.0
  %6396 = vmatprep.subr.mxu0 0.0
  %6397 = vmatpush1.msra.mxu0 0.0
  %6398 = vmatprep.subr.mxu0 0.0
  %6399 = vmatpush1.msra.mxu0 0.0
  %6400 = vmatprep.subr.mxu0 0.0
  %6401 = vmatpush1.msra.mxu0 0.0
  %6402 = vmatprep.subr.mxu0 0.0
  %6403 = vmatpush1.msra.mxu0 0.0
  %6404 = vmatprep.subr.mxu0 0.0
  %6405 = vmatpush1.msra.mxu0 0.0
  %6406 = vmatprep.mubr.f32.mxu0 0.0
  %6407 = vmatmul.mubr.f32.gmra.mrb[0].mxu0 %v6337
  %v6408 = vpop.f32.mrb[0].mxu0
  %v6409 = vadd.f32 0.0, %v6408
  %v6410 = vpop.f32.mrb[0].mxu0
  %v6411 = vadd.f32 0.0, %v6410
  %6412 = vmatprep.mubr.f32.mxu0 0.0
  %6413 = vmatmul.mubr.f32.gmra.mrb[0].mxu0 %v6340
  %v6414 = vpop.f32.mrb[0].mxu0
  %v6415 = vadd.f32 0.0, %v6414
  %v6416 = vpop.f32.mrb[0].mxu0
  %v6417 = vadd.f32 0.0, %v6416
  %6418 = vdwg.mxu0
  %6419 = vmatprep.subr.mxu0 %v6320
  %6420 = vmatpush1.msra.mxu0 %v6319
  %6421 = vmatprep.subr.mxu0 %v6324
  %6422 = vmatpush1.msra.mxu0 %v6323
  %6423 = vmatprep.subr.mxu0 %v6328
  %6424 = vmatpush1.msra.mxu0 %v6327
  %6425 = vmatprep.subr.mxu0 %v6332
  %6426 = vmatpush1.msra.mxu0 %v6331
  %6427 = vmatprep.subr.mxu0 0.0
  %6428 = vmatpush1.msra.mxu0 0.0
  %6429 = vmatprep.subr.mxu0 0.0
  %6430 = vmatpush1.msra.mxu0 0.0
  %6431 = vmatprep.subr.mxu0 0.0
  %6432 = vmatpush1.msra.mxu0 0.0
  %6433 = vmatprep.subr.mxu0 0.0
  %6434 = vmatpush1.msra.mxu0 0.0
  %6435 = vmatprep.subr.mxu0 0.0
  %6436 = vmatpush1.msra.mxu0 0.0
  %6437 = vmatprep.subr.mxu0 0.0
  %6438 = vmatpush1.msra.mxu0 0.0
  %6439 = vmatprep.subr.mxu0 0.0
  %6440 = vmatpush1.msra.mxu0 0.0
  %6441 = vmatprep.subr.mxu0 0.0
  %6442 = vmatpush1.msra.mxu0 0.0
  %6443 = vmatprep.subr.mxu0 0.0
  %6444 = vmatpush1.msra.mxu0 0.0
  %6445 = vmatprep.subr.mxu0 0.0
  %6446 = vmatpush1.msra.mxu0 0.0
  %6447 = vmatprep.subr.mxu0 0.0
  %6448 = vmatpush1.msra.mxu0 0.0
  %6449 = vmatprep.subr.mxu0 0.0
  %6450 = vmatpush1.msra.mxu0 0.0
  %6451 = vmatprep.subr.mxu0 0.0
  %6452 = vmatpush1.msra.mxu0 0.0
  %6453 = vmatprep.subr.mxu0 0.0
  %6454 = vmatpush1.msra.mxu0 0.0
  %6455 = vmatprep.subr.mxu0 0.0
  %6456 = vmatpush1.msra.mxu0 0.0
  %6457 = vmatprep.subr.mxu0 0.0
  %6458 = vmatpush1.msra.mxu0 0.0
  %6459 = vmatprep.subr.mxu0 0.0
  %6460 = vmatpush1.msra.mxu0 0.0
  %6461 = vmatprep.subr.mxu0 0.0
  %6462 = vmatpush1.msra.mxu0 0.0
  %6463 = vmatprep.subr.mxu0 0.0
  %6464 = vmatpush1.msra.mxu0 0.0
  %6465 = vmatprep.subr.mxu0 0.0
  %6466 = vmatpush1.msra.mxu0 0.0
  %6467 = vmatprep.subr.mxu0 0.0
  %6468 = vmatpush1.msra.mxu0 0.0
  %6469 = vmatprep.subr.mxu0 0.0
  %6470 = vmatpush1.msra.mxu0 0.0
  %6471 = vmatprep.subr.mxu0 0.0
  %6472 = vmatpush1.msra.mxu0 0.0
  %6473 = vmatprep.subr.mxu0 0.0
  %6474 = vmatpush1.msra.mxu0 0.0
  %6475 = vmatprep.subr.mxu0 0.0
  %6476 = vmatpush1.msra.mxu0 0.0
  %6477 = vmatprep.subr.mxu0 0.0
  %6478 = vmatpush1.msra.mxu0 0.0
  %6479 = vmatprep.subr.mxu0 0.0
  %6480 = vmatpush1.msra.mxu0 0.0
  %6481 = vmatprep.subr.mxu0 0.0
  %6482 = vmatpush1.msra.mxu0 0.0
  %6483 = vmatprep.mubr.f32.mxu0 0.0
  %6484 = vmatmul.mubr.f32.gmra.mrb[0].mxu0 %v6337
  %v6485 = vpop.f32.mrb[0].mxu0
  %v6486 = vadd.f32 0.0, %v6485
  %v6487 = vpop.f32.mrb[0].mxu0
  %v6488 = vadd.f32 0.0, %v6487
  %6489 = vmatprep.mubr.f32.mxu0 0.0
  %6490 = vmatmul.mubr.f32.gmra.mrb[0].mxu0 %v6340
  %v6491 = vpop.f32.mrb[0].mxu0
  %v6492 = vadd.f32 0.0, %v6491
  %v6493 = vpop.f32.mrb[0].mxu0
  %v6494 = vadd.f32 0.0, %v6493
  %6495 = vdwg.mxu0
  %v6496 = vadd.f32 %v6261, %v6409
  %v6497 = vadd.f32 %v6262, %v6411
  %v6498 = vadd.f32 %v6263, %v6486
  %v6499 = vadd.f32 %v6264, %v6488
  %v6500 = vadd.f32 %v6265, %v6415
  %v6501 = vadd.f32 %v6266, %v6417
  %v6502 = vadd.f32 %v6267, %v6492
  %v6503 = vadd.f32 %v6268, %v6494
  %s6504 = scalar_lea.vmem %s3, 64
  %v6505 = vld [vmem:[%s6504] sm:$0xff]
  %v6506 = vld [vmem:[%s6504 + $0x8] sm:$0xff]
  %v6508 = vsel %vm2811, %v6505, 0
  %v6511 = vsel %vm2811, %v6506, 0
  %6513 = vmatprep.subr.mxu0 %v5566
  %6514 = vmatpush1.msra.mxu0 %v5565
  %6515 = vmatprep.subr.mxu0 %v5570
  %6516 = vmatpush1.msra.mxu0 %v5569
  %6517 = vmatprep.subr.mxu0 %v5574
  %6518 = vmatpush1.msra.mxu0 %v5573
  %6519 = vmatprep.subr.mxu0 %v5578
  %6520 = vmatpush1.msra.mxu0 %v5577
  %6521 = vmatprep.subr.mxu0 0.0
  %6522 = vmatpush1.msra.mxu0 0.0
  %6523 = vmatprep.subr.mxu0 0.0
  %6524 = vmatpush1.msra.mxu0 0.0
  %6525 = vmatprep.subr.mxu0 0.0
  %6526 = vmatpush1.msra.mxu0 0.0
  %6527 = vmatprep.subr.mxu0 0.0
  %6528 = vmatpush1.msra.mxu0 0.0
  %6529 = vmatprep.subr.mxu0 0.0
  %6530 = vmatpush1.msra.mxu0 0.0
  %6531 = vmatprep.subr.mxu0 0.0
  %6532 = vmatpush1.msra.mxu0 0.0
  %6533 = vmatprep.subr.mxu0 0.0
  %6534 = vmatpush1.msra.mxu0 0.0
  %6535 = vmatprep.subr.mxu0 0.0
  %6536 = vmatpush1.msra.mxu0 0.0
  %6537 = vmatprep.subr.mxu0 0.0
  %6538 = vmatpush1.msra.mxu0 0.0
  %6539 = vmatprep.subr.mxu0 0.0
  %6540 = vmatpush1.msra.mxu0 0.0
  %6541 = vmatprep.subr.mxu0 0.0
  %6542 = vmatpush1.msra.mxu0 0.0
  %6543 = vmatprep.subr.mxu0 0.0
  %6544 = vmatpush1.msra.mxu0 0.0
  %6545 = vmatprep.subr.mxu0 0.0
  %6546 = vmatpush1.msra.mxu0 0.0
  %6547 = vmatprep.subr.mxu0 0.0
  %6548 = vmatpush1.msra.mxu0 0.0
  %6549 = vmatprep.subr.mxu0 0.0
  %6550 = vmatpush1.msra.mxu0 0.0
  %6551 = vmatprep.subr.mxu0 0.0
  %6552 = vmatpush1.msra.mxu0 0.0
  %6553 = vmatprep.subr.mxu0 0.0
  %6554 = vmatpush1.msra.mxu0 0.0
  %6555 = vmatprep.subr.mxu0 0.0
  %6556 = vmatpush1.msra.mxu0 0.0
  %6557 = vmatprep.subr.mxu0 0.0
  %6558 = vmatpush1.msra.mxu0 0.0
  %6559 = vmatprep.subr.mxu0 0.0
  %6560 = vmatpush1.msra.mxu0 0.0
  %6561 = vmatprep.subr.mxu0 0.0
  %6562 = vmatpush1.msra.mxu0 0.0
  %6563 = vmatprep.subr.mxu0 0.0
  %6564 = vmatpush1.msra.mxu0 0.0
  %6565 = vmatprep.subr.mxu0 0.0
  %6566 = vmatpush1.msra.mxu0 0.0
  %6567 = vmatprep.subr.mxu0 0.0
  %6568 = vmatpush1.msra.mxu0 0.0
  %6569 = vmatprep.subr.mxu0 0.0
  %6570 = vmatpush1.msra.mxu0 0.0
  %6571 = vmatprep.subr.mxu0 0.0
  %6572 = vmatpush1.msra.mxu0 0.0
  %6573 = vmatprep.subr.mxu0 0.0
  %6574 = vmatpush1.msra.mxu0 0.0
  %6575 = vmatprep.subr.mxu0 0.0
  %6576 = vmatpush1.msra.mxu0 0.0
  %6577 = vmatprep.mubr.f32.mxu0 0.0
  %6578 = vmatmul.mubr.f32.gmra.mrb[0].mxu0 %v6508
  %v6579 = vpop.f32.mrb[0].mxu0
  %v6580 = vadd.f32 0.0, %v6579
  %v6581 = vpop.f32.mrb[0].mxu0
  %v6582 = vadd.f32 0.0, %v6581
  %6583 = vmatprep.mubr.f32.mxu0 0.0
  %6584 = vmatmul.mubr.f32.gmra.mrb[0].mxu0 %v6511
  %v6585 = vpop.f32.mrb[0].mxu0
  %v6586 = vadd.f32 0.0, %v6585
  %v6587 = vpop.f32.mrb[0].mxu0
  %v6588 = vadd.f32 0.0, %v6587
  %6589 = vdwg.mxu0
  %6590 = vmatprep.subr.mxu0 %v5568
  %6591 = vmatpush1.msra.mxu0 %v5567
  %6592 = vmatprep.subr.mxu0 %v5572
  %6593 = vmatpush1.msra.mxu0 %v5571
  %6594 = vmatprep.subr.mxu0 %v5576
  %6595 = vmatpush1.msra.mxu0 %v5575
  %6596 = vmatprep.subr.mxu0 %v5580
  %6597 = vmatpush1.msra.mxu0 %v5579
  %6598 = vmatprep.subr.mxu0 0.0
  %6599 = vmatpush1.msra.mxu0 0.0
  %6600 = vmatprep.subr.mxu0 0.0
  %6601 = vmatpush1.msra.mxu0 0.0
  %6602 = vmatprep.subr.mxu0 0.0
  %6603 = vmatpush1.msra.mxu0 0.0
  %6604 = vmatprep.subr.mxu0 0.0
  %6605 = vmatpush1.msra.mxu0 0.0
  %6606 = vmatprep.subr.mxu0 0.0
  %6607 = vmatpush1.msra.mxu0 0.0
  %6608 = vmatprep.subr.mxu0 0.0
  %6609 = vmatpush1.msra.mxu0 0.0
  %6610 = vmatprep.subr.mxu0 0.0
  %6611 = vmatpush1.msra.mxu0 0.0
  %6612 = vmatprep.subr.mxu0 0.0
  %6613 = vmatpush1.msra.mxu0 0.0
  %6614 = vmatprep.subr.mxu0 0.0
  %6615 = vmatpush1.msra.mxu0 0.0
  %6616 = vmatprep.subr.mxu0 0.0
  %6617 = vmatpush1.msra.mxu0 0.0
  %6618 = vmatprep.subr.mxu0 0.0
  %6619 = vmatpush1.msra.mxu0 0.0
  %6620 = vmatprep.subr.mxu0 0.0
  %6621 = vmatpush1.msra.mxu0 0.0
  %6622 = vmatprep.subr.mxu0 0.0
  %6623 = vmatpush1.msra.mxu0 0.0
  %6624 = vmatprep.subr.mxu0 0.0
  %6625 = vmatpush1.msra.mxu0 0.0
  %6626 = vmatprep.subr.mxu0 0.0
  %6627 = vmatpush1.msra.mxu0 0.0
  %6628 = vmatprep.subr.mxu0 0.0
  %6629 = vmatpush1.msra.mxu0 0.0
  %6630 = vmatprep.subr.mxu0 0.0
  %6631 = vmatpush1.msra.mxu0 0.0
  %6632 = vmatprep.subr.mxu0 0.0
  %6633 = vmatpush1.msra.mxu0 0.0
  %6634 = vmatprep.subr.mxu0 0.0
  %6635 = vmatpush1.msra.mxu0 0.0
  %6636 = vmatprep.subr.mxu0 0.0
  %6637 = vmatpush1.msra.mxu0 0.0
  %6638 = vmatprep.subr.mxu0 0.0
  %6639 = vmatpush1.msra.mxu0 0.0
  %6640 = vmatprep.subr.mxu0 0.0
  %6641 = vmatpush1.msra.mxu0 0.0
  %6642 = vmatprep.subr.mxu0 0.0
  %6643 = vmatpush1.msra.mxu0 0.0
  %6644 = vmatprep.subr.mxu0 0.0
  %6645 = vmatpush1.msra.mxu0 0.0
  %6646 = vmatprep.subr.mxu0 0.0
  %6647 = vmatpush1.msra.mxu0 0.0
  %6648 = vmatprep.subr.mxu0 0.0
  %6649 = vmatpush1.msra.mxu0 0.0
  %6650 = vmatprep.subr.mxu0 0.0
  %6651 = vmatpush1.msra.mxu0 0.0
  %6652 = vmatprep.subr.mxu0 0.0
  %6653 = vmatpush1.msra.mxu0 0.0
  %6654 = vmatprep.mubr.f32.mxu0 0.0
  %6655 = vmatmul.mubr.f32.gmra.mrb[0].mxu0 %v6508
  %v6656 = vpop.f32.mrb[0].mxu0
  %v6657 = vadd.f32 0.0, %v6656
  %v6658 = vpop.f32.mrb[0].mxu0
  %v6659 = vadd.f32 0.0, %v6658
  %6660 = vmatprep.mubr.f32.mxu0 0.0
  %6661 = vmatmul.mubr.f32.gmra.mrb[0].mxu0 %v6511
  %v6662 = vpop.f32.mrb[0].mxu0
  %v6663 = vadd.f32 0.0, %v6662
  %v6664 = vpop.f32.mrb[0].mxu0
  %v6665 = vadd.f32 0.0, %v6664
  %6666 = vdwg.mxu0
  %v6667 = vadd.f32 %v6496, %v6580
  %v6668 = vadd.f32 %v6497, %v6582
  %v6669 = vadd.f32 %v6498, %v6657
  %v6670 = vadd.f32 %v6499, %v6659
  %v6671 = vadd.f32 %v6500, %v6586
  %v6672 = vadd.f32 %v6501, %v6588
  %v6673 = vadd.f32 %v6502, %v6663
  %v6674 = vadd.f32 %v6503, %v6665
  %6675 = vrot.lane.b32.xlu0 %v5565, 127
  %v6676 = vpop.permute.xlu0 %6675
  %6677 = vrot.lane.b32.xlu0 %v5569, 127
  %v6678 = vpop.permute.xlu0 %6677
  %6679 = vrot.lane.b32.xlu0 %v5573, 127
  %v6680 = vpop.permute.xlu0 %6679
  %6681 = vrot.lane.b32.xlu0 %v5577, 127
  %v6682 = vpop.permute.xlu0 %6681
  %6683 = vrot.lane.b32.xlu0 %v5566, 127
  %v6684 = vpop.permute.xlu0 %6683
  %6685 = vrot.lane.b32.xlu0 %v5570, 127
  %v6686 = vpop.permute.xlu0 %6685
  %6687 = vrot.lane.b32.xlu0 %v5574, 127
  %v6688 = vpop.permute.xlu0 %6687
  %6689 = vrot.lane.b32.xlu0 %v5578, 127
  %v6690 = vpop.permute.xlu0 %6689
  %6691 = vrot.lane.b32.xlu0 %v5567, 127
  %v6692 = vpop.permute.xlu0 %6691
  %6693 = vrot.lane.b32.xlu0 %v5571, 127
  %v6694 = vpop.permute.xlu0 %6693
  %6695 = vrot.lane.b32.xlu0 %v5575, 127
  %v6696 = vpop.permute.xlu0 %6695
  %6697 = vrot.lane.b32.xlu0 %v5579, 127
  %v6698 = vpop.permute.xlu0 %6697
  %6699 = vrot.lane.b32.xlu0 %v5568, 127
  %v6700 = vpop.permute.xlu0 %6699
  %6701 = vrot.lane.b32.xlu0 %v5572, 127
  %v6702 = vpop.permute.xlu0 %6701
  %6703 = vrot.lane.b32.xlu0 %v5576, 127
  %v6704 = vpop.permute.xlu0 %6703
  %6705 = vrot.lane.b32.xlu0 %v5580, 127
  %v6706 = vpop.permute.xlu0 %6705
  %v6707 = vsel %vm1270, %v6692, %v6700
  %v6708 = vsel %vm1270, %v6694, %v6702
  %v6709 = vsel %vm1270, %v6696, %v6704
  %v6710 = vsel %vm1270, %v6698, %v6706
  %v6711 = vsel %vm1270, %v6684, %v6692
  %v6712 = vsel %vm1270, %v6686, %v6694
  %v6713 = vsel %vm1270, %v6688, %v6696
  %v6714 = vsel %vm1270, %v6690, %v6698
  %v6715 = vsel %vm1270, %v6676, %v6684
  %v6716 = vsel %vm1270, %v6678, %v6686
  %v6717 = vsel %vm1270, %v6680, %v6688
  %v6718 = vsel %vm1270, %v6682, %v6690
  %v6719 = vsel %vm1270, %v6700, %v6676
  %v6720 = vsel %vm1270, %v6702, %v6678
  %v6721 = vsel %vm1270, %v6704, %v6680
  %v6722 = vsel %vm1270, %v6706, %v6682
  %v6723 = vmul.f32 %v6715, %v132
  %v6724 = vmul.f32 %v6711, %v133
  %v6725 = vmul.f32 %v6707, %v134
  %v6726 = vmul.f32 %v6719, %v135
  %v6727 = vmul.f32 %v6716, %v132
  %v6728 = vmul.f32 %v6712, %v133
  %v6729 = vmul.f32 %v6708, %v134
  %v6730 = vmul.f32 %v6720, %v135
  %v6731 = vmul.f32 %v6717, %v132
  %v6732 = vmul.f32 %v6713, %v133
  %v6733 = vmul.f32 %v6709, %v134
  %v6734 = vmul.f32 %v6721, %v135
  %v6735 = vmul.f32 %v6718, %v132
  %v6736 = vmul.f32 %v6714, %v133
  %v6737 = vmul.f32 %v6710, %v134
  %v6738 = vmul.f32 %v6722, %v135
  %s6739 = scalar_lea.vmem %s3, 80
  %v6740 = vld [vmem:[%s6739] sm:$0xff]
  %v6741 = vld [vmem:[%s6739 + $0x8] sm:$0xff]
  %v6743 = vsel %vm2811, %v6740, 0
  %v6746 = vsel %vm2811, %v6741, 0
  %6748 = vmatprep.subr.mxu0 %v6724
  %6749 = vmatpush1.msra.mxu0 %v6723
  %6750 = vmatprep.subr.mxu0 %v6728
  %6751 = vmatpush1.msra.mxu0 %v6727
  %6752 = vmatprep.subr.mxu0 %v6732
  %6753 = vmatpush1.msra.mxu0 %v6731
  %6754 = vmatprep.subr.mxu0 %v6736
  %6755 = vmatpush1.msra.mxu0 %v6735
  %6756 = vmatprep.subr.mxu0 0.0
  %6757 = vmatpush1.msra.mxu0 0.0
  %6758 = vmatprep.subr.mxu0 0.0
  %6759 = vmatpush1.msra.mxu0 0.0
  %6760 = vmatprep.subr.mxu0 0.0
  %6761 = vmatpush1.msra.mxu0 0.0
  %6762 = vmatprep.subr.mxu0 0.0
  %6763 = vmatpush1.msra.mxu0 0.0
  %6764 = vmatprep.subr.mxu0 0.0
  %6765 = vmatpush1.msra.mxu0 0.0
  %6766 = vmatprep.subr.mxu0 0.0
  %6767 = vmatpush1.msra.mxu0 0.0
  %6768 = vmatprep.subr.mxu0 0.0
  %6769 = vmatpush1.msra.mxu0 0.0
  %6770 = vmatprep.subr.mxu0 0.0
  %6771 = vmatpush1.msra.mxu0 0.0
  %6772 = vmatprep.subr.mxu0 0.0
  %6773 = vmatpush1.msra.mxu0 0.0
  %6774 = vmatprep.subr.mxu0 0.0
  %6775 = vmatpush1.msra.mxu0 0.0
  %6776 = vmatprep.subr.mxu0 0.0
  %6777 = vmatpush1.msra.mxu0 0.0
  %6778 = vmatprep.subr.mxu0 0.0
  %6779 = vmatpush1.msra.mxu0 0.0
  %6780 = vmatprep.subr.mxu0 0.0
  %6781 = vmatpush1.msra.mxu0 0.0
  %6782 = vmatprep.subr.mxu0 0.0
  %6783 = vmatpush1.msra.mxu0 0.0
  %6784 = vmatprep.subr.mxu0 0.0
  %6785 = vmatpush1.msra.mxu0 0.0
  %6786 = vmatprep.subr.mxu0 0.0
  %6787 = vmatpush1.msra.mxu0 0.0
  %6788 = vmatprep.subr.mxu0 0.0
  %6789 = vmatpush1.msra.mxu0 0.0
  %6790 = vmatprep.subr.mxu0 0.0
  %6791 = vmatpush1.msra.mxu0 0.0
  %6792 = vmatprep.subr.mxu0 0.0
  %6793 = vmatpush1.msra.mxu0 0.0
  %6794 = vmatprep.subr.mxu0 0.0
  %6795 = vmatpush1.msra.mxu0 0.0
  %6796 = vmatprep.subr.mxu0 0.0
  %6797 = vmatpush1.msra.mxu0 0.0
  %6798 = vmatprep.subr.mxu0 0.0
  %6799 = vmatpush1.msra.mxu0 0.0
  %6800 = vmatprep.subr.mxu0 0.0
  %6801 = vmatpush1.msra.mxu0 0.0
  %6802 = vmatprep.subr.mxu0 0.0
  %6803 = vmatpush1.msra.mxu0 0.0
  %6804 = vmatprep.subr.mxu0 0.0
  %6805 = vmatpush1.msra.mxu0 0.0
  %6806 = vmatprep.subr.mxu0 0.0
  %6807 = vmatpush1.msra.mxu0 0.0
  %6808 = vmatprep.subr.mxu0 0.0
  %6809 = vmatpush1.msra.mxu0 0.0
  %6810 = vmatprep.subr.mxu0 0.0
  %6811 = vmatpush1.msra.mxu0 0.0
  %6812 = vmatprep.mubr.f32.mxu0 0.0
  %6813 = vmatmul.mubr.f32.gmra.mrb[0].mxu0 %v6743
  %v6814 = vpop.f32.mrb[0].mxu0
  %v6815 = vadd.f32 0.0, %v6814
  %v6816 = vpop.f32.mrb[0].mxu0
  %v6817 = vadd.f32 0.0, %v6816
  %6818 = vmatprep.mubr.f32.mxu0 0.0
  %6819 = vmatmul.mubr.f32.gmra.mrb[0].mxu0 %v6746
  %v6820 = vpop.f32.mrb[0].mxu0
  %v6821 = vadd.f32 0.0, %v6820
  %v6822 = vpop.f32.mrb[0].mxu0
  %v6823 = vadd.f32 0.0, %v6822
  %6824 = vdwg.mxu0
  %6825 = vmatprep.subr.mxu0 %v6726
  %6826 = vmatpush1.msra.mxu0 %v6725
  %6827 = vmatprep.subr.mxu0 %v6730
  %6828 = vmatpush1.msra.mxu0 %v6729
  %6829 = vmatprep.subr.mxu0 %v6734
  %6830 = vmatpush1.msra.mxu0 %v6733
  %6831 = vmatprep.subr.mxu0 %v6738
  %6832 = vmatpush1.msra.mxu0 %v6737
  %6833 = vmatprep.subr.mxu0 0.0
  %6834 = vmatpush1.msra.mxu0 0.0
  %6835 = vmatprep.subr.mxu0 0.0
  %6836 = vmatpush1.msra.mxu0 0.0
  %6837 = vmatprep.subr.mxu0 0.0
  %6838 = vmatpush1.msra.mxu0 0.0
  %6839 = vmatprep.subr.mxu0 0.0
  %6840 = vmatpush1.msra.mxu0 0.0
  %6841 = vmatprep.subr.mxu0 0.0
  %6842 = vmatpush1.msra.mxu0 0.0
  %6843 = vmatprep.subr.mxu0 0.0
  %6844 = vmatpush1.msra.mxu0 0.0
  %6845 = vmatprep.subr.mxu0 0.0
  %6846 = vmatpush1.msra.mxu0 0.0
  %6847 = vmatprep.subr.mxu0 0.0
  %6848 = vmatpush1.msra.mxu0 0.0
  %6849 = vmatprep.subr.mxu0 0.0
  %6850 = vmatpush1.msra.mxu0 0.0
  %6851 = vmatprep.subr.mxu0 0.0
  %6852 = vmatpush1.msra.mxu0 0.0
  %6853 = vmatprep.subr.mxu0 0.0
  %6854 = vmatpush1.msra.mxu0 0.0
  %6855 = vmatprep.subr.mxu0 0.0
  %6856 = vmatpush1.msra.mxu0 0.0
  %6857 = vmatprep.subr.mxu0 0.0
  %6858 = vmatpush1.msra.mxu0 0.0
  %6859 = vmatprep.subr.mxu0 0.0
  %6860 = vmatpush1.msra.mxu0 0.0
  %6861 = vmatprep.subr.mxu0 0.0
  %6862 = vmatpush1.msra.mxu0 0.0
  %6863 = vmatprep.subr.mxu0 0.0
  %6864 = vmatpush1.msra.mxu0 0.0
  %6865 = vmatprep.subr.mxu0 0.0
  %6866 = vmatpush1.msra.mxu0 0.0
  %6867 = vmatprep.subr.mxu0 0.0
  %6868 = vmatpush1.msra.mxu0 0.0
  %6869 = vmatprep.subr.mxu0 0.0
  %6870 = vmatpush1.msra.mxu0 0.0
  %6871 = vmatprep.subr.mxu0 0.0
  %6872 = vmatpush1.msra.mxu0 0.0
  %6873 = vmatprep.subr.mxu0 0.0
  %6874 = vmatpush1.msra.mxu0 0.0
  %6875 = vmatprep.subr.mxu0 0.0
  %6876 = vmatpush1.msra.mxu0 0.0
  %6877 = vmatprep.subr.mxu0 0.0
  %6878 = vmatpush1.msra.mxu0 0.0
  %6879 = vmatprep.subr.mxu0 0.0
  %6880 = vmatpush1.msra.mxu0 0.0
  %6881 = vmatprep.subr.mxu0 0.0
  %6882 = vmatpush1.msra.mxu0 0.0
  %6883 = vmatprep.subr.mxu0 0.0
  %6884 = vmatpush1.msra.mxu0 0.0
  %6885 = vmatprep.subr.mxu0 0.0
  %6886 = vmatpush1.msra.mxu0 0.0
  %6887 = vmatprep.subr.mxu0 0.0
  %6888 = vmatpush1.msra.mxu0 0.0
  %6889 = vmatprep.mubr.f32.mxu0 0.0
  %6890 = vmatmul.mubr.f32.gmra.mrb[0].mxu0 %v6743
  %v6891 = vpop.f32.mrb[0].mxu0
  %v6892 = vadd.f32 0.0, %v6891
  %v6893 = vpop.f32.mrb[0].mxu0
  %v6894 = vadd.f32 0.0, %v6893
  %6895 = vmatprep.mubr.f32.mxu0 0.0
  %6896 = vmatmul.mubr.f32.gmra.mrb[0].mxu0 %v6746
  %v6897 = vpop.f32.mrb[0].mxu0
  %v6898 = vadd.f32 0.0, %v6897
  %v6899 = vpop.f32.mrb[0].mxu0
  %v6900 = vadd.f32 0.0, %v6899
  %6901 = vdwg.mxu0
  %v6902 = vadd.f32 %v6667, %v6815
  %v6903 = vadd.f32 %v6668, %v6817
  %v6904 = vadd.f32 %v6669, %v6892
  %v6905 = vadd.f32 %v6670, %v6894
  %v6906 = vadd.f32 %v6671, %v6821
  %v6907 = vadd.f32 %v6672, %v6823
  %v6908 = vadd.f32 %v6673, %v6898
  %v6909 = vadd.f32 %v6674, %v6900
  %6910 = vrot.lane.b32.xlu0 %v5565, 113
  %v6911 = vpop.permute.xlu0 %6910
  %6912 = vrot.lane.b32.xlu0 %v5569, 113
  %v6913 = vpop.permute.xlu0 %6912
  %6914 = vrot.lane.b32.xlu0 %v5573, 113
  %v6915 = vpop.permute.xlu0 %6914
  %6916 = vrot.lane.b32.xlu0 %v5577, 113
  %v6917 = vpop.permute.xlu0 %6916
  %6918 = vrot.lane.b32.xlu0 %v5566, 113
  %v6919 = vpop.permute.xlu0 %6918
  %6920 = vrot.lane.b32.xlu0 %v5570, 113
  %v6921 = vpop.permute.xlu0 %6920
  %6922 = vrot.lane.b32.xlu0 %v5574, 113
  %v6923 = vpop.permute.xlu0 %6922
  %6924 = vrot.lane.b32.xlu0 %v5578, 113
  %v6925 = vpop.permute.xlu0 %6924
  %6926 = vrot.lane.b32.xlu0 %v5567, 113
  %v6927 = vpop.permute.xlu0 %6926
  %6928 = vrot.lane.b32.xlu0 %v5571, 113
  %v6929 = vpop.permute.xlu0 %6928
  %6930 = vrot.lane.b32.xlu0 %v5575, 113
  %v6931 = vpop.permute.xlu0 %6930
  %6932 = vrot.lane.b32.xlu0 %v5579, 113
  %v6933 = vpop.permute.xlu0 %6932
  %6934 = vrot.lane.b32.xlu0 %v5568, 113
  %v6935 = vpop.permute.xlu0 %6934
  %6936 = vrot.lane.b32.xlu0 %v5572, 113
  %v6937 = vpop.permute.xlu0 %6936
  %6938 = vrot.lane.b32.xlu0 %v5576, 113
  %v6939 = vpop.permute.xlu0 %6938
  %6940 = vrot.lane.b32.xlu0 %v5580, 113
  %v6941 = vpop.permute.xlu0 %6940
  %v6942 = vsel %vm1498, %v6927, %v6935
  %v6943 = vsel %vm1498, %v6929, %v6937
  %v6944 = vsel %vm1498, %v6931, %v6939
  %v6945 = vsel %vm1498, %v6933, %v6941
  %v6946 = vsel %vm1498, %v6919, %v6927
  %v6947 = vsel %vm1498, %v6921, %v6929
  %v6948 = vsel %vm1498, %v6923, %v6931
  %v6949 = vsel %vm1498, %v6925, %v6933
  %v6950 = vsel %vm1498, %v6911, %v6919
  %v6951 = vsel %vm1498, %v6913, %v6921
  %v6952 = vsel %vm1498, %v6915, %v6923
  %v6953 = vsel %vm1498, %v6917, %v6925
  %v6954 = vsel %vm1498, %v6935, %v6911
  %v6955 = vsel %vm1498, %v6937, %v6913
  %v6956 = vsel %vm1498, %v6939, %v6915
  %v6957 = vsel %vm1498, %v6941, %v6917
  %v6958 = vmul.f32 %v6950, %v144
  %v6959 = vmul.f32 %v6946, %v145
  %v6960 = vmul.f32 %v6942, %v146
  %v6961 = vmul.f32 %v6954, %v147
  %v6962 = vmul.f32 %v6951, %v144
  %v6963 = vmul.f32 %v6947, %v145
  %v6964 = vmul.f32 %v6943, %v146
  %v6965 = vmul.f32 %v6955, %v147
  %v6966 = vmul.f32 %v6952, %v144
  %v6967 = vmul.f32 %v6948, %v145
  %v6968 = vmul.f32 %v6944, %v146
  %v6969 = vmul.f32 %v6956, %v147
  %v6970 = vmul.f32 %v6953, %v144
  %v6971 = vmul.f32 %v6949, %v145
  %v6972 = vmul.f32 %v6945, %v146
  %v6973 = vmul.f32 %v6957, %v147
  %s6974 = scalar_lea.vmem %s3, 96
  %v6975 = vld [vmem:[%s6974] sm:$0xff]
  %v6976 = vld [vmem:[%s6974 + $0x8] sm:$0xff]
  %v6978 = vsel %vm2811, %v6975, 0
  %v6981 = vsel %vm2811, %v6976, 0
  %6983 = vmatprep.subr.mxu0 %v6959
  %6984 = vmatpush1.msra.mxu0 %v6958
  %6985 = vmatprep.subr.mxu0 %v6963
  %6986 = vmatpush1.msra.mxu0 %v6962
  %6987 = vmatprep.subr.mxu0 %v6967
  %6988 = vmatpush1.msra.mxu0 %v6966
  %6989 = vmatprep.subr.mxu0 %v6971
  %6990 = vmatpush1.msra.mxu0 %v6970
  %6991 = vmatprep.subr.mxu0 0.0
  %6992 = vmatpush1.msra.mxu0 0.0
  %6993 = vmatprep.subr.mxu0 0.0
  %6994 = vmatpush1.msra.mxu0 0.0
  %6995 = vmatprep.subr.mxu0 0.0
  %6996 = vmatpush1.msra.mxu0 0.0
  %6997 = vmatprep.subr.mxu0 0.0
  %6998 = vmatpush1.msra.mxu0 0.0
  %6999 = vmatprep.subr.mxu0 0.0
  %7000 = vmatpush1.msra.mxu0 0.0
  %7001 = vmatprep.subr.mxu0 0.0
  %7002 = vmatpush1.msra.mxu0 0.0
  %7003 = vmatprep.subr.mxu0 0.0
  %7004 = vmatpush1.msra.mxu0 0.0
  %7005 = vmatprep.subr.mxu0 0.0
  %7006 = vmatpush1.msra.mxu0 0.0
  %7007 = vmatprep.subr.mxu0 0.0
  %7008 = vmatpush1.msra.mxu0 0.0
  %7009 = vmatprep.subr.mxu0 0.0
  %7010 = vmatpush1.msra.mxu0 0.0
  %7011 = vmatprep.subr.mxu0 0.0
  %7012 = vmatpush1.msra.mxu0 0.0
  %7013 = vmatprep.subr.mxu0 0.0
  %7014 = vmatpush1.msra.mxu0 0.0
  %7015 = vmatprep.subr.mxu0 0.0
  %7016 = vmatpush1.msra.mxu0 0.0
  %7017 = vmatprep.subr.mxu0 0.0
  %7018 = vmatpush1.msra.mxu0 0.0
  %7019 = vmatprep.subr.mxu0 0.0
  %7020 = vmatpush1.msra.mxu0 0.0
  %7021 = vmatprep.subr.mxu0 0.0
  %7022 = vmatpush1.msra.mxu0 0.0
  %7023 = vmatprep.subr.mxu0 0.0
  %7024 = vmatpush1.msra.mxu0 0.0
  %7025 = vmatprep.subr.mxu0 0.0
  %7026 = vmatpush1.msra.mxu0 0.0
  %7027 = vmatprep.subr.mxu0 0.0
  %7028 = vmatpush1.msra.mxu0 0.0
  %7029 = vmatprep.subr.mxu0 0.0
  %7030 = vmatpush1.msra.mxu0 0.0
  %7031 = vmatprep.subr.mxu0 0.0
  %7032 = vmatpush1.msra.mxu0 0.0
  %7033 = vmatprep.subr.mxu0 0.0
  %7034 = vmatpush1.msra.mxu0 0.0
  %7035 = vmatprep.subr.mxu0 0.0
  %7036 = vmatpush1.msra.mxu0 0.0
  %7037 = vmatprep.subr.mxu0 0.0
  %7038 = vmatpush1.msra.mxu0 0.0
  %7039 = vmatprep.subr.mxu0 0.0
  %7040 = vmatpush1.msra.mxu0 0.0
  %7041 = vmatprep.subr.mxu0 0.0
  %7042 = vmatpush1.msra.mxu0 0.0
  %7043 = vmatprep.subr.mxu0 0.0
  %7044 = vmatpush1.msra.mxu0 0.0
  %7045 = vmatprep.subr.mxu0 0.0
  %7046 = vmatpush1.msra.mxu0 0.0
  %7047 = vmatprep.mubr.f32.mxu0 0.0
  %7048 = vmatmul.mubr.f32.gmra.mrb[0].mxu0 %v6978
  %v7049 = vpop.f32.mrb[0].mxu0
  %v7050 = vadd.f32 0.0, %v7049
  %v7051 = vpop.f32.mrb[0].mxu0
  %v7052 = vadd.f32 0.0, %v7051
  %7053 = vmatprep.mubr.f32.mxu0 0.0
  %7054 = vmatmul.mubr.f32.gmra.mrb[0].mxu0 %v6981
  %v7055 = vpop.f32.mrb[0].mxu0
  %v7056 = vadd.f32 0.0, %v7055
  %v7057 = vpop.f32.mrb[0].mxu0
  %v7058 = vadd.f32 0.0, %v7057
  %7059 = vdwg.mxu0
  %7060 = vmatprep.subr.mxu0 %v6961
  %7061 = vmatpush1.msra.mxu0 %v6960
  %7062 = vmatprep.subr.mxu0 %v6965
  %7063 = vmatpush1.msra.mxu0 %v6964
  %7064 = vmatprep.subr.mxu0 %v6969
  %7065 = vmatpush1.msra.mxu0 %v6968
  %7066 = vmatprep.subr.mxu0 %v6973
  %7067 = vmatpush1.msra.mxu0 %v6972
  %7068 = vmatprep.subr.mxu0 0.0
  %7069 = vmatpush1.msra.mxu0 0.0
  %7070 = vmatprep.subr.mxu0 0.0
  %7071 = vmatpush1.msra.mxu0 0.0
  %7072 = vmatprep.subr.mxu0 0.0
  %7073 = vmatpush1.msra.mxu0 0.0
  %7074 = vmatprep.subr.mxu0 0.0
  %7075 = vmatpush1.msra.mxu0 0.0
  %7076 = vmatprep.subr.mxu0 0.0
  %7077 = vmatpush1.msra.mxu0 0.0
  %7078 = vmatprep.subr.mxu0 0.0
  %7079 = vmatpush1.msra.mxu0 0.0
  %7080 = vmatprep.subr.mxu0 0.0
  %7081 = vmatpush1.msra.mxu0 0.0
  %7082 = vmatprep.subr.mxu0 0.0
  %7083 = vmatpush1.msra.mxu0 0.0
  %7084 = vmatprep.subr.mxu0 0.0
  %7085 = vmatpush1.msra.mxu0 0.0
  %7086 = vmatprep.subr.mxu0 0.0
  %7087 = vmatpush1.msra.mxu0 0.0
  %7088 = vmatprep.subr.mxu0 0.0
  %7089 = vmatpush1.msra.mxu0 0.0
  %7090 = vmatprep.subr.mxu0 0.0
  %7091 = vmatpush1.msra.mxu0 0.0
  %7092 = vmatprep.subr.mxu0 0.0
  %7093 = vmatpush1.msra.mxu0 0.0
  %7094 = vmatprep.subr.mxu0 0.0
  %7095 = vmatpush1.msra.mxu0 0.0
  %7096 = vmatprep.subr.mxu0 0.0
  %7097 = vmatpush1.msra.mxu0 0.0
  %7098 = vmatprep.subr.mxu0 0.0
  %7099 = vmatpush1.msra.mxu0 0.0
  %7100 = vmatprep.subr.mxu0 0.0
  %7101 = vmatpush1.msra.mxu0 0.0
  %7102 = vmatprep.subr.mxu0 0.0
  %7103 = vmatpush1.msra.mxu0 0.0
  %7104 = vmatprep.subr.mxu0 0.0
  %7105 = vmatpush1.msra.mxu0 0.0
  %7106 = vmatprep.subr.mxu0 0.0
  %7107 = vmatpush1.msra.mxu0 0.0
  %7108 = vmatprep.subr.mxu0 0.0
  %7109 = vmatpush1.msra.mxu0 0.0
  %7110 = vmatprep.subr.mxu0 0.0
  %7111 = vmatpush1.msra.mxu0 0.0
  %7112 = vmatprep.subr.mxu0 0.0
  %7113 = vmatpush1.msra.mxu0 0.0
  %7114 = vmatprep.subr.mxu0 0.0
  %7115 = vmatpush1.msra.mxu0 0.0
  %7116 = vmatprep.subr.mxu0 0.0
  %7117 = vmatpush1.msra.mxu0 0.0
  %7118 = vmatprep.subr.mxu0 0.0
  %7119 = vmatpush1.msra.mxu0 0.0
  %7120 = vmatprep.subr.mxu0 0.0
  %7121 = vmatpush1.msra.mxu0 0.0
  %7122 = vmatprep.subr.mxu0 0.0
  %7123 = vmatpush1.msra.mxu0 0.0
  %7124 = vmatprep.mubr.f32.mxu0 0.0
  %7125 = vmatmul.mubr.f32.gmra.mrb[0].mxu0 %v6978
  %v7126 = vpop.f32.mrb[0].mxu0
  %v7127 = vadd.f32 0.0, %v7126
  %v7128 = vpop.f32.mrb[0].mxu0
  %v7129 = vadd.f32 0.0, %v7128
  %7130 = vmatprep.mubr.f32.mxu0 0.0
  %7131 = vmatmul.mubr.f32.gmra.mrb[0].mxu0 %v6981
  %v7132 = vpop.f32.mrb[0].mxu0
  %v7133 = vadd.f32 0.0, %v7132
  %v7134 = vpop.f32.mrb[0].mxu0
  %v7135 = vadd.f32 0.0, %v7134
  %7136 = vdwg.mxu0
  %v7137 = vadd.f32 %v6902, %v7050
  %v7138 = vadd.f32 %v6903, %v7052
  %v7139 = vadd.f32 %v6904, %v7127
  %v7140 = vadd.f32 %v6905, %v7129
  %v7141 = vadd.f32 %v6906, %v7056
  %v7142 = vadd.f32 %v6907, %v7058
  %v7143 = vadd.f32 %v6908, %v7133
  %v7144 = vadd.f32 %v6909, %v7135
  %7145 = vrot.lane.b32.xlu0 %v5565, 112
  %v7146 = vpop.permute.xlu0 %7145
  %7147 = vrot.lane.b32.xlu0 %v5569, 112
  %v7148 = vpop.permute.xlu0 %7147
  %7149 = vrot.lane.b32.xlu0 %v5573, 112
  %v7150 = vpop.permute.xlu0 %7149
  %7151 = vrot.lane.b32.xlu0 %v5577, 112
  %v7152 = vpop.permute.xlu0 %7151
  %7153 = vrot.lane.b32.xlu0 %v5566, 112
  %v7154 = vpop.permute.xlu0 %7153
  %7155 = vrot.lane.b32.xlu0 %v5570, 112
  %v7156 = vpop.permute.xlu0 %7155
  %7157 = vrot.lane.b32.xlu0 %v5574, 112
  %v7158 = vpop.permute.xlu0 %7157
  %7159 = vrot.lane.b32.xlu0 %v5578, 112
  %v7160 = vpop.permute.xlu0 %7159
  %7161 = vrot.lane.b32.xlu0 %v5567, 112
  %v7162 = vpop.permute.xlu0 %7161
  %7163 = vrot.lane.b32.xlu0 %v5571, 112
  %v7164 = vpop.permute.xlu0 %7163
  %7165 = vrot.lane.b32.xlu0 %v5575, 112
  %v7166 = vpop.permute.xlu0 %7165
  %7167 = vrot.lane.b32.xlu0 %v5579, 112
  %v7168 = vpop.permute.xlu0 %7167
  %7169 = vrot.lane.b32.xlu0 %v5568, 112
  %v7170 = vpop.permute.xlu0 %7169
  %7171 = vrot.lane.b32.xlu0 %v5572, 112
  %v7172 = vpop.permute.xlu0 %7171
  %7173 = vrot.lane.b32.xlu0 %v5576, 112
  %v7174 = vpop.permute.xlu0 %7173
  %7175 = vrot.lane.b32.xlu0 %v5580, 112
  %v7176 = vpop.permute.xlu0 %7175
  %v7177 = vsel %vm1726, %v7162, %v7170
  %v7178 = vsel %vm1726, %v7164, %v7172
  %v7179 = vsel %vm1726, %v7166, %v7174
  %v7180 = vsel %vm1726, %v7168, %v7176
  %v7181 = vsel %vm1726, %v7154, %v7162
  %v7182 = vsel %vm1726, %v7156, %v7164
  %v7183 = vsel %vm1726, %v7158, %v7166
  %v7184 = vsel %vm1726, %v7160, %v7168
  %v7185 = vsel %vm1726, %v7146, %v7154
  %v7186 = vsel %vm1726, %v7148, %v7156
  %v7187 = vsel %vm1726, %v7150, %v7158
  %v7188 = vsel %vm1726, %v7152, %v7160
  %v7189 = vsel %vm1726, %v7170, %v7146
  %v7190 = vsel %vm1726, %v7172, %v7148
  %v7191 = vsel %vm1726, %v7174, %v7150
  %v7192 = vsel %vm1726, %v7176, %v7152
  %v7193 = vmul.f32 %v7185, %v84
  %v7194 = vmul.f32 %v7181, %v85
  %v7195 = vmul.f32 %v7177, %v86
  %v7196 = vmul.f32 %v7189, %v87
  %v7197 = vmul.f32 %v7186, %v84
  %v7198 = vmul.f32 %v7182, %v85
  %v7199 = vmul.f32 %v7178, %v86
  %v7200 = vmul.f32 %v7190, %v87
  %v7201 = vmul.f32 %v7187, %v84
  %v7202 = vmul.f32 %v7183, %v85
  %v7203 = vmul.f32 %v7179, %v86
  %v7204 = vmul.f32 %v7191, %v87
  %v7205 = vmul.f32 %v7188, %v84
  %v7206 = vmul.f32 %v7184, %v85
  %v7207 = vmul.f32 %v7180, %v86
  %v7208 = vmul.f32 %v7192, %v87
  %s7209 = scalar_lea.vmem %s3, 112
  %v7210 = vld [vmem:[%s7209] sm:$0xff]
  %v7211 = vld [vmem:[%s7209 + $0x8] sm:$0xff]
  %v7213 = vsel %vm2811, %v7210, 0
  %v7216 = vsel %vm2811, %v7211, 0
  %7218 = vmatprep.subr.mxu0 %v7194
  %7219 = vmatpush1.msra.mxu0 %v7193
  %7220 = vmatprep.subr.mxu0 %v7198
  %7221 = vmatpush1.msra.mxu0 %v7197
  %7222 = vmatprep.subr.mxu0 %v7202
  %7223 = vmatpush1.msra.mxu0 %v7201
  %7224 = vmatprep.subr.mxu0 %v7206
  %7225 = vmatpush1.msra.mxu0 %v7205
  %7226 = vmatprep.subr.mxu0 0.0
  %7227 = vmatpush1.msra.mxu0 0.0
  %7228 = vmatprep.subr.mxu0 0.0
  %7229 = vmatpush1.msra.mxu0 0.0
  %7230 = vmatprep.subr.mxu0 0.0
  %7231 = vmatpush1.msra.mxu0 0.0
  %7232 = vmatprep.subr.mxu0 0.0
  %7233 = vmatpush1.msra.mxu0 0.0
  %7234 = vmatprep.subr.mxu0 0.0
  %7235 = vmatpush1.msra.mxu0 0.0
  %7236 = vmatprep.subr.mxu0 0.0
  %7237 = vmatpush1.msra.mxu0 0.0
  %7238 = vmatprep.subr.mxu0 0.0
  %7239 = vmatpush1.msra.mxu0 0.0
  %7240 = vmatprep.subr.mxu0 0.0
  %7241 = vmatpush1.msra.mxu0 0.0
  %7242 = vmatprep.subr.mxu0 0.0
  %7243 = vmatpush1.msra.mxu0 0.0
  %7244 = vmatprep.subr.mxu0 0.0
  %7245 = vmatpush1.msra.mxu0 0.0
  %7246 = vmatprep.subr.mxu0 0.0
  %7247 = vmatpush1.msra.mxu0 0.0
  %7248 = vmatprep.subr.mxu0 0.0
  %7249 = vmatpush1.msra.mxu0 0.0
  %7250 = vmatprep.subr.mxu0 0.0
  %7251 = vmatpush1.msra.mxu0 0.0
  %7252 = vmatprep.subr.mxu0 0.0
  %7253 = vmatpush1.msra.mxu0 0.0
  %7254 = vmatprep.subr.mxu0 0.0
  %7255 = vmatpush1.msra.mxu0 0.0
  %7256 = vmatprep.subr.mxu0 0.0
  %7257 = vmatpush1.msra.mxu0 0.0
  %7258 = vmatprep.subr.mxu0 0.0
  %7259 = vmatpush1.msra.mxu0 0.0
  %7260 = vmatprep.subr.mxu0 0.0
  %7261 = vmatpush1.msra.mxu0 0.0
  %7262 = vmatprep.subr.mxu0 0.0
  %7263 = vmatpush1.msra.mxu0 0.0
  %7264 = vmatprep.subr.mxu0 0.0
  %7265 = vmatpush1.msra.mxu0 0.0
  %7266 = vmatprep.subr.mxu0 0.0
  %7267 = vmatpush1.msra.mxu0 0.0
  %7268 = vmatprep.subr.mxu0 0.0
  %7269 = vmatpush1.msra.mxu0 0.0
  %7270 = vmatprep.subr.mxu0 0.0
  %7271 = vmatpush1.msra.mxu0 0.0
  %7272 = vmatprep.subr.mxu0 0.0
  %7273 = vmatpush1.msra.mxu0 0.0
  %7274 = vmatprep.subr.mxu0 0.0
  %7275 = vmatpush1.msra.mxu0 0.0
  %7276 = vmatprep.subr.mxu0 0.0
  %7277 = vmatpush1.msra.mxu0 0.0
  %7278 = vmatprep.subr.mxu0 0.0
  %7279 = vmatpush1.msra.mxu0 0.0
  %7280 = vmatprep.subr.mxu0 0.0
  %7281 = vmatpush1.msra.mxu0 0.0
  %7282 = vmatprep.mubr.f32.mxu0 0.0
  %7283 = vmatmul.mubr.f32.gmra.mrb[0].mxu0 %v7213
  %v7284 = vpop.f32.mrb[0].mxu0
  %v7285 = vadd.f32 0.0, %v7284
  %v7286 = vpop.f32.mrb[0].mxu0
  %v7287 = vadd.f32 0.0, %v7286
  %7288 = vmatprep.mubr.f32.mxu0 0.0
  %7289 = vmatmul.mubr.f32.gmra.mrb[0].mxu0 %v7216
  %v7290 = vpop.f32.mrb[0].mxu0
  %v7291 = vadd.f32 0.0, %v7290
  %v7292 = vpop.f32.mrb[0].mxu0
  %v7293 = vadd.f32 0.0, %v7292
  %7294 = vdwg.mxu0
  %7295 = vmatprep.subr.mxu0 %v7196
  %7296 = vmatpush1.msra.mxu0 %v7195
  %7297 = vmatprep.subr.mxu0 %v7200
  %7298 = vmatpush1.msra.mxu0 %v7199
  %7299 = vmatprep.subr.mxu0 %v7204
  %7300 = vmatpush1.msra.mxu0 %v7203
  %7301 = vmatprep.subr.mxu0 %v7208
  %7302 = vmatpush1.msra.mxu0 %v7207
  %7303 = vmatprep.subr.mxu0 0.0
  %7304 = vmatpush1.msra.mxu0 0.0
  %7305 = vmatprep.subr.mxu0 0.0
  %7306 = vmatpush1.msra.mxu0 0.0
  %7307 = vmatprep.subr.mxu0 0.0
  %7308 = vmatpush1.msra.mxu0 0.0
  %7309 = vmatprep.subr.mxu0 0.0
  %7310 = vmatpush1.msra.mxu0 0.0
  %7311 = vmatprep.subr.mxu0 0.0
  %7312 = vmatpush1.msra.mxu0 0.0
  %7313 = vmatprep.subr.mxu0 0.0
  %7314 = vmatpush1.msra.mxu0 0.0
  %7315 = vmatprep.subr.mxu0 0.0
  %7316 = vmatpush1.msra.mxu0 0.0
  %7317 = vmatprep.subr.mxu0 0.0
  %7318 = vmatpush1.msra.mxu0 0.0
  %7319 = vmatprep.subr.mxu0 0.0
  %7320 = vmatpush1.msra.mxu0 0.0
  %7321 = vmatprep.subr.mxu0 0.0
  %7322 = vmatpush1.msra.mxu0 0.0
  %7323 = vmatprep.subr.mxu0 0.0
  %7324 = vmatpush1.msra.mxu0 0.0
  %7325 = vmatprep.subr.mxu0 0.0
  %7326 = vmatpush1.msra.mxu0 0.0
  %7327 = vmatprep.subr.mxu0 0.0
  %7328 = vmatpush1.msra.mxu0 0.0
  %7329 = vmatprep.subr.mxu0 0.0
  %7330 = vmatpush1.msra.mxu0 0.0
  %7331 = vmatprep.subr.mxu0 0.0
  %7332 = vmatpush1.msra.mxu0 0.0
  %7333 = vmatprep.subr.mxu0 0.0
  %7334 = vmatpush1.msra.mxu0 0.0
  %7335 = vmatprep.subr.mxu0 0.0
  %7336 = vmatpush1.msra.mxu0 0.0
  %7337 = vmatprep.subr.mxu0 0.0
  %7338 = vmatpush1.msra.mxu0 0.0
  %7339 = vmatprep.subr.mxu0 0.0
  %7340 = vmatpush1.msra.mxu0 0.0
  %7341 = vmatprep.subr.mxu0 0.0
  %7342 = vmatpush1.msra.mxu0 0.0
  %7343 = vmatprep.subr.mxu0 0.0
  %7344 = vmatpush1.msra.mxu0 0.0
  %7345 = vmatprep.subr.mxu0 0.0
  %7346 = vmatpush1.msra.mxu0 0.0
  %7347 = vmatprep.subr.mxu0 0.0
  %7348 = vmatpush1.msra.mxu0 0.0
  %7349 = vmatprep.subr.mxu0 0.0
  %7350 = vmatpush1.msra.mxu0 0.0
  %7351 = vmatprep.subr.mxu0 0.0
  %7352 = vmatpush1.msra.mxu0 0.0
  %7353 = vmatprep.subr.mxu0 0.0
  %7354 = vmatpush1.msra.mxu0 0.0
  %7355 = vmatprep.subr.mxu0 0.0
  %7356 = vmatpush1.msra.mxu0 0.0
  %7357 = vmatprep.subr.mxu0 0.0
  %7358 = vmatpush1.msra.mxu0 0.0
  %7359 = vmatprep.mubr.f32.mxu0 0.0
  %7360 = vmatmul.mubr.f32.gmra.mrb[0].mxu0 %v7213
  %v7361 = vpop.f32.mrb[0].mxu0
  %v7362 = vadd.f32 0.0, %v7361
  %v7363 = vpop.f32.mrb[0].mxu0
  %v7364 = vadd.f32 0.0, %v7363
  %7365 = vmatprep.mubr.f32.mxu0 0.0
  %7366 = vmatmul.mubr.f32.gmra.mrb[0].mxu0 %v7216
  %v7367 = vpop.f32.mrb[0].mxu0
  %v7368 = vadd.f32 0.0, %v7367
  %v7369 = vpop.f32.mrb[0].mxu0
  %v7370 = vadd.f32 0.0, %v7369
  %7371 = vdwg.mxu0
  %v7372 = vadd.f32 %v7137, %v7285
  %v7373 = vadd.f32 %v7138, %v7287
  %v7374 = vadd.f32 %v7139, %v7362
  %v7375 = vadd.f32 %v7140, %v7364
  %v7376 = vadd.f32 %v7141, %v7291
  %v7377 = vadd.f32 %v7142, %v7293
  %v7378 = vadd.f32 %v7143, %v7368
  %v7379 = vadd.f32 %v7144, %v7370
  %7380 = vrot.lane.b32.xlu0 %v5565, 111
  %v7381 = vpop.permute.xlu0 %7380
  %7382 = vrot.lane.b32.xlu0 %v5569, 111
  %v7383 = vpop.permute.xlu0 %7382
  %7384 = vrot.lane.b32.xlu0 %v5573, 111
  %v7385 = vpop.permute.xlu0 %7384
  %7386 = vrot.lane.b32.xlu0 %v5577, 111
  %v7387 = vpop.permute.xlu0 %7386
  %7388 = vrot.lane.b32.xlu0 %v5566, 111
  %v7389 = vpop.permute.xlu0 %7388
  %7390 = vrot.lane.b32.xlu0 %v5570, 111
  %v7391 = vpop.permute.xlu0 %7390
  %7392 = vrot.lane.b32.xlu0 %v5574, 111
  %v7393 = vpop.permute.xlu0 %7392
  %7394 = vrot.lane.b32.xlu0 %v5578, 111
  %v7395 = vpop.permute.xlu0 %7394
  %7396 = vrot.lane.b32.xlu0 %v5567, 111
  %v7397 = vpop.permute.xlu0 %7396
  %7398 = vrot.lane.b32.xlu0 %v5571, 111
  %v7399 = vpop.permute.xlu0 %7398
  %7400 = vrot.lane.b32.xlu0 %v5575, 111
  %v7401 = vpop.permute.xlu0 %7400
  %7402 = vrot.lane.b32.xlu0 %v5579, 111
  %v7403 = vpop.permute.xlu0 %7402
  %7404 = vrot.lane.b32.xlu0 %v5568, 111
  %v7405 = vpop.permute.xlu0 %7404
  %7406 = vrot.lane.b32.xlu0 %v5572, 111
  %v7407 = vpop.permute.xlu0 %7406
  %7408 = vrot.lane.b32.xlu0 %v5576, 111
  %v7409 = vpop.permute.xlu0 %7408
  %7410 = vrot.lane.b32.xlu0 %v5580, 111
  %v7411 = vpop.permute.xlu0 %7410
  %v7412 = vsel %vm1954, %v7397, %v7405
  %v7413 = vsel %vm1954, %v7399, %v7407
  %v7414 = vsel %vm1954, %v7401, %v7409
  %v7415 = vsel %vm1954, %v7403, %v7411
  %v7416 = vsel %vm1954, %v7389, %v7397
  %v7417 = vsel %vm1954, %v7391, %v7399
  %v7418 = vsel %vm1954, %v7393, %v7401
  %v7419 = vsel %vm1954, %v7395, %v7403
  %v7420 = vsel %vm1954, %v7381, %v7389
  %v7421 = vsel %vm1954, %v7383, %v7391
  %v7422 = vsel %vm1954, %v7385, %v7393
  %v7423 = vsel %vm1954, %v7387, %v7395
  %v7424 = vsel %vm1954, %v7405, %v7381
  %v7425 = vsel %vm1954, %v7407, %v7383
  %v7426 = vsel %vm1954, %v7409, %v7385
  %v7427 = vsel %vm1954, %v7411, %v7387
  %v7428 = vmul.f32 %v7420, %v148
  %v7429 = vmul.f32 %v7416, %v149
  %v7430 = vmul.f32 %v7412, %v150
  %v7431 = vmul.f32 %v7424, %v151
  %v7432 = vmul.f32 %v7421, %v148
  %v7433 = vmul.f32 %v7417, %v149
  %v7434 = vmul.f32 %v7413, %v150
  %v7435 = vmul.f32 %v7425, %v151
  %v7436 = vmul.f32 %v7422, %v148
  %v7437 = vmul.f32 %v7418, %v149
  %v7438 = vmul.f32 %v7414, %v150
  %v7439 = vmul.f32 %v7426, %v151
  %v7440 = vmul.f32 %v7423, %v148
  %v7441 = vmul.f32 %v7419, %v149
  %v7442 = vmul.f32 %v7415, %v150
  %v7443 = vmul.f32 %v7427, %v151
  %s7444 = scalar_lea.vmem %s3, 128
  %v7445 = vld [vmem:[%s7444] sm:$0xff]
  %v7446 = vld [vmem:[%s7444 + $0x8] sm:$0xff]
  %v7448 = vsel %vm2811, %v7445, 0
  %v7451 = vsel %vm2811, %v7446, 0
  %7453 = vmatprep.subr.mxu0 %v7429
  %7454 = vmatpush1.msra.mxu0 %v7428
  %7455 = vmatprep.subr.mxu0 %v7433
  %7456 = vmatpush1.msra.mxu0 %v7432
  %7457 = vmatprep.subr.mxu0 %v7437
  %7458 = vmatpush1.msra.mxu0 %v7436
  %7459 = vmatprep.subr.mxu0 %v7441
  %7460 = vmatpush1.msra.mxu0 %v7440
  %7461 = vmatprep.subr.mxu0 0.0
  %7462 = vmatpush1.msra.mxu0 0.0
  %7463 = vmatprep.subr.mxu0 0.0
  %7464 = vmatpush1.msra.mxu0 0.0
  %7465 = vmatprep.subr.mxu0 0.0
  %7466 = vmatpush1.msra.mxu0 0.0
  %7467 = vmatprep.subr.mxu0 0.0
  %7468 = vmatpush1.msra.mxu0 0.0
  %7469 = vmatprep.subr.mxu0 0.0
  %7470 = vmatpush1.msra.mxu0 0.0
  %7471 = vmatprep.subr.mxu0 0.0
  %7472 = vmatpush1.msra.mxu0 0.0
  %7473 = vmatprep.subr.mxu0 0.0
  %7474 = vmatpush1.msra.mxu0 0.0
  %7475 = vmatprep.subr.mxu0 0.0
  %7476 = vmatpush1.msra.mxu0 0.0
  %7477 = vmatprep.subr.mxu0 0.0
  %7478 = vmatpush1.msra.mxu0 0.0
  %7479 = vmatprep.subr.mxu0 0.0
  %7480 = vmatpush1.msra.mxu0 0.0
  %7481 = vmatprep.subr.mxu0 0.0
  %7482 = vmatpush1.msra.mxu0 0.0
  %7483 = vmatprep.subr.mxu0 0.0
  %7484 = vmatpush1.msra.mxu0 0.0
  %7485 = vmatprep.subr.mxu0 0.0
  %7486 = vmatpush1.msra.mxu0 0.0
  %7487 = vmatprep.subr.mxu0 0.0
  %7488 = vmatpush1.msra.mxu0 0.0
  %7489 = vmatprep.subr.mxu0 0.0
  %7490 = vmatpush1.msra.mxu0 0.0
  %7491 = vmatprep.subr.mxu0 0.0
  %7492 = vmatpush1.msra.mxu0 0.0
  %7493 = vmatprep.subr.mxu0 0.0
  %7494 = vmatpush1.msra.mxu0 0.0
  %7495 = vmatprep.subr.mxu0 0.0
  %7496 = vmatpush1.msra.mxu0 0.0
  %7497 = vmatprep.subr.mxu0 0.0
  %7498 = vmatpush1.msra.mxu0 0.0
  %7499 = vmatprep.subr.mxu0 0.0
  %7500 = vmatpush1.msra.mxu0 0.0
  %7501 = vmatprep.subr.mxu0 0.0
  %7502 = vmatpush1.msra.mxu0 0.0
  %7503 = vmatprep.subr.mxu0 0.0
  %7504 = vmatpush1.msra.mxu0 0.0
  %7505 = vmatprep.subr.mxu0 0.0
  %7506 = vmatpush1.msra.mxu0 0.0
  %7507 = vmatprep.subr.mxu0 0.0
  %7508 = vmatpush1.msra.mxu0 0.0
  %7509 = vmatprep.subr.mxu0 0.0
  %7510 = vmatpush1.msra.mxu0 0.0
  %7511 = vmatprep.subr.mxu0 0.0
  %7512 = vmatpush1.msra.mxu0 0.0
  %7513 = vmatprep.subr.mxu0 0.0
  %7514 = vmatpush1.msra.mxu0 0.0
  %7515 = vmatprep.subr.mxu0 0.0
  %7516 = vmatpush1.msra.mxu0 0.0
  %7517 = vmatprep.mubr.f32.mxu0 0.0
  %7518 = vmatmul.mubr.f32.gmra.mrb[0].mxu0 %v7448
  %v7519 = vpop.f32.mrb[0].mxu0
  %v7520 = vadd.f32 0.0, %v7519
  %v7521 = vpop.f32.mrb[0].mxu0
  %v7522 = vadd.f32 0.0, %v7521
  %7523 = vmatprep.mubr.f32.mxu0 0.0
  %7524 = vmatmul.mubr.f32.gmra.mrb[0].mxu0 %v7451
  %v7525 = vpop.f32.mrb[0].mxu0
  %v7526 = vadd.f32 0.0, %v7525
  %v7527 = vpop.f32.mrb[0].mxu0
  %v7528 = vadd.f32 0.0, %v7527
  %7529 = vdwg.mxu0
  %7530 = vmatprep.subr.mxu0 %v7431
  %7531 = vmatpush1.msra.mxu0 %v7430
  %7532 = vmatprep.subr.mxu0 %v7435
  %7533 = vmatpush1.msra.mxu0 %v7434
  %7534 = vmatprep.subr.mxu0 %v7439
  %7535 = vmatpush1.msra.mxu0 %v7438
  %7536 = vmatprep.subr.mxu0 %v7443
  %7537 = vmatpush1.msra.mxu0 %v7442
  %7538 = vmatprep.subr.mxu0 0.0
  %7539 = vmatpush1.msra.mxu0 0.0
  %7540 = vmatprep.subr.mxu0 0.0
  %7541 = vmatpush1.msra.mxu0 0.0
  %7542 = vmatprep.subr.mxu0 0.0
  %7543 = vmatpush1.msra.mxu0 0.0
  %7544 = vmatprep.subr.mxu0 0.0
  %7545 = vmatpush1.msra.mxu0 0.0
  %7546 = vmatprep.subr.mxu0 0.0
  %7547 = vmatpush1.msra.mxu0 0.0
  %7548 = vmatprep.subr.mxu0 0.0
  %7549 = vmatpush1.msra.mxu0 0.0
  %7550 = vmatprep.subr.mxu0 0.0
  %7551 = vmatpush1.msra.mxu0 0.0
  %7552 = vmatprep.subr.mxu0 0.0
  %7553 = vmatpush1.msra.mxu0 0.0
  %7554 = vmatprep.subr.mxu0 0.0
  %7555 = vmatpush1.msra.mxu0 0.0
  %7556 = vmatprep.subr.mxu0 0.0
  %7557 = vmatpush1.msra.mxu0 0.0
  %7558 = vmatprep.subr.mxu0 0.0
  %7559 = vmatpush1.msra.mxu0 0.0
  %7560 = vmatprep.subr.mxu0 0.0
  %7561 = vmatpush1.msra.mxu0 0.0
  %7562 = vmatprep.subr.mxu0 0.0
  %7563 = vmatpush1.msra.mxu0 0.0
  %7564 = vmatprep.subr.mxu0 0.0
  %7565 = vmatpush1.msra.mxu0 0.0
  %7566 = vmatprep.subr.mxu0 0.0
  %7567 = vmatpush1.msra.mxu0 0.0
  %7568 = vmatprep.subr.mxu0 0.0
  %7569 = vmatpush1.msra.mxu0 0.0
  %7570 = vmatprep.subr.mxu0 0.0
  %7571 = vmatpush1.msra.mxu0 0.0
  %7572 = vmatprep.subr.mxu0 0.0
  %7573 = vmatpush1.msra.mxu0 0.0
  %7574 = vmatprep.subr.mxu0 0.0
  %7575 = vmatpush1.msra.mxu0 0.0
  %7576 = vmatprep.subr.mxu0 0.0
  %7577 = vmatpush1.msra.mxu0 0.0
  %7578 = vmatprep.subr.mxu0 0.0
  %7579 = vmatpush1.msra.mxu0 0.0
  %7580 = vmatprep.subr.mxu0 0.0
  %7581 = vmatpush1.msra.mxu0 0.0
  %7582 = vmatprep.subr.mxu0 0.0
  %7583 = vmatpush1.msra.mxu0 0.0
  %7584 = vmatprep.subr.mxu0 0.0
  %7585 = vmatpush1.msra.mxu0 0.0
  %7586 = vmatprep.subr.mxu0 0.0
  %7587 = vmatpush1.msra.mxu0 0.0
  %7588 = vmatprep.subr.mxu0 0.0
  %7589 = vmatpush1.msra.mxu0 0.0
  %7590 = vmatprep.subr.mxu0 0.0
  %7591 = vmatpush1.msra.mxu0 0.0
  %7592 = vmatprep.subr.mxu0 0.0
  %7593 = vmatpush1.msra.mxu0 0.0
  %7594 = vmatprep.mubr.f32.mxu0 0.0
  %7595 = vmatmul.mubr.f32.gmra.mrb[0].mxu0 %v7448
  %v7596 = vpop.f32.mrb[0].mxu0
  %v7597 = vadd.f32 0.0, %v7596
  %v7598 = vpop.f32.mrb[0].mxu0
  %v7599 = vadd.f32 0.0, %v7598
  %7600 = vmatprep.mubr.f32.mxu0 0.0
  %7601 = vmatmul.mubr.f32.gmra.mrb[0].mxu0 %v7451
  %v7602 = vpop.f32.mrb[0].mxu0
  %v7603 = vadd.f32 0.0, %v7602
  %v7604 = vpop.f32.mrb[0].mxu0
  %v7605 = vadd.f32 0.0, %v7604
  %7606 = vdwg.mxu0
  %v7607 = vadd.f32 %v7372, %v7520
  %v7608 = vadd.f32 %v7373, %v7522
  %v7609 = vadd.f32 %v7374, %v7597
  %v7610 = vadd.f32 %v7375, %v7599
  %v7611 = vadd.f32 %v7376, %v7526
  %v7612 = vadd.f32 %v7377, %v7528
  %v7613 = vadd.f32 %v7378, %v7603
  %v7614 = vadd.f32 %v7379, %v7605
  %7615 = vmatprep.subr.mxu0 0.0
  %7616 = vmatpush1.msra.mxu0 1.0
  %7617 = vmatprep.subr.mxu0 0.0
  %7618 = vmatpush1.msra.mxu0 1.0
  %7619 = vmatprep.subr.mxu0 0.0
  %7620 = vmatpush1.msra.mxu0 1.0
  %7621 = vmatprep.subr.mxu0 0.0
  %7622 = vmatpush1.msra.mxu0 1.0
  %7623 = vmatprep.subr.mxu0 0.0
  %7624 = vmatpush1.msra.mxu0 1.0
  %7625 = vmatprep.subr.mxu0 0.0
  %7626 = vmatpush1.msra.mxu0 1.0
  %7627 = vmatprep.subr.mxu0 0.0
  %7628 = vmatpush1.msra.mxu0 1.0
  %7629 = vmatprep.subr.mxu0 0.0
  %7630 = vmatpush1.msra.mxu0 1.0
  %7631 = vmatprep.subr.mxu0 0.0
  %7632 = vmatpush1.msra.mxu0 1.0
  %7633 = vmatprep.subr.mxu0 0.0
  %7634 = vmatpush1.msra.mxu0 1.0
  %7635 = vmatprep.subr.mxu0 0.0
  %7636 = vmatpush1.msra.mxu0 1.0
  %7637 = vmatprep.subr.mxu0 0.0
  %7638 = vmatpush1.msra.mxu0 1.0
  %7639 = vmatprep.subr.mxu0 0.0
  %7640 = vmatpush1.msra.mxu0 1.0
  %7641 = vmatprep.subr.mxu0 0.0
  %7642 = vmatpush1.msra.mxu0 1.0
  %7643 = vmatprep.subr.mxu0 0.0
  %7644 = vmatpush1.msra.mxu0 1.0
  %7645 = vmatprep.subr.mxu0 0.0
  %7646 = vmatpush1.msra.mxu0 1.0
  %7647 = vmatprep.subr.mxu0 0.0
  %7648 = vmatpush1.msra.mxu0 1.0
  %7649 = vmatprep.subr.mxu0 0.0
  %7650 = vmatpush1.msra.mxu0 1.0
  %7651 = vmatprep.subr.mxu0 0.0
  %7652 = vmatpush1.msra.mxu0 1.0
  %7653 = vmatprep.subr.mxu0 0.0
  %7654 = vmatpush1.msra.mxu0 1.0
  %7655 = vmatprep.subr.mxu0 0.0
  %7656 = vmatpush1.msra.mxu0 1.0
  %7657 = vmatprep.subr.mxu0 0.0
  %7658 = vmatpush1.msra.mxu0 1.0
  %7659 = vmatprep.subr.mxu0 0.0
  %7660 = vmatpush1.msra.mxu0 1.0
  %7661 = vmatprep.subr.mxu0 0.0
  %7662 = vmatpush1.msra.mxu0 1.0
  %7663 = vmatprep.subr.mxu0 0.0
  %7664 = vmatpush1.msra.mxu0 1.0
  %7665 = vmatprep.subr.mxu0 0.0
  %7666 = vmatpush1.msra.mxu0 1.0
  %7667 = vmatprep.subr.mxu0 0.0
  %7668 = vmatpush1.msra.mxu0 1.0
  %7669 = vmatprep.subr.mxu0 0.0
  %7670 = vmatpush1.msra.mxu0 1.0
  %7671 = vmatprep.subr.mxu0 0.0
  %7672 = vmatpush1.msra.mxu0 1.0
  %7673 = vmatprep.subr.mxu0 0.0
  %7674 = vmatpush1.msra.mxu0 1.0
  %7675 = vmatprep.subr.mxu0 0.0
  %7676 = vmatpush1.msra.mxu0 1.0
  %7677 = vmatprep.subr.mxu0 0.0
  %7678 = vmatpush1.msra.mxu0 1.0
  %7679 = vmatprep.mubr.f32.mxu0 %v7608
  %7680 = vmatmul.mubr.f32.gmra.mrb[0].mxu0 %v7607
  %v7681 = vpop.f32.mrb[0].mxu0
  %v7682 = vadd.f32 0.0, %v7681
  %v7683 = vpop.f32.mrb[0].mxu0
  %7684 = vmatprep.mubr.f32.mxu0 %v7612
  %7685 = vmatmul.mubr.f32.gmra.mrb[0].mxu0 %v7611
  %v7686 = vpop.f32.mrb[0].mxu0
  %v7687 = vadd.f32 0.0, %v7686
  %v7688 = vpop.f32.mrb[0].mxu0
  %7689 = vdwg.mxu0
  %7690 = vmatprep.subr.mxu0 0.0
  %7691 = vmatpush1.msra.mxu0 1.0
  %7692 = vmatprep.subr.mxu0 0.0
  %7693 = vmatpush1.msra.mxu0 1.0
  %7694 = vmatprep.subr.mxu0 0.0
  %7695 = vmatpush1.msra.mxu0 1.0
  %7696 = vmatprep.subr.mxu0 0.0
  %7697 = vmatpush1.msra.mxu0 1.0
  %7698 = vmatprep.subr.mxu0 0.0
  %7699 = vmatpush1.msra.mxu0 1.0
  %7700 = vmatprep.subr.mxu0 0.0
  %7701 = vmatpush1.msra.mxu0 1.0
  %7702 = vmatprep.subr.mxu0 0.0
  %7703 = vmatpush1.msra.mxu0 1.0
  %7704 = vmatprep.subr.mxu0 0.0
  %7705 = vmatpush1.msra.mxu0 1.0
  %7706 = vmatprep.subr.mxu0 0.0
  %7707 = vmatpush1.msra.mxu0 1.0
  %7708 = vmatprep.subr.mxu0 0.0
  %7709 = vmatpush1.msra.mxu0 1.0
  %7710 = vmatprep.subr.mxu0 0.0
  %7711 = vmatpush1.msra.mxu0 1.0
  %7712 = vmatprep.subr.mxu0 0.0
  %7713 = vmatpush1.msra.mxu0 1.0
  %7714 = vmatprep.subr.mxu0 0.0
  %7715 = vmatpush1.msra.mxu0 1.0
  %7716 = vmatprep.subr.mxu0 0.0
  %7717 = vmatpush1.msra.mxu0 1.0
  %7718 = vmatprep.subr.mxu0 0.0
  %7719 = vmatpush1.msra.mxu0 1.0
  %7720 = vmatprep.subr.mxu0 0.0
  %7721 = vmatpush1.msra.mxu0 1.0
  %7722 = vmatprep.subr.mxu0 0.0
  %7723 = vmatpush1.msra.mxu0 1.0
  %7724 = vmatprep.subr.mxu0 0.0
  %7725 = vmatpush1.msra.mxu0 1.0
  %7726 = vmatprep.subr.mxu0 0.0
  %7727 = vmatpush1.msra.mxu0 1.0
  %7728 = vmatprep.subr.mxu0 0.0
  %7729 = vmatpush1.msra.mxu0 1.0
  %7730 = vmatprep.subr.mxu0 0.0
  %7731 = vmatpush1.msra.mxu0 1.0
  %7732 = vmatprep.subr.mxu0 0.0
  %7733 = vmatpush1.msra.mxu0 1.0
  %7734 = vmatprep.subr.mxu0 0.0
  %7735 = vmatpush1.msra.mxu0 1.0
  %7736 = vmatprep.subr.mxu0 0.0
  %7737 = vmatpush1.msra.mxu0 1.0
  %7738 = vmatprep.subr.mxu0 0.0
  %7739 = vmatpush1.msra.mxu0 1.0
  %7740 = vmatprep.subr.mxu0 0.0
  %7741 = vmatpush1.msra.mxu0 1.0
  %7742 = vmatprep.subr.mxu0 0.0
  %7743 = vmatpush1.msra.mxu0 1.0
  %7744 = vmatprep.subr.mxu0 0.0
  %7745 = vmatpush1.msra.mxu0 1.0
  %7746 = vmatprep.subr.mxu0 0.0
  %7747 = vmatpush1.msra.mxu0 1.0
  %7748 = vmatprep.subr.mxu0 0.0
  %7749 = vmatpush1.msra.mxu0 1.0
  %7750 = vmatprep.subr.mxu0 0.0
  %7751 = vmatpush1.msra.mxu0 1.0
  %7752 = vmatprep.subr.mxu0 0.0
  %7753 = vmatpush1.msra.mxu0 1.0
  %7754 = vmatprep.mubr.f32.mxu0 %v7610
  %7755 = vmatmul.mubr.f32.gmra.mrb[0].mxu0 %v7609
  %v7756 = vpop.f32.mrb[0].mxu0
  %v7757 = vadd.f32 %v7682, %v7756
  %v7758 = vpop.f32.mrb[0].mxu0
  %7759 = vmatprep.mubr.f32.mxu0 %v7614
  %7760 = vmatmul.mubr.f32.gmra.mrb[0].mxu0 %v7613
  %v7761 = vpop.f32.mrb[0].mxu0
  %v7762 = vadd.f32 %v7687, %v7761
  %v7763 = vpop.f32.mrb[0].mxu0
  %7764 = vdwg.mxu0
  %v7765 = vmul.f32 %v7607, %v7607
  %v7766 = vmul.f32 %v7608, %v7608
  %v7767 = vmul.f32 %v7609, %v7609
  %v7768 = vmul.f32 %v7610, %v7610
  %v7769 = vmul.f32 %v7611, %v7611
  %v7770 = vmul.f32 %v7612, %v7612
  %v7771 = vmul.f32 %v7613, %v7613
  %v7772 = vmul.f32 %v7614, %v7614
  %7773 = vmatprep.subr.mxu0 0.0
  %7774 = vmatpush1.msra.mxu0 1.0
  %7775 = vmatprep.subr.mxu0 0.0
  %7776 = vmatpush1.msra.mxu0 1.0
  %7777 = vmatprep.subr.mxu0 0.0
  %7778 = vmatpush1.msra.mxu0 1.0
  %7779 = vmatprep.subr.mxu0 0.0
  %7780 = vmatpush1.msra.mxu0 1.0
  %7781 = vmatprep.subr.mxu0 0.0
  %7782 = vmatpush1.msra.mxu0 1.0
  %7783 = vmatprep.subr.mxu0 0.0
  %7784 = vmatpush1.msra.mxu0 1.0
  %7785 = vmatprep.subr.mxu0 0.0
  %7786 = vmatpush1.msra.mxu0 1.0
  %7787 = vmatprep.subr.mxu0 0.0
  %7788 = vmatpush1.msra.mxu0 1.0
  %7789 = vmatprep.subr.mxu0 0.0
  %7790 = vmatpush1.msra.mxu0 1.0
  %7791 = vmatprep.subr.mxu0 0.0
  %7792 = vmatpush1.msra.mxu0 1.0
  %7793 = vmatprep.subr.mxu0 0.0
  %7794 = vmatpush1.msra.mxu0 1.0
  %7795 = vmatprep.subr.mxu0 0.0
  %7796 = vmatpush1.msra.mxu0 1.0
  %7797 = vmatprep.subr.mxu0 0.0
  %7798 = vmatpush1.msra.mxu0 1.0
  %7799 = vmatprep.subr.mxu0 0.0
  %7800 = vmatpush1.msra.mxu0 1.0
  %7801 = vmatprep.subr.mxu0 0.0
  %7802 = vmatpush1.msra.mxu0 1.0
  %7803 = vmatprep.subr.mxu0 0.0
  %7804 = vmatpush1.msra.mxu0 1.0
  %7805 = vmatprep.subr.mxu0 0.0
  %7806 = vmatpush1.msra.mxu0 1.0
  %7807 = vmatprep.subr.mxu0 0.0
  %7808 = vmatpush1.msra.mxu0 1.0
  %7809 = vmatprep.subr.mxu0 0.0
  %7810 = vmatpush1.msra.mxu0 1.0
  %7811 = vmatprep.subr.mxu0 0.0
  %7812 = vmatpush1.msra.mxu0 1.0
  %7813 = vmatprep.subr.mxu0 0.0
  %7814 = vmatpush1.msra.mxu0 1.0
  %7815 = vmatprep.subr.mxu0 0.0
  %7816 = vmatpush1.msra.mxu0 1.0
  %7817 = vmatprep.subr.mxu0 0.0
  %7818 = vmatpush1.msra.mxu0 1.0
  %7819 = vmatprep.subr.mxu0 0.0
  %7820 = vmatpush1.msra.mxu0 1.0
  %7821 = vmatprep.subr.mxu0 0.0
  %7822 = vmatpush1.msra.mxu0 1.0
  %7823 = vmatprep.subr.mxu0 0.0
  %7824 = vmatpush1.msra.mxu0 1.0
  %7825 = vmatprep.subr.mxu0 0.0
  %7826 = vmatpush1.msra.mxu0 1.0
  %7827 = vmatprep.subr.mxu0 0.0
  %7828 = vmatpush1.msra.mxu0 1.0
  %7829 = vmatprep.subr.mxu0 0.0
  %7830 = vmatpush1.msra.mxu0 1.0
  %7831 = vmatprep.subr.mxu0 0.0
  %7832 = vmatpush1.msra.mxu0 1.0
  %7833 = vmatprep.subr.mxu0 0.0
  %7834 = vmatpush1.msra.mxu0 1.0
  %7835 = vmatprep.subr.mxu0 0.0
  %7836 = vmatpush1.msra.mxu0 1.0
  %7837 = vmatprep.mubr.f32.mxu0 %v7766
  %7838 = vmatmul.mubr.f32.gmra.mrb[0].mxu0 %v7765
  %v7839 = vpop.f32.mrb[0].mxu0
  %v7840 = vadd.f32 0.0, %v7839
  %v7841 = vpop.f32.mrb[0].mxu0
  %7842 = vmatprep.mubr.f32.mxu0 %v7770
  %7843 = vmatmul.mubr.f32.gmra.mrb[0].mxu0 %v7769
  %v7844 = vpop.f32.mrb[0].mxu0
  %v7845 = vadd.f32 0.0, %v7844
  %v7846 = vpop.f32.mrb[0].mxu0
  %7847 = vdwg.mxu0
  %7848 = vmatprep.subr.mxu0 0.0
  %7849 = vmatpush1.msra.mxu0 1.0
  %7850 = vmatprep.subr.mxu0 0.0
  %7851 = vmatpush1.msra.mxu0 1.0
  %7852 = vmatprep.subr.mxu0 0.0
  %7853 = vmatpush1.msra.mxu0 1.0
  %7854 = vmatprep.subr.mxu0 0.0
  %7855 = vmatpush1.msra.mxu0 1.0
  %7856 = vmatprep.subr.mxu0 0.0
  %7857 = vmatpush1.msra.mxu0 1.0
  %7858 = vmatprep.subr.mxu0 0.0
  %7859 = vmatpush1.msra.mxu0 1.0
  %7860 = vmatprep.subr.mxu0 0.0
  %7861 = vmatpush1.msra.mxu0 1.0
  %7862 = vmatprep.subr.mxu0 0.0
  %7863 = vmatpush1.msra.mxu0 1.0
  %7864 = vmatprep.subr.mxu0 0.0
  %7865 = vmatpush1.msra.mxu0 1.0
  %7866 = vmatprep.subr.mxu0 0.0
  %7867 = vmatpush1.msra.mxu0 1.0
  %7868 = vmatprep.subr.mxu0 0.0
  %7869 = vmatpush1.msra.mxu0 1.0
  %7870 = vmatprep.subr.mxu0 0.0
  %7871 = vmatpush1.msra.mxu0 1.0
  %7872 = vmatprep.subr.mxu0 0.0
  %7873 = vmatpush1.msra.mxu0 1.0
  %7874 = vmatprep.subr.mxu0 0.0
  %7875 = vmatpush1.msra.mxu0 1.0
  %7876 = vmatprep.subr.mxu0 0.0
  %7877 = vmatpush1.msra.mxu0 1.0
  %7878 = vmatprep.subr.mxu0 0.0
  %7879 = vmatpush1.msra.mxu0 1.0
  %7880 = vmatprep.subr.mxu0 0.0
  %7881 = vmatpush1.msra.mxu0 1.0
  %7882 = vmatprep.subr.mxu0 0.0
  %7883 = vmatpush1.msra.mxu0 1.0
  %7884 = vmatprep.subr.mxu0 0.0
  %7885 = vmatpush1.msra.mxu0 1.0
  %7886 = vmatprep.subr.mxu0 0.0
  %7887 = vmatpush1.msra.mxu0 1.0
  %7888 = vmatprep.subr.mxu0 0.0
  %7889 = vmatpush1.msra.mxu0 1.0
  %7890 = vmatprep.subr.mxu0 0.0
  %7891 = vmatpush1.msra.mxu0 1.0
  %7892 = vmatprep.subr.mxu0 0.0
  %7893 = vmatpush1.msra.mxu0 1.0
  %7894 = vmatprep.subr.mxu0 0.0
  %7895 = vmatpush1.msra.mxu0 1.0
  %7896 = vmatprep.subr.mxu0 0.0
  %7897 = vmatpush1.msra.mxu0 1.0
  %7898 = vmatprep.subr.mxu0 0.0
  %7899 = vmatpush1.msra.mxu0 1.0
  %7900 = vmatprep.subr.mxu0 0.0
  %7901 = vmatpush1.msra.mxu0 1.0
  %7902 = vmatprep.subr.mxu0 0.0
  %7903 = vmatpush1.msra.mxu0 1.0
  %7904 = vmatprep.subr.mxu0 0.0
  %7905 = vmatpush1.msra.mxu0 1.0
  %7906 = vmatprep.subr.mxu0 0.0
  %7907 = vmatpush1.msra.mxu0 1.0
  %7908 = vmatprep.subr.mxu0 0.0
  %7909 = vmatpush1.msra.mxu0 1.0
  %7910 = vmatprep.subr.mxu0 0.0
  %7911 = vmatpush1.msra.mxu0 1.0
  %7912 = vmatprep.mubr.f32.mxu0 %v7768
  %7913 = vmatmul.mubr.f32.gmra.mrb[0].mxu0 %v7767
  %v7914 = vpop.f32.mrb[0].mxu0
  %v7915 = vadd.f32 %v7840, %v7914
  %v7916 = vpop.f32.mrb[0].mxu0
  %7917 = vmatprep.mubr.f32.mxu0 %v7772
  %7918 = vmatmul.mubr.f32.gmra.mrb[0].mxu0 %v7771
  %v7919 = vpop.f32.mrb[0].mxu0
  %v7920 = vadd.f32 %v7845, %v7919
  %v7921 = vpop.f32.mrb[0].mxu0
  %7922 = vdwg.mxu0
  %v7923 = vmul.f32 %v7757, 0.001953125
  %v7924 = vmul.f32 %v7762, 0.001953125
  %v7925 = vmul.f32 %v7915, 0.001953125
  %v7926 = vmul.f32 %v7920, 0.001953125
  %v7927 = vmul.f32 %v7923, %v7923
  %v7928 = vmul.f32 %v7924, %v7924
  %v7929 = vsub.f32 %v7925, %v7927
  %v7930 = vsub.f32 %v7926, %v7928
  %v7931 = vmax.f32 %v7929, 0.0
  %v7932 = vmax.f32 %v7930, 0.0
  %v7933 = vadd.f32 %v7931, 1e-05
  %v7934 = vadd.f32 %v7932, 1e-05
  %v7935 = vrsqrt.pop %v7933
  %v7936 = vrsqrt.pop %v7934
  %7939 = vrot.lane.b32.xlu0 %v7935, 4
  %v7940 = vpop.permute.xlu0 %7939
  %7941 = vrot.lane.b32.xlu0 %v7936, 4
  %v7942 = vpop.permute.xlu0 %7941
  %v7945 = vmul.f32 %v152, %v7940
  %v7946 = vmul.f32 %v153, %v7942
  %7949 = vrot.lane.b32.xlu0 %v7945, 124
  %v7950 = vpop.permute.xlu0 %7949
  %7951 = vrot.lane.b32.xlu0 %v7946, 124
  %v7952 = vpop.permute.xlu0 %7951
  %v7955 = vmul.f32 %v7923, %v7950
  %v7956 = vmul.f32 %v7924, %v7952
  %7959 = vrot.lane.b32.xlu0 %v7955, 5
  %v7960 = vpop.permute.xlu0 %7959
  %7961 = vrot.lane.b32.xlu0 %v7956, 5
  %v7962 = vpop.permute.xlu0 %7961
  %v7965 = vsub.f32 %v152, %v7960
  %v7966 = vsub.f32 %v153, %v7962
  %7967 = vset.pattern.permute.xlu0 4
  %7968 = vperm.xlu0 %7967, %v7945
  %v7969 = vpop.permute.xlu0 %7968
  %7971 = vset.pattern.permute.xlu0 4
  %7972 = vperm.xlu0 %7971, %v7946
  %v7973 = vpop.permute.xlu0 %7972
  %v7975 = vmul.f32 %v7607, %v7969
  %v7976 = vmul.f32 %v7608, %v7969
  %v7977 = vmul.f32 %v7609, %v7969
  %v7978 = vmul.f32 %v7610, %v7969
  %v7979 = vmul.f32 %v7611, %v7973
  %v7980 = vmul.f32 %v7612, %v7973
  %v7981 = vmul.f32 %v7613, %v7973
  %v7982 = vmul.f32 %v7614, %v7973
  %7984 = vset.pattern.permute.xlu0 5
  %7985 = vperm.xlu0 %7984, %v7965
  %v7986 = vpop.permute.xlu0 %7985
  %7989 = vset.pattern.permute.xlu0 5
  %7990 = vperm.xlu0 %7989, %v7966
  %v7991 = vpop.permute.xlu0 %7990
  %v7993 = vadd.f32 %v7975, %v7986
  %v7994 = vadd.f32 %v7976, %v7986
  %v7995 = vadd.f32 %v7977, %v7986
  %v7996 = vadd.f32 %v7978, %v7986
  %v7997 = vadd.f32 %v7979, %v7991
  %v7998 = vadd.f32 %v7980, %v7991
  %v7999 = vadd.f32 %v7981, %v7991
  %v8000 = vadd.f32 %v7982, %v7991
  %v8001 = vmax.f32 %v7993, 0.0
  %v8002 = vmax.f32 %v7994, 0.0
  %v8003 = vmax.f32 %v7995, 0.0
  %v8004 = vmax.f32 %v7996, 0.0
  %v8005 = vmax.f32 %v7997, 0.0
  %v8006 = vmax.f32 %v7998, 0.0
  %v8007 = vmax.f32 %v7999, 0.0
  %v8008 = vmax.f32 %v8000, 0.0
  %v8009 = vld [vmem:[%s4] sm:$0x1]
  %8011 = vset.pattern.permute.xlu0 6
  %8012 = vperm.xlu0 %8011, %v156
  %v8013 = vpop.permute.xlu0 %8012
  %vm8015 = vcmask 130048
  %v8017 = vsel %vm8015, %v8009, 0
  %8019 = vmatprep.subr.mxu0 %v8002
  %8020 = vmatpush1.msra.mxu0 %v8001
  %8021 = vmatprep.subr.mxu0 %v8006
  %8022 = vmatpush1.msra.mxu0 %v8005
  %8023 = vmatprep.subr.mxu0 0.0
  %8024 = vmatpush1.msra.mxu0 0.0
  %8025 = vmatprep.subr.mxu0 0.0
  %8026 = vmatpush1.msra.mxu0 0.0
  %8027 = vmatprep.subr.mxu0 0.0
  %8028 = vmatpush1.msra.mxu0 0.0
  %8029 = vmatprep.subr.mxu0 0.0
  %8030 = vmatpush1.msra.mxu0 0.0
  %8031 = vmatprep.subr.mxu0 0.0
  %8032 = vmatpush1.msra.mxu0 0.0
  %8033 = vmatprep.subr.mxu0 0.0
  %8034 = vmatpush1.msra.mxu0 0.0
  %8035 = vmatprep.subr.mxu0 0.0
  %8036 = vmatpush1.msra.mxu0 0.0
  %8037 = vmatprep.subr.mxu0 0.0
  %8038 = vmatpush1.msra.mxu0 0.0
  %8039 = vmatprep.subr.mxu0 0.0
  %8040 = vmatpush1.msra.mxu0 0.0
  %8041 = vmatprep.subr.mxu0 0.0
  %8042 = vmatpush1.msra.mxu0 0.0
  %8043 = vmatprep.subr.mxu0 0.0
  %8044 = vmatpush1.msra.mxu0 0.0
  %8045 = vmatprep.subr.mxu0 0.0
  %8046 = vmatpush1.msra.mxu0 0.0
  %8047 = vmatprep.subr.mxu0 0.0
  %8048 = vmatpush1.msra.mxu0 0.0
  %8049 = vmatprep.subr.mxu0 0.0
  %8050 = vmatpush1.msra.mxu0 0.0
  %8051 = vmatprep.subr.mxu0 0.0
  %8052 = vmatpush1.msra.mxu0 0.0
  %8053 = vmatprep.subr.mxu0 0.0
  %8054 = vmatpush1.msra.mxu0 0.0
  %8055 = vmatprep.subr.mxu0 0.0
  %8056 = vmatpush1.msra.mxu0 0.0
  %8057 = vmatprep.subr.mxu0 0.0
  %8058 = vmatpush1.msra.mxu0 0.0
  %8059 = vmatprep.subr.mxu0 0.0
  %8060 = vmatpush1.msra.mxu0 0.0
  %8061 = vmatprep.subr.mxu0 0.0
  %8062 = vmatpush1.msra.mxu0 0.0
  %8063 = vmatprep.subr.mxu0 0.0
  %8064 = vmatpush1.msra.mxu0 0.0
  %8065 = vmatprep.subr.mxu0 0.0
  %8066 = vmatpush1.msra.mxu0 0.0
  %8067 = vmatprep.subr.mxu0 0.0
  %8068 = vmatpush1.msra.mxu0 0.0
  %8069 = vmatprep.subr.mxu0 0.0
  %8070 = vmatpush1.msra.mxu0 0.0
  %8071 = vmatprep.subr.mxu0 0.0
  %8072 = vmatpush1.msra.mxu0 0.0
  %8073 = vmatprep.subr.mxu0 0.0
  %8074 = vmatpush1.msra.mxu0 0.0
  %8075 = vmatprep.subr.mxu0 0.0
  %8076 = vmatpush1.msra.mxu0 0.0
  %8077 = vmatprep.subr.mxu0 0.0
  %8078 = vmatpush1.msra.mxu0 0.0
  %8079 = vmatprep.subr.mxu0 0.0
  %8080 = vmatpush1.msra.mxu0 0.0
  %8081 = vmatprep.subr.mxu0 0.0
  %8082 = vmatpush1.msra.mxu0 0.0
  %8083 = vmatprep.mubr.f32.mxu0 0.0
  %8084 = vmatmul.mubr.f32.gmra.mrb[0].mxu0 %v8017
  %v8085 = vpop.f32.mrb[0].mxu0
  %v8086 = vadd.f32 %v8013, %v8085
  %v8087 = vpop.f32.mrb[0].mxu0
  %v8088 = vadd.f32 %v8013, %v8087
  %8089 = vdwg.mxu0
  %8090 = vmatprep.subr.mxu0 %v8004
  %8091 = vmatpush1.msra.mxu0 %v8003
  %8092 = vmatprep.subr.mxu0 %v8008
  %8093 = vmatpush1.msra.mxu0 %v8007
  %8094 = vmatprep.subr.mxu0 0.0
  %8095 = vmatpush1.msra.mxu0 0.0
  %8096 = vmatprep.subr.mxu0 0.0
  %8097 = vmatpush1.msra.mxu0 0.0
  %8098 = vmatprep.subr.mxu0 0.0
  %8099 = vmatpush1.msra.mxu0 0.0
  %8100 = vmatprep.subr.mxu0 0.0
  %8101 = vmatpush1.msra.mxu0 0.0
  %8102 = vmatprep.subr.mxu0 0.0
  %8103 = vmatpush1.msra.mxu0 0.0
  %8104 = vmatprep.subr.mxu0 0.0
  %8105 = vmatpush1.msra.mxu0 0.0
  %8106 = vmatprep.subr.mxu0 0.0
  %8107 = vmatpush1.msra.mxu0 0.0
  %8108 = vmatprep.subr.mxu0 0.0
  %8109 = vmatpush1.msra.mxu0 0.0
  %8110 = vmatprep.subr.mxu0 0.0
  %8111 = vmatpush1.msra.mxu0 0.0
  %8112 = vmatprep.subr.mxu0 0.0
  %8113 = vmatpush1.msra.mxu0 0.0
  %8114 = vmatprep.subr.mxu0 0.0
  %8115 = vmatpush1.msra.mxu0 0.0
  %8116 = vmatprep.subr.mxu0 0.0
  %8117 = vmatpush1.msra.mxu0 0.0
  %8118 = vmatprep.subr.mxu0 0.0
  %8119 = vmatpush1.msra.mxu0 0.0
  %8120 = vmatprep.subr.mxu0 0.0
  %8121 = vmatpush1.msra.mxu0 0.0
  %8122 = vmatprep.subr.mxu0 0.0
  %8123 = vmatpush1.msra.mxu0 0.0
  %8124 = vmatprep.subr.mxu0 0.0
  %8125 = vmatpush1.msra.mxu0 0.0
  %8126 = vmatprep.subr.mxu0 0.0
  %8127 = vmatpush1.msra.mxu0 0.0
  %8128 = vmatprep.subr.mxu0 0.0
  %8129 = vmatpush1.msra.mxu0 0.0
  %8130 = vmatprep.subr.mxu0 0.0
  %8131 = vmatpush1.msra.mxu0 0.0
  %8132 = vmatprep.subr.mxu0 0.0
  %8133 = vmatpush1.msra.mxu0 0.0
  %8134 = vmatprep.subr.mxu0 0.0
  %8135 = vmatpush1.msra.mxu0 0.0
  %8136 = vmatprep.subr.mxu0 0.0
  %8137 = vmatpush1.msra.mxu0 0.0
  %8138 = vmatprep.subr.mxu0 0.0
  %8139 = vmatpush1.msra.mxu0 0.0
  %8140 = vmatprep.subr.mxu0 0.0
  %8141 = vmatpush1.msra.mxu0 0.0
  %8142 = vmatprep.subr.mxu0 0.0
  %8143 = vmatpush1.msra.mxu0 0.0
  %8144 = vmatprep.subr.mxu0 0.0
  %8145 = vmatpush1.msra.mxu0 0.0
  %8146 = vmatprep.subr.mxu0 0.0
  %8147 = vmatpush1.msra.mxu0 0.0
  %8148 = vmatprep.subr.mxu0 0.0
  %8149 = vmatpush1.msra.mxu0 0.0
  %8150 = vmatprep.subr.mxu0 0.0
  %8151 = vmatpush1.msra.mxu0 0.0
  %8152 = vmatprep.subr.mxu0 0.0
  %8153 = vmatpush1.msra.mxu0 0.0
  %8154 = vmatprep.mubr.f32.mxu0 0.0
  %8155 = vmatmul.mubr.f32.gmra.mrb[0].mxu0 %v8017
  %v8156 = vpop.f32.mrb[0].mxu0
  %v8157 = vadd.f32 %v8013, %v8156
  %v8158 = vpop.f32.mrb[0].mxu0
  %v8159 = vadd.f32 %v8013, %v8158
  %8160 = vdwg.mxu0
  %v8161 = vxor.u32 %v8086, 2147483648
  %v8162 = vxor.u32 %v8088, 2147483648
  %v8163 = vxor.u32 %v8157, 2147483648
  %v8164 = vxor.u32 %v8159, 2147483648
  %v8165 = vmul.f32 %v8161, 1.442695
  %v8166 = vpow.pop %v8165
  %v8167 = vmul.f32 %v8162, 1.442695
  %v8168 = vpow.pop %v8167
  %v8169 = vmul.f32 %v8163, 1.442695
  %v8170 = vpow.pop %v8169
  %v8171 = vmul.f32 %v8164, 1.442695
  %v8172 = vpow.pop %v8171
  %v8173 = vadd.f32 %v8166, 1.0
  %v8174 = vadd.f32 %v8168, 1.0
  %v8175 = vadd.f32 %v8170, 1.0
  %v8176 = vadd.f32 %v8172, 1.0
  %v8177 = vrcp.pop %v8173
  %v8178 = vmul.f32 1.0, %v8177
  %v8179 = vrcp.pop %v8174
  %v8180 = vmul.f32 1.0, %v8179
  %v8181 = vrcp.pop %v8175
  %v8182 = vmul.f32 1.0, %v8181
  %v8183 = vrcp.pop %v8176
  %v8184 = vmul.f32 1.0, %v8183
  %v8189 = vcombine.low %v8178, %v8180
  %v8190 = vcombine.low %v8182, %v8184
  %v8192 = vunpack.c.l.s4 1966171168
  %v8193 = vunpack.c.0.s8 %v8192
  %v8194 = vlaneseq
  %v8195 = vshrl.u32 %v8194, 7
  %v8196 = vsub.s32 %v8193, %v8195
  %v8197 = vrot.slane %v8189, %v8196
  %v8199 = vunpack.c.l.s4 1966171168
  %v8200 = vunpack.c.0.s8 %v8199
  %v8201 = vlaneseq
  %v8202 = vshrl.u32 %v8201, 7
  %v8203 = vsub.s32 %v8200, %v8202
  %v8204 = vrot.slane %v8190, %v8203
  %v8205 = vcombine.low %v8197, %v8204
  %v8207 = vunpack.c.l.s4 1966171168
  %v8208 = vunpack.c.0.s8 %v8207
  %v8209 = vlaneseq
  %v8210 = vshrl.u32 %v8209, 7
  %v8211 = vsub.s32 %v8208, %v8210
  %v8212 = vrot.slane %v8205, %v8211
  %v8214 = vlaneseq
  %vm8215 = vcmp.ge.s32.totalorder %v8214, 0
  %vm8216 = vcmp.lt.s32.totalorder %v8214, 512
  %vm8217 = vmand %vm8215, %vm8216
  %8218 = vst.msk [vmem:[%s6] sm:$0xf] %vm8217, %v8212
  // Predicated region
  $region26: #{weight_generator.1} parent=0 // pred_check
    _
  $region27: #{weight_generator.1} parent=0 // pred_check_branch
    %8220 = sbr.rel (0) target = $region29
  $region28: #{weight_generator.1} parent=0 // pred_region
    _
  $region29: #{weight_generator.1} parent=0 // pred_fallthru
    _
  // Predicated region
  $region30: #{weight_generator.1} parent=0 // pred_check
    _
  $region31: #{weight_generator.1} parent=0 // pred_check_branch
    %8222 = sbr.rel (0) target = $region33
  $region32: #{weight_generator.1} parent=0 // pred_region
    _
  $region33: #{weight_generator.1} parent=0 // pred_fallthru
    _

</llo_original>
